<compile_context>
chip_gen: v5e
topology: v5e:2x2
jax: 0.10.0
libtpu: 0.0.40
codegen_flags: <defaults>
</compile_context>

<pallas_src>
import jax
import jax.numpy as jnp
import numpy as np
from jax.experimental import pallas as pl
from jax.experimental.pallas import tpu as pltpu

# ----- model constants -----------------------------------------------------
H = 93                  # input_length == hidden_length in the PyTorch module
HP = 128                # H padded to a full lane tile
TIME_EMBED_SIZE = 4     # TODO(synk): TIME_EMBED_SIZE is undefined in the source; chose 4
INPUT_LENGTH = 8        # TODO(synk): INPUT_LENGTH undefined in the source; chose 8
OUTPUT_LENGTH = 4       # TODO(synk): OUTPUT_LENGTH undefined in the source; chose 4
NG = 5                  # fused gate order along lanes: [i, f, k, o, T]
GW = NG * HP            # fused x-path gate width (640 lanes)
GW_HC = 4 * HP          # recurrent [h|c] gate width (512 lanes; T column dropped)


# ----- Pallas kernel ---------------------------------------------------------
def seq_time_lstm_kernel(x_ref, t_ref, ft_ref,
                         w1x_ref, w1hc_ref, b1_ref, wt1_ref,
                         w2x_ref, w2hc_ref, b2_ref, wt2_ref,
                         lw_ref, lb_ref,
                         out_ref):
    f32, bf16 = jnp.float32, jnp.bfloat16

    # global max-normalization of the time embeddings (t / t.max(), ft / ft.max())
    t = t_ref[...] / jnp.max(t_ref[...])
    ft = ft_ref[...] / jnp.max(ft_ref[...])

    # ---- hoist every state-independent term out of the recurrence ----------
    # Per step/cell bias slab on the fused gate lanes [i | f | k | o | T]:
    #   i,f,k lanes: bias only
    #   o lanes    : bias + d @ W_t_out
    #   T lanes    : bias + sigmoid(d @ W_t_time)
    # Built without any zero-block concats (wt is packed as [W_t_out | W_t_time]).
    def time_bias_slab(d, wt_ref, b_ref):
        L = d.shape[0]
        p = jnp.dot(d, wt_ref[...], preferred_element_type=f32)   # (L, 2*HP)
        head = jnp.broadcast_to(b_ref[:, :3 * HP], (L, 3 * HP))   # i,f,k biases
        o_tail = p[:, :HP] + b_ref[:, 3 * HP:4 * HP]              # o bias + d@W_t_out
        T_tail = jax.nn.sigmoid(p[:, HP:]) + b_ref[:, 4 * HP:]    # T bias + sig(d@W_t_time)
        return jnp.concatenate([head, o_tail, T_tail], axis=-1)   # (L, GW)

    bd1_enc = time_bias_slab(t, wt1_ref, b1_ref)      # (L_IN,  GW)
    bd1_dec = time_bias_slab(ft, wt1_ref, b1_ref)     # (L_OUT, GW)
    bd2_enc = time_bias_slab(t, wt2_ref, b2_ref)
    bd2_dec = time_bias_slab(ft, wt2_ref, b2_ref)

    w1_x, w1_hc = w1x_ref[...], w1hc_ref[...]         # (HP,GW), (2*HP,GW_HC) bf16
    w2_x, w2_hc = w2x_ref[...], w2hc_ref[...]

    # encoder cell-1 x-path: one batched (L_IN,HP)@(HP,GW) matmul, hoisted;
    # bias/time slab folded in so the per-step work is only the hc dot + gates.
    xz1 = jnp.dot(x_ref[...].astype(bf16), w1_x,
                  preferred_element_type=f32) + bd1_enc           # (L_IN, GW)

    def gates(z_main, z_T, c_prev):
        # z_main lanes: [i | f | k | o] (512), z_T lanes: [T] (128); all f32.
        s = jax.nn.sigmoid(z_main[:, :3 * HP])        # fused sigmoid over i,f,o? -> i,f,o
        i_g, f_g, o_g = s[:, :HP], s[:, HP:2 * HP], s[:, 2 * HP:3 * HP]
        k_g = jnp.tanh(z_main[:, 3 * HP:])
        T_g = jax.nn.sigmoid(z_T)
        c_next = i_g * T_g * k_g + f_g * c_prev
        h_next = o_g * jnp.tanh(c_next)
        # cast h/c to bf16 exactly once per production; reuse everywhere downstream
        h_bf = h_next.astype(bf16)
        hc_bf = jnp.concatenate([h_bf, c_next.astype(bf16)], axis=-1)   # (1, 2*HP)
        return c_next, h_bf, hc_bf

    c1 = jnp.zeros((1, HP), f32)
    c2 = jnp.zeros((1, HP), f32)
    hc1_bf = jnp.zeros((1, 2 * HP), bf16)
    hc2_bf = jnp.zeros((1, 2 * HP), bf16)
    h2_bf = jnp.zeros((1, HP), bf16)

    # wait: z_main lane order is [i, f, k, o]; adjust gate extraction accordingly
    def gates(z_main, z_T, c_prev):                   # noqa: F811 (final definition)
        sig_ifo = jax.nn.sigmoid(z_main[:, :2 * HP])  # i, f
        i_g, f_g = sig_ifo[:, :HP], sig_ifo[:, HP:]
        k_g = jnp.tanh(z_main[:, 2 * HP:3 * HP])
        o_g = jax.nn.sigmoid(z_main[:, 3 * HP:])
        T_g = jax.nn.sigmoid(z_T)
        c_next = i_g * T_g * k_g + f_g * c_prev
        h_next = o_g * jnp.tanh(c_next)
        h_bf = h_next.astype(bf16)
        hc_bf = jnp.concatenate([h_bf, c_next.astype(bf16)], axis=-1)
        return c_next, h_bf, hc_bf

    # ---- encoder --------------------------------------------------------------
    for i in range(INPUT_LENGTH):
        # cell 1: x-path precomputed; only the state-dependent hc dot per step
        z1_hc = jnp.dot(hc1_bf, w1_hc, preferred_element_type=f32)       # (1, GW_HC)
        x_row = xz1[i:i + 1]
        c1, h1_bf, hc1_bf = gates(x_row[:, :GW_HC] + z1_hc, x_row[:, GW_HC:], c1)

        # cell 2: hc dot depends only on the PREVIOUS step's (h2,c2) -> overlaps cell 1
        z2_hc = jnp.dot(hc2_bf, w2_hc, preferred_element_type=f32)
        z2_x = jnp.dot(h1_bf, w2_x, preferred_element_type=f32)          # (1, GW)
        b_row = bd2_enc[i:i + 1]
        c2, h2_bf, hc2_bf = gates(z2_x[:, :GW_HC] + z2_hc + b_row[:, :GW_HC],
                                  z2_x[:, GW_HC:] + b_row[:, GW_HC:], c2)

    # ---- decoder --------------------------------------------------------------
    h2_rows = []
    for j in range(OUTPUT_LENGTH):
        # cell 1: x input is previous-step h2; hc is previous-step (h1,c1)
        z1_x = jnp.dot(h2_bf, w1_x, preferred_element_type=f32)          # (1, GW)
        z1_hc = jnp.dot(hc1_bf, w1_hc, preferred_element_type=f32)
        b1_row = bd1_dec[j:j + 1]
        c1, h1_bf, hc1_bf = gates(z1_x[:, :GW_HC] + z1_hc + b1_row[:, :GW_HC],
                                  z1_x[:, GW_HC:] + b1_row[:, GW_HC:], c1)

        # cell 2
        z2_hc = jnp.dot(hc2_bf, w2_hc, preferred_element_type=f32)
        z2_x = jnp.dot(h1_bf, w2_x, preferred_element_type=f32)
        b2_row = bd2_dec[j:j + 1]
        c2, h2_bf, hc2_bf = gates(z2_x[:, :GW_HC] + z2_hc + b2_row[:, :GW_HC],
                                  z2_x[:, GW_HC:] + b2_row[:, GW_HC:], c2)
        h2_rows.append(h2_bf)                 # keep decoder h2 rows in values (no scratch)

    # ---- one batched final Linear and a single lane-dense store ------------
    h2_mat = jnp.concatenate(h2_rows, axis=0)                            # (L_OUT, HP) bf16
    out_ref[...] = jnp.dot(h2_mat, lw_ref[...],
                           preferred_element_type=f32) + lb_ref[...]


# ----- wrapper-side parameter packing (padding + gate fusion) ----------------
def _pad_mat(w, rows, cols):
    out = jnp.zeros((rows, cols), jnp.float32)
    return out.at[:w.shape[0], :w.shape[1]].set(w)


def pack_cell_params(cell_params):
    """Fuse per-gate weights into lane-concatenated, 128-padded matrices.

    cell_params = (Wx (5,H,H), Bx (5,H), Wh (4,H,H), Wc (3,H,H), Wt (2,TE,H)),
    with the per-gate orders of the original model:
      Wx: [input, forget, time, cell, output]; Wh: [input, forget, cell, output];
      Wc: [input, forget, output]; Wt: [time, output].
    Fused gate lane order is [i, f, k, o, T] for the x-path and [i, f, k, o] for the
    recurrent [h|c] path (the T column is identically zero there and is dropped).
    Returns (w_x (HP,GW) bf16, w_hc (2*HP,GW_HC) bf16, b (1,GW) f32, wt (TE,2*HP) f32)
    where wt is packed as [W_t_out | W_t_time].
    """
    Wx, Bx, Wh, Wc, Wt = cell_params
    zero = jnp.zeros((HP, HP), jnp.float32)
    pad = lambda w: _pad_mat(w, HP, HP)

    w_x = jnp.concatenate([pad(Wx[0]), pad(Wx[1]), pad(Wx[3]), pad(Wx[4]), pad(Wx[2])],
                          axis=1).astype(jnp.bfloat16)                    # (HP, GW)
    h_blk = jnp.concatenate([pad(Wh[0]), pad(Wh[1]), pad(Wh[2]), pad(Wh[3])], axis=1)
    c_blk = jnp.concatenate([pad(Wc[0]), pad(Wc[1]), zero,       pad(Wc[2])], axis=1)
    w_hc = jnp.concatenate([h_blk, c_blk], axis=0).astype(jnp.bfloat16)   # (2*HP, GW_HC)

    padb = lambda b: _pad_mat(b[None, :], 1, HP)
    b_big = jnp.concatenate([padb(Bx[0]), padb(Bx[1]), padb(Bx[3]),
                             padb(Bx[4]), padb(Bx[2])], axis=1)           # (1, GW)
    wt_big = jnp.concatenate([_pad_mat(Wt[1], TIME_EMBED_SIZE, HP),       # W_t_out
                              _pad_mat(Wt[0], TIME_EMBED_SIZE, HP)],      # W_t_time
                             axis=1)                                      # (TE, 2*HP)
    return w_x, w_hc, b_big, wt_big


def seq_time_lstm(x, t, ft, params):
    (Wx1, Bx1, Wh1, Wc1, Wt1,
     Wx2, Bx2, Wh2, Wc2, Wt2, Lw, Lb) = params
    w1x, w1hc, b1, wt1 = pack_cell_params((Wx1, Bx1, Wh1, Wc1, Wt1))
    w2x, w2hc, b2, wt2 = pack_cell_params((Wx2, Bx2, Wh2, Wc2, Wt2))
    lw = _pad_mat(Lw, HP, HP).astype(jnp.bfloat16)
    lb = _pad_mat(Lb, 1, HP)
    xp = _pad_mat(x, INPUT_LENGTH, HP)

    inputs = (xp, t, ft, w1x, w1hc, b1, wt1, w2x, w2hc, b2, wt2, lw, lb)
    out = pl.pallas_call(
        seq_time_lstm_kernel,
        out_shape=jax.ShapeDtypeStruct((OUTPUT_LENGTH, HP), jnp.float32),
        in_specs=[pl.BlockSpec(memory_space=pltpu.MemorySpace.VMEM)] * len(inputs),
        out_specs=pl.BlockSpec(memory_space=pltpu.MemorySpace.VMEM),
    )(*inputs)
    return out[:, :H]                      # drop the 93->128 padding


# ----- pure-JAX reference (original per-gate formulation; mirrors bf16 dots) -
def _bdot(a, w):
    return jnp.dot(a.astype(jnp.bfloat16), w.astype(jnp.bfloat16),
                   preferred_element_type=jnp.float32)


def _cell_ref(x, h, c_prev, d, Wx, Bx, Wh, Wc, Wt):
    i = jax.nn.sigmoid(_bdot(x, Wx[0]) + Bx[0:1] + _bdot(h, Wh[0]) + _bdot(c_prev, Wc[0]))
    f = jax.nn.sigmoid(_bdot(x, Wx[1]) + Bx[1:2] + _bdot(h, Wh[1]) + _bdot(c_prev, Wc[1]))
    t_inner = jax.nn.sigmoid(jnp.dot(d, Wt[0], preferred_element_type=jnp.float32))
    T = jax.nn.sigmoid(_bdot(x, Wx[2]) + Bx[2:3] + t_inner)
    k = jnp.tanh(_bdot(x, Wx[3]) + Bx[3:4] + _bdot(h, Wh[2]))
    c_next = i * T * k + f * c_prev
    o = jax.nn.sigmoid(_bdot(x, Wx[4]) + Bx[4:5]
                       + jnp.dot(d, Wt[1], preferred_element_type=jnp.float32)
                       + _bdot(h, Wh[3]) + _bdot(c_prev, Wc[2]))
    h_next = o * jnp.tanh(c_next)
    return h_next, c_next


def seq_time_lstm_reference(x, t, ft, params):
    (Wx1, Bx1, Wh1, Wc1, Wt1,
     Wx2, Bx2, Wh2, Wc2, Wt2, Lw, Lb) = params
    t = t / jnp.max(t)
    ft = ft / jnp.max(ft)
    h1 = c1 = h2 = c2 = jnp.zeros((1, H), jnp.float32)
    for i in range(INPUT_LENGTH):
        xi, di = x[i:i + 1], t[i:i + 1]
        h1, c1 = _cell_ref(xi, h1, c1, di, Wx1, Bx1, Wh1, Wc1, Wt1)
        h2, c2 = _cell_ref(h1, h2, c2, di, Wx2, Bx2, Wh2, Wc2, Wt2)
    outs = []
    for j in range(OUTPUT_LENGTH):
        dj = ft[j:j + 1]
        h1, c1 = _cell_ref(h2, h1, c1, dj, Wx1, Bx1, Wh1, Wc1, Wt1)
        h2, c2 = _cell_ref(h1, h2, c2, dj, Wx2, Bx2, Wh2, Wc2, Wt2)
        outs.append(_bdot(h2, Lw) + Lb)
    return jnp.concatenate(outs, axis=0)


# ----- deterministic parameter init (PyTorch nn.Linear-style uniform) --------
def init_cell_params(key):
    ks = jax.random.split(key, 5)
    bx = 1.0 / np.sqrt(H)
    bt = 1.0 / np.sqrt(TIME_EMBED_SIZE)
    Wx = jax.random.uniform(ks[0], (5, H, H), jnp.float32, -bx, bx)   # (in,out), transposed
    Bx = jax.random.uniform(ks[1], (5, H), jnp.float32, -bx, bx)
    Wh = jax.random.uniform(ks[2], (4, H, H), jnp.float32, -bx, bx)
    Wc = jax.random.uniform(ks[3], (3, H, H), jnp.float32, -bx, bx)
    Wt = jax.random.uniform(ks[4], (2, TIME_EMBED_SIZE, H), jnp.float32, -bt, bt)
    return (Wx, Bx, Wh, Wc, Wt)


if __name__ == "__main__":
    key = jax.random.PRNGKey(0)
    k_x, k_t, k_ft, k_c1, k_c2, k_lw, k_lb = jax.random.split(key, 7)

    x = jax.random.normal(k_x, (INPUT_LENGTH, H), jnp.float32)
    t = jax.random.uniform(k_t, (INPUT_LENGTH, TIME_EMBED_SIZE), jnp.float32, 0.1, 1.0)
    ft = jax.random.uniform(k_ft, (OUTPUT_LENGTH, TIME_EMBED_SIZE), jnp.float32, 0.1, 1.0)

    p1 = init_cell_params(k_c1)
    p2 = init_cell_params(k_c2)
    bl = 1.0 / np.sqrt(H)
    Lw = jax.random.uniform(k_lw, (H, H), jnp.float32, -bl, bl)       # final Linear, (in,out)
    Lb = jax.random.uniform(k_lb, (1, H), jnp.float32, -bl, bl)
    params = p1 + p2 + (Lw, Lb)

    run = jax.jit(seq_time_lstm)
    out = run(x, t, ft, params)
    out = jax.block_until_ready(out)

    ref = seq_time_lstm_reference(x, t, ft, params)
    np.testing.assert_allclose(np.asarray(out), np.asarray(ref), rtol=2e-2, atol=2e-2)
    assert out.shape == (OUTPUT_LENGTH, H)
    print("KERNEL_OK")
</pallas_src>

<mosaic_0001>
module attributes {stable_mosaic.version = 11 : i64} {
  func.func @seq_time_lstm_kernel(%arg0: memref<8x128xf32, #tpu.memory_space<vmem>>, %arg1: memref<8x4xf32, #tpu.memory_space<vmem>>, %arg2: memref<4x4xf32, #tpu.memory_space<vmem>>, %arg3: memref<128x640xbf16, #tpu.memory_space<vmem>>, %arg4: memref<256x512xbf16, #tpu.memory_space<vmem>>, %arg5: memref<1x640xf32, #tpu.memory_space<vmem>>, %arg6: memref<4x256xf32, #tpu.memory_space<vmem>>, %arg7: memref<128x640xbf16, #tpu.memory_space<vmem>>, %arg8: memref<256x512xbf16, #tpu.memory_space<vmem>>, %arg9: memref<1x640xf32, #tpu.memory_space<vmem>>, %arg10: memref<4x256xf32, #tpu.memory_space<vmem>>, %arg11: memref<128x128xbf16, #tpu.memory_space<vmem>>, %arg12: memref<1x128xf32, #tpu.memory_space<vmem>>, %arg13: memref<4x128xf32, #tpu.memory_space<vmem>>) attributes {dimension_semantics = [], scalar_prefetch = 0 : i64, scratch_operands = 0 : i64, tpu.core_type = #tpu.core_type<tc>} {
    %c0 = arith.constant 0 : index
    %c0_0 = arith.constant 0 : index
    %0 = vector.load %arg1[%c0, %c0_0] : memref<8x4xf32, #tpu.memory_space<vmem>>, vector<8x4xf32>
    %c0_1 = arith.constant 0 : index
    %c0_2 = arith.constant 0 : index
    %1 = vector.load %arg1[%c0_1, %c0_2] : memref<8x4xf32, #tpu.memory_space<vmem>>, vector<8x4xf32>
    %2 = vector.shape_cast %1 : vector<8x4xf32> to vector<1x8x4xf32>
    %cst = arith.constant dense<0xFF800000> : vector<1xf32>
    %3 = vector.multi_reduction <maximumf>, %2, %cst [1, 2] : vector<1x8x4xf32> to vector<1xf32>
    %4 = vector.shape_cast %3 : vector<1xf32> to vector<1x1x1xf32>
    %5 = vector.extract %4[0, 0, 0] : f32 from vector<1x1x1xf32>
    %6 = vector.broadcast %5 : f32 to vector<8x4xf32>
    %7 = arith.divf %0, %6 : vector<8x4xf32>
    %c0_3 = arith.constant 0 : index
    %c0_4 = arith.constant 0 : index
    %8 = vector.load %arg2[%c0_3, %c0_4] : memref<4x4xf32, #tpu.memory_space<vmem>>, vector<4x4xf32>
    %c0_5 = arith.constant 0 : index
    %c0_6 = arith.constant 0 : index
    %9 = vector.load %arg2[%c0_5, %c0_6] : memref<4x4xf32, #tpu.memory_space<vmem>>, vector<4x4xf32>
    %10 = vector.shape_cast %9 : vector<4x4xf32> to vector<1x4x4xf32>
    %cst_7 = arith.constant dense<0xFF800000> : vector<1xf32>
    %11 = vector.multi_reduction <maximumf>, %10, %cst_7 [1, 2] : vector<1x4x4xf32> to vector<1xf32>
    %12 = vector.shape_cast %11 : vector<1xf32> to vector<1x1x1xf32>
    %13 = vector.extract %12[0, 0, 0] : f32 from vector<1x1x1xf32>
    %14 = vector.broadcast %13 : f32 to vector<4x4xf32>
    %15 = arith.divf %8, %14 : vector<4x4xf32>
    %c0_8 = arith.constant 0 : index
    %c0_9 = arith.constant 0 : index
    %16 = vector.load %arg6[%c0_8, %c0_9] : memref<4x256xf32, #tpu.memory_space<vmem>>, vector<4x256xf32>
    %cst_10 = arith.constant dense<0.000000e+00> : vector<8x256xf32>
    %17 = tpu.matmul %7, %16, %cst_10 {dimension_numbers = #tpu.dot_dimension_numbers<[1], [0], [0], [1], [0, 0, 1, 1], [], []>} : vector<8x4xf32>, vector<4x256xf32>, vector<8x256xf32> -> vector<8x256xf32>
    %c0_11 = arith.constant 0 : index
    %c0_12 = arith.constant 0 : index
    %18 = vector.load %arg5[%c0_11, %c0_12] : memref<1x640xf32, #tpu.memory_space<vmem>>, vector<1x384xf32>
    %19 = vector.shape_cast %18 : vector<1x384xf32> to vector<1x384xf32>
    %20 = vector.broadcast %19 : vector<1x384xf32> to vector<8x384xf32>
    %21 = vector.extract_strided_slice %17 {offsets = [0, 0], sizes = [8, 128], strides = [1, 1]} : vector<8x256xf32> to vector<8x128xf32>
    %c0_13 = arith.constant 0 : index
    %c384 = arith.constant 384 : index
    %22 = vector.load %arg5[%c0_13, %c384] : memref<1x640xf32, #tpu.memory_space<vmem>>, vector<1x128xf32>
    %23 = vector.broadcast %22 : vector<1x128xf32> to vector<8x128xf32>
    %24 = arith.addf %21, %23 : vector<8x128xf32>
    %25 = vector.extract_strided_slice %17 {offsets = [0, 128], sizes = [8, 128], strides = [1, 1]} : vector<8x256xf32> to vector<8x128xf32>
    %26 = arith.negf %25 : vector<8x128xf32>
    %27 = math.exp %26 : vector<8x128xf32>
    %cst_14 = arith.constant 1.000000e+00 : f32
    %28 = vector.broadcast %cst_14 : f32 to vector<8x128xf32>
    %29 = arith.addf %28, %27 : vector<8x128xf32>
    %30 = arith.divf %28, %29 : vector<8x128xf32>
    %c0_15 = arith.constant 0 : index
    %c512 = arith.constant 512 : index
    %31 = vector.load %arg5[%c0_15, %c512] : memref<1x640xf32, #tpu.memory_space<vmem>>, vector<1x128xf32>
    %32 = vector.broadcast %31 : vector<1x128xf32> to vector<8x128xf32>
    %33 = arith.addf %30, %32 : vector<8x128xf32>
    %34 = tpu.concatenate %20, %24, %33 in 1 : vector<8x384xf32>, vector<8x128xf32>, vector<8x128xf32> -> vector<8x640xf32>
    %c0_16 = arith.constant 0 : index
    %c0_17 = arith.constant 0 : index
    %35 = vector.load %arg6[%c0_16, %c0_17] : memref<4x256xf32, #tpu.memory_space<vmem>>, vector<4x256xf32>
    %cst_18 = arith.constant dense<0.000000e+00> : vector<4x256xf32>
    %36 = tpu.matmul %15, %35, %cst_18 {dimension_numbers = #tpu.dot_dimension_numbers<[1], [0], [0], [1], [0, 0, 1, 1], [], []>} : vector<4x4xf32>, vector<4x256xf32>, vector<4x256xf32> -> vector<4x256xf32>
    %c0_19 = arith.constant 0 : index
    %c0_20 = arith.constant 0 : index
    %37 = vector.load %arg5[%c0_19, %c0_20] : memref<1x640xf32, #tpu.memory_space<vmem>>, vector<1x384xf32>
    %38 = vector.shape_cast %37 : vector<1x384xf32> to vector<1x384xf32>
    %39 = vector.broadcast %38 : vector<1x384xf32> to vector<4x384xf32>
    %40 = vector.extract_strided_slice %36 {offsets = [0, 0], sizes = [4, 128], strides = [1, 1]} : vector<4x256xf32> to vector<4x128xf32>
    %c0_21 = arith.constant 0 : index
    %c384_22 = arith.constant 384 : index
    %41 = vector.load %arg5[%c0_21, %c384_22] : memref<1x640xf32, #tpu.memory_space<vmem>>, vector<1x128xf32>
    %42 = vector.broadcast %41 : vector<1x128xf32> to vector<4x128xf32>
    %43 = arith.addf %40, %42 : vector<4x128xf32>
    %44 = vector.extract_strided_slice %36 {offsets = [0, 128], sizes = [4, 128], strides = [1, 1]} : vector<4x256xf32> to vector<4x128xf32>
    %45 = arith.negf %44 : vector<4x128xf32>
    %46 = math.exp %45 : vector<4x128xf32>
    %cst_23 = arith.constant 1.000000e+00 : f32
    %47 = vector.broadcast %cst_23 : f32 to vector<4x128xf32>
    %48 = arith.addf %47, %46 : vector<4x128xf32>
    %49 = arith.divf %47, %48 : vector<4x128xf32>
    %c0_24 = arith.constant 0 : index
    %c512_25 = arith.constant 512 : index
    %50 = vector.load %arg5[%c0_24, %c512_25] : memref<1x640xf32, #tpu.memory_space<vmem>>, vector<1x128xf32>
    %51 = vector.broadcast %50 : vector<1x128xf32> to vector<4x128xf32>
    %52 = arith.addf %49, %51 : vector<4x128xf32>
    %53 = tpu.concatenate %39, %43, %52 in 1 : vector<4x384xf32>, vector<4x128xf32>, vector<4x128xf32> -> vector<4x640xf32>
    %c0_26 = arith.constant 0 : index
    %c0_27 = arith.constant 0 : index
    %54 = vector.load %arg10[%c0_26, %c0_27] : memref<4x256xf32, #tpu.memory_space<vmem>>, vector<4x256xf32>
    %cst_28 = arith.constant dense<0.000000e+00> : vector<8x256xf32>
    %55 = tpu.matmul %7, %54, %cst_28 {dimension_numbers = #tpu.dot_dimension_numbers<[1], [0], [0], [1], [0, 0, 1, 1], [], []>} : vector<8x4xf32>, vector<4x256xf32>, vector<8x256xf32> -> vector<8x256xf32>
    %c0_29 = arith.constant 0 : index
    %c0_30 = arith.constant 0 : index
    %56 = vector.load %arg9[%c0_29, %c0_30] : memref<1x640xf32, #tpu.memory_space<vmem>>, vector<1x384xf32>
    %57 = vector.shape_cast %56 : vector<1x384xf32> to vector<1x384xf32>
    %58 = vector.broadcast %57 : vector<1x384xf32> to vector<8x384xf32>
    %59 = vector.extract_strided_slice %55 {offsets = [0, 0], sizes = [8, 128], strides = [1, 1]} : vector<8x256xf32> to vector<8x128xf32>
    %c0_31 = arith.constant 0 : index
    %c384_32 = arith.constant 384 : index
    %60 = vector.load %arg9[%c0_31, %c384_32] : memref<1x640xf32, #tpu.memory_space<vmem>>, vector<1x128xf32>
    %61 = vector.broadcast %60 : vector<1x128xf32> to vector<8x128xf32>
    %62 = arith.addf %59, %61 : vector<8x128xf32>
    %63 = vector.extract_strided_slice %55 {offsets = [0, 128], sizes = [8, 128], strides = [1, 1]} : vector<8x256xf32> to vector<8x128xf32>
    %64 = arith.negf %63 : vector<8x128xf32>
    %65 = math.exp %64 : vector<8x128xf32>
    %cst_33 = arith.constant 1.000000e+00 : f32
    %66 = vector.broadcast %cst_33 : f32 to vector<8x128xf32>
    %67 = arith.addf %66, %65 : vector<8x128xf32>
    %68 = arith.divf %66, %67 : vector<8x128xf32>
    %c0_34 = arith.constant 0 : index
    %c512_35 = arith.constant 512 : index
    %69 = vector.load %arg9[%c0_34, %c512_35] : memref<1x640xf32, #tpu.memory_space<vmem>>, vector<1x128xf32>
    %70 = vector.broadcast %69 : vector<1x128xf32> to vector<8x128xf32>
    %71 = arith.addf %68, %70 : vector<8x128xf32>
    %72 = tpu.concatenate %58, %62, %71 in 1 : vector<8x384xf32>, vector<8x128xf32>, vector<8x128xf32> -> vector<8x640xf32>
    %c0_36 = arith.constant 0 : index
    %c0_37 = arith.constant 0 : index
    %73 = vector.load %arg10[%c0_36, %c0_37] : memref<4x256xf32, #tpu.memory_space<vmem>>, vector<4x256xf32>
    %cst_38 = arith.constant dense<0.000000e+00> : vector<4x256xf32>
    %74 = tpu.matmul %15, %73, %cst_38 {dimension_numbers = #tpu.dot_dimension_numbers<[1], [0], [0], [1], [0, 0, 1, 1], [], []>} : vector<4x4xf32>, vector<4x256xf32>, vector<4x256xf32> -> vector<4x256xf32>
    %c0_39 = arith.constant 0 : index
    %c0_40 = arith.constant 0 : index
    %75 = vector.load %arg9[%c0_39, %c0_40] : memref<1x640xf32, #tpu.memory_space<vmem>>, vector<1x384xf32>
    %76 = vector.shape_cast %75 : vector<1x384xf32> to vector<1x384xf32>
    %77 = vector.broadcast %76 : vector<1x384xf32> to vector<4x384xf32>
    %78 = vector.extract_strided_slice %74 {offsets = [0, 0], sizes = [4, 128], strides = [1, 1]} : vector<4x256xf32> to vector<4x128xf32>
    %c0_41 = arith.constant 0 : index
    %c384_42 = arith.constant 384 : index
    %79 = vector.load %arg9[%c0_41, %c384_42] : memref<1x640xf32, #tpu.memory_space<vmem>>, vector<1x128xf32>
    %80 = vector.broadcast %79 : vector<1x128xf32> to vector<4x128xf32>
    %81 = arith.addf %78, %80 : vector<4x128xf32>
    %82 = vector.extract_strided_slice %74 {offsets = [0, 128], sizes = [4, 128], strides = [1, 1]} : vector<4x256xf32> to vector<4x128xf32>
    %83 = arith.negf %82 : vector<4x128xf32>
    %84 = math.exp %83 : vector<4x128xf32>
    %cst_43 = arith.constant 1.000000e+00 : f32
    %85 = vector.broadcast %cst_43 : f32 to vector<4x128xf32>
    %86 = arith.addf %85, %84 : vector<4x128xf32>
    %87 = arith.divf %85, %86 : vector<4x128xf32>
    %c0_44 = arith.constant 0 : index
    %c512_45 = arith.constant 512 : index
    %88 = vector.load %arg9[%c0_44, %c512_45] : memref<1x640xf32, #tpu.memory_space<vmem>>, vector<1x128xf32>
    %89 = vector.broadcast %88 : vector<1x128xf32> to vector<4x128xf32>
    %90 = arith.addf %87, %89 : vector<4x128xf32>
    %91 = tpu.concatenate %77, %81, %90 in 1 : vector<4x384xf32>, vector<4x128xf32>, vector<4x128xf32> -> vector<4x640xf32>
    %c0_46 = arith.constant 0 : index
    %c0_47 = arith.constant 0 : index
    %92 = vector.load %arg3[%c0_46, %c0_47] : memref<128x640xbf16, #tpu.memory_space<vmem>>, vector<128x640xbf16>
    %c0_48 = arith.constant 0 : index
    %c0_49 = arith.constant 0 : index
    %93 = vector.load %arg4[%c0_48, %c0_49] : memref<256x512xbf16, #tpu.memory_space<vmem>>, vector<256x512xbf16>
    %c0_50 = arith.constant 0 : index
    %c0_51 = arith.constant 0 : index
    %94 = vector.load %arg7[%c0_50, %c0_51] : memref<128x640xbf16, #tpu.memory_space<vmem>>, vector<128x640xbf16>
    %c0_52 = arith.constant 0 : index
    %c0_53 = arith.constant 0 : index
    %95 = vector.load %arg8[%c0_52, %c0_53] : memref<256x512xbf16, #tpu.memory_space<vmem>>, vector<256x512xbf16>
    %c0_54 = arith.constant 0 : index
    %c0_55 = arith.constant 0 : index
    %96 = vector.load %arg0[%c0_54, %c0_55] : memref<8x128xf32, #tpu.memory_space<vmem>>, vector<8x128xf32>
    %97 = arith.truncf %96 : vector<8x128xf32> to vector<8x128xbf16>
    %cst_56 = arith.constant dense<0.000000e+00> : vector<8x640xf32>
    %98 = tpu.matmul %97, %92, %cst_56 {dimension_numbers = #tpu.dot_dimension_numbers<[1], [0], [0], [1], [0, 0, 1, 1], [], []>} : vector<8x128xbf16>, vector<128x640xbf16>, vector<8x640xf32> -> vector<8x640xf32>
    %99 = arith.addf %98, %34 : vector<8x640xf32>
    %cst_57 = arith.constant 0.000000e+00 : f32
    %100 = vector.broadcast %cst_57 : f32 to vector<1x128xf32>
    %cst_58 = arith.constant 0.000000e+00 : f32
    %101 = vector.broadcast %cst_58 : f32 to vector<1x128xf32>
    %cst_59 = arith.constant 0.000000e+00 : bf16
    %102 = vector.broadcast %cst_59 : bf16 to vector<1x256xbf16>
    %cst_60 = arith.constant 0.000000e+00 : bf16
    %103 = vector.broadcast %cst_60 : bf16 to vector<1x256xbf16>
    %cst_61 = arith.constant dense<0.000000e+00> : vector<1x512xf32>
    %104 = tpu.matmul %102, %93, %cst_61 {dimension_numbers = #tpu.dot_dimension_numbers<[1], [0], [0], [1], [0, 0, 1, 1], [], []>} : vector<1x256xbf16>, vector<256x512xbf16>, vector<1x512xf32> -> vector<1x512xf32>
    %105 = vector.extract_strided_slice %99 {offsets = [0, 0], sizes = [1, 640], strides = [1, 1]} : vector<8x640xf32> to vector<1x640xf32>
    %106 = vector.extract_strided_slice %105 {offsets = [0, 0], sizes = [1, 512], strides = [1, 1]} : vector<1x640xf32> to vector<1x512xf32>
    %107 = arith.addf %106, %104 : vector<1x512xf32>
    %108 = vector.extract_strided_slice %105 {offsets = [0, 512], sizes = [1, 128], strides = [1, 1]} : vector<1x640xf32> to vector<1x128xf32>
    %109 = vector.extract_strided_slice %107 {offsets = [0, 0], sizes = [1, 256], strides = [1, 1]} : vector<1x512xf32> to vector<1x256xf32>
    %110 = arith.negf %109 : vector<1x256xf32>
    %111 = math.exp %110 : vector<1x256xf32>
    %cst_62 = arith.constant 1.000000e+00 : f32
    %112 = vector.broadcast %cst_62 : f32 to vector<1x256xf32>
    %113 = arith.addf %112, %111 : vector<1x256xf32>
    %114 = arith.divf %112, %113 : vector<1x256xf32>
    %115 = vector.extract_strided_slice %114 {offsets = [0, 0], sizes = [1, 128], strides = [1, 1]} : vector<1x256xf32> to vector<1x128xf32>
    %116 = vector.extract_strided_slice %114 {offsets = [0, 128], sizes = [1, 128], strides = [1, 1]} : vector<1x256xf32> to vector<1x128xf32>
    %117 = vector.extract_strided_slice %107 {offsets = [0, 256], sizes = [1, 128], strides = [1, 1]} : vector<1x512xf32> to vector<1x128xf32>
    %118 = math.tanh %117 : vector<1x128xf32>
    %119 = vector.extract_strided_slice %107 {offsets = [0, 384], sizes = [1, 128], strides = [1, 1]} : vector<1x512xf32> to vector<1x128xf32>
    %120 = arith.negf %119 : vector<1x128xf32>
    %121 = math.exp %120 : vector<1x128xf32>
    %cst_63 = arith.constant 1.000000e+00 : f32
    %122 = vector.broadcast %cst_63 : f32 to vector<1x128xf32>
    %123 = arith.addf %122, %121 : vector<1x128xf32>
    %124 = arith.divf %122, %123 : vector<1x128xf32>
    %125 = arith.negf %108 : vector<1x128xf32>
    %126 = math.exp %125 : vector<1x128xf32>
    %cst_64 = arith.constant 1.000000e+00 : f32
    %127 = vector.broadcast %cst_64 : f32 to vector<1x128xf32>
    %128 = arith.addf %127, %126 : vector<1x128xf32>
    %129 = arith.divf %127, %128 : vector<1x128xf32>
    %130 = arith.mulf %115, %129 : vector<1x128xf32>
    %131 = arith.mulf %130, %118 : vector<1x128xf32>
    %132 = arith.mulf %116, %100 : vector<1x128xf32>
    %133 = arith.addf %131, %132 : vector<1x128xf32>
    %134 = math.tanh %133 : vector<1x128xf32>
    %135 = arith.mulf %124, %134 : vector<1x128xf32>
    %136 = arith.truncf %135 : vector<1x128xf32> to vector<1x128xbf16>
    %137 = arith.truncf %133 : vector<1x128xf32> to vector<1x128xbf16>
    %138 = tpu.concatenate %136, %137 in 1 : vector<1x128xbf16>, vector<1x128xbf16> -> vector<1x256xbf16>
    %cst_65 = arith.constant dense<0.000000e+00> : vector<1x512xf32>
    %139 = tpu.matmul %103, %95, %cst_65 {dimension_numbers = #tpu.dot_dimension_numbers<[1], [0], [0], [1], [0, 0, 1, 1], [], []>} : vector<1x256xbf16>, vector<256x512xbf16>, vector<1x512xf32> -> vector<1x512xf32>
    %cst_66 = arith.constant dense<0.000000e+00> : vector<1x640xf32>
    %140 = tpu.matmul %136, %94, %cst_66 {dimension_numbers = #tpu.dot_dimension_numbers<[1], [0], [0], [1], [0, 0, 1, 1], [], []>} : vector<1x128xbf16>, vector<128x640xbf16>, vector<1x640xf32> -> vector<1x640xf32>
    %141 = vector.extract_strided_slice %72 {offsets = [0, 0], sizes = [1, 640], strides = [1, 1]} : vector<8x640xf32> to vector<1x640xf32>
    %142 = vector.extract_strided_slice %140 {offsets = [0, 0], sizes = [1, 512], strides = [1, 1]} : vector<1x640xf32> to vector<1x512xf32>
    %143 = arith.addf %142, %139 : vector<1x512xf32>
    %144 = vector.extract_strided_slice %141 {offsets = [0, 0], sizes = [1, 512], strides = [1, 1]} : vector<1x640xf32> to vector<1x512xf32>
    %145 = arith.addf %143, %144 : vector<1x512xf32>
    %146 = vector.extract_strided_slice %140 {offsets = [0, 512], sizes = [1, 128], strides = [1, 1]} : vector<1x640xf32> to vector<1x128xf32>
    %147 = vector.extract_strided_slice %141 {offsets = [0, 512], sizes = [1, 128], strides = [1, 1]} : vector<1x640xf32> to vector<1x128xf32>
    %148 = arith.addf %146, %147 : vector<1x128xf32>
    %149 = vector.extract_strided_slice %145 {offsets = [0, 0], sizes = [1, 256], strides = [1, 1]} : vector<1x512xf32> to vector<1x256xf32>
    %150 = arith.negf %149 : vector<1x256xf32>
    %151 = math.exp %150 : vector<1x256xf32>
    %cst_67 = arith.constant 1.000000e+00 : f32
    %152 = vector.broadcast %cst_67 : f32 to vector<1x256xf32>
    %153 = arith.addf %152, %151 : vector<1x256xf32>
    %154 = arith.divf %152, %153 : vector<1x256xf32>
    %155 = vector.extract_strided_slice %154 {offsets = [0, 0], sizes = [1, 128], strides = [1, 1]} : vector<1x256xf32> to vector<1x128xf32>
    %156 = vector.extract_strided_slice %154 {offsets = [0, 128], sizes = [1, 128], strides = [1, 1]} : vector<1x256xf32> to vector<1x128xf32>
    %157 = vector.extract_strided_slice %145 {offsets = [0, 256], sizes = [1, 128], strides = [1, 1]} : vector<1x512xf32> to vector<1x128xf32>
    %158 = math.tanh %157 : vector<1x128xf32>
    %159 = vector.extract_strided_slice %145 {offsets = [0, 384], sizes = [1, 128], strides = [1, 1]} : vector<1x512xf32> to vector<1x128xf32>
    %160 = arith.negf %159 : vector<1x128xf32>
    %161 = math.exp %160 : vector<1x128xf32>
    %cst_68 = arith.constant 1.000000e+00 : f32
    %162 = vector.broadcast %cst_68 : f32 to vector<1x128xf32>
    %163 = arith.addf %162, %161 : vector<1x128xf32>
    %164 = arith.divf %162, %163 : vector<1x128xf32>
    %165 = arith.negf %148 : vector<1x128xf32>
    %166 = math.exp %165 : vector<1x128xf32>
    %cst_69 = arith.constant 1.000000e+00 : f32
    %167 = vector.broadcast %cst_69 : f32 to vector<1x128xf32>
    %168 = arith.addf %167, %166 : vector<1x128xf32>
    %169 = arith.divf %167, %168 : vector<1x128xf32>
    %170 = arith.mulf %155, %169 : vector<1x128xf32>
    %171 = arith.mulf %170, %158 : vector<1x128xf32>
    %172 = arith.mulf %156, %101 : vector<1x128xf32>
    %173 = arith.addf %171, %172 : vector<1x128xf32>
    %174 = math.tanh %173 : vector<1x128xf32>
    %175 = arith.mulf %164, %174 : vector<1x128xf32>
    %176 = arith.truncf %175 : vector<1x128xf32> to vector<1x128xbf16>
    %177 = arith.truncf %173 : vector<1x128xf32> to vector<1x128xbf16>
    %178 = tpu.concatenate %176, %177 in 1 : vector<1x128xbf16>, vector<1x128xbf16> -> vector<1x256xbf16>
    %cst_70 = arith.constant dense<0.000000e+00> : vector<1x512xf32>
    %179 = tpu.matmul %138, %93, %cst_70 {dimension_numbers = #tpu.dot_dimension_numbers<[1], [0], [0], [1], [0, 0, 1, 1], [], []>} : vector<1x256xbf16>, vector<256x512xbf16>, vector<1x512xf32> -> vector<1x512xf32>
    %180 = vector.extract_strided_slice %99 {offsets = [1, 0], sizes = [1, 640], strides = [1, 1]} : vector<8x640xf32> to vector<1x640xf32>
    %181 = vector.extract_strided_slice %180 {offsets = [0, 0], sizes = [1, 512], strides = [1, 1]} : vector<1x640xf32> to vector<1x512xf32>
    %182 = arith.addf %181, %179 : vector<1x512xf32>
    %183 = vector.extract_strided_slice %180 {offsets = [0, 512], sizes = [1, 128], strides = [1, 1]} : vector<1x640xf32> to vector<1x128xf32>
    %184 = vector.extract_strided_slice %182 {offsets = [0, 0], sizes = [1, 256], strides = [1, 1]} : vector<1x512xf32> to vector<1x256xf32>
    %185 = arith.negf %184 : vector<1x256xf32>
    %186 = math.exp %185 : vector<1x256xf32>
    %cst_71 = arith.constant 1.000000e+00 : f32
    %187 = vector.broadcast %cst_71 : f32 to vector<1x256xf32>
    %188 = arith.addf %187, %186 : vector<1x256xf32>
    %189 = arith.divf %187, %188 : vector<1x256xf32>
    %190 = vector.extract_strided_slice %189 {offsets = [0, 0], sizes = [1, 128], strides = [1, 1]} : vector<1x256xf32> to vector<1x128xf32>
    %191 = vector.extract_strided_slice %189 {offsets = [0, 128], sizes = [1, 128], strides = [1, 1]} : vector<1x256xf32> to vector<1x128xf32>
    %192 = vector.extract_strided_slice %182 {offsets = [0, 256], sizes = [1, 128], strides = [1, 1]} : vector<1x512xf32> to vector<1x128xf32>
    %193 = math.tanh %192 : vector<1x128xf32>
    %194 = vector.extract_strided_slice %182 {offsets = [0, 384], sizes = [1, 128], strides = [1, 1]} : vector<1x512xf32> to vector<1x128xf32>
    %195 = arith.negf %194 : vector<1x128xf32>
    %196 = math.exp %195 : vector<1x128xf32>
    %cst_72 = arith.constant 1.000000e+00 : f32
    %197 = vector.broadcast %cst_72 : f32 to vector<1x128xf32>
    %198 = arith.addf %197, %196 : vector<1x128xf32>
    %199 = arith.divf %197, %198 : vector<1x128xf32>
    %200 = arith.negf %183 : vector<1x128xf32>
    %201 = math.exp %200 : vector<1x128xf32>
    %cst_73 = arith.constant 1.000000e+00 : f32
    %202 = vector.broadcast %cst_73 : f32 to vector<1x128xf32>
    %203 = arith.addf %202, %201 : vector<1x128xf32>
    %204 = arith.divf %202, %203 : vector<1x128xf32>
    %205 = arith.mulf %190, %204 : vector<1x128xf32>
    %206 = arith.mulf %205, %193 : vector<1x128xf32>
    %207 = arith.mulf %191, %133 : vector<1x128xf32>
    %208 = arith.addf %206, %207 : vector<1x128xf32>
    %209 = math.tanh %208 : vector<1x128xf32>
    %210 = arith.mulf %199, %209 : vector<1x128xf32>
    %211 = arith.truncf %210 : vector<1x128xf32> to vector<1x128xbf16>
    %212 = arith.truncf %208 : vector<1x128xf32> to vector<1x128xbf16>
    %213 = tpu.concatenate %211, %212 in 1 : vector<1x128xbf16>, vector<1x128xbf16> -> vector<1x256xbf16>
    %cst_74 = arith.constant dense<0.000000e+00> : vector<1x512xf32>
    %214 = tpu.matmul %178, %95, %cst_74 {dimension_numbers = #tpu.dot_dimension_numbers<[1], [0], [0], [1], [0, 0, 1, 1], [], []>} : vector<1x256xbf16>, vector<256x512xbf16>, vector<1x512xf32> -> vector<1x512xf32>
    %cst_75 = arith.constant dense<0.000000e+00> : vector<1x640xf32>
    %215 = tpu.matmul %211, %94, %cst_75 {dimension_numbers = #tpu.dot_dimension_numbers<[1], [0], [0], [1], [0, 0, 1, 1], [], []>} : vector<1x128xbf16>, vector<128x640xbf16>, vector<1x640xf32> -> vector<1x640xf32>
    %216 = vector.extract_strided_slice %72 {offsets = [1, 0], sizes = [1, 640], strides = [1, 1]} : vector<8x640xf32> to vector<1x640xf32>
    %217 = vector.extract_strided_slice %215 {offsets = [0, 0], sizes = [1, 512], strides = [1, 1]} : vector<1x640xf32> to vector<1x512xf32>
    %218 = arith.addf %217, %214 : vector<1x512xf32>
    %219 = vector.extract_strided_slice %216 {offsets = [0, 0], sizes = [1, 512], strides = [1, 1]} : vector<1x640xf32> to vector<1x512xf32>
    %220 = arith.addf %218, %219 : vector<1x512xf32>
    %221 = vector.extract_strided_slice %215 {offsets = [0, 512], sizes = [1, 128], strides = [1, 1]} : vector<1x640xf32> to vector<1x128xf32>
    %222 = vector.extract_strided_slice %216 {offsets = [0, 512], sizes = [1, 128], strides = [1, 1]} : vector<1x640xf32> to vector<1x128xf32>
    %223 = arith.addf %221, %222 : vector<1x128xf32>
    %224 = vector.extract_strided_slice %220 {offsets = [0, 0], sizes = [1, 256], strides = [1, 1]} : vector<1x512xf32> to vector<1x256xf32>
    %225 = arith.negf %224 : vector<1x256xf32>
    %226 = math.exp %225 : vector<1x256xf32>
    %cst_76 = arith.constant 1.000000e+00 : f32
    %227 = vector.broadcast %cst_76 : f32 to vector<1x256xf32>
    %228 = arith.addf %227, %226 : vector<1x256xf32>
    %229 = arith.divf %227, %228 : vector<1x256xf32>
    %230 = vector.extract_strided_slice %229 {offsets = [0, 0], sizes = [1, 128], strides = [1, 1]} : vector<1x256xf32> to vector<1x128xf32>
    %231 = vector.extract_strided_slice %229 {offsets = [0, 128], sizes = [1, 128], strides = [1, 1]} : vector<1x256xf32> to vector<1x128xf32>
    %232 = vector.extract_strided_slice %220 {offsets = [0, 256], sizes = [1, 128], strides = [1, 1]} : vector<1x512xf32> to vector<1x128xf32>
    %233 = math.tanh %232 : vector<1x128xf32>
    %234 = vector.extract_strided_slice %220 {offsets = [0, 384], sizes = [1, 128], strides = [1, 1]} : vector<1x512xf32> to vector<1x128xf32>
    %235 = arith.negf %234 : vector<1x128xf32>
    %236 = math.exp %235 : vector<1x128xf32>
    %cst_77 = arith.constant 1.000000e+00 : f32
    %237 = vector.broadcast %cst_77 : f32 to vector<1x128xf32>
    %238 = arith.addf %237, %236 : vector<1x128xf32>
    %239 = arith.divf %237, %238 : vector<1x128xf32>
    %240 = arith.negf %223 : vector<1x128xf32>
    %241 = math.exp %240 : vector<1x128xf32>
    %cst_78 = arith.constant 1.000000e+00 : f32
    %242 = vector.broadcast %cst_78 : f32 to vector<1x128xf32>
    %243 = arith.addf %242, %241 : vector<1x128xf32>
    %244 = arith.divf %242, %243 : vector<1x128xf32>
    %245 = arith.mulf %230, %244 : vector<1x128xf32>
    %246 = arith.mulf %245, %233 : vector<1x128xf32>
    %247 = arith.mulf %231, %173 : vector<1x128xf32>
    %248 = arith.addf %246, %247 : vector<1x128xf32>
    %249 = math.tanh %248 : vector<1x128xf32>
    %250 = arith.mulf %239, %249 : vector<1x128xf32>
    %251 = arith.truncf %250 : vector<1x128xf32> to vector<1x128xbf16>
    %252 = arith.truncf %248 : vector<1x128xf32> to vector<1x128xbf16>
    %253 = tpu.concatenate %251, %252 in 1 : vector<1x128xbf16>, vector<1x128xbf16> -> vector<1x256xbf16>
    %cst_79 = arith.constant dense<0.000000e+00> : vector<1x512xf32>
    %254 = tpu.matmul %213, %93, %cst_79 {dimension_numbers = #tpu.dot_dimension_numbers<[1], [0], [0], [1], [0, 0, 1, 1], [], []>} : vector<1x256xbf16>, vector<256x512xbf16>, vector<1x512xf32> -> vector<1x512xf32>
    %255 = vector.extract_strided_slice %99 {offsets = [2, 0], sizes = [1, 640], strides = [1, 1]} : vector<8x640xf32> to vector<1x640xf32>
    %256 = vector.extract_strided_slice %255 {offsets = [0, 0], sizes = [1, 512], strides = [1, 1]} : vector<1x640xf32> to vector<1x512xf32>
    %257 = arith.addf %256, %254 : vector<1x512xf32>
    %258 = vector.extract_strided_slice %255 {offsets = [0, 512], sizes = [1, 128], strides = [1, 1]} : vector<1x640xf32> to vector<1x128xf32>
    %259 = vector.extract_strided_slice %257 {offsets = [0, 0], sizes = [1, 256], strides = [1, 1]} : vector<1x512xf32> to vector<1x256xf32>
    %260 = arith.negf %259 : vector<1x256xf32>
    %261 = math.exp %260 : vector<1x256xf32>
    %cst_80 = arith.constant 1.000000e+00 : f32
    %262 = vector.broadcast %cst_80 : f32 to vector<1x256xf32>
    %263 = arith.addf %262, %261 : vector<1x256xf32>
    %264 = arith.divf %262, %263 : vector<1x256xf32>
    %265 = vector.extract_strided_slice %264 {offsets = [0, 0], sizes = [1, 128], strides = [1, 1]} : vector<1x256xf32> to vector<1x128xf32>
    %266 = vector.extract_strided_slice %264 {offsets = [0, 128], sizes = [1, 128], strides = [1, 1]} : vector<1x256xf32> to vector<1x128xf32>
    %267 = vector.extract_strided_slice %257 {offsets = [0, 256], sizes = [1, 128], strides = [1, 1]} : vector<1x512xf32> to vector<1x128xf32>
    %268 = math.tanh %267 : vector<1x128xf32>
    %269 = vector.extract_strided_slice %257 {offsets = [0, 384], sizes = [1, 128], strides = [1, 1]} : vector<1x512xf32> to vector<1x128xf32>
    %270 = arith.negf %269 : vector<1x128xf32>
    %271 = math.exp %270 : vector<1x128xf32>
    %cst_81 = arith.constant 1.000000e+00 : f32
    %272 = vector.broadcast %cst_81 : f32 to vector<1x128xf32>
    %273 = arith.addf %272, %271 : vector<1x128xf32>
    %274 = arith.divf %272, %273 : vector<1x128xf32>
    %275 = arith.negf %258 : vector<1x128xf32>
    %276 = math.exp %275 : vector<1x128xf32>
    %cst_82 = arith.constant 1.000000e+00 : f32
    %277 = vector.broadcast %cst_82 : f32 to vector<1x128xf32>
    %278 = arith.addf %277, %276 : vector<1x128xf32>
    %279 = arith.divf %277, %278 : vector<1x128xf32>
    %280 = arith.mulf %265, %279 : vector<1x128xf32>
    %281 = arith.mulf %280, %268 : vector<1x128xf32>
    %282 = arith.mulf %266, %208 : vector<1x128xf32>
    %283 = arith.addf %281, %282 : vector<1x128xf32>
    %284 = math.tanh %283 : vector<1x128xf32>
    %285 = arith.mulf %274, %284 : vector<1x128xf32>
    %286 = arith.truncf %285 : vector<1x128xf32> to vector<1x128xbf16>
    %287 = arith.truncf %283 : vector<1x128xf32> to vector<1x128xbf16>
    %288 = tpu.concatenate %286, %287 in 1 : vector<1x128xbf16>, vector<1x128xbf16> -> vector<1x256xbf16>
    %cst_83 = arith.constant dense<0.000000e+00> : vector<1x512xf32>
    %289 = tpu.matmul %253, %95, %cst_83 {dimension_numbers = #tpu.dot_dimension_numbers<[1], [0], [0], [1], [0, 0, 1, 1], [], []>} : vector<1x256xbf16>, vector<256x512xbf16>, vector<1x512xf32> -> vector<1x512xf32>
    %cst_84 = arith.constant dense<0.000000e+00> : vector<1x640xf32>
    %290 = tpu.matmul %286, %94, %cst_84 {dimension_numbers = #tpu.dot_dimension_numbers<[1], [0], [0], [1], [0, 0, 1, 1], [], []>} : vector<1x128xbf16>, vector<128x640xbf16>, vector<1x640xf32> -> vector<1x640xf32>
    %291 = vector.extract_strided_slice %72 {offsets = [2, 0], sizes = [1, 640], strides = [1, 1]} : vector<8x640xf32> to vector<1x640xf32>
    %292 = vector.extract_strided_slice %290 {offsets = [0, 0], sizes = [1, 512], strides = [1, 1]} : vector<1x640xf32> to vector<1x512xf32>
    %293 = arith.addf %292, %289 : vector<1x512xf32>
    %294 = vector.extract_strided_slice %291 {offsets = [0, 0], sizes = [1, 512], strides = [1, 1]} : vector<1x640xf32> to vector<1x512xf32>
    %295 = arith.addf %293, %294 : vector<1x512xf32>
    %296 = vector.extract_strided_slice %290 {offsets = [0, 512], sizes = [1, 128], strides = [1, 1]} : vector<1x640xf32> to vector<1x128xf32>
    %297 = vector.extract_strided_slice %291 {offsets = [0, 512], sizes = [1, 128], strides = [1, 1]} : vector<1x640xf32> to vector<1x128xf32>
    %298 = arith.addf %296, %297 : vector<1x128xf32>
    %299 = vector.extract_strided_slice %295 {offsets = [0, 0], sizes = [1, 256], strides = [1, 1]} : vector<1x512xf32> to vector<1x256xf32>
    %300 = arith.negf %299 : vector<1x256xf32>
    %301 = math.exp %300 : vector<1x256xf32>
    %cst_85 = arith.constant 1.000000e+00 : f32
    %302 = vector.broadcast %cst_85 : f32 to vector<1x256xf32>
    %303 = arith.addf %302, %301 : vector<1x256xf32>
    %304 = arith.divf %302, %303 : vector<1x256xf32>
    %305 = vector.extract_strided_slice %304 {offsets = [0, 0], sizes = [1, 128], strides = [1, 1]} : vector<1x256xf32> to vector<1x128xf32>
    %306 = vector.extract_strided_slice %304 {offsets = [0, 128], sizes = [1, 128], strides = [1, 1]} : vector<1x256xf32> to vector<1x128xf32>
    %307 = vector.extract_strided_slice %295 {offsets = [0, 256], sizes = [1, 128], strides = [1, 1]} : vector<1x512xf32> to vector<1x128xf32>
    %308 = math.tanh %307 : vector<1x128xf32>
    %309 = vector.extract_strided_slice %295 {offsets = [0, 384], sizes = [1, 128], strides = [1, 1]} : vector<1x512xf32> to vector<1x128xf32>
    %310 = arith.negf %309 : vector<1x128xf32>
    %311 = math.exp %310 : vector<1x128xf32>
    %cst_86 = arith.constant 1.000000e+00 : f32
    %312 = vector.broadcast %cst_86 : f32 to vector<1x128xf32>
    %313 = arith.addf %312, %311 : vector<1x128xf32>
    %314 = arith.divf %312, %313 : vector<1x128xf32>
    %315 = arith.negf %298 : vector<1x128xf32>
    %316 = math.exp %315 : vector<1x128xf32>
    %cst_87 = arith.constant 1.000000e+00 : f32
    %317 = vector.broadcast %cst_87 : f32 to vector<1x128xf32>
    %318 = arith.addf %317, %316 : vector<1x128xf32>
    %319 = arith.divf %317, %318 : vector<1x128xf32>
    %320 = arith.mulf %305, %319 : vector<1x128xf32>
    %321 = arith.mulf %320, %308 : vector<1x128xf32>
    %322 = arith.mulf %306, %248 : vector<1x128xf32>
    %323 = arith.addf %321, %322 : vector<1x128xf32>
    %324 = math.tanh %323 : vector<1x128xf32>
    %325 = arith.mulf %314, %324 : vector<1x128xf32>
    %326 = arith.truncf %325 : vector<1x128xf32> to vector<1x128xbf16>
    %327 = arith.truncf %323 : vector<1x128xf32> to vector<1x128xbf16>
    %328 = tpu.concatenate %326, %327 in 1 : vector<1x128xbf16>, vector<1x128xbf16> -> vector<1x256xbf16>
    %cst_88 = arith.constant dense<0.000000e+00> : vector<1x512xf32>
    %329 = tpu.matmul %288, %93, %cst_88 {dimension_numbers = #tpu.dot_dimension_numbers<[1], [0], [0], [1], [0, 0, 1, 1], [], []>} : vector<1x256xbf16>, vector<256x512xbf16>, vector<1x512xf32> -> vector<1x512xf32>
    %330 = vector.extract_strided_slice %99 {offsets = [3, 0], sizes = [1, 640], strides = [1, 1]} : vector<8x640xf32> to vector<1x640xf32>
    %331 = vector.extract_strided_slice %330 {offsets = [0, 0], sizes = [1, 512], strides = [1, 1]} : vector<1x640xf32> to vector<1x512xf32>
    %332 = arith.addf %331, %329 : vector<1x512xf32>
    %333 = vector.extract_strided_slice %330 {offsets = [0, 512], sizes = [1, 128], strides = [1, 1]} : vector<1x640xf32> to vector<1x128xf32>
    %334 = vector.extract_strided_slice %332 {offsets = [0, 0], sizes = [1, 256], strides = [1, 1]} : vector<1x512xf32> to vector<1x256xf32>
    %335 = arith.negf %334 : vector<1x256xf32>
    %336 = math.exp %335 : vector<1x256xf32>
    %cst_89 = arith.constant 1.000000e+00 : f32
    %337 = vector.broadcast %cst_89 : f32 to vector<1x256xf32>
    %338 = arith.addf %337, %336 : vector<1x256xf32>
    %339 = arith.divf %337, %338 : vector<1x256xf32>
    %340 = vector.extract_strided_slice %339 {offsets = [0, 0], sizes = [1, 128], strides = [1, 1]} : vector<1x256xf32> to vector<1x128xf32>
    %341 = vector.extract_strided_slice %339 {offsets = [0, 128], sizes = [1, 128], strides = [1, 1]} : vector<1x256xf32> to vector<1x128xf32>
    %342 = vector.extract_strided_slice %332 {offsets = [0, 256], sizes = [1, 128], strides = [1, 1]} : vector<1x512xf32> to vector<1x128xf32>
    %343 = math.tanh %342 : vector<1x128xf32>
    %344 = vector.extract_strided_slice %332 {offsets = [0, 384], sizes = [1, 128], strides = [1, 1]} : vector<1x512xf32> to vector<1x128xf32>
    %345 = arith.negf %344 : vector<1x128xf32>
    %346 = math.exp %345 : vector<1x128xf32>
    %cst_90 = arith.constant 1.000000e+00 : f32
    %347 = vector.broadcast %cst_90 : f32 to vector<1x128xf32>
    %348 = arith.addf %347, %346 : vector<1x128xf32>
    %349 = arith.divf %347, %348 : vector<1x128xf32>
    %350 = arith.negf %333 : vector<1x128xf32>
    %351 = math.exp %350 : vector<1x128xf32>
    %cst_91 = arith.constant 1.000000e+00 : f32
    %352 = vector.broadcast %cst_91 : f32 to vector<1x128xf32>
    %353 = arith.addf %352, %351 : vector<1x128xf32>
    %354 = arith.divf %352, %353 : vector<1x128xf32>
    %355 = arith.mulf %340, %354 : vector<1x128xf32>
    %356 = arith.mulf %355, %343 : vector<1x128xf32>
    %357 = arith.mulf %341, %283 : vector<1x128xf32>
    %358 = arith.addf %356, %357 : vector<1x128xf32>
    %359 = math.tanh %358 : vector<1x128xf32>
    %360 = arith.mulf %349, %359 : vector<1x128xf32>
    %361 = arith.truncf %360 : vector<1x128xf32> to vector<1x128xbf16>
    %362 = arith.truncf %358 : vector<1x128xf32> to vector<1x128xbf16>
    %363 = tpu.concatenate %361, %362 in 1 : vector<1x128xbf16>, vector<1x128xbf16> -> vector<1x256xbf16>
    %cst_92 = arith.constant dense<0.000000e+00> : vector<1x512xf32>
    %364 = tpu.matmul %328, %95, %cst_92 {dimension_numbers = #tpu.dot_dimension_numbers<[1], [0], [0], [1], [0, 0, 1, 1], [], []>} : vector<1x256xbf16>, vector<256x512xbf16>, vector<1x512xf32> -> vector<1x512xf32>
    %cst_93 = arith.constant dense<0.000000e+00> : vector<1x640xf32>
    %365 = tpu.matmul %361, %94, %cst_93 {dimension_numbers = #tpu.dot_dimension_numbers<[1], [0], [0], [1], [0, 0, 1, 1], [], []>} : vector<1x128xbf16>, vector<128x640xbf16>, vector<1x640xf32> -> vector<1x640xf32>
    %366 = vector.extract_strided_slice %72 {offsets = [3, 0], sizes = [1, 640], strides = [1, 1]} : vector<8x640xf32> to vector<1x640xf32>
    %367 = vector.extract_strided_slice %365 {offsets = [0, 0], sizes = [1, 512], strides = [1, 1]} : vector<1x640xf32> to vector<1x512xf32>
    %368 = arith.addf %367, %364 : vector<1x512xf32>
    %369 = vector.extract_strided_slice %366 {offsets = [0, 0], sizes = [1, 512], strides = [1, 1]} : vector<1x640xf32> to vector<1x512xf32>
    %370 = arith.addf %368, %369 : vector<1x512xf32>
    %371 = vector.extract_strided_slice %365 {offsets = [0, 512], sizes = [1, 128], strides = [1, 1]} : vector<1x640xf32> to vector<1x128xf32>
    %372 = vector.extract_strided_slice %366 {offsets = [0, 512], sizes = [1, 128], strides = [1, 1]} : vector<1x640xf32> to vector<1x128xf32>
    %373 = arith.addf %371, %372 : vector<1x128xf32>
    %374 = vector.extract_strided_slice %370 {offsets = [0, 0], sizes = [1, 256], strides = [1, 1]} : vector<1x512xf32> to vector<1x256xf32>
    %375 = arith.negf %374 : vector<1x256xf32>
    %376 = math.exp %375 : vector<1x256xf32>
    %cst_94 = arith.constant 1.000000e+00 : f32
    %377 = vector.broadcast %cst_94 : f32 to vector<1x256xf32>
    %378 = arith.addf %377, %376 : vector<1x256xf32>
    %379 = arith.divf %377, %378 : vector<1x256xf32>
    %380 = vector.extract_strided_slice %379 {offsets = [0, 0], sizes = [1, 128], strides = [1, 1]} : vector<1x256xf32> to vector<1x128xf32>
    %381 = vector.extract_strided_slice %379 {offsets = [0, 128], sizes = [1, 128], strides = [1, 1]} : vector<1x256xf32> to vector<1x128xf32>
    %382 = vector.extract_strided_slice %370 {offsets = [0, 256], sizes = [1, 128], strides = [1, 1]} : vector<1x512xf32> to vector<1x128xf32>
    %383 = math.tanh %382 : vector<1x128xf32>
    %384 = vector.extract_strided_slice %370 {offsets = [0, 384], sizes = [1, 128], strides = [1, 1]} : vector<1x512xf32> to vector<1x128xf32>
    %385 = arith.negf %384 : vector<1x128xf32>
    %386 = math.exp %385 : vector<1x128xf32>
    %cst_95 = arith.constant 1.000000e+00 : f32
    %387 = vector.broadcast %cst_95 : f32 to vector<1x128xf32>
    %388 = arith.addf %387, %386 : vector<1x128xf32>
    %389 = arith.divf %387, %388 : vector<1x128xf32>
    %390 = arith.negf %373 : vector<1x128xf32>
    %391 = math.exp %390 : vector<1x128xf32>
    %cst_96 = arith.constant 1.000000e+00 : f32
    %392 = vector.broadcast %cst_96 : f32 to vector<1x128xf32>
    %393 = arith.addf %392, %391 : vector<1x128xf32>
    %394 = arith.divf %392, %393 : vector<1x128xf32>
    %395 = arith.mulf %380, %394 : vector<1x128xf32>
    %396 = arith.mulf %395, %383 : vector<1x128xf32>
    %397 = arith.mulf %381, %323 : vector<1x128xf32>
    %398 = arith.addf %396, %397 : vector<1x128xf32>
    %399 = math.tanh %398 : vector<1x128xf32>
    %400 = arith.mulf %389, %399 : vector<1x128xf32>
    %401 = arith.truncf %400 : vector<1x128xf32> to vector<1x128xbf16>
    %402 = arith.truncf %398 : vector<1x128xf32> to vector<1x128xbf16>
    %403 = tpu.concatenate %401, %402 in 1 : vector<1x128xbf16>, vector<1x128xbf16> -> vector<1x256xbf16>
    %cst_97 = arith.constant dense<0.000000e+00> : vector<1x512xf32>
    %404 = tpu.matmul %363, %93, %cst_97 {dimension_numbers = #tpu.dot_dimension_numbers<[1], [0], [0], [1], [0, 0, 1, 1], [], []>} : vector<1x256xbf16>, vector<256x512xbf16>, vector<1x512xf32> -> vector<1x512xf32>
    %405 = vector.extract_strided_slice %99 {offsets = [4, 0], sizes = [1, 640], strides = [1, 1]} : vector<8x640xf32> to vector<1x640xf32>
    %406 = vector.extract_strided_slice %405 {offsets = [0, 0], sizes = [1, 512], strides = [1, 1]} : vector<1x640xf32> to vector<1x512xf32>
    %407 = arith.addf %406, %404 : vector<1x512xf32>
    %408 = vector.extract_strided_slice %405 {offsets = [0, 512], sizes = [1, 128], strides = [1, 1]} : vector<1x640xf32> to vector<1x128xf32>
    %409 = vector.extract_strided_slice %407 {offsets = [0, 0], sizes = [1, 256], strides = [1, 1]} : vector<1x512xf32> to vector<1x256xf32>
    %410 = arith.negf %409 : vector<1x256xf32>
    %411 = math.exp %410 : vector<1x256xf32>
    %cst_98 = arith.constant 1.000000e+00 : f32
    %412 = vector.broadcast %cst_98 : f32 to vector<1x256xf32>
    %413 = arith.addf %412, %411 : vector<1x256xf32>
    %414 = arith.divf %412, %413 : vector<1x256xf32>
    %415 = vector.extract_strided_slice %414 {offsets = [0, 0], sizes = [1, 128], strides = [1, 1]} : vector<1x256xf32> to vector<1x128xf32>
    %416 = vector.extract_strided_slice %414 {offsets = [0, 128], sizes = [1, 128], strides = [1, 1]} : vector<1x256xf32> to vector<1x128xf32>
    %417 = vector.extract_strided_slice %407 {offsets = [0, 256], sizes = [1, 128], strides = [1, 1]} : vector<1x512xf32> to vector<1x128xf32>
    %418 = math.tanh %417 : vector<1x128xf32>
    %419 = vector.extract_strided_slice %407 {offsets = [0, 384], sizes = [1, 128], strides = [1, 1]} : vector<1x512xf32> to vector<1x128xf32>
    %420 = arith.negf %419 : vector<1x128xf32>
    %421 = math.exp %420 : vector<1x128xf32>
    %cst_99 = arith.constant 1.000000e+00 : f32
    %422 = vector.broadcast %cst_99 : f32 to vector<1x128xf32>
    %423 = arith.addf %422, %421 : vector<1x128xf32>
    %424 = arith.divf %422, %423 : vector<1x128xf32>
    %425 = arith.negf %408 : vector<1x128xf32>
    %426 = math.exp %425 : vector<1x128xf32>
    %cst_100 = arith.constant 1.000000e+00 : f32
    %427 = vector.broadcast %cst_100 : f32 to vector<1x128xf32>
    %428 = arith.addf %427, %426 : vector<1x128xf32>
    %429 = arith.divf %427, %428 : vector<1x128xf32>
    %430 = arith.mulf %415, %429 : vector<1x128xf32>
    %431 = arith.mulf %430, %418 : vector<1x128xf32>
    %432 = arith.mulf %416, %358 : vector<1x128xf32>
    %433 = arith.addf %431, %432 : vector<1x128xf32>
    %434 = math.tanh %433 : vector<1x128xf32>
    %435 = arith.mulf %424, %434 : vector<1x128xf32>
    %436 = arith.truncf %435 : vector<1x128xf32> to vector<1x128xbf16>
    %437 = arith.truncf %433 : vector<1x128xf32> to vector<1x128xbf16>
    %438 = tpu.concatenate %436, %437 in 1 : vector<1x128xbf16>, vector<1x128xbf16> -> vector<1x256xbf16>
    %cst_101 = arith.constant dense<0.000000e+00> : vector<1x512xf32>
    %439 = tpu.matmul %403, %95, %cst_101 {dimension_numbers = #tpu.dot_dimension_numbers<[1], [0], [0], [1], [0, 0, 1, 1], [], []>} : vector<1x256xbf16>, vector<256x512xbf16>, vector<1x512xf32> -> vector<1x512xf32>
    %cst_102 = arith.constant dense<0.000000e+00> : vector<1x640xf32>
    %440 = tpu.matmul %436, %94, %cst_102 {dimension_numbers = #tpu.dot_dimension_numbers<[1], [0], [0], [1], [0, 0, 1, 1], [], []>} : vector<1x128xbf16>, vector<128x640xbf16>, vector<1x640xf32> -> vector<1x640xf32>
    %441 = vector.extract_strided_slice %72 {offsets = [4, 0], sizes = [1, 640], strides = [1, 1]} : vector<8x640xf32> to vector<1x640xf32>
    %442 = vector.extract_strided_slice %440 {offsets = [0, 0], sizes = [1, 512], strides = [1, 1]} : vector<1x640xf32> to vector<1x512xf32>
    %443 = arith.addf %442, %439 : vector<1x512xf32>
    %444 = vector.extract_strided_slice %441 {offsets = [0, 0], sizes = [1, 512], strides = [1, 1]} : vector<1x640xf32> to vector<1x512xf32>
    %445 = arith.addf %443, %444 : vector<1x512xf32>
    %446 = vector.extract_strided_slice %440 {offsets = [0, 512], sizes = [1, 128], strides = [1, 1]} : vector<1x640xf32> to vector<1x128xf32>
    %447 = vector.extract_strided_slice %441 {offsets = [0, 512], sizes = [1, 128], strides = [1, 1]} : vector<1x640xf32> to vector<1x128xf32>
    %448 = arith.addf %446, %447 : vector<1x128xf32>
    %449 = vector.extract_strided_slice %445 {offsets = [0, 0], sizes = [1, 256], strides = [1, 1]} : vector<1x512xf32> to vector<1x256xf32>
    %450 = arith.negf %449 : vector<1x256xf32>
    %451 = math.exp %450 : vector<1x256xf32>
    %cst_103 = arith.constant 1.000000e+00 : f32
    %452 = vector.broadcast %cst_103 : f32 to vector<1x256xf32>
    %453 = arith.addf %452, %451 : vector<1x256xf32>
    %454 = arith.divf %452, %453 : vector<1x256xf32>
    %455 = vector.extract_strided_slice %454 {offsets = [0, 0], sizes = [1, 128], strides = [1, 1]} : vector<1x256xf32> to vector<1x128xf32>
    %456 = vector.extract_strided_slice %454 {offsets = [0, 128], sizes = [1, 128], strides = [1, 1]} : vector<1x256xf32> to vector<1x128xf32>
    %457 = vector.extract_strided_slice %445 {offsets = [0, 256], sizes = [1, 128], strides = [1, 1]} : vector<1x512xf32> to vector<1x128xf32>
    %458 = math.tanh %457 : vector<1x128xf32>
    %459 = vector.extract_strided_slice %445 {offsets = [0, 384], sizes = [1, 128], strides = [1, 1]} : vector<1x512xf32> to vector<1x128xf32>
    %460 = arith.negf %459 : vector<1x128xf32>
    %461 = math.exp %460 : vector<1x128xf32>
    %cst_104 = arith.constant 1.000000e+00 : f32
    %462 = vector.broadcast %cst_104 : f32 to vector<1x128xf32>
    %463 = arith.addf %462, %461 : vector<1x128xf32>
    %464 = arith.divf %462, %463 : vector<1x128xf32>
    %465 = arith.negf %448 : vector<1x128xf32>
    %466 = math.exp %465 : vector<1x128xf32>
    %cst_105 = arith.constant 1.000000e+00 : f32
    %467 = vector.broadcast %cst_105 : f32 to vector<1x128xf32>
    %468 = arith.addf %467, %466 : vector<1x128xf32>
    %469 = arith.divf %467, %468 : vector<1x128xf32>
    %470 = arith.mulf %455, %469 : vector<1x128xf32>
    %471 = arith.mulf %470, %458 : vector<1x128xf32>
    %472 = arith.mulf %456, %398 : vector<1x128xf32>
    %473 = arith.addf %471, %472 : vector<1x128xf32>
    %474 = math.tanh %473 : vector<1x128xf32>
    %475 = arith.mulf %464, %474 : vector<1x128xf32>
    %476 = arith.truncf %475 : vector<1x128xf32> to vector<1x128xbf16>
    %477 = arith.truncf %473 : vector<1x128xf32> to vector<1x128xbf16>
    %478 = tpu.concatenate %476, %477 in 1 : vector<1x128xbf16>, vector<1x128xbf16> -> vector<1x256xbf16>
    %cst_106 = arith.constant dense<0.000000e+00> : vector<1x512xf32>
    %479 = tpu.matmul %438, %93, %cst_106 {dimension_numbers = #tpu.dot_dimension_numbers<[1], [0], [0], [1], [0, 0, 1, 1], [], []>} : vector<1x256xbf16>, vector<256x512xbf16>, vector<1x512xf32> -> vector<1x512xf32>
    %480 = vector.extract_strided_slice %99 {offsets = [5, 0], sizes = [1, 640], strides = [1, 1]} : vector<8x640xf32> to vector<1x640xf32>
    %481 = vector.extract_strided_slice %480 {offsets = [0, 0], sizes = [1, 512], strides = [1, 1]} : vector<1x640xf32> to vector<1x512xf32>
    %482 = arith.addf %481, %479 : vector<1x512xf32>
    %483 = vector.extract_strided_slice %480 {offsets = [0, 512], sizes = [1, 128], strides = [1, 1]} : vector<1x640xf32> to vector<1x128xf32>
    %484 = vector.extract_strided_slice %482 {offsets = [0, 0], sizes = [1, 256], strides = [1, 1]} : vector<1x512xf32> to vector<1x256xf32>
    %485 = arith.negf %484 : vector<1x256xf32>
    %486 = math.exp %485 : vector<1x256xf32>
    %cst_107 = arith.constant 1.000000e+00 : f32
    %487 = vector.broadcast %cst_107 : f32 to vector<1x256xf32>
    %488 = arith.addf %487, %486 : vector<1x256xf32>
    %489 = arith.divf %487, %488 : vector<1x256xf32>
    %490 = vector.extract_strided_slice %489 {offsets = [0, 0], sizes = [1, 128], strides = [1, 1]} : vector<1x256xf32> to vector<1x128xf32>
    %491 = vector.extract_strided_slice %489 {offsets = [0, 128], sizes = [1, 128], strides = [1, 1]} : vector<1x256xf32> to vector<1x128xf32>
    %492 = vector.extract_strided_slice %482 {offsets = [0, 256], sizes = [1, 128], strides = [1, 1]} : vector<1x512xf32> to vector<1x128xf32>
    %493 = math.tanh %492 : vector<1x128xf32>
    %494 = vector.extract_strided_slice %482 {offsets = [0, 384], sizes = [1, 128], strides = [1, 1]} : vector<1x512xf32> to vector<1x128xf32>
    %495 = arith.negf %494 : vector<1x128xf32>
    %496 = math.exp %495 : vector<1x128xf32>
    %cst_108 = arith.constant 1.000000e+00 : f32
    %497 = vector.broadcast %cst_108 : f32 to vector<1x128xf32>
    %498 = arith.addf %497, %496 : vector<1x128xf32>
    %499 = arith.divf %497, %498 : vector<1x128xf32>
    %500 = arith.negf %483 : vector<1x128xf32>
    %501 = math.exp %500 : vector<1x128xf32>
    %cst_109 = arith.constant 1.000000e+00 : f32
    %502 = vector.broadcast %cst_109 : f32 to vector<1x128xf32>
    %503 = arith.addf %502, %501 : vector<1x128xf32>
    %504 = arith.divf %502, %503 : vector<1x128xf32>
    %505 = arith.mulf %490, %504 : vector<1x128xf32>
    %506 = arith.mulf %505, %493 : vector<1x128xf32>
    %507 = arith.mulf %491, %433 : vector<1x128xf32>
    %508 = arith.addf %506, %507 : vector<1x128xf32>
    %509 = math.tanh %508 : vector<1x128xf32>
    %510 = arith.mulf %499, %509 : vector<1x128xf32>
    %511 = arith.truncf %510 : vector<1x128xf32> to vector<1x128xbf16>
    %512 = arith.truncf %508 : vector<1x128xf32> to vector<1x128xbf16>
    %513 = tpu.concatenate %511, %512 in 1 : vector<1x128xbf16>, vector<1x128xbf16> -> vector<1x256xbf16>
    %cst_110 = arith.constant dense<0.000000e+00> : vector<1x512xf32>
    %514 = tpu.matmul %478, %95, %cst_110 {dimension_numbers = #tpu.dot_dimension_numbers<[1], [0], [0], [1], [0, 0, 1, 1], [], []>} : vector<1x256xbf16>, vector<256x512xbf16>, vector<1x512xf32> -> vector<1x512xf32>
    %cst_111 = arith.constant dense<0.000000e+00> : vector<1x640xf32>
    %515 = tpu.matmul %511, %94, %cst_111 {dimension_numbers = #tpu.dot_dimension_numbers<[1], [0], [0], [1], [0, 0, 1, 1], [], []>} : vector<1x128xbf16>, vector<128x640xbf16>, vector<1x640xf32> -> vector<1x640xf32>
    %516 = vector.extract_strided_slice %72 {offsets = [5, 0], sizes = [1, 640], strides = [1, 1]} : vector<8x640xf32> to vector<1x640xf32>
    %517 = vector.extract_strided_slice %515 {offsets = [0, 0], sizes = [1, 512], strides = [1, 1]} : vector<1x640xf32> to vector<1x512xf32>
    %518 = arith.addf %517, %514 : vector<1x512xf32>
    %519 = vector.extract_strided_slice %516 {offsets = [0, 0], sizes = [1, 512], strides = [1, 1]} : vector<1x640xf32> to vector<1x512xf32>
    %520 = arith.addf %518, %519 : vector<1x512xf32>
    %521 = vector.extract_strided_slice %515 {offsets = [0, 512], sizes = [1, 128], strides = [1, 1]} : vector<1x640xf32> to vector<1x128xf32>
    %522 = vector.extract_strided_slice %516 {offsets = [0, 512], sizes = [1, 128], strides = [1, 1]} : vector<1x640xf32> to vector<1x128xf32>
    %523 = arith.addf %521, %522 : vector<1x128xf32>
    %524 = vector.extract_strided_slice %520 {offsets = [0, 0], sizes = [1, 256], strides = [1, 1]} : vector<1x512xf32> to vector<1x256xf32>
    %525 = arith.negf %524 : vector<1x256xf32>
    %526 = math.exp %525 : vector<1x256xf32>
    %cst_112 = arith.constant 1.000000e+00 : f32
    %527 = vector.broadcast %cst_112 : f32 to vector<1x256xf32>
    %528 = arith.addf %527, %526 : vector<1x256xf32>
    %529 = arith.divf %527, %528 : vector<1x256xf32>
    %530 = vector.extract_strided_slice %529 {offsets = [0, 0], sizes = [1, 128], strides = [1, 1]} : vector<1x256xf32> to vector<1x128xf32>
    %531 = vector.extract_strided_slice %529 {offsets = [0, 128], sizes = [1, 128], strides = [1, 1]} : vector<1x256xf32> to vector<1x128xf32>
    %532 = vector.extract_strided_slice %520 {offsets = [0, 256], sizes = [1, 128], strides = [1, 1]} : vector<1x512xf32> to vector<1x128xf32>
    %533 = math.tanh %532 : vector<1x128xf32>
    %534 = vector.extract_strided_slice %520 {offsets = [0, 384], sizes = [1, 128], strides = [1, 1]} : vector<1x512xf32> to vector<1x128xf32>
    %535 = arith.negf %534 : vector<1x128xf32>
    %536 = math.exp %535 : vector<1x128xf32>
    %cst_113 = arith.constant 1.000000e+00 : f32
    %537 = vector.broadcast %cst_113 : f32 to vector<1x128xf32>
    %538 = arith.addf %537, %536 : vector<1x128xf32>
    %539 = arith.divf %537, %538 : vector<1x128xf32>
    %540 = arith.negf %523 : vector<1x128xf32>
    %541 = math.exp %540 : vector<1x128xf32>
    %cst_114 = arith.constant 1.000000e+00 : f32
    %542 = vector.broadcast %cst_114 : f32 to vector<1x128xf32>
    %543 = arith.addf %542, %541 : vector<1x128xf32>
    %544 = arith.divf %542, %543 : vector<1x128xf32>
    %545 = arith.mulf %530, %544 : vector<1x128xf32>
    %546 = arith.mulf %545, %533 : vector<1x128xf32>
    %547 = arith.mulf %531, %473 : vector<1x128xf32>
    %548 = arith.addf %546, %547 : vector<1x128xf32>
    %549 = math.tanh %548 : vector<1x128xf32>
    %550 = arith.mulf %539, %549 : vector<1x128xf32>
    %551 = arith.truncf %550 : vector<1x128xf32> to vector<1x128xbf16>
    %552 = arith.truncf %548 : vector<1x128xf32> to vector<1x128xbf16>
    %553 = tpu.concatenate %551, %552 in 1 : vector<1x128xbf16>, vector<1x128xbf16> -> vector<1x256xbf16>
    %cst_115 = arith.constant dense<0.000000e+00> : vector<1x512xf32>
    %554 = tpu.matmul %513, %93, %cst_115 {dimension_numbers = #tpu.dot_dimension_numbers<[1], [0], [0], [1], [0, 0, 1, 1], [], []>} : vector<1x256xbf16>, vector<256x512xbf16>, vector<1x512xf32> -> vector<1x512xf32>
    %555 = vector.extract_strided_slice %99 {offsets = [6, 0], sizes = [1, 640], strides = [1, 1]} : vector<8x640xf32> to vector<1x640xf32>
    %556 = vector.extract_strided_slice %555 {offsets = [0, 0], sizes = [1, 512], strides = [1, 1]} : vector<1x640xf32> to vector<1x512xf32>
    %557 = arith.addf %556, %554 : vector<1x512xf32>
    %558 = vector.extract_strided_slice %555 {offsets = [0, 512], sizes = [1, 128], strides = [1, 1]} : vector<1x640xf32> to vector<1x128xf32>
    %559 = vector.extract_strided_slice %557 {offsets = [0, 0], sizes = [1, 256], strides = [1, 1]} : vector<1x512xf32> to vector<1x256xf32>
    %560 = arith.negf %559 : vector<1x256xf32>
    %561 = math.exp %560 : vector<1x256xf32>
    %cst_116 = arith.constant 1.000000e+00 : f32
    %562 = vector.broadcast %cst_116 : f32 to vector<1x256xf32>
    %563 = arith.addf %562, %561 : vector<1x256xf32>
    %564 = arith.divf %562, %563 : vector<1x256xf32>
    %565 = vector.extract_strided_slice %564 {offsets = [0, 0], sizes = [1, 128], strides = [1, 1]} : vector<1x256xf32> to vector<1x128xf32>
    %566 = vector.extract_strided_slice %564 {offsets = [0, 128], sizes = [1, 128], strides = [1, 1]} : vector<1x256xf32> to vector<1x128xf32>
    %567 = vector.extract_strided_slice %557 {offsets = [0, 256], sizes = [1, 128], strides = [1, 1]} : vector<1x512xf32> to vector<1x128xf32>
    %568 = math.tanh %567 : vector<1x128xf32>
    %569 = vector.extract_strided_slice %557 {offsets = [0, 384], sizes = [1, 128], strides = [1, 1]} : vector<1x512xf32> to vector<1x128xf32>
    %570 = arith.negf %569 : vector<1x128xf32>
    %571 = math.exp %570 : vector<1x128xf32>
    %cst_117 = arith.constant 1.000000e+00 : f32
    %572 = vector.broadcast %cst_117 : f32 to vector<1x128xf32>
    %573 = arith.addf %572, %571 : vector<1x128xf32>
    %574 = arith.divf %572, %573 : vector<1x128xf32>
    %575 = arith.negf %558 : vector<1x128xf32>
    %576 = math.exp %575 : vector<1x128xf32>
    %cst_118 = arith.constant 1.000000e+00 : f32
    %577 = vector.broadcast %cst_118 : f32 to vector<1x128xf32>
    %578 = arith.addf %577, %576 : vector<1x128xf32>
    %579 = arith.divf %577, %578 : vector<1x128xf32>
    %580 = arith.mulf %565, %579 : vector<1x128xf32>
    %581 = arith.mulf %580, %568 : vector<1x128xf32>
    %582 = arith.mulf %566, %508 : vector<1x128xf32>
    %583 = arith.addf %581, %582 : vector<1x128xf32>
    %584 = math.tanh %583 : vector<1x128xf32>
    %585 = arith.mulf %574, %584 : vector<1x128xf32>
    %586 = arith.truncf %585 : vector<1x128xf32> to vector<1x128xbf16>
    %587 = arith.truncf %583 : vector<1x128xf32> to vector<1x128xbf16>
    %588 = tpu.concatenate %586, %587 in 1 : vector<1x128xbf16>, vector<1x128xbf16> -> vector<1x256xbf16>
    %cst_119 = arith.constant dense<0.000000e+00> : vector<1x512xf32>
    %589 = tpu.matmul %553, %95, %cst_119 {dimension_numbers = #tpu.dot_dimension_numbers<[1], [0], [0], [1], [0, 0, 1, 1], [], []>} : vector<1x256xbf16>, vector<256x512xbf16>, vector<1x512xf32> -> vector<1x512xf32>
    %cst_120 = arith.constant dense<0.000000e+00> : vector<1x640xf32>
    %590 = tpu.matmul %586, %94, %cst_120 {dimension_numbers = #tpu.dot_dimension_numbers<[1], [0], [0], [1], [0, 0, 1, 1], [], []>} : vector<1x128xbf16>, vector<128x640xbf16>, vector<1x640xf32> -> vector<1x640xf32>
    %591 = vector.extract_strided_slice %72 {offsets = [6, 0], sizes = [1, 640], strides = [1, 1]} : vector<8x640xf32> to vector<1x640xf32>
    %592 = vector.extract_strided_slice %590 {offsets = [0, 0], sizes = [1, 512], strides = [1, 1]} : vector<1x640xf32> to vector<1x512xf32>
    %593 = arith.addf %592, %589 : vector<1x512xf32>
    %594 = vector.extract_strided_slice %591 {offsets = [0, 0], sizes = [1, 512], strides = [1, 1]} : vector<1x640xf32> to vector<1x512xf32>
    %595 = arith.addf %593, %594 : vector<1x512xf32>
    %596 = vector.extract_strided_slice %590 {offsets = [0, 512], sizes = [1, 128], strides = [1, 1]} : vector<1x640xf32> to vector<1x128xf32>
    %597 = vector.extract_strided_slice %591 {offsets = [0, 512], sizes = [1, 128], strides = [1, 1]} : vector<1x640xf32> to vector<1x128xf32>
    %598 = arith.addf %596, %597 : vector<1x128xf32>
    %599 = vector.extract_strided_slice %595 {offsets = [0, 0], sizes = [1, 256], strides = [1, 1]} : vector<1x512xf32> to vector<1x256xf32>
    %600 = arith.negf %599 : vector<1x256xf32>
    %601 = math.exp %600 : vector<1x256xf32>
    %cst_121 = arith.constant 1.000000e+00 : f32
    %602 = vector.broadcast %cst_121 : f32 to vector<1x256xf32>
    %603 = arith.addf %602, %601 : vector<1x256xf32>
    %604 = arith.divf %602, %603 : vector<1x256xf32>
    %605 = vector.extract_strided_slice %604 {offsets = [0, 0], sizes = [1, 128], strides = [1, 1]} : vector<1x256xf32> to vector<1x128xf32>
    %606 = vector.extract_strided_slice %604 {offsets = [0, 128], sizes = [1, 128], strides = [1, 1]} : vector<1x256xf32> to vector<1x128xf32>
    %607 = vector.extract_strided_slice %595 {offsets = [0, 256], sizes = [1, 128], strides = [1, 1]} : vector<1x512xf32> to vector<1x128xf32>
    %608 = math.tanh %607 : vector<1x128xf32>
    %609 = vector.extract_strided_slice %595 {offsets = [0, 384], sizes = [1, 128], strides = [1, 1]} : vector<1x512xf32> to vector<1x128xf32>
    %610 = arith.negf %609 : vector<1x128xf32>
    %611 = math.exp %610 : vector<1x128xf32>
    %cst_122 = arith.constant 1.000000e+00 : f32
    %612 = vector.broadcast %cst_122 : f32 to vector<1x128xf32>
    %613 = arith.addf %612, %611 : vector<1x128xf32>
    %614 = arith.divf %612, %613 : vector<1x128xf32>
    %615 = arith.negf %598 : vector<1x128xf32>
    %616 = math.exp %615 : vector<1x128xf32>
    %cst_123 = arith.constant 1.000000e+00 : f32
    %617 = vector.broadcast %cst_123 : f32 to vector<1x128xf32>
    %618 = arith.addf %617, %616 : vector<1x128xf32>
    %619 = arith.divf %617, %618 : vector<1x128xf32>
    %620 = arith.mulf %605, %619 : vector<1x128xf32>
    %621 = arith.mulf %620, %608 : vector<1x128xf32>
    %622 = arith.mulf %606, %548 : vector<1x128xf32>
    %623 = arith.addf %621, %622 : vector<1x128xf32>
    %624 = math.tanh %623 : vector<1x128xf32>
    %625 = arith.mulf %614, %624 : vector<1x128xf32>
    %626 = arith.truncf %625 : vector<1x128xf32> to vector<1x128xbf16>
    %627 = arith.truncf %623 : vector<1x128xf32> to vector<1x128xbf16>
    %628 = tpu.concatenate %626, %627 in 1 : vector<1x128xbf16>, vector<1x128xbf16> -> vector<1x256xbf16>
    %cst_124 = arith.constant dense<0.000000e+00> : vector<1x512xf32>
    %629 = tpu.matmul %588, %93, %cst_124 {dimension_numbers = #tpu.dot_dimension_numbers<[1], [0], [0], [1], [0, 0, 1, 1], [], []>} : vector<1x256xbf16>, vector<256x512xbf16>, vector<1x512xf32> -> vector<1x512xf32>
    %630 = vector.extract_strided_slice %99 {offsets = [7, 0], sizes = [1, 640], strides = [1, 1]} : vector<8x640xf32> to vector<1x640xf32>
    %631 = vector.extract_strided_slice %630 {offsets = [0, 0], sizes = [1, 512], strides = [1, 1]} : vector<1x640xf32> to vector<1x512xf32>
    %632 = arith.addf %631, %629 : vector<1x512xf32>
    %633 = vector.extract_strided_slice %630 {offsets = [0, 512], sizes = [1, 128], strides = [1, 1]} : vector<1x640xf32> to vector<1x128xf32>
    %634 = vector.extract_strided_slice %632 {offsets = [0, 0], sizes = [1, 256], strides = [1, 1]} : vector<1x512xf32> to vector<1x256xf32>
    %635 = arith.negf %634 : vector<1x256xf32>
    %636 = math.exp %635 : vector<1x256xf32>
    %cst_125 = arith.constant 1.000000e+00 : f32
    %637 = vector.broadcast %cst_125 : f32 to vector<1x256xf32>
    %638 = arith.addf %637, %636 : vector<1x256xf32>
    %639 = arith.divf %637, %638 : vector<1x256xf32>
    %640 = vector.extract_strided_slice %639 {offsets = [0, 0], sizes = [1, 128], strides = [1, 1]} : vector<1x256xf32> to vector<1x128xf32>
    %641 = vector.extract_strided_slice %639 {offsets = [0, 128], sizes = [1, 128], strides = [1, 1]} : vector<1x256xf32> to vector<1x128xf32>
    %642 = vector.extract_strided_slice %632 {offsets = [0, 256], sizes = [1, 128], strides = [1, 1]} : vector<1x512xf32> to vector<1x128xf32>
    %643 = math.tanh %642 : vector<1x128xf32>
    %644 = vector.extract_strided_slice %632 {offsets = [0, 384], sizes = [1, 128], strides = [1, 1]} : vector<1x512xf32> to vector<1x128xf32>
    %645 = arith.negf %644 : vector<1x128xf32>
    %646 = math.exp %645 : vector<1x128xf32>
    %cst_126 = arith.constant 1.000000e+00 : f32
    %647 = vector.broadcast %cst_126 : f32 to vector<1x128xf32>
    %648 = arith.addf %647, %646 : vector<1x128xf32>
    %649 = arith.divf %647, %648 : vector<1x128xf32>
    %650 = arith.negf %633 : vector<1x128xf32>
    %651 = math.exp %650 : vector<1x128xf32>
    %cst_127 = arith.constant 1.000000e+00 : f32
    %652 = vector.broadcast %cst_127 : f32 to vector<1x128xf32>
    %653 = arith.addf %652, %651 : vector<1x128xf32>
    %654 = arith.divf %652, %653 : vector<1x128xf32>
    %655 = arith.mulf %640, %654 : vector<1x128xf32>
    %656 = arith.mulf %655, %643 : vector<1x128xf32>
    %657 = arith.mulf %641, %583 : vector<1x128xf32>
    %658 = arith.addf %656, %657 : vector<1x128xf32>
    %659 = math.tanh %658 : vector<1x128xf32>
    %660 = arith.mulf %649, %659 : vector<1x128xf32>
    %661 = arith.truncf %660 : vector<1x128xf32> to vector<1x128xbf16>
    %662 = arith.truncf %658 : vector<1x128xf32> to vector<1x128xbf16>
    %663 = tpu.concatenate %661, %662 in 1 : vector<1x128xbf16>, vector<1x128xbf16> -> vector<1x256xbf16>
    %cst_128 = arith.constant dense<0.000000e+00> : vector<1x512xf32>
    %664 = tpu.matmul %628, %95, %cst_128 {dimension_numbers = #tpu.dot_dimension_numbers<[1], [0], [0], [1], [0, 0, 1, 1], [], []>} : vector<1x256xbf16>, vector<256x512xbf16>, vector<1x512xf32> -> vector<1x512xf32>
    %cst_129 = arith.constant dense<0.000000e+00> : vector<1x640xf32>
    %665 = tpu.matmul %661, %94, %cst_129 {dimension_numbers = #tpu.dot_dimension_numbers<[1], [0], [0], [1], [0, 0, 1, 1], [], []>} : vector<1x128xbf16>, vector<128x640xbf16>, vector<1x640xf32> -> vector<1x640xf32>
    %666 = vector.extract_strided_slice %72 {offsets = [7, 0], sizes = [1, 640], strides = [1, 1]} : vector<8x640xf32> to vector<1x640xf32>
    %667 = vector.extract_strided_slice %665 {offsets = [0, 0], sizes = [1, 512], strides = [1, 1]} : vector<1x640xf32> to vector<1x512xf32>
    %668 = arith.addf %667, %664 : vector<1x512xf32>
    %669 = vector.extract_strided_slice %666 {offsets = [0, 0], sizes = [1, 512], strides = [1, 1]} : vector<1x640xf32> to vector<1x512xf32>
    %670 = arith.addf %668, %669 : vector<1x512xf32>
    %671 = vector.extract_strided_slice %665 {offsets = [0, 512], sizes = [1, 128], strides = [1, 1]} : vector<1x640xf32> to vector<1x128xf32>
    %672 = vector.extract_strided_slice %666 {offsets = [0, 512], sizes = [1, 128], strides = [1, 1]} : vector<1x640xf32> to vector<1x128xf32>
    %673 = arith.addf %671, %672 : vector<1x128xf32>
    %674 = vector.extract_strided_slice %670 {offsets = [0, 0], sizes = [1, 256], strides = [1, 1]} : vector<1x512xf32> to vector<1x256xf32>
    %675 = arith.negf %674 : vector<1x256xf32>
    %676 = math.exp %675 : vector<1x256xf32>
    %cst_130 = arith.constant 1.000000e+00 : f32
    %677 = vector.broadcast %cst_130 : f32 to vector<1x256xf32>
    %678 = arith.addf %677, %676 : vector<1x256xf32>
    %679 = arith.divf %677, %678 : vector<1x256xf32>
    %680 = vector.extract_strided_slice %679 {offsets = [0, 0], sizes = [1, 128], strides = [1, 1]} : vector<1x256xf32> to vector<1x128xf32>
    %681 = vector.extract_strided_slice %679 {offsets = [0, 128], sizes = [1, 128], strides = [1, 1]} : vector<1x256xf32> to vector<1x128xf32>
    %682 = vector.extract_strided_slice %670 {offsets = [0, 256], sizes = [1, 128], strides = [1, 1]} : vector<1x512xf32> to vector<1x128xf32>
    %683 = math.tanh %682 : vector<1x128xf32>
    %684 = vector.extract_strided_slice %670 {offsets = [0, 384], sizes = [1, 128], strides = [1, 1]} : vector<1x512xf32> to vector<1x128xf32>
    %685 = arith.negf %684 : vector<1x128xf32>
    %686 = math.exp %685 : vector<1x128xf32>
    %cst_131 = arith.constant 1.000000e+00 : f32
    %687 = vector.broadcast %cst_131 : f32 to vector<1x128xf32>
    %688 = arith.addf %687, %686 : vector<1x128xf32>
    %689 = arith.divf %687, %688 : vector<1x128xf32>
    %690 = arith.negf %673 : vector<1x128xf32>
    %691 = math.exp %690 : vector<1x128xf32>
    %cst_132 = arith.constant 1.000000e+00 : f32
    %692 = vector.broadcast %cst_132 : f32 to vector<1x128xf32>
    %693 = arith.addf %692, %691 : vector<1x128xf32>
    %694 = arith.divf %692, %693 : vector<1x128xf32>
    %695 = arith.mulf %680, %694 : vector<1x128xf32>
    %696 = arith.mulf %695, %683 : vector<1x128xf32>
    %697 = arith.mulf %681, %623 : vector<1x128xf32>
    %698 = arith.addf %696, %697 : vector<1x128xf32>
    %699 = math.tanh %698 : vector<1x128xf32>
    %700 = arith.mulf %689, %699 : vector<1x128xf32>
    %701 = arith.truncf %700 : vector<1x128xf32> to vector<1x128xbf16>
    %702 = arith.truncf %698 : vector<1x128xf32> to vector<1x128xbf16>
    %703 = tpu.concatenate %701, %702 in 1 : vector<1x128xbf16>, vector<1x128xbf16> -> vector<1x256xbf16>
    %cst_133 = arith.constant dense<0.000000e+00> : vector<1x640xf32>
    %704 = tpu.matmul %701, %92, %cst_133 {dimension_numbers = #tpu.dot_dimension_numbers<[1], [0], [0], [1], [0, 0, 1, 1], [], []>} : vector<1x128xbf16>, vector<128x640xbf16>, vector<1x640xf32> -> vector<1x640xf32>
    %cst_134 = arith.constant dense<0.000000e+00> : vector<1x512xf32>
    %705 = tpu.matmul %663, %93, %cst_134 {dimension_numbers = #tpu.dot_dimension_numbers<[1], [0], [0], [1], [0, 0, 1, 1], [], []>} : vector<1x256xbf16>, vector<256x512xbf16>, vector<1x512xf32> -> vector<1x512xf32>
    %706 = vector.extract_strided_slice %53 {offsets = [0, 0], sizes = [1, 640], strides = [1, 1]} : vector<4x640xf32> to vector<1x640xf32>
    %707 = vector.extract_strided_slice %704 {offsets = [0, 0], sizes = [1, 512], strides = [1, 1]} : vector<1x640xf32> to vector<1x512xf32>
    %708 = arith.addf %707, %705 : vector<1x512xf32>
    %709 = vector.extract_strided_slice %706 {offsets = [0, 0], sizes = [1, 512], strides = [1, 1]} : vector<1x640xf32> to vector<1x512xf32>
    %710 = arith.addf %708, %709 : vector<1x512xf32>
    %711 = vector.extract_strided_slice %704 {offsets = [0, 512], sizes = [1, 128], strides = [1, 1]} : vector<1x640xf32> to vector<1x128xf32>
    %712 = vector.extract_strided_slice %706 {offsets = [0, 512], sizes = [1, 128], strides = [1, 1]} : vector<1x640xf32> to vector<1x128xf32>
    %713 = arith.addf %711, %712 : vector<1x128xf32>
    %714 = vector.extract_strided_slice %710 {offsets = [0, 0], sizes = [1, 256], strides = [1, 1]} : vector<1x512xf32> to vector<1x256xf32>
    %715 = arith.negf %714 : vector<1x256xf32>
    %716 = math.exp %715 : vector<1x256xf32>
    %cst_135 = arith.constant 1.000000e+00 : f32
    %717 = vector.broadcast %cst_135 : f32 to vector<1x256xf32>
    %718 = arith.addf %717, %716 : vector<1x256xf32>
    %719 = arith.divf %717, %718 : vector<1x256xf32>
    %720 = vector.extract_strided_slice %719 {offsets = [0, 0], sizes = [1, 128], strides = [1, 1]} : vector<1x256xf32> to vector<1x128xf32>
    %721 = vector.extract_strided_slice %719 {offsets = [0, 128], sizes = [1, 128], strides = [1, 1]} : vector<1x256xf32> to vector<1x128xf32>
    %722 = vector.extract_strided_slice %710 {offsets = [0, 256], sizes = [1, 128], strides = [1, 1]} : vector<1x512xf32> to vector<1x128xf32>
    %723 = math.tanh %722 : vector<1x128xf32>
    %724 = vector.extract_strided_slice %710 {offsets = [0, 384], sizes = [1, 128], strides = [1, 1]} : vector<1x512xf32> to vector<1x128xf32>
    %725 = arith.negf %724 : vector<1x128xf32>
    %726 = math.exp %725 : vector<1x128xf32>
    %cst_136 = arith.constant 1.000000e+00 : f32
    %727 = vector.broadcast %cst_136 : f32 to vector<1x128xf32>
    %728 = arith.addf %727, %726 : vector<1x128xf32>
    %729 = arith.divf %727, %728 : vector<1x128xf32>
    %730 = arith.negf %713 : vector<1x128xf32>
    %731 = math.exp %730 : vector<1x128xf32>
    %cst_137 = arith.constant 1.000000e+00 : f32
    %732 = vector.broadcast %cst_137 : f32 to vector<1x128xf32>
    %733 = arith.addf %732, %731 : vector<1x128xf32>
    %734 = arith.divf %732, %733 : vector<1x128xf32>
    %735 = arith.mulf %720, %734 : vector<1x128xf32>
    %736 = arith.mulf %735, %723 : vector<1x128xf32>
    %737 = arith.mulf %721, %658 : vector<1x128xf32>
    %738 = arith.addf %736, %737 : vector<1x128xf32>
    %739 = math.tanh %738 : vector<1x128xf32>
    %740 = arith.mulf %729, %739 : vector<1x128xf32>
    %741 = arith.truncf %740 : vector<1x128xf32> to vector<1x128xbf16>
    %742 = arith.truncf %738 : vector<1x128xf32> to vector<1x128xbf16>
    %743 = tpu.concatenate %741, %742 in 1 : vector<1x128xbf16>, vector<1x128xbf16> -> vector<1x256xbf16>
    %cst_138 = arith.constant dense<0.000000e+00> : vector<1x512xf32>
    %744 = tpu.matmul %703, %95, %cst_138 {dimension_numbers = #tpu.dot_dimension_numbers<[1], [0], [0], [1], [0, 0, 1, 1], [], []>} : vector<1x256xbf16>, vector<256x512xbf16>, vector<1x512xf32> -> vector<1x512xf32>
    %cst_139 = arith.constant dense<0.000000e+00> : vector<1x640xf32>
    %745 = tpu.matmul %741, %94, %cst_139 {dimension_numbers = #tpu.dot_dimension_numbers<[1], [0], [0], [1], [0, 0, 1, 1], [], []>} : vector<1x128xbf16>, vector<128x640xbf16>, vector<1x640xf32> -> vector<1x640xf32>
    %746 = vector.extract_strided_slice %91 {offsets = [0, 0], sizes = [1, 640], strides = [1, 1]} : vector<4x640xf32> to vector<1x640xf32>
    %747 = vector.extract_strided_slice %745 {offsets = [0, 0], sizes = [1, 512], strides = [1, 1]} : vector<1x640xf32> to vector<1x512xf32>
    %748 = arith.addf %747, %744 : vector<1x512xf32>
    %749 = vector.extract_strided_slice %746 {offsets = [0, 0], sizes = [1, 512], strides = [1, 1]} : vector<1x640xf32> to vector<1x512xf32>
    %750 = arith.addf %748, %749 : vector<1x512xf32>
    %751 = vector.extract_strided_slice %745 {offsets = [0, 512], sizes = [1, 128], strides = [1, 1]} : vector<1x640xf32> to vector<1x128xf32>
    %752 = vector.extract_strided_slice %746 {offsets = [0, 512], sizes = [1, 128], strides = [1, 1]} : vector<1x640xf32> to vector<1x128xf32>
    %753 = arith.addf %751, %752 : vector<1x128xf32>
    %754 = vector.extract_strided_slice %750 {offsets = [0, 0], sizes = [1, 256], strides = [1, 1]} : vector<1x512xf32> to vector<1x256xf32>
    %755 = arith.negf %754 : vector<1x256xf32>
    %756 = math.exp %755 : vector<1x256xf32>
    %cst_140 = arith.constant 1.000000e+00 : f32
    %757 = vector.broadcast %cst_140 : f32 to vector<1x256xf32>
    %758 = arith.addf %757, %756 : vector<1x256xf32>
    %759 = arith.divf %757, %758 : vector<1x256xf32>
    %760 = vector.extract_strided_slice %759 {offsets = [0, 0], sizes = [1, 128], strides = [1, 1]} : vector<1x256xf32> to vector<1x128xf32>
    %761 = vector.extract_strided_slice %759 {offsets = [0, 128], sizes = [1, 128], strides = [1, 1]} : vector<1x256xf32> to vector<1x128xf32>
    %762 = vector.extract_strided_slice %750 {offsets = [0, 256], sizes = [1, 128], strides = [1, 1]} : vector<1x512xf32> to vector<1x128xf32>
    %763 = math.tanh %762 : vector<1x128xf32>
    %764 = vector.extract_strided_slice %750 {offsets = [0, 384], sizes = [1, 128], strides = [1, 1]} : vector<1x512xf32> to vector<1x128xf32>
    %765 = arith.negf %764 : vector<1x128xf32>
    %766 = math.exp %765 : vector<1x128xf32>
    %cst_141 = arith.constant 1.000000e+00 : f32
    %767 = vector.broadcast %cst_141 : f32 to vector<1x128xf32>
    %768 = arith.addf %767, %766 : vector<1x128xf32>
    %769 = arith.divf %767, %768 : vector<1x128xf32>
    %770 = arith.negf %753 : vector<1x128xf32>
    %771 = math.exp %770 : vector<1x128xf32>
    %cst_142 = arith.constant 1.000000e+00 : f32
    %772 = vector.broadcast %cst_142 : f32 to vector<1x128xf32>
    %773 = arith.addf %772, %771 : vector<1x128xf32>
    %774 = arith.divf %772, %773 : vector<1x128xf32>
    %775 = arith.mulf %760, %774 : vector<1x128xf32>
    %776 = arith.mulf %775, %763 : vector<1x128xf32>
    %777 = arith.mulf %761, %698 : vector<1x128xf32>
    %778 = arith.addf %776, %777 : vector<1x128xf32>
    %779 = math.tanh %778 : vector<1x128xf32>
    %780 = arith.mulf %769, %779 : vector<1x128xf32>
    %781 = arith.truncf %780 : vector<1x128xf32> to vector<1x128xbf16>
    %782 = arith.truncf %778 : vector<1x128xf32> to vector<1x128xbf16>
    %783 = tpu.concatenate %781, %782 in 1 : vector<1x128xbf16>, vector<1x128xbf16> -> vector<1x256xbf16>
    %cst_143 = arith.constant dense<0.000000e+00> : vector<1x640xf32>
    %784 = tpu.matmul %781, %92, %cst_143 {dimension_numbers = #tpu.dot_dimension_numbers<[1], [0], [0], [1], [0, 0, 1, 1], [], []>} : vector<1x128xbf16>, vector<128x640xbf16>, vector<1x640xf32> -> vector<1x640xf32>
    %cst_144 = arith.constant dense<0.000000e+00> : vector<1x512xf32>
    %785 = tpu.matmul %743, %93, %cst_144 {dimension_numbers = #tpu.dot_dimension_numbers<[1], [0], [0], [1], [0, 0, 1, 1], [], []>} : vector<1x256xbf16>, vector<256x512xbf16>, vector<1x512xf32> -> vector<1x512xf32>
    %786 = vector.extract_strided_slice %53 {offsets = [1, 0], sizes = [1, 640], strides = [1, 1]} : vector<4x640xf32> to vector<1x640xf32>
    %787 = vector.extract_strided_slice %784 {offsets = [0, 0], sizes = [1, 512], strides = [1, 1]} : vector<1x640xf32> to vector<1x512xf32>
    %788 = arith.addf %787, %785 : vector<1x512xf32>
    %789 = vector.extract_strided_slice %786 {offsets = [0, 0], sizes = [1, 512], strides = [1, 1]} : vector<1x640xf32> to vector<1x512xf32>
    %790 = arith.addf %788, %789 : vector<1x512xf32>
    %791 = vector.extract_strided_slice %784 {offsets = [0, 512], sizes = [1, 128], strides = [1, 1]} : vector<1x640xf32> to vector<1x128xf32>
    %792 = vector.extract_strided_slice %786 {offsets = [0, 512], sizes = [1, 128], strides = [1, 1]} : vector<1x640xf32> to vector<1x128xf32>
    %793 = arith.addf %791, %792 : vector<1x128xf32>
    %794 = vector.extract_strided_slice %790 {offsets = [0, 0], sizes = [1, 256], strides = [1, 1]} : vector<1x512xf32> to vector<1x256xf32>
    %795 = arith.negf %794 : vector<1x256xf32>
    %796 = math.exp %795 : vector<1x256xf32>
    %cst_145 = arith.constant 1.000000e+00 : f32
    %797 = vector.broadcast %cst_145 : f32 to vector<1x256xf32>
    %798 = arith.addf %797, %796 : vector<1x256xf32>
    %799 = arith.divf %797, %798 : vector<1x256xf32>
    %800 = vector.extract_strided_slice %799 {offsets = [0, 0], sizes = [1, 128], strides = [1, 1]} : vector<1x256xf32> to vector<1x128xf32>
    %801 = vector.extract_strided_slice %799 {offsets = [0, 128], sizes = [1, 128], strides = [1, 1]} : vector<1x256xf32> to vector<1x128xf32>
    %802 = vector.extract_strided_slice %790 {offsets = [0, 256], sizes = [1, 128], strides = [1, 1]} : vector<1x512xf32> to vector<1x128xf32>
    %803 = math.tanh %802 : vector<1x128xf32>
    %804 = vector.extract_strided_slice %790 {offsets = [0, 384], sizes = [1, 128], strides = [1, 1]} : vector<1x512xf32> to vector<1x128xf32>
    %805 = arith.negf %804 : vector<1x128xf32>
    %806 = math.exp %805 : vector<1x128xf32>
    %cst_146 = arith.constant 1.000000e+00 : f32
    %807 = vector.broadcast %cst_146 : f32 to vector<1x128xf32>
    %808 = arith.addf %807, %806 : vector<1x128xf32>
    %809 = arith.divf %807, %808 : vector<1x128xf32>
    %810 = arith.negf %793 : vector<1x128xf32>
    %811 = math.exp %810 : vector<1x128xf32>
    %cst_147 = arith.constant 1.000000e+00 : f32
    %812 = vector.broadcast %cst_147 : f32 to vector<1x128xf32>
    %813 = arith.addf %812, %811 : vector<1x128xf32>
    %814 = arith.divf %812, %813 : vector<1x128xf32>
    %815 = arith.mulf %800, %814 : vector<1x128xf32>
    %816 = arith.mulf %815, %803 : vector<1x128xf32>
    %817 = arith.mulf %801, %738 : vector<1x128xf32>
    %818 = arith.addf %816, %817 : vector<1x128xf32>
    %819 = math.tanh %818 : vector<1x128xf32>
    %820 = arith.mulf %809, %819 : vector<1x128xf32>
    %821 = arith.truncf %820 : vector<1x128xf32> to vector<1x128xbf16>
    %822 = arith.truncf %818 : vector<1x128xf32> to vector<1x128xbf16>
    %823 = tpu.concatenate %821, %822 in 1 : vector<1x128xbf16>, vector<1x128xbf16> -> vector<1x256xbf16>
    %cst_148 = arith.constant dense<0.000000e+00> : vector<1x512xf32>
    %824 = tpu.matmul %783, %95, %cst_148 {dimension_numbers = #tpu.dot_dimension_numbers<[1], [0], [0], [1], [0, 0, 1, 1], [], []>} : vector<1x256xbf16>, vector<256x512xbf16>, vector<1x512xf32> -> vector<1x512xf32>
    %cst_149 = arith.constant dense<0.000000e+00> : vector<1x640xf32>
    %825 = tpu.matmul %821, %94, %cst_149 {dimension_numbers = #tpu.dot_dimension_numbers<[1], [0], [0], [1], [0, 0, 1, 1], [], []>} : vector<1x128xbf16>, vector<128x640xbf16>, vector<1x640xf32> -> vector<1x640xf32>
    %826 = vector.extract_strided_slice %91 {offsets = [1, 0], sizes = [1, 640], strides = [1, 1]} : vector<4x640xf32> to vector<1x640xf32>
    %827 = vector.extract_strided_slice %825 {offsets = [0, 0], sizes = [1, 512], strides = [1, 1]} : vector<1x640xf32> to vector<1x512xf32>
    %828 = arith.addf %827, %824 : vector<1x512xf32>
    %829 = vector.extract_strided_slice %826 {offsets = [0, 0], sizes = [1, 512], strides = [1, 1]} : vector<1x640xf32> to vector<1x512xf32>
    %830 = arith.addf %828, %829 : vector<1x512xf32>
    %831 = vector.extract_strided_slice %825 {offsets = [0, 512], sizes = [1, 128], strides = [1, 1]} : vector<1x640xf32> to vector<1x128xf32>
    %832 = vector.extract_strided_slice %826 {offsets = [0, 512], sizes = [1, 128], strides = [1, 1]} : vector<1x640xf32> to vector<1x128xf32>
    %833 = arith.addf %831, %832 : vector<1x128xf32>
    %834 = vector.extract_strided_slice %830 {offsets = [0, 0], sizes = [1, 256], strides = [1, 1]} : vector<1x512xf32> to vector<1x256xf32>
    %835 = arith.negf %834 : vector<1x256xf32>
    %836 = math.exp %835 : vector<1x256xf32>
    %cst_150 = arith.constant 1.000000e+00 : f32
    %837 = vector.broadcast %cst_150 : f32 to vector<1x256xf32>
    %838 = arith.addf %837, %836 : vector<1x256xf32>
    %839 = arith.divf %837, %838 : vector<1x256xf32>
    %840 = vector.extract_strided_slice %839 {offsets = [0, 0], sizes = [1, 128], strides = [1, 1]} : vector<1x256xf32> to vector<1x128xf32>
    %841 = vector.extract_strided_slice %839 {offsets = [0, 128], sizes = [1, 128], strides = [1, 1]} : vector<1x256xf32> to vector<1x128xf32>
    %842 = vector.extract_strided_slice %830 {offsets = [0, 256], sizes = [1, 128], strides = [1, 1]} : vector<1x512xf32> to vector<1x128xf32>
    %843 = math.tanh %842 : vector<1x128xf32>
    %844 = vector.extract_strided_slice %830 {offsets = [0, 384], sizes = [1, 128], strides = [1, 1]} : vector<1x512xf32> to vector<1x128xf32>
    %845 = arith.negf %844 : vector<1x128xf32>
    %846 = math.exp %845 : vector<1x128xf32>
    %cst_151 = arith.constant 1.000000e+00 : f32
    %847 = vector.broadcast %cst_151 : f32 to vector<1x128xf32>
    %848 = arith.addf %847, %846 : vector<1x128xf32>
    %849 = arith.divf %847, %848 : vector<1x128xf32>
    %850 = arith.negf %833 : vector<1x128xf32>
    %851 = math.exp %850 : vector<1x128xf32>
    %cst_152 = arith.constant 1.000000e+00 : f32
    %852 = vector.broadcast %cst_152 : f32 to vector<1x128xf32>
    %853 = arith.addf %852, %851 : vector<1x128xf32>
    %854 = arith.divf %852, %853 : vector<1x128xf32>
    %855 = arith.mulf %840, %854 : vector<1x128xf32>
    %856 = arith.mulf %855, %843 : vector<1x128xf32>
    %857 = arith.mulf %841, %778 : vector<1x128xf32>
    %858 = arith.addf %856, %857 : vector<1x128xf32>
    %859 = math.tanh %858 : vector<1x128xf32>
    %860 = arith.mulf %849, %859 : vector<1x128xf32>
    %861 = arith.truncf %860 : vector<1x128xf32> to vector<1x128xbf16>
    %862 = arith.truncf %858 : vector<1x128xf32> to vector<1x128xbf16>
    %863 = tpu.concatenate %861, %862 in 1 : vector<1x128xbf16>, vector<1x128xbf16> -> vector<1x256xbf16>
    %cst_153 = arith.constant dense<0.000000e+00> : vector<1x640xf32>
    %864 = tpu.matmul %861, %92, %cst_153 {dimension_numbers = #tpu.dot_dimension_numbers<[1], [0], [0], [1], [0, 0, 1, 1], [], []>} : vector<1x128xbf16>, vector<128x640xbf16>, vector<1x640xf32> -> vector<1x640xf32>
    %cst_154 = arith.constant dense<0.000000e+00> : vector<1x512xf32>
    %865 = tpu.matmul %823, %93, %cst_154 {dimension_numbers = #tpu.dot_dimension_numbers<[1], [0], [0], [1], [0, 0, 1, 1], [], []>} : vector<1x256xbf16>, vector<256x512xbf16>, vector<1x512xf32> -> vector<1x512xf32>
    %866 = vector.extract_strided_slice %53 {offsets = [2, 0], sizes = [1, 640], strides = [1, 1]} : vector<4x640xf32> to vector<1x640xf32>
    %867 = vector.extract_strided_slice %864 {offsets = [0, 0], sizes = [1, 512], strides = [1, 1]} : vector<1x640xf32> to vector<1x512xf32>
    %868 = arith.addf %867, %865 : vector<1x512xf32>
    %869 = vector.extract_strided_slice %866 {offsets = [0, 0], sizes = [1, 512], strides = [1, 1]} : vector<1x640xf32> to vector<1x512xf32>
    %870 = arith.addf %868, %869 : vector<1x512xf32>
    %871 = vector.extract_strided_slice %864 {offsets = [0, 512], sizes = [1, 128], strides = [1, 1]} : vector<1x640xf32> to vector<1x128xf32>
    %872 = vector.extract_strided_slice %866 {offsets = [0, 512], sizes = [1, 128], strides = [1, 1]} : vector<1x640xf32> to vector<1x128xf32>
    %873 = arith.addf %871, %872 : vector<1x128xf32>
    %874 = vector.extract_strided_slice %870 {offsets = [0, 0], sizes = [1, 256], strides = [1, 1]} : vector<1x512xf32> to vector<1x256xf32>
    %875 = arith.negf %874 : vector<1x256xf32>
    %876 = math.exp %875 : vector<1x256xf32>
    %cst_155 = arith.constant 1.000000e+00 : f32
    %877 = vector.broadcast %cst_155 : f32 to vector<1x256xf32>
    %878 = arith.addf %877, %876 : vector<1x256xf32>
    %879 = arith.divf %877, %878 : vector<1x256xf32>
    %880 = vector.extract_strided_slice %879 {offsets = [0, 0], sizes = [1, 128], strides = [1, 1]} : vector<1x256xf32> to vector<1x128xf32>
    %881 = vector.extract_strided_slice %879 {offsets = [0, 128], sizes = [1, 128], strides = [1, 1]} : vector<1x256xf32> to vector<1x128xf32>
    %882 = vector.extract_strided_slice %870 {offsets = [0, 256], sizes = [1, 128], strides = [1, 1]} : vector<1x512xf32> to vector<1x128xf32>
    %883 = math.tanh %882 : vector<1x128xf32>
    %884 = vector.extract_strided_slice %870 {offsets = [0, 384], sizes = [1, 128], strides = [1, 1]} : vector<1x512xf32> to vector<1x128xf32>
    %885 = arith.negf %884 : vector<1x128xf32>
    %886 = math.exp %885 : vector<1x128xf32>
    %cst_156 = arith.constant 1.000000e+00 : f32
    %887 = vector.broadcast %cst_156 : f32 to vector<1x128xf32>
    %888 = arith.addf %887, %886 : vector<1x128xf32>
    %889 = arith.divf %887, %888 : vector<1x128xf32>
    %890 = arith.negf %873 : vector<1x128xf32>
    %891 = math.exp %890 : vector<1x128xf32>
    %cst_157 = arith.constant 1.000000e+00 : f32
    %892 = vector.broadcast %cst_157 : f32 to vector<1x128xf32>
    %893 = arith.addf %892, %891 : vector<1x128xf32>
    %894 = arith.divf %892, %893 : vector<1x128xf32>
    %895 = arith.mulf %880, %894 : vector<1x128xf32>
    %896 = arith.mulf %895, %883 : vector<1x128xf32>
    %897 = arith.mulf %881, %818 : vector<1x128xf32>
    %898 = arith.addf %896, %897 : vector<1x128xf32>
    %899 = math.tanh %898 : vector<1x128xf32>
    %900 = arith.mulf %889, %899 : vector<1x128xf32>
    %901 = arith.truncf %900 : vector<1x128xf32> to vector<1x128xbf16>
    %902 = arith.truncf %898 : vector<1x128xf32> to vector<1x128xbf16>
    %903 = tpu.concatenate %901, %902 in 1 : vector<1x128xbf16>, vector<1x128xbf16> -> vector<1x256xbf16>
    %cst_158 = arith.constant dense<0.000000e+00> : vector<1x512xf32>
    %904 = tpu.matmul %863, %95, %cst_158 {dimension_numbers = #tpu.dot_dimension_numbers<[1], [0], [0], [1], [0, 0, 1, 1], [], []>} : vector<1x256xbf16>, vector<256x512xbf16>, vector<1x512xf32> -> vector<1x512xf32>
    %cst_159 = arith.constant dense<0.000000e+00> : vector<1x640xf32>
    %905 = tpu.matmul %901, %94, %cst_159 {dimension_numbers = #tpu.dot_dimension_numbers<[1], [0], [0], [1], [0, 0, 1, 1], [], []>} : vector<1x128xbf16>, vector<128x640xbf16>, vector<1x640xf32> -> vector<1x640xf32>
    %906 = vector.extract_strided_slice %91 {offsets = [2, 0], sizes = [1, 640], strides = [1, 1]} : vector<4x640xf32> to vector<1x640xf32>
    %907 = vector.extract_strided_slice %905 {offsets = [0, 0], sizes = [1, 512], strides = [1, 1]} : vector<1x640xf32> to vector<1x512xf32>
    %908 = arith.addf %907, %904 : vector<1x512xf32>
    %909 = vector.extract_strided_slice %906 {offsets = [0, 0], sizes = [1, 512], strides = [1, 1]} : vector<1x640xf32> to vector<1x512xf32>
    %910 = arith.addf %908, %909 : vector<1x512xf32>
    %911 = vector.extract_strided_slice %905 {offsets = [0, 512], sizes = [1, 128], strides = [1, 1]} : vector<1x640xf32> to vector<1x128xf32>
    %912 = vector.extract_strided_slice %906 {offsets = [0, 512], sizes = [1, 128], strides = [1, 1]} : vector<1x640xf32> to vector<1x128xf32>
    %913 = arith.addf %911, %912 : vector<1x128xf32>
    %914 = vector.extract_strided_slice %910 {offsets = [0, 0], sizes = [1, 256], strides = [1, 1]} : vector<1x512xf32> to vector<1x256xf32>
    %915 = arith.negf %914 : vector<1x256xf32>
    %916 = math.exp %915 : vector<1x256xf32>
    %cst_160 = arith.constant 1.000000e+00 : f32
    %917 = vector.broadcast %cst_160 : f32 to vector<1x256xf32>
    %918 = arith.addf %917, %916 : vector<1x256xf32>
    %919 = arith.divf %917, %918 : vector<1x256xf32>
    %920 = vector.extract_strided_slice %919 {offsets = [0, 0], sizes = [1, 128], strides = [1, 1]} : vector<1x256xf32> to vector<1x128xf32>
    %921 = vector.extract_strided_slice %919 {offsets = [0, 128], sizes = [1, 128], strides = [1, 1]} : vector<1x256xf32> to vector<1x128xf32>
    %922 = vector.extract_strided_slice %910 {offsets = [0, 256], sizes = [1, 128], strides = [1, 1]} : vector<1x512xf32> to vector<1x128xf32>
    %923 = math.tanh %922 : vector<1x128xf32>
    %924 = vector.extract_strided_slice %910 {offsets = [0, 384], sizes = [1, 128], strides = [1, 1]} : vector<1x512xf32> to vector<1x128xf32>
    %925 = arith.negf %924 : vector<1x128xf32>
    %926 = math.exp %925 : vector<1x128xf32>
    %cst_161 = arith.constant 1.000000e+00 : f32
    %927 = vector.broadcast %cst_161 : f32 to vector<1x128xf32>
    %928 = arith.addf %927, %926 : vector<1x128xf32>
    %929 = arith.divf %927, %928 : vector<1x128xf32>
    %930 = arith.negf %913 : vector<1x128xf32>
    %931 = math.exp %930 : vector<1x128xf32>
    %cst_162 = arith.constant 1.000000e+00 : f32
    %932 = vector.broadcast %cst_162 : f32 to vector<1x128xf32>
    %933 = arith.addf %932, %931 : vector<1x128xf32>
    %934 = arith.divf %932, %933 : vector<1x128xf32>
    %935 = arith.mulf %920, %934 : vector<1x128xf32>
    %936 = arith.mulf %935, %923 : vector<1x128xf32>
    %937 = arith.mulf %921, %858 : vector<1x128xf32>
    %938 = arith.addf %936, %937 : vector<1x128xf32>
    %939 = math.tanh %938 : vector<1x128xf32>
    %940 = arith.mulf %929, %939 : vector<1x128xf32>
    %941 = arith.truncf %940 : vector<1x128xf32> to vector<1x128xbf16>
    %942 = arith.truncf %938 : vector<1x128xf32> to vector<1x128xbf16>
    %943 = tpu.concatenate %941, %942 in 1 : vector<1x128xbf16>, vector<1x128xbf16> -> vector<1x256xbf16>
    %cst_163 = arith.constant dense<0.000000e+00> : vector<1x640xf32>
    %944 = tpu.matmul %941, %92, %cst_163 {dimension_numbers = #tpu.dot_dimension_numbers<[1], [0], [0], [1], [0, 0, 1, 1], [], []>} : vector<1x128xbf16>, vector<128x640xbf16>, vector<1x640xf32> -> vector<1x640xf32>
    %cst_164 = arith.constant dense<0.000000e+00> : vector<1x512xf32>
    %945 = tpu.matmul %903, %93, %cst_164 {dimension_numbers = #tpu.dot_dimension_numbers<[1], [0], [0], [1], [0, 0, 1, 1], [], []>} : vector<1x256xbf16>, vector<256x512xbf16>, vector<1x512xf32> -> vector<1x512xf32>
    %946 = vector.extract_strided_slice %53 {offsets = [3, 0], sizes = [1, 640], strides = [1, 1]} : vector<4x640xf32> to vector<1x640xf32>
    %947 = vector.extract_strided_slice %944 {offsets = [0, 0], sizes = [1, 512], strides = [1, 1]} : vector<1x640xf32> to vector<1x512xf32>
    %948 = arith.addf %947, %945 : vector<1x512xf32>
    %949 = vector.extract_strided_slice %946 {offsets = [0, 0], sizes = [1, 512], strides = [1, 1]} : vector<1x640xf32> to vector<1x512xf32>
    %950 = arith.addf %948, %949 : vector<1x512xf32>
    %951 = vector.extract_strided_slice %944 {offsets = [0, 512], sizes = [1, 128], strides = [1, 1]} : vector<1x640xf32> to vector<1x128xf32>
    %952 = vector.extract_strided_slice %946 {offsets = [0, 512], sizes = [1, 128], strides = [1, 1]} : vector<1x640xf32> to vector<1x128xf32>
    %953 = arith.addf %951, %952 : vector<1x128xf32>
    %954 = vector.extract_strided_slice %950 {offsets = [0, 0], sizes = [1, 256], strides = [1, 1]} : vector<1x512xf32> to vector<1x256xf32>
    %955 = arith.negf %954 : vector<1x256xf32>
    %956 = math.exp %955 : vector<1x256xf32>
    %cst_165 = arith.constant 1.000000e+00 : f32
    %957 = vector.broadcast %cst_165 : f32 to vector<1x256xf32>
    %958 = arith.addf %957, %956 : vector<1x256xf32>
    %959 = arith.divf %957, %958 : vector<1x256xf32>
    %960 = vector.extract_strided_slice %959 {offsets = [0, 0], sizes = [1, 128], strides = [1, 1]} : vector<1x256xf32> to vector<1x128xf32>
    %961 = vector.extract_strided_slice %959 {offsets = [0, 128], sizes = [1, 128], strides = [1, 1]} : vector<1x256xf32> to vector<1x128xf32>
    %962 = vector.extract_strided_slice %950 {offsets = [0, 256], sizes = [1, 128], strides = [1, 1]} : vector<1x512xf32> to vector<1x128xf32>
    %963 = math.tanh %962 : vector<1x128xf32>
    %964 = vector.extract_strided_slice %950 {offsets = [0, 384], sizes = [1, 128], strides = [1, 1]} : vector<1x512xf32> to vector<1x128xf32>
    %965 = arith.negf %964 : vector<1x128xf32>
    %966 = math.exp %965 : vector<1x128xf32>
    %cst_166 = arith.constant 1.000000e+00 : f32
    %967 = vector.broadcast %cst_166 : f32 to vector<1x128xf32>
    %968 = arith.addf %967, %966 : vector<1x128xf32>
    %969 = arith.divf %967, %968 : vector<1x128xf32>
    %970 = arith.negf %953 : vector<1x128xf32>
    %971 = math.exp %970 : vector<1x128xf32>
    %cst_167 = arith.constant 1.000000e+00 : f32
    %972 = vector.broadcast %cst_167 : f32 to vector<1x128xf32>
    %973 = arith.addf %972, %971 : vector<1x128xf32>
    %974 = arith.divf %972, %973 : vector<1x128xf32>
    %975 = arith.mulf %960, %974 : vector<1x128xf32>
    %976 = arith.mulf %975, %963 : vector<1x128xf32>
    %977 = arith.mulf %961, %898 : vector<1x128xf32>
    %978 = arith.addf %976, %977 : vector<1x128xf32>
    %979 = math.tanh %978 : vector<1x128xf32>
    %980 = arith.mulf %969, %979 : vector<1x128xf32>
    %981 = arith.truncf %980 : vector<1x128xf32> to vector<1x128xbf16>
    %cst_168 = arith.constant dense<0.000000e+00> : vector<1x512xf32>
    %982 = tpu.matmul %943, %95, %cst_168 {dimension_numbers = #tpu.dot_dimension_numbers<[1], [0], [0], [1], [0, 0, 1, 1], [], []>} : vector<1x256xbf16>, vector<256x512xbf16>, vector<1x512xf32> -> vector<1x512xf32>
    %cst_169 = arith.constant dense<0.000000e+00> : vector<1x640xf32>
    %983 = tpu.matmul %981, %94, %cst_169 {dimension_numbers = #tpu.dot_dimension_numbers<[1], [0], [0], [1], [0, 0, 1, 1], [], []>} : vector<1x128xbf16>, vector<128x640xbf16>, vector<1x640xf32> -> vector<1x640xf32>
    %984 = vector.extract_strided_slice %91 {offsets = [3, 0], sizes = [1, 640], strides = [1, 1]} : vector<4x640xf32> to vector<1x640xf32>
    %985 = vector.extract_strided_slice %983 {offsets = [0, 0], sizes = [1, 512], strides = [1, 1]} : vector<1x640xf32> to vector<1x512xf32>
    %986 = arith.addf %985, %982 : vector<1x512xf32>
    %987 = vector.extract_strided_slice %984 {offsets = [0, 0], sizes = [1, 512], strides = [1, 1]} : vector<1x640xf32> to vector<1x512xf32>
    %988 = arith.addf %986, %987 : vector<1x512xf32>
    %989 = vector.extract_strided_slice %983 {offsets = [0, 512], sizes = [1, 128], strides = [1, 1]} : vector<1x640xf32> to vector<1x128xf32>
    %990 = vector.extract_strided_slice %984 {offsets = [0, 512], sizes = [1, 128], strides = [1, 1]} : vector<1x640xf32> to vector<1x128xf32>
    %991 = arith.addf %989, %990 : vector<1x128xf32>
    %992 = vector.extract_strided_slice %988 {offsets = [0, 0], sizes = [1, 256], strides = [1, 1]} : vector<1x512xf32> to vector<1x256xf32>
    %993 = arith.negf %992 : vector<1x256xf32>
    %994 = math.exp %993 : vector<1x256xf32>
    %cst_170 = arith.constant 1.000000e+00 : f32
    %995 = vector.broadcast %cst_170 : f32 to vector<1x256xf32>
    %996 = arith.addf %995, %994 : vector<1x256xf32>
    %997 = arith.divf %995, %996 : vector<1x256xf32>
    %998 = vector.extract_strided_slice %997 {offsets = [0, 0], sizes = [1, 128], strides = [1, 1]} : vector<1x256xf32> to vector<1x128xf32>
    %999 = vector.extract_strided_slice %997 {offsets = [0, 128], sizes = [1, 128], strides = [1, 1]} : vector<1x256xf32> to vector<1x128xf32>
    %1000 = vector.extract_strided_slice %988 {offsets = [0, 256], sizes = [1, 128], strides = [1, 1]} : vector<1x512xf32> to vector<1x128xf32>
    %1001 = math.tanh %1000 : vector<1x128xf32>
    %1002 = vector.extract_strided_slice %988 {offsets = [0, 384], sizes = [1, 128], strides = [1, 1]} : vector<1x512xf32> to vector<1x128xf32>
    %1003 = arith.negf %1002 : vector<1x128xf32>
    %1004 = math.exp %1003 : vector<1x128xf32>
    %cst_171 = arith.constant 1.000000e+00 : f32
    %1005 = vector.broadcast %cst_171 : f32 to vector<1x128xf32>
    %1006 = arith.addf %1005, %1004 : vector<1x128xf32>
    %1007 = arith.divf %1005, %1006 : vector<1x128xf32>
    %1008 = arith.negf %991 : vector<1x128xf32>
    %1009 = math.exp %1008 : vector<1x128xf32>
    %cst_172 = arith.constant 1.000000e+00 : f32
    %1010 = vector.broadcast %cst_172 : f32 to vector<1x128xf32>
    %1011 = arith.addf %1010, %1009 : vector<1x128xf32>
    %1012 = arith.divf %1010, %1011 : vector<1x128xf32>
    %1013 = arith.mulf %998, %1012 : vector<1x128xf32>
    %1014 = arith.mulf %1013, %1001 : vector<1x128xf32>
    %1015 = arith.mulf %999, %938 : vector<1x128xf32>
    %1016 = arith.addf %1014, %1015 : vector<1x128xf32>
    %1017 = math.tanh %1016 : vector<1x128xf32>
    %1018 = arith.mulf %1007, %1017 : vector<1x128xf32>
    %1019 = arith.truncf %1018 : vector<1x128xf32> to vector<1x128xbf16>
    %1020 = tpu.concatenate %781, %861, %941, %1019 in 0 : vector<1x128xbf16>, vector<1x128xbf16>, vector<1x128xbf16>, vector<1x128xbf16> -> vector<4x128xbf16>
    %c0_173 = arith.constant 0 : index
    %c0_174 = arith.constant 0 : index
    %1021 = vector.load %arg11[%c0_173, %c0_174] : memref<128x128xbf16, #tpu.memory_space<vmem>>, vector<128x128xbf16>
    %cst_175 = arith.constant dense<0.000000e+00> : vector<4x128xf32>
    %1022 = tpu.matmul %1020, %1021, %cst_175 {dimension_numbers = #tpu.dot_dimension_numbers<[1], [0], [0], [1], [0, 0, 1, 1], [], []>} : vector<4x128xbf16>, vector<128x128xbf16>, vector<4x128xf32> -> vector<4x128xf32>
    %c0_176 = arith.constant 0 : index
    %c0_177 = arith.constant 0 : index
    %1023 = vector.load %arg12[%c0_176, %c0_177] : memref<1x128xf32, #tpu.memory_space<vmem>>, vector<1x128xf32>
    %1024 = vector.broadcast %1023 : vector<1x128xf32> to vector<4x128xf32>
    %1025 = arith.addf %1022, %1024 : vector<4x128xf32>
    %c0_178 = arith.constant 0 : index
    %c0_179 = arith.constant 0 : index
    %1026 = vector.load %arg13[%c0_178, %c0_179] : memref<4x128xf32, #tpu.memory_space<vmem>>, vector<4x128xf32>
    tpu.vector_store %arg13[%c0_178, %c0_179], %1025 {strides = array<i32>} : memref<4x128xf32, #tpu.memory_space<vmem>>, vector<4x128xf32>,
    return
  }
}

</mosaic_0001>

<llo_original>
// kernel: seq_time_lstm.1
$region0: #{seq_time_lstm.1}
  #allocation0 [shape = 'u32[]', space=smem, size = 0x4, offset = 0x4, fixed_abs, tag = 'smem constant byte address 0x4 - core index']
  #allocation1 [shape = 'u32[72,128]{1,0:T(1,128)}', space=vmem, size = 0x9000, scoped, tag = 'internal scratch']
  %s0 = inlined_call_operand.vmem [shape: f32[8,128], index: 0, kind: input, shape index: {}]
  %s1 = inlined_call_operand.vmem [shape: f32[8,4], index: 1, kind: input, shape index: {}]
  %s2 = inlined_call_operand.vmem [shape: f32[4,4], index: 2, kind: input, shape index: {}]
  %s3 = inlined_call_operand.vmem [shape: bf16[128,640], index: 3, kind: input, shape index: {}]
  %s4 = inlined_call_operand.vmem [shape: bf16[256,512], index: 4, kind: input, shape index: {}]
  %s5 = inlined_call_operand.vmem [shape: f32[1,640], index: 5, kind: input, shape index: {}]
  %s6 = inlined_call_operand.vmem [shape: f32[4,256], index: 6, kind: input, shape index: {}]
  %s7 = inlined_call_operand.vmem [shape: bf16[128,640], index: 7, kind: input, shape index: {}]
  %s8 = inlined_call_operand.vmem [shape: bf16[256,512], index: 8, kind: input, shape index: {}]
  %s9 = inlined_call_operand.vmem [shape: f32[1,640], index: 9, kind: input, shape index: {}]
  %s10 = inlined_call_operand.vmem [shape: f32[4,256], index: 10, kind: input, shape index: {}]
  %s11 = inlined_call_operand.vmem [shape: bf16[128,128], index: 11, kind: input, shape index: {}]
  %s12 = inlined_call_operand.vmem [shape: f32[1,128], index: 12, kind: input, shape index: {}]
  %s13 = inlined_call_operand.hbm [shape: f32[4,128], index: 13, kind: output, shape index: {}]
  %s14 = sld [smem:[#allocation0]]
  $region62: #{seq_time_lstm.1} parent=0
    _
  %s16 = ssub.s32 1, %s14
  %s17 = scalar_select 0, %s16, %s14
  $region1: #{seq_time_lstm.1} parent=0
    #allocation2 [shape = 'u8[2048]{0}', space=vmem, size = 0x800, scoped, tag = 'output window, operand 0, single buffered']
    #allocation3 [shape = 's32[1]{0}', space=sflag, size = 0x4, scoped, tag = 'scoped memory for seq_time_lstm.1']
    %18 = vsyncpa [#allocation3], 0
    // Predicated region
    $region2: #{seq_time_lstm.1} parent=1 // pred_check
      _
    $region3: #{seq_time_lstm.1} parent=1 // pred_check_branch
      %20 = sbr.rel (0) target = $region5
    $region4: #{seq_time_lstm.1} parent=1 // pred_region
      _
    $region5: #{seq_time_lstm.1} parent=1 // pred_fallthru
      _
    // Predicated region
    $region6: #{seq_time_lstm.1} parent=1 // pred_check
      _
    $region7: #{seq_time_lstm.1} parent=1 // pred_check_branch
      %22 = sbr.rel (0) target = $region9
    $region8: #{seq_time_lstm.1} parent=1 // pred_region
      _
    $region9: #{seq_time_lstm.1} parent=1 // pred_fallthru
      _
    // Predicated region
    $region10: #{seq_time_lstm.1} parent=1 // pred_check
      _
    $region11: #{seq_time_lstm.1} parent=1 // pred_check_branch
      %24 = sbr.rel (0) target = $region13
    $region12: #{seq_time_lstm.1} parent=1 // pred_region
      _
    $region13: #{seq_time_lstm.1} parent=1 // pred_fallthru
      _
    // Predicated region
    $region14: #{seq_time_lstm.1} parent=1 // pred_check
      _
    $region15: #{seq_time_lstm.1} parent=1 // pred_check_branch
      %26 = sbr.rel (0) target = $region17
    $region16: #{seq_time_lstm.1} parent=1 // pred_region
      _
    $region17: #{seq_time_lstm.1} parent=1 // pred_fallthru
      _
    // Predicated region
    $region18: #{seq_time_lstm.1} parent=1 // pred_check
      _
    $region19: #{seq_time_lstm.1} parent=1 // pred_check_branch
      %28 = sbr.rel (0) target = $region21
    $region20: #{seq_time_lstm.1} parent=1 // pred_region
      _
    $region21: #{seq_time_lstm.1} parent=1 // pred_fallthru
      _
    // Predicated region
    $region22: #{seq_time_lstm.1} parent=1 // pred_check
      _
    $region23: #{seq_time_lstm.1} parent=1 // pred_check_branch
      %30 = sbr.rel (0) target = $region25
    $region24: #{seq_time_lstm.1} parent=1 // pred_region
      _
    $region25: #{seq_time_lstm.1} parent=1 // pred_fallthru
      _
    // Predicated region
    $region26: #{seq_time_lstm.1} parent=1 // pred_check
      _
    $region27: #{seq_time_lstm.1} parent=1 // pred_check_branch
      %32 = sbr.rel (0) target = $region29
    $region28: #{seq_time_lstm.1} parent=1 // pred_region
      _
    $region29: #{seq_time_lstm.1} parent=1 // pred_fallthru
      _
    // Predicated region
    $region30: #{seq_time_lstm.1} parent=1 // pred_check
      _
    $region31: #{seq_time_lstm.1} parent=1 // pred_check_branch
      %34 = sbr.rel (0) target = $region33
    $region32: #{seq_time_lstm.1} parent=1 // pred_region
      _
    $region33: #{seq_time_lstm.1} parent=1 // pred_fallthru
      _
    // Predicated region
    $region34: #{seq_time_lstm.1} parent=1 // pred_check
      _
    $region35: #{seq_time_lstm.1} parent=1 // pred_check_branch
      %36 = sbr.rel (0) target = $region37
    $region36: #{seq_time_lstm.1} parent=1 // pred_region
      _
    $region37: #{seq_time_lstm.1} parent=1 // pred_fallthru
      _
    // Predicated region
    $region38: #{seq_time_lstm.1} parent=1 // pred_check
      _
    $region39: #{seq_time_lstm.1} parent=1 // pred_check_branch
      %38 = sbr.rel (0) target = $region41
    $region40: #{seq_time_lstm.1} parent=1 // pred_region
      _
    $region41: #{seq_time_lstm.1} parent=1 // pred_fallthru
      _
    // Predicated region
    $region42: #{seq_time_lstm.1} parent=1 // pred_check
      _
    $region43: #{seq_time_lstm.1} parent=1 // pred_check_branch
      %40 = sbr.rel (0) target = $region45
    $region44: #{seq_time_lstm.1} parent=1 // pred_region
      _
    $region45: #{seq_time_lstm.1} parent=1 // pred_fallthru
      _
    // Predicated region
    $region46: #{seq_time_lstm.1} parent=1 // pred_check
      _
    $region47: #{seq_time_lstm.1} parent=1 // pred_check_branch
      %42 = sbr.rel (0) target = $region49
    $region48: #{seq_time_lstm.1} parent=1 // pred_region
      _
    $region49: #{seq_time_lstm.1} parent=1 // pred_fallthru
      _
    // Predicated region
    $region50: #{seq_time_lstm.1} parent=1 // pred_check
      _
    $region51: #{seq_time_lstm.1} parent=1 // pred_check_branch
      %44 = sbr.rel (0) target = $region53
    $region52: #{seq_time_lstm.1} parent=1 // pred_region
      _
    $region53: #{seq_time_lstm.1} parent=1 // pred_fallthru
      _
    %v46 = vld [vmem:[%s1] sm:$0xff]
    %vm47 = vcmask 31744
    %v48 = vsel %vm47, %v46, -inf
    %49 = vmax.xlane.f32.xlu0 %v48
    %v50 = vpop.xlane.xlu0 %49
    %v51 = vrot.slane %v50, 4
    %v52 = vmax.f32 %v50, %v51
    %v53 = vrot.slane %v52, 2
    %v54 = vmax.f32 %v52, %v53
    %v55 = vrot.slane %v54, 1
    %v56 = vmax.f32 %v54, %v55
    %s57 = vtos %v56
    %v58 = vstv %s57
    %v59 = vrcp.pop %v58
    %v60 = vmul.f32 %v58, %v59
    %v61 = vsub.f32 1.0, %v60
    %v62 = vmul.f32 %v59, %v61
    %v63 = vadd.f32 %v59, %v62
    %vm64 = vweird.f32 %v58
    %vm65 = vweird.f32 %v59
    %vm66 = vmor %vm64, %vm65
    %v67 = vsel %vm66, %v59, %v63
    %v68 = vand.u32 2147483647, %v58
    %vm69 = vcmp.eq.f32.partialorder %v68, 8.507059e+37
    %v70 = vand.u32 %v58, 2147483648
    %v71 = vor.u32 1.1754944e-38, %v70
    %v72 = vsel %vm69, %v71, %v67
    %v73 = vmul.f32 %v46, %v72
    %v74 = vld [vmem:[%s2] sm:$0xf]
    %vm75 = vcmask 27648
    %v76 = vsel %vm75, %v74, -inf
    %77 = vmax.xlane.f32.xlu0 %v76
    %v78 = vpop.xlane.xlu0 %77
    %v79 = vrot.slane %v78, 4
    %v80 = vmax.f32 %v78, %v79
    %v81 = vrot.slane %v80, 2
    %v82 = vmax.f32 %v80, %v81
    %v83 = vrot.slane %v82, 1
    %v84 = vmax.f32 %v82, %v83
    %s85 = vtos %v84
    %v86 = vstv %s85
    %v87 = vrcp.pop %v86
    %v88 = vmul.f32 %v86, %v87
    %v89 = vsub.f32 1.0, %v88
    %v90 = vmul.f32 %v87, %v89
    %v91 = vadd.f32 %v87, %v90
    %vm92 = vweird.f32 %v86
    %vm93 = vweird.f32 %v87
    %vm94 = vmor %vm92, %vm93
    %v95 = vsel %vm94, %v87, %v91
    %v96 = vand.u32 2147483647, %v86
    %vm97 = vcmp.eq.f32.partialorder %v96, 8.507059e+37
    %v98 = vand.u32 %v86, 2147483648
    %v99 = vor.u32 1.1754944e-38, %v98
    %v100 = vsel %vm97, %v99, %v95
    %v101 = vmul.f32 %v74, %v100
    %v102 = vld [vmem:[%s6] sm:$0xff]
    %104 = vst [vmem:[#allocation1] ss:$2 sm:$0xff] %v102
    %v105 = vld.sshfl [vmem:[#allocation1] sm:$0xff pattern:$0x75316420]
    %v106 = vld.sshfl [vmem:[#allocation1 + $0x8] sm:$0xff pattern:$0x75316420]
    %v108 = vsel %vm47, %v73, 0
    %vm110 = vcmask 1043456
    %v111 = vsel %vm110, %v105, 0
    %v113 = vsel %vm110, %v106, 0
    %115 = vmatpush.msra.mxu0 0.0
    %116 = vmatpush.msra.mxu0 0.0
    %117 = vmatpush.msra.mxu0 0.0
    %118 = vmatpush.msra.mxu0 0.0
    %119 = vmatpush.msra.mxu0 0.0
    %120 = vmatpush.msra.mxu0 0.0
    %121 = vmatpush.msra.mxu0 0.0
    %122 = vmatpush.msra.mxu0 0.0
    %123 = vmatpush.msra.mxu0 0.0
    %124 = vmatpush.msra.mxu0 0.0
    %125 = vmatpush.msra.mxu0 0.0
    %126 = vmatpush.msra.mxu0 0.0
    %127 = vmatpush.msra.mxu0 0.0
    %128 = vmatpush.msra.mxu0 0.0
    %129 = vmatpush.msra.mxu0 0.0
    %130 = vmatpush.msra.mxu0 %v111
    %131 = vmatmul.f32.gmra.mxu0 %v108
    %v132 = vpop.f32.mrf.mxu0
    %v133 = vadd.f32 0.0, %v132
    %134 = vdwg.mxu0
    %135 = vmatpush.msra.mxu0 0.0
    %136 = vmatpush.msra.mxu0 0.0
    %137 = vmatpush.msra.mxu0 0.0
    %138 = vmatpush.msra.mxu0 0.0
    %139 = vmatpush.msra.mxu0 0.0
    %140 = vmatpush.msra.mxu0 0.0
    %141 = vmatpush.msra.mxu0 0.0
    %142 = vmatpush.msra.mxu0 0.0
    %143 = vmatpush.msra.mxu0 0.0
    %144 = vmatpush.msra.mxu0 0.0
    %145 = vmatpush.msra.mxu0 0.0
    %146 = vmatpush.msra.mxu0 0.0
    %147 = vmatpush.msra.mxu0 0.0
    %148 = vmatpush.msra.mxu0 0.0
    %149 = vmatpush.msra.mxu0 0.0
    %150 = vmatpush.msra.mxu0 %v113
    %151 = vmatmul.f32.gmra.mxu0 %v108
    %v152 = vpop.f32.mrf.mxu0
    %v153 = vadd.f32 0.0, %v152
    %154 = vdwg.mxu0
    %v155 = vld [vmem:[%s5] sm:$0x7]
    %v157 = vperm.slane %v155, 0
    %v158 = vperm.slane %v155, 1
    %v159 = vperm.slane %v155, 2
    %v163 = vld [vmem:[%s5 + $0x3] sm:$0x1]
    %v165 = vperm.slane %v163, 0
    %v167 = vadd.f32 %v133, %v165
    %v168 = vxor.u32 %v153, 2147483648
    %v169 = vmul.f32 %v168, 1.442695
    %v170 = vpow.pop %v169
    %v171 = vadd.f32 %v170, 1.0
    %v172 = vrcp.pop %v171
    %v173 = vmul.f32 %v171, %v172
    %v174 = vsub.f32 1.0, %v173
    %v175 = vmul.f32 %v172, %v174
    %v176 = vadd.f32 %v172, %v175
    %vm177 = vweird.f32 %v171
    %vm178 = vweird.f32 %v172
    %vm179 = vmor %vm177, %vm178
    %v180 = vsel %vm179, %v172, %v176
    %v181 = vand.u32 2147483647, %v171
    %vm182 = vcmp.eq.f32.partialorder %v181, 8.507059e+37
    %v183 = vand.u32 %v171, 2147483648
    %v184 = vor.u32 1.1754944e-38, %v183
    %v185 = vsel %vm182, %v184, %v180
    %v186 = vmul.f32 1.0, %v185
    %v187 = vld [vmem:[%s5 + $0x4] sm:$0x1]
    %v189 = vperm.slane %v187, 0
    %v191 = vadd.f32 %v186, %v189
    %192 = vst [vmem:[#allocation1] ss:$2 sm:$0xff] %v102
    %v193 = vld.sshfl [vmem:[#allocation1] sm:$0xff pattern:$0x75316420]
    %v194 = vld.sshfl [vmem:[#allocation1 + $0x8] sm:$0xff pattern:$0x75316420]
    %v196 = vsel %vm47, %v101, 0
    %v198 = vsel %vm110, %v193, 0
    %v200 = vsel %vm110, %v194, 0
    %202 = vmatpush.msra.mxu0 0.0
    %203 = vmatpush.msra.mxu0 0.0
    %204 = vmatpush.msra.mxu0 0.0
    %205 = vmatpush.msra.mxu0 0.0
    %206 = vmatpush.msra.mxu0 0.0
    %207 = vmatpush.msra.mxu0 0.0
    %208 = vmatpush.msra.mxu0 0.0
    %209 = vmatpush.msra.mxu0 0.0
    %210 = vmatpush.msra.mxu0 0.0
    %211 = vmatpush.msra.mxu0 0.0
    %212 = vmatpush.msra.mxu0 0.0
    %213 = vmatpush.msra.mxu0 0.0
    %214 = vmatpush.msra.mxu0 0.0
    %215 = vmatpush.msra.mxu0 0.0
    %216 = vmatpush.msra.mxu0 0.0
    %217 = vmatpush.msra.mxu0 %v198
    %218 = vmatmul.f32.gmra.mxu0 %v196
    %v219 = vpop.f32.mrf.mxu0
    %v220 = vadd.f32 0.0, %v219
    %221 = vdwg.mxu0
    %222 = vmatpush.msra.mxu0 0.0
    %223 = vmatpush.msra.mxu0 0.0
    %224 = vmatpush.msra.mxu0 0.0
    %225 = vmatpush.msra.mxu0 0.0
    %226 = vmatpush.msra.mxu0 0.0
    %227 = vmatpush.msra.mxu0 0.0
    %228 = vmatpush.msra.mxu0 0.0
    %229 = vmatpush.msra.mxu0 0.0
    %230 = vmatpush.msra.mxu0 0.0
    %231 = vmatpush.msra.mxu0 0.0
    %232 = vmatpush.msra.mxu0 0.0
    %233 = vmatpush.msra.mxu0 0.0
    %234 = vmatpush.msra.mxu0 0.0
    %235 = vmatpush.msra.mxu0 0.0
    %236 = vmatpush.msra.mxu0 0.0
    %237 = vmatpush.msra.mxu0 %v200
    %238 = vmatmul.f32.gmra.mxu0 %v196
    %v239 = vpop.f32.mrf.mxu0
    %v240 = vadd.f32 0.0, %v239
    %241 = vdwg.mxu0
    %v242 = vadd.f32 %v220, %v165
    %v243 = vxor.u32 %v240, 2147483648
    %v244 = vmul.f32 %v243, 1.442695
    %v245 = vpow.pop %v244
    %v246 = vadd.f32 %v245, 1.0
    %v247 = vrcp.pop %v246
    %v248 = vmul.f32 %v246, %v247
    %v249 = vsub.f32 1.0, %v248
    %v250 = vmul.f32 %v247, %v249
    %v251 = vadd.f32 %v247, %v250
    %vm252 = vweird.f32 %v246
    %vm253 = vweird.f32 %v247
    %vm254 = vmor %vm252, %vm253
    %v255 = vsel %vm254, %v247, %v251
    %v256 = vand.u32 2147483647, %v246
    %vm257 = vcmp.eq.f32.partialorder %v256, 8.507059e+37
    %v258 = vand.u32 %v246, 2147483648
    %v259 = vor.u32 1.1754944e-38, %v258
    %v260 = vsel %vm257, %v259, %v255
    %v261 = vmul.f32 1.0, %v260
    %v262 = vadd.f32 %v261, %v189
    %v263 = vld [vmem:[%s10] sm:$0xff]
    %265 = vst [vmem:[#allocation1] ss:$2 sm:$0xff] %v263
    %v266 = vld.sshfl [vmem:[#allocation1] sm:$0xff pattern:$0x75316420]
    %v267 = vld.sshfl [vmem:[#allocation1 + $0x8] sm:$0xff pattern:$0x75316420]
    %v268 = vsel %vm110, %v266, 0
    %v270 = vsel %vm110, %v267, 0
    %272 = vmatpush.msra.mxu0 0.0
    %273 = vmatpush.msra.mxu0 0.0
    %274 = vmatpush.msra.mxu0 0.0
    %275 = vmatpush.msra.mxu0 0.0
    %276 = vmatpush.msra.mxu0 0.0
    %277 = vmatpush.msra.mxu0 0.0
    %278 = vmatpush.msra.mxu0 0.0
    %279 = vmatpush.msra.mxu0 0.0
    %280 = vmatpush.msra.mxu0 0.0
    %281 = vmatpush.msra.mxu0 0.0
    %282 = vmatpush.msra.mxu0 0.0
    %283 = vmatpush.msra.mxu0 0.0
    %284 = vmatpush.msra.mxu0 0.0
    %285 = vmatpush.msra.mxu0 0.0
    %286 = vmatpush.msra.mxu0 0.0
    %287 = vmatpush.msra.mxu0 %v268
    %288 = vmatmul.f32.gmra.mxu0 %v108
    %v289 = vpop.f32.mrf.mxu0
    %v290 = vadd.f32 0.0, %v289
    %291 = vdwg.mxu0
    %292 = vmatpush.msra.mxu0 0.0
    %293 = vmatpush.msra.mxu0 0.0
    %294 = vmatpush.msra.mxu0 0.0
    %295 = vmatpush.msra.mxu0 0.0
    %296 = vmatpush.msra.mxu0 0.0
    %297 = vmatpush.msra.mxu0 0.0
    %298 = vmatpush.msra.mxu0 0.0
    %299 = vmatpush.msra.mxu0 0.0
    %300 = vmatpush.msra.mxu0 0.0
    %301 = vmatpush.msra.mxu0 0.0
    %302 = vmatpush.msra.mxu0 0.0
    %303 = vmatpush.msra.mxu0 0.0
    %304 = vmatpush.msra.mxu0 0.0
    %305 = vmatpush.msra.mxu0 0.0
    %306 = vmatpush.msra.mxu0 0.0
    %307 = vmatpush.msra.mxu0 %v270
    %308 = vmatmul.f32.gmra.mxu0 %v108
    %v309 = vpop.f32.mrf.mxu0
    %v310 = vadd.f32 0.0, %v309
    %311 = vdwg.mxu0
    %v312 = vld [vmem:[%s9] sm:$0x7]
    %v314 = vperm.slane %v312, 0
    %v315 = vperm.slane %v312, 1
    %v316 = vperm.slane %v312, 2
    %v320 = vld [vmem:[%s9 + $0x3] sm:$0x1]
    %v322 = vperm.slane %v320, 0
    %v324 = vadd.f32 %v290, %v322
    %v325 = vxor.u32 %v310, 2147483648
    %v326 = vmul.f32 %v325, 1.442695
    %v327 = vpow.pop %v326
    %v328 = vadd.f32 %v327, 1.0
    %v329 = vrcp.pop %v328
    %v330 = vmul.f32 %v328, %v329
    %v331 = vsub.f32 1.0, %v330
    %v332 = vmul.f32 %v329, %v331
    %v333 = vadd.f32 %v329, %v332
    %vm334 = vweird.f32 %v328
    %vm335 = vweird.f32 %v329
    %vm336 = vmor %vm334, %vm335
    %v337 = vsel %vm336, %v329, %v333
    %v338 = vand.u32 2147483647, %v328
    %vm339 = vcmp.eq.f32.partialorder %v338, 8.507059e+37
    %v340 = vand.u32 %v328, 2147483648
    %v341 = vor.u32 1.1754944e-38, %v340
    %v342 = vsel %vm339, %v341, %v337
    %v343 = vmul.f32 1.0, %v342
    %v344 = vld [vmem:[%s9 + $0x4] sm:$0x1]
    %v346 = vperm.slane %v344, 0
    %v348 = vadd.f32 %v343, %v346
    %349 = vst [vmem:[#allocation1] ss:$2 sm:$0xff] %v263
    %v350 = vld.sshfl [vmem:[#allocation1] sm:$0xff pattern:$0x75316420]
    %v351 = vld.sshfl [vmem:[#allocation1 + $0x8] sm:$0xff pattern:$0x75316420]
    %v352 = vsel %vm110, %v350, 0
    %v354 = vsel %vm110, %v351, 0
    %356 = vmatpush.msra.mxu0 0.0
    %357 = vmatpush.msra.mxu0 0.0
    %358 = vmatpush.msra.mxu0 0.0
    %359 = vmatpush.msra.mxu0 0.0
    %360 = vmatpush.msra.mxu0 0.0
    %361 = vmatpush.msra.mxu0 0.0
    %362 = vmatpush.msra.mxu0 0.0
    %363 = vmatpush.msra.mxu0 0.0
    %364 = vmatpush.msra.mxu0 0.0
    %365 = vmatpush.msra.mxu0 0.0
    %366 = vmatpush.msra.mxu0 0.0
    %367 = vmatpush.msra.mxu0 0.0
    %368 = vmatpush.msra.mxu0 0.0
    %369 = vmatpush.msra.mxu0 0.0
    %370 = vmatpush.msra.mxu0 0.0
    %371 = vmatpush.msra.mxu0 %v352
    %372 = vmatmul.f32.gmra.mxu0 %v196
    %v373 = vpop.f32.mrf.mxu0
    %v374 = vadd.f32 0.0, %v373
    %375 = vdwg.mxu0
    %376 = vmatpush.msra.mxu0 0.0
    %377 = vmatpush.msra.mxu0 0.0
    %378 = vmatpush.msra.mxu0 0.0
    %379 = vmatpush.msra.mxu0 0.0
    %380 = vmatpush.msra.mxu0 0.0
    %381 = vmatpush.msra.mxu0 0.0
    %382 = vmatpush.msra.mxu0 0.0
    %383 = vmatpush.msra.mxu0 0.0
    %384 = vmatpush.msra.mxu0 0.0
    %385 = vmatpush.msra.mxu0 0.0
    %386 = vmatpush.msra.mxu0 0.0
    %387 = vmatpush.msra.mxu0 0.0
    %388 = vmatpush.msra.mxu0 0.0
    %389 = vmatpush.msra.mxu0 0.0
    %390 = vmatpush.msra.mxu0 0.0
    %391 = vmatpush.msra.mxu0 %v354
    %392 = vmatmul.f32.gmra.mxu0 %v196
    %v393 = vpop.f32.mrf.mxu0
    %v394 = vadd.f32 0.0, %v393
    %395 = vdwg.mxu0
    %v396 = vadd.f32 %v374, %v322
    %v397 = vxor.u32 %v394, 2147483648
    %v398 = vmul.f32 %v397, 1.442695
    %v399 = vpow.pop %v398
    %v400 = vadd.f32 %v399, 1.0
    %v401 = vrcp.pop %v400
    %v402 = vmul.f32 %v400, %v401
    %v403 = vsub.f32 1.0, %v402
    %v404 = vmul.f32 %v401, %v403
    %v405 = vadd.f32 %v401, %v404
    %vm406 = vweird.f32 %v400
    %vm407 = vweird.f32 %v401
    %vm408 = vmor %vm406, %vm407
    %v409 = vsel %vm408, %v401, %v405
    %v410 = vand.u32 2147483647, %v400
    %vm411 = vcmp.eq.f32.partialorder %v410, 8.507059e+37
    %v412 = vand.u32 %v400, 2147483648
    %v413 = vor.u32 1.1754944e-38, %v412
    %v414 = vsel %vm411, %v413, %v409
    %v415 = vmul.f32 1.0, %v414
    %v416 = vadd.f32 %v415, %v346
    %v417 = vld [vmem:[%s3] sm:$0xff]
    %v418 = vld [vmem:[%s3 + $0x8] sm:$0xff]
    %v419 = vld [vmem:[%s3 + $0x10] sm:$0xf]
    %v420 = vld [vmem:[%s3 + $0x14] sm:$0xff]
    %v421 = vld [vmem:[%s3 + $0x1c] sm:$0xff]
    %v422 = vld [vmem:[%s3 + $0x24] sm:$0xf]
    %v423 = vld [vmem:[%s3 + $0x28] sm:$0xff]
    %v424 = vld [vmem:[%s3 + $0x30] sm:$0xff]
    %v425 = vld [vmem:[%s3 + $0x38] sm:$0xf]
    %v426 = vld [vmem:[%s3 + $0x3c] sm:$0xff]
    %v427 = vld [vmem:[%s3 + $0x44] sm:$0xff]
    %v428 = vld [vmem:[%s3 + $0x4c] sm:$0xf]
    %v429 = vld [vmem:[%s3 + $0x50] sm:$0xff]
    %v430 = vld [vmem:[%s3 + $0x58] sm:$0xff]
    %v431 = vld [vmem:[%s3 + $0x60] sm:$0xf]
    %v432 = vld [vmem:[%s3 + $0x64] sm:$0xff]
    %v433 = vld [vmem:[%s3 + $0x6c] sm:$0xff]
    %v434 = vld [vmem:[%s3 + $0x74] sm:$0xf]
    %v435 = vld [vmem:[%s3 + $0x78] sm:$0xff]
    %v436 = vld [vmem:[%s3 + $0x80] sm:$0xff]
    %v437 = vld [vmem:[%s3 + $0x88] sm:$0xf]
    %v438 = vld [vmem:[%s3 + $0x8c] sm:$0xff]
    %v439 = vld [vmem:[%s3 + $0x94] sm:$0xff]
    %v440 = vld [vmem:[%s3 + $0x9c] sm:$0xf]
    %v441 = vld [vmem:[%s3 + $0xa0] sm:$0xff]
    %v442 = vld [vmem:[%s3 + $0xa8] sm:$0xff]
    %v443 = vld [vmem:[%s3 + $0xb0] sm:$0xf]
    %v444 = vld [vmem:[%s3 + $0xb4] sm:$0xff]
    %v445 = vld [vmem:[%s3 + $0xbc] sm:$0xff]
    %v446 = vld [vmem:[%s3 + $0xc4] sm:$0xf]
    %v447 = vld [vmem:[%s3 + $0xc8] sm:$0xff]
    %v448 = vld [vmem:[%s3 + $0xd0] sm:$0xff]
    %v449 = vld [vmem:[%s3 + $0xd8] sm:$0xf]
    %v450 = vld [vmem:[%s3 + $0xdc] sm:$0xff]
    %v451 = vld [vmem:[%s3 + $0xe4] sm:$0xff]
    %v452 = vld [vmem:[%s3 + $0xec] sm:$0xf]
    %v453 = vld [vmem:[%s3 + $0xf0] sm:$0xff]
    %v454 = vld [vmem:[%s3 + $0xf8] sm:$0xff]
    %v455 = vld [vmem:[%s3 + $0x100] sm:$0xf]
    %v456 = vld [vmem:[%s3 + $0x104] sm:$0xff]
    %v457 = vld [vmem:[%s3 + $0x10c] sm:$0xff]
    %v458 = vld [vmem:[%s3 + $0x114] sm:$0xf]
    %v459 = vld [vmem:[%s3 + $0x118] sm:$0xff]
    %v460 = vld [vmem:[%s3 + $0x120] sm:$0xff]
    %v461 = vld [vmem:[%s3 + $0x128] sm:$0xf]
    %v462 = vld [vmem:[%s3 + $0x12c] sm:$0xff]
    %v463 = vld [vmem:[%s3 + $0x134] sm:$0xff]
    %v464 = vld [vmem:[%s3 + $0x13c] sm:$0xf]
    %v465 = vld [vmem:[%s4] sm:$0xff]
    %v466 = vld [vmem:[%s4 + $0x8] sm:$0xff]
    %v467 = vld [vmem:[%s4 + $0x10] sm:$0xff]
    %v468 = vld [vmem:[%s4 + $0x18] sm:$0xff]
    %v469 = vld [vmem:[%s4 + $0x20] sm:$0xff]
    %v470 = vld [vmem:[%s4 + $0x28] sm:$0xff]
    %v471 = vld [vmem:[%s4 + $0x30] sm:$0xff]
    %v472 = vld [vmem:[%s4 + $0x38] sm:$0xff]
    %v473 = vld [vmem:[%s4 + $0x40] sm:$0xff]
    %v474 = vld [vmem:[%s4 + $0x48] sm:$0xff]
    %v475 = vld [vmem:[%s4 + $0x50] sm:$0xff]
    %v476 = vld [vmem:[%s4 + $0x58] sm:$0xff]
    %v477 = vld [vmem:[%s4 + $0x60] sm:$0xff]
    %v478 = vld [vmem:[%s4 + $0x68] sm:$0xff]
    %v479 = vld [vmem:[%s4 + $0x70] sm:$0xff]
    %v480 = vld [vmem:[%s4 + $0x78] sm:$0xff]
    %v481 = vld [vmem:[%s4 + $0x80] sm:$0xff]
    %v482 = vld [vmem:[%s4 + $0x88] sm:$0xff]
    %v483 = vld [vmem:[%s4 + $0x90] sm:$0xff]
    %v484 = vld [vmem:[%s4 + $0x98] sm:$0xff]
    %v485 = vld [vmem:[%s4 + $0xa0] sm:$0xff]
    %v486 = vld [vmem:[%s4 + $0xa8] sm:$0xff]
    %v487 = vld [vmem:[%s4 + $0xb0] sm:$0xff]
    %v488 = vld [vmem:[%s4 + $0xb8] sm:$0xff]
    %v489 = vld [vmem:[%s4 + $0xc0] sm:$0xff]
    %v490 = vld [vmem:[%s4 + $0xc8] sm:$0xff]
    %v491 = vld [vmem:[%s4 + $0xd0] sm:$0xff]
    %v492 = vld [vmem:[%s4 + $0xd8] sm:$0xff]
    %v493 = vld [vmem:[%s4 + $0xe0] sm:$0xff]
    %v494 = vld [vmem:[%s4 + $0xe8] sm:$0xff]
    %v495 = vld [vmem:[%s4 + $0xf0] sm:$0xff]
    %v496 = vld [vmem:[%s4 + $0xf8] sm:$0xff]
    %v497 = vld [vmem:[%s4 + $0x100] sm:$0xff]
    %v498 = vld [vmem:[%s4 + $0x108] sm:$0xff]
    %v499 = vld [vmem:[%s4 + $0x110] sm:$0xff]
    %v500 = vld [vmem:[%s4 + $0x118] sm:$0xff]
    %v501 = vld [vmem:[%s4 + $0x120] sm:$0xff]
    %v502 = vld [vmem:[%s4 + $0x128] sm:$0xff]
    %v503 = vld [vmem:[%s4 + $0x130] sm:$0xff]
    %v504 = vld [vmem:[%s4 + $0x138] sm:$0xff]
    %v505 = vld [vmem:[%s4 + $0x140] sm:$0xff]
    %v506 = vld [vmem:[%s4 + $0x148] sm:$0xff]
    %v507 = vld [vmem:[%s4 + $0x150] sm:$0xff]
    %v508 = vld [vmem:[%s4 + $0x158] sm:$0xff]
    %v509 = vld [vmem:[%s4 + $0x160] sm:$0xff]
    %v510 = vld [vmem:[%s4 + $0x168] sm:$0xff]
    %v511 = vld [vmem:[%s4 + $0x170] sm:$0xff]
    %v512 = vld [vmem:[%s4 + $0x178] sm:$0xff]
    %v513 = vld [vmem:[%s4 + $0x180] sm:$0xff]
    %v514 = vld [vmem:[%s4 + $0x188] sm:$0xff]
    %v515 = vld [vmem:[%s4 + $0x190] sm:$0xff]
    %v516 = vld [vmem:[%s4 + $0x198] sm:$0xff]
    %v517 = vld [vmem:[%s4 + $0x1a0] sm:$0xff]
    %v518 = vld [vmem:[%s4 + $0x1a8] sm:$0xff]
    %v519 = vld [vmem:[%s4 + $0x1b0] sm:$0xff]
    %v520 = vld [vmem:[%s4 + $0x1b8] sm:$0xff]
    %v521 = vld [vmem:[%s4 + $0x1c0] sm:$0xff]
    %v522 = vld [vmem:[%s4 + $0x1c8] sm:$0xff]
    %v523 = vld [vmem:[%s4 + $0x1d0] sm:$0xff]
    %v524 = vld [vmem:[%s4 + $0x1d8] sm:$0xff]
    %v525 = vld [vmem:[%s4 + $0x1e0] sm:$0xff]
    %v526 = vld [vmem:[%s4 + $0x1e8] sm:$0xff]
    %v527 = vld [vmem:[%s4 + $0x1f0] sm:$0xff]
    %v528 = vld [vmem:[%s4 + $0x1f8] sm:$0xff]
    %v529 = vld [vmem:[%s7] sm:$0xff]
    %v530 = vld [vmem:[%s7 + $0x8] sm:$0xff]
    %v531 = vld [vmem:[%s7 + $0x10] sm:$0xf]
    %v532 = vld [vmem:[%s7 + $0x14] sm:$0xff]
    %v533 = vld [vmem:[%s7 + $0x1c] sm:$0xff]
    %v534 = vld [vmem:[%s7 + $0x24] sm:$0xf]
    %v535 = vld [vmem:[%s7 + $0x28] sm:$0xff]
    %v536 = vld [vmem:[%s7 + $0x30] sm:$0xff]
    %v537 = vld [vmem:[%s7 + $0x38] sm:$0xf]
    %v538 = vld [vmem:[%s7 + $0x3c] sm:$0xff]
    %v539 = vld [vmem:[%s7 + $0x44] sm:$0xff]
    %v540 = vld [vmem:[%s7 + $0x4c] sm:$0xf]
    %v541 = vld [vmem:[%s7 + $0x50] sm:$0xff]
    %v542 = vld [vmem:[%s7 + $0x58] sm:$0xff]
    %v543 = vld [vmem:[%s7 + $0x60] sm:$0xf]
    %v544 = vld [vmem:[%s7 + $0x64] sm:$0xff]
    %v545 = vld [vmem:[%s7 + $0x6c] sm:$0xff]
    %v546 = vld [vmem:[%s7 + $0x74] sm:$0xf]
    %v547 = vld [vmem:[%s7 + $0x78] sm:$0xff]
    %v548 = vld [vmem:[%s7 + $0x80] sm:$0xff]
    %v549 = vld [vmem:[%s7 + $0x88] sm:$0xf]
    %v550 = vld [vmem:[%s7 + $0x8c] sm:$0xff]
    %v551 = vld [vmem:[%s7 + $0x94] sm:$0xff]
    %v552 = vld [vmem:[%s7 + $0x9c] sm:$0xf]
    %v553 = vld [vmem:[%s7 + $0xa0] sm:$0xff]
    %v554 = vld [vmem:[%s7 + $0xa8] sm:$0xff]
    %v555 = vld [vmem:[%s7 + $0xb0] sm:$0xf]
    %v556 = vld [vmem:[%s7 + $0xb4] sm:$0xff]
    %v557 = vld [vmem:[%s7 + $0xbc] sm:$0xff]
    %v558 = vld [vmem:[%s7 + $0xc4] sm:$0xf]
    %v559 = vld [vmem:[%s7 + $0xc8] sm:$0xff]
    %v560 = vld [vmem:[%s7 + $0xd0] sm:$0xff]
    %v561 = vld [vmem:[%s7 + $0xd8] sm:$0xf]
    %v562 = vld [vmem:[%s7 + $0xdc] sm:$0xff]
    %v563 = vld [vmem:[%s7 + $0xe4] sm:$0xff]
    %v564 = vld [vmem:[%s7 + $0xec] sm:$0xf]
    %v565 = vld [vmem:[%s7 + $0xf0] sm:$0xff]
    %v566 = vld [vmem:[%s7 + $0xf8] sm:$0xff]
    %v567 = vld [vmem:[%s7 + $0x100] sm:$0xf]
    %v568 = vld [vmem:[%s7 + $0x104] sm:$0xff]
    %v569 = vld [vmem:[%s7 + $0x10c] sm:$0xff]
    %v570 = vld [vmem:[%s7 + $0x114] sm:$0xf]
    %v571 = vld [vmem:[%s7 + $0x118] sm:$0xff]
    %v572 = vld [vmem:[%s7 + $0x120] sm:$0xff]
    %v573 = vld [vmem:[%s7 + $0x128] sm:$0xf]
    %v574 = vld [vmem:[%s7 + $0x12c] sm:$0xff]
    %v575 = vld [vmem:[%s7 + $0x134] sm:$0xff]
    %v576 = vld [vmem:[%s7 + $0x13c] sm:$0xf]
    %v577 = vld [vmem:[%s8] sm:$0xff]
    %v578 = vld [vmem:[%s8 + $0x8] sm:$0xff]
    %v579 = vld [vmem:[%s8 + $0x10] sm:$0xff]
    %v580 = vld [vmem:[%s8 + $0x18] sm:$0xff]
    %v581 = vld [vmem:[%s8 + $0x20] sm:$0xff]
    %v582 = vld [vmem:[%s8 + $0x28] sm:$0xff]
    %v583 = vld [vmem:[%s8 + $0x30] sm:$0xff]
    %v584 = vld [vmem:[%s8 + $0x38] sm:$0xff]
    %v585 = vld [vmem:[%s8 + $0x40] sm:$0xff]
    %v586 = vld [vmem:[%s8 + $0x48] sm:$0xff]
    %v587 = vld [vmem:[%s8 + $0x50] sm:$0xff]
    %v588 = vld [vmem:[%s8 + $0x58] sm:$0xff]
    %v589 = vld [vmem:[%s8 + $0x60] sm:$0xff]
    %v590 = vld [vmem:[%s8 + $0x68] sm:$0xff]
    %v591 = vld [vmem:[%s8 + $0x70] sm:$0xff]
    %v592 = vld [vmem:[%s8 + $0x78] sm:$0xff]
    %v593 = vld [vmem:[%s8 + $0x80] sm:$0xff]
    %v594 = vld [vmem:[%s8 + $0x88] sm:$0xff]
    %v595 = vld [vmem:[%s8 + $0x90] sm:$0xff]
    %v596 = vld [vmem:[%s8 + $0x98] sm:$0xff]
    %v597 = vld [vmem:[%s8 + $0xa0] sm:$0xff]
    %v598 = vld [vmem:[%s8 + $0xa8] sm:$0xff]
    %v599 = vld [vmem:[%s8 + $0xb0] sm:$0xff]
    %v600 = vld [vmem:[%s8 + $0xb8] sm:$0xff]
    %v601 = vld [vmem:[%s8 + $0xc0] sm:$0xff]
    %v602 = vld [vmem:[%s8 + $0xc8] sm:$0xff]
    %v603 = vld [vmem:[%s8 + $0xd0] sm:$0xff]
    %v604 = vld [vmem:[%s8 + $0xd8] sm:$0xff]
    %v605 = vld [vmem:[%s8 + $0xe0] sm:$0xff]
    %v606 = vld [vmem:[%s8 + $0xe8] sm:$0xff]
    %v607 = vld [vmem:[%s8 + $0xf0] sm:$0xff]
    %v608 = vld [vmem:[%s8 + $0xf8] sm:$0xff]
    %v609 = vld [vmem:[%s8 + $0x100] sm:$0xff]
    %v610 = vld [vmem:[%s8 + $0x108] sm:$0xff]
    %v611 = vld [vmem:[%s8 + $0x110] sm:$0xff]
    %v612 = vld [vmem:[%s8 + $0x118] sm:$0xff]
    %v613 = vld [vmem:[%s8 + $0x120] sm:$0xff]
    %v614 = vld [vmem:[%s8 + $0x128] sm:$0xff]
    %v615 = vld [vmem:[%s8 + $0x130] sm:$0xff]
    %v616 = vld [vmem:[%s8 + $0x138] sm:$0xff]
    %v617 = vld [vmem:[%s8 + $0x140] sm:$0xff]
    %v618 = vld [vmem:[%s8 + $0x148] sm:$0xff]
    %v619 = vld [vmem:[%s8 + $0x150] sm:$0xff]
    %v620 = vld [vmem:[%s8 + $0x158] sm:$0xff]
    %v621 = vld [vmem:[%s8 + $0x160] sm:$0xff]
    %v622 = vld [vmem:[%s8 + $0x168] sm:$0xff]
    %v623 = vld [vmem:[%s8 + $0x170] sm:$0xff]
    %v624 = vld [vmem:[%s8 + $0x178] sm:$0xff]
    %v625 = vld [vmem:[%s8 + $0x180] sm:$0xff]
    %v626 = vld [vmem:[%s8 + $0x188] sm:$0xff]
    %v627 = vld [vmem:[%s8 + $0x190] sm:$0xff]
    %v628 = vld [vmem:[%s8 + $0x198] sm:$0xff]
    %v629 = vld [vmem:[%s8 + $0x1a0] sm:$0xff]
    %v630 = vld [vmem:[%s8 + $0x1a8] sm:$0xff]
    %v631 = vld [vmem:[%s8 + $0x1b0] sm:$0xff]
    %v632 = vld [vmem:[%s8 + $0x1b8] sm:$0xff]
    %v633 = vld [vmem:[%s8 + $0x1c0] sm:$0xff]
    %v634 = vld [vmem:[%s8 + $0x1c8] sm:$0xff]
    %v635 = vld [vmem:[%s8 + $0x1d0] sm:$0xff]
    %v636 = vld [vmem:[%s8 + $0x1d8] sm:$0xff]
    %v637 = vld [vmem:[%s8 + $0x1e0] sm:$0xff]
    %v638 = vld [vmem:[%s8 + $0x1e8] sm:$0xff]
    %v639 = vld [vmem:[%s8 + $0x1f0] sm:$0xff]
    %v640 = vld [vmem:[%s8 + $0x1f8] sm:$0xff]
    %v641 = vld [vmem:[%s0] sm:$0xff]
    %v642 = vpack.c.bf16 %v641, %v641
    %v691 = vunpack.c.l.b16 %v417
    %v692 = vunpack.c.h.b16 %v417
    %v693 = vunpack.c.l.b16 %v418
    %v694 = vunpack.c.h.b16 %v418
    %v695 = vunpack.c.l.b16 %v419
    %v696 = vunpack.c.l.b16 %v420
    %v697 = vunpack.c.h.b16 %v420
    %v698 = vunpack.c.l.b16 %v421
    %v699 = vunpack.c.h.b16 %v421
    %v700 = vunpack.c.l.b16 %v422
    %v701 = vunpack.c.l.b16 %v423
    %v702 = vunpack.c.h.b16 %v423
    %v703 = vunpack.c.l.b16 %v424
    %v704 = vunpack.c.h.b16 %v424
    %v705 = vunpack.c.l.b16 %v425
    %v706 = vunpack.c.l.b16 %v426
    %v707 = vunpack.c.h.b16 %v426
    %v708 = vunpack.c.l.b16 %v427
    %v709 = vunpack.c.h.b16 %v427
    %v710 = vunpack.c.l.b16 %v428
    %v711 = vunpack.c.l.b16 %v429
    %v712 = vunpack.c.h.b16 %v429
    %v713 = vunpack.c.l.b16 %v430
    %v714 = vunpack.c.h.b16 %v430
    %v715 = vunpack.c.l.b16 %v431
    %v716 = vunpack.c.l.b16 %v432
    %v717 = vunpack.c.h.b16 %v432
    %v718 = vunpack.c.l.b16 %v433
    %v719 = vunpack.c.h.b16 %v433
    %v720 = vunpack.c.l.b16 %v434
    %v721 = vunpack.c.l.b16 %v435
    %v722 = vunpack.c.h.b16 %v435
    %v723 = vunpack.c.l.b16 %v436
    %v724 = vunpack.c.h.b16 %v436
    %v725 = vunpack.c.l.b16 %v437
    %v726 = vunpack.c.l.b16 %v438
    %v727 = vunpack.c.h.b16 %v438
    %v728 = vunpack.c.l.b16 %v439
    %v729 = vunpack.c.h.b16 %v439
    %v730 = vunpack.c.l.b16 %v440
    %v731 = vunpack.c.l.b16 %v441
    %v732 = vunpack.c.h.b16 %v441
    %v733 = vunpack.c.l.b16 %v442
    %v734 = vunpack.c.h.b16 %v442
    %v735 = vunpack.c.l.b16 %v443
    %v736 = vunpack.c.l.b16 %v444
    %v737 = vunpack.c.h.b16 %v444
    %v738 = vunpack.c.l.b16 %v445
    %v739 = vunpack.c.h.b16 %v445
    %v740 = vunpack.c.l.b16 %v446
    %v741 = vunpack.c.l.b16 %v447
    %v742 = vunpack.c.h.b16 %v447
    %v743 = vunpack.c.l.b16 %v448
    %v744 = vunpack.c.h.b16 %v448
    %v745 = vunpack.c.l.b16 %v449
    %v746 = vunpack.c.l.b16 %v450
    %v747 = vunpack.c.h.b16 %v450
    %v748 = vunpack.c.l.b16 %v451
    %v749 = vunpack.c.h.b16 %v451
    %v750 = vunpack.c.l.b16 %v452
    %v751 = vunpack.c.l.b16 %v453
    %v752 = vunpack.c.h.b16 %v453
    %v753 = vunpack.c.l.b16 %v454
    %v754 = vunpack.c.h.b16 %v454
    %v755 = vunpack.c.l.b16 %v455
    %v756 = vunpack.c.l.b16 %v456
    %v757 = vunpack.c.h.b16 %v456
    %v758 = vunpack.c.l.b16 %v457
    %v759 = vunpack.c.h.b16 %v457
    %v760 = vunpack.c.l.b16 %v458
    %v761 = vunpack.c.l.b16 %v459
    %v762 = vunpack.c.h.b16 %v459
    %v763 = vunpack.c.l.b16 %v460
    %v764 = vunpack.c.h.b16 %v460
    %v765 = vunpack.c.l.b16 %v461
    %v766 = vunpack.c.l.b16 %v462
    %v767 = vunpack.c.h.b16 %v462
    %v768 = vunpack.c.l.b16 %v463
    %v769 = vunpack.c.h.b16 %v463
    %v770 = vunpack.c.l.b16 %v464
    %v771 = vpack.c.b16 %v696, %v691
    %v772 = vpack.c.b16 %v697, %v692
    %v773 = vpack.c.b16 %v698, %v693
    %v774 = vpack.c.b16 %v699, %v694
    %v775 = vpack.c.b16 %v700, %v695
    %v776 = vpack.c.b16 %v706, %v701
    %v777 = vpack.c.b16 %v707, %v702
    %v778 = vpack.c.b16 %v708, %v703
    %v779 = vpack.c.b16 %v709, %v704
    %v780 = vpack.c.b16 %v710, %v705
    %v781 = vpack.c.b16 %v716, %v711
    %v782 = vpack.c.b16 %v717, %v712
    %v783 = vpack.c.b16 %v718, %v713
    %v784 = vpack.c.b16 %v719, %v714
    %v785 = vpack.c.b16 %v720, %v715
    %v786 = vpack.c.b16 %v726, %v721
    %v787 = vpack.c.b16 %v727, %v722
    %v788 = vpack.c.b16 %v728, %v723
    %v789 = vpack.c.b16 %v729, %v724
    %v790 = vpack.c.b16 %v730, %v725
    %v791 = vpack.c.b16 %v736, %v731
    %v792 = vpack.c.b16 %v737, %v732
    %v793 = vpack.c.b16 %v738, %v733
    %v794 = vpack.c.b16 %v739, %v734
    %v795 = vpack.c.b16 %v740, %v735
    %v796 = vpack.c.b16 %v746, %v741
    %v797 = vpack.c.b16 %v747, %v742
    %v798 = vpack.c.b16 %v748, %v743
    %v799 = vpack.c.b16 %v749, %v744
    %v800 = vpack.c.b16 %v750, %v745
    %v801 = vpack.c.b16 %v756, %v751
    %v802 = vpack.c.b16 %v757, %v752
    %v803 = vpack.c.b16 %v758, %v753
    %v804 = vpack.c.b16 %v759, %v754
    %v805 = vpack.c.b16 %v760, %v755
    %v806 = vpack.c.b16 %v766, %v761
    %v807 = vpack.c.b16 %v767, %v762
    %v808 = vpack.c.b16 %v768, %v763
    %v809 = vpack.c.b16 %v769, %v764
    %v810 = vpack.c.b16 %v770, %v765
    %851 = vmatpush.bf16.msra.mxu0 %v806
    %852 = vmatpush.bf16.msra.mxu0 %v801
    %853 = vmatpush.bf16.msra.mxu0 %v796
    %854 = vmatpush.bf16.msra.mxu0 %v791
    %855 = vmatpush.bf16.msra.mxu0 %v786
    %856 = vmatpush.bf16.msra.mxu0 %v781
    %857 = vmatpush.bf16.msra.mxu0 %v776
    %858 = vmatpush.bf16.msra.mxu0 %v771
    %859 = vmatmul.bf16.gmra.mxu0 %v642
    %v860 = vpop.f32.mrf.mxu0
    %v861 = vadd.f32 %v157, %v860
    %v862 = vpop.f32.mrf.mxu0
    %863 = vdwg.mxu0
    %864 = vmatpush.bf16.msra.mxu0 %v807
    %865 = vmatpush.bf16.msra.mxu0 %v802
    %866 = vmatpush.bf16.msra.mxu0 %v797
    %867 = vmatpush.bf16.msra.mxu0 %v792
    %868 = vmatpush.bf16.msra.mxu0 %v787
    %869 = vmatpush.bf16.msra.mxu0 %v782
    %870 = vmatpush.bf16.msra.mxu0 %v777
    %871 = vmatpush.bf16.msra.mxu0 %v772
    %872 = vmatmul.bf16.gmra.mxu0 %v642
    %v873 = vpop.f32.mrf.mxu0
    %v874 = vadd.f32 %v158, %v873
    %v875 = vpop.f32.mrf.mxu0
    %876 = vdwg.mxu0
    %877 = vmatpush.bf16.msra.mxu0 %v808
    %878 = vmatpush.bf16.msra.mxu0 %v803
    %879 = vmatpush.bf16.msra.mxu0 %v798
    %880 = vmatpush.bf16.msra.mxu0 %v793
    %881 = vmatpush.bf16.msra.mxu0 %v788
    %882 = vmatpush.bf16.msra.mxu0 %v783
    %883 = vmatpush.bf16.msra.mxu0 %v778
    %884 = vmatpush.bf16.msra.mxu0 %v773
    %885 = vmatmul.bf16.gmra.mxu0 %v642
    %v886 = vpop.f32.mrf.mxu0
    %v887 = vadd.f32 %v159, %v886
    %v888 = vpop.f32.mrf.mxu0
    %889 = vdwg.mxu0
    %890 = vmatpush.bf16.msra.mxu0 %v809
    %891 = vmatpush.bf16.msra.mxu0 %v804
    %892 = vmatpush.bf16.msra.mxu0 %v799
    %893 = vmatpush.bf16.msra.mxu0 %v794
    %894 = vmatpush.bf16.msra.mxu0 %v789
    %895 = vmatpush.bf16.msra.mxu0 %v784
    %896 = vmatpush.bf16.msra.mxu0 %v779
    %897 = vmatpush.bf16.msra.mxu0 %v774
    %898 = vmatmul.bf16.gmra.mxu0 %v642
    %v899 = vpop.f32.mrf.mxu0
    %v900 = vadd.f32 %v167, %v899
    %v901 = vpop.f32.mrf.mxu0
    %902 = vdwg.mxu0
    %903 = vmatpush.bf16.msra.mxu0 %v810
    %904 = vmatpush.bf16.msra.mxu0 %v805
    %905 = vmatpush.bf16.msra.mxu0 %v800
    %906 = vmatpush.bf16.msra.mxu0 %v795
    %907 = vmatpush.bf16.msra.mxu0 %v790
    %908 = vmatpush.bf16.msra.mxu0 %v785
    %909 = vmatpush.bf16.msra.mxu0 %v780
    %910 = vmatpush.bf16.msra.mxu0 %v775
    %911 = vmatmul.bf16.gmra.mxu0 %v642
    %v912 = vpop.f32.mrf.mxu0
    %v913 = vadd.f32 %v191, %v912
    %v914 = vpop.f32.mrf.mxu0
    %915 = vdwg.mxu0
    %v980 = vunpack.c.l.b16 %v465
    %v981 = vunpack.c.h.b16 %v465
    %v982 = vunpack.c.l.b16 %v466
    %v983 = vunpack.c.h.b16 %v466
    %v984 = vunpack.c.l.b16 %v467
    %v985 = vunpack.c.h.b16 %v467
    %v986 = vunpack.c.l.b16 %v468
    %v987 = vunpack.c.h.b16 %v468
    %v988 = vunpack.c.l.b16 %v469
    %v989 = vunpack.c.h.b16 %v469
    %v990 = vunpack.c.l.b16 %v470
    %v991 = vunpack.c.h.b16 %v470
    %v992 = vunpack.c.l.b16 %v471
    %v993 = vunpack.c.h.b16 %v471
    %v994 = vunpack.c.l.b16 %v472
    %v995 = vunpack.c.h.b16 %v472
    %v996 = vunpack.c.l.b16 %v473
    %v997 = vunpack.c.h.b16 %v473
    %v998 = vunpack.c.l.b16 %v474
    %v999 = vunpack.c.h.b16 %v474
    %v1000 = vunpack.c.l.b16 %v475
    %v1001 = vunpack.c.h.b16 %v475
    %v1002 = vunpack.c.l.b16 %v476
    %v1003 = vunpack.c.h.b16 %v476
    %v1004 = vunpack.c.l.b16 %v477
    %v1005 = vunpack.c.h.b16 %v477
    %v1006 = vunpack.c.l.b16 %v478
    %v1007 = vunpack.c.h.b16 %v478
    %v1008 = vunpack.c.l.b16 %v479
    %v1009 = vunpack.c.h.b16 %v479
    %v1010 = vunpack.c.l.b16 %v480
    %v1011 = vunpack.c.h.b16 %v480
    %v1012 = vunpack.c.l.b16 %v481
    %v1013 = vunpack.c.h.b16 %v481
    %v1014 = vunpack.c.l.b16 %v482
    %v1015 = vunpack.c.h.b16 %v482
    %v1016 = vunpack.c.l.b16 %v483
    %v1017 = vunpack.c.h.b16 %v483
    %v1018 = vunpack.c.l.b16 %v484
    %v1019 = vunpack.c.h.b16 %v484
    %v1020 = vunpack.c.l.b16 %v485
    %v1021 = vunpack.c.h.b16 %v485
    %v1022 = vunpack.c.l.b16 %v486
    %v1023 = vunpack.c.h.b16 %v486
    %v1024 = vunpack.c.l.b16 %v487
    %v1025 = vunpack.c.h.b16 %v487
    %v1026 = vunpack.c.l.b16 %v488
    %v1027 = vunpack.c.h.b16 %v488
    %v1028 = vunpack.c.l.b16 %v489
    %v1029 = vunpack.c.h.b16 %v489
    %v1030 = vunpack.c.l.b16 %v490
    %v1031 = vunpack.c.h.b16 %v490
    %v1032 = vunpack.c.l.b16 %v491
    %v1033 = vunpack.c.h.b16 %v491
    %v1034 = vunpack.c.l.b16 %v492
    %v1035 = vunpack.c.h.b16 %v492
    %v1036 = vunpack.c.l.b16 %v493
    %v1037 = vunpack.c.h.b16 %v493
    %v1038 = vunpack.c.l.b16 %v494
    %v1039 = vunpack.c.h.b16 %v494
    %v1040 = vunpack.c.l.b16 %v495
    %v1041 = vunpack.c.h.b16 %v495
    %v1042 = vunpack.c.l.b16 %v496
    %v1043 = vunpack.c.h.b16 %v496
    %v1044 = vunpack.c.l.b16 %v497
    %v1045 = vunpack.c.h.b16 %v497
    %v1046 = vunpack.c.l.b16 %v498
    %v1047 = vunpack.c.h.b16 %v498
    %v1048 = vunpack.c.l.b16 %v499
    %v1049 = vunpack.c.h.b16 %v499
    %v1050 = vunpack.c.l.b16 %v500
    %v1051 = vunpack.c.h.b16 %v500
    %v1052 = vunpack.c.l.b16 %v501
    %v1053 = vunpack.c.h.b16 %v501
    %v1054 = vunpack.c.l.b16 %v502
    %v1055 = vunpack.c.h.b16 %v502
    %v1056 = vunpack.c.l.b16 %v503
    %v1057 = vunpack.c.h.b16 %v503
    %v1058 = vunpack.c.l.b16 %v504
    %v1059 = vunpack.c.h.b16 %v504
    %v1060 = vunpack.c.l.b16 %v505
    %v1061 = vunpack.c.h.b16 %v505
    %v1062 = vunpack.c.l.b16 %v506
    %v1063 = vunpack.c.h.b16 %v506
    %v1064 = vunpack.c.l.b16 %v507
    %v1065 = vunpack.c.h.b16 %v507
    %v1066 = vunpack.c.l.b16 %v508
    %v1067 = vunpack.c.h.b16 %v508
    %v1068 = vunpack.c.l.b16 %v509
    %v1069 = vunpack.c.h.b16 %v509
    %v1070 = vunpack.c.l.b16 %v510
    %v1071 = vunpack.c.h.b16 %v510
    %v1072 = vunpack.c.l.b16 %v511
    %v1073 = vunpack.c.h.b16 %v511
    %v1074 = vunpack.c.l.b16 %v512
    %v1075 = vunpack.c.h.b16 %v512
    %v1076 = vunpack.c.l.b16 %v513
    %v1077 = vunpack.c.h.b16 %v513
    %v1078 = vunpack.c.l.b16 %v514
    %v1079 = vunpack.c.h.b16 %v514
    %v1080 = vunpack.c.l.b16 %v515
    %v1081 = vunpack.c.h.b16 %v515
    %v1082 = vunpack.c.l.b16 %v516
    %v1083 = vunpack.c.h.b16 %v516
    %v1084 = vunpack.c.l.b16 %v517
    %v1085 = vunpack.c.h.b16 %v517
    %v1086 = vunpack.c.l.b16 %v518
    %v1087 = vunpack.c.h.b16 %v518
    %v1088 = vunpack.c.l.b16 %v519
    %v1089 = vunpack.c.h.b16 %v519
    %v1090 = vunpack.c.l.b16 %v520
    %v1091 = vunpack.c.h.b16 %v520
    %v1092 = vunpack.c.l.b16 %v521
    %v1093 = vunpack.c.h.b16 %v521
    %v1094 = vunpack.c.l.b16 %v522
    %v1095 = vunpack.c.h.b16 %v522
    %v1096 = vunpack.c.l.b16 %v523
    %v1097 = vunpack.c.h.b16 %v523
    %v1098 = vunpack.c.l.b16 %v524
    %v1099 = vunpack.c.h.b16 %v524
    %v1100 = vunpack.c.l.b16 %v525
    %v1101 = vunpack.c.h.b16 %v525
    %v1102 = vunpack.c.l.b16 %v526
    %v1103 = vunpack.c.h.b16 %v526
    %v1104 = vunpack.c.l.b16 %v527
    %v1105 = vunpack.c.h.b16 %v527
    %v1106 = vunpack.c.l.b16 %v528
    %v1107 = vunpack.c.h.b16 %v528
    %v1108 = vpack.c.b16 %v984, %v980
    %v1109 = vpack.c.b16 %v985, %v981
    %v1110 = vpack.c.b16 %v986, %v982
    %v1111 = vpack.c.b16 %v987, %v983
    %v1112 = vpack.c.b16 %v992, %v988
    %v1113 = vpack.c.b16 %v993, %v989
    %v1114 = vpack.c.b16 %v994, %v990
    %v1115 = vpack.c.b16 %v995, %v991
    %v1116 = vpack.c.b16 %v1000, %v996
    %v1117 = vpack.c.b16 %v1001, %v997
    %v1118 = vpack.c.b16 %v1002, %v998
    %v1119 = vpack.c.b16 %v1003, %v999
    %v1120 = vpack.c.b16 %v1008, %v1004
    %v1121 = vpack.c.b16 %v1009, %v1005
    %v1122 = vpack.c.b16 %v1010, %v1006
    %v1123 = vpack.c.b16 %v1011, %v1007
    %v1124 = vpack.c.b16 %v1016, %v1012
    %v1125 = vpack.c.b16 %v1017, %v1013
    %v1126 = vpack.c.b16 %v1018, %v1014
    %v1127 = vpack.c.b16 %v1019, %v1015
    %v1128 = vpack.c.b16 %v1024, %v1020
    %v1129 = vpack.c.b16 %v1025, %v1021
    %v1130 = vpack.c.b16 %v1026, %v1022
    %v1131 = vpack.c.b16 %v1027, %v1023
    %v1132 = vpack.c.b16 %v1032, %v1028
    %v1133 = vpack.c.b16 %v1033, %v1029
    %v1134 = vpack.c.b16 %v1034, %v1030
    %v1135 = vpack.c.b16 %v1035, %v1031
    %v1136 = vpack.c.b16 %v1040, %v1036
    %v1137 = vpack.c.b16 %v1041, %v1037
    %v1138 = vpack.c.b16 %v1042, %v1038
    %v1139 = vpack.c.b16 %v1043, %v1039
    %v1140 = vpack.c.b16 %v1048, %v1044
    %v1141 = vpack.c.b16 %v1049, %v1045
    %v1142 = vpack.c.b16 %v1050, %v1046
    %v1143 = vpack.c.b16 %v1051, %v1047
    %v1144 = vpack.c.b16 %v1056, %v1052
    %v1145 = vpack.c.b16 %v1057, %v1053
    %v1146 = vpack.c.b16 %v1058, %v1054
    %v1147 = vpack.c.b16 %v1059, %v1055
    %v1148 = vpack.c.b16 %v1064, %v1060
    %v1149 = vpack.c.b16 %v1065, %v1061
    %v1150 = vpack.c.b16 %v1066, %v1062
    %v1151 = vpack.c.b16 %v1067, %v1063
    %v1152 = vpack.c.b16 %v1072, %v1068
    %v1153 = vpack.c.b16 %v1073, %v1069
    %v1154 = vpack.c.b16 %v1074, %v1070
    %v1155 = vpack.c.b16 %v1075, %v1071
    %v1156 = vpack.c.b16 %v1080, %v1076
    %v1157 = vpack.c.b16 %v1081, %v1077
    %v1158 = vpack.c.b16 %v1082, %v1078
    %v1159 = vpack.c.b16 %v1083, %v1079
    %v1160 = vpack.c.b16 %v1088, %v1084
    %v1161 = vpack.c.b16 %v1089, %v1085
    %v1162 = vpack.c.b16 %v1090, %v1086
    %v1163 = vpack.c.b16 %v1091, %v1087
    %v1164 = vpack.c.b16 %v1096, %v1092
    %v1165 = vpack.c.b16 %v1097, %v1093
    %v1166 = vpack.c.b16 %v1098, %v1094
    %v1167 = vpack.c.b16 %v1099, %v1095
    %v1168 = vpack.c.b16 %v1104, %v1100
    %v1169 = vpack.c.b16 %v1105, %v1101
    %v1170 = vpack.c.b16 %v1106, %v1102
    %v1171 = vpack.c.b16 %v1107, %v1103
    %1236 = vmatpush.bf16.msra.mxu0 %v1136
    %1237 = vmatpush.bf16.msra.mxu0 %v1132
    %1238 = vmatpush.bf16.msra.mxu0 %v1128
    %1239 = vmatpush.bf16.msra.mxu0 %v1124
    %1240 = vmatpush.bf16.msra.mxu0 %v1120
    %1241 = vmatpush.bf16.msra.mxu0 %v1116
    %1242 = vmatpush.bf16.msra.mxu0 %v1112
    %1243 = vmatpush.bf16.msra.mxu0 %v1108
    %1244 = vmatmul.bf16.gmra.mxu0 0
    %v1245 = vpop.f32.mrf.mxu0
    %v1246 = vadd.f32 0.0, %v1245
    %v1247 = vpop.f32.mrf.mxu0
    %1248 = vdwg.mxu0
    %1249 = vmatpush.bf16.msra.mxu0 %v1168
    %1250 = vmatpush.bf16.msra.mxu0 %v1164
    %1251 = vmatpush.bf16.msra.mxu0 %v1160
    %1252 = vmatpush.bf16.msra.mxu0 %v1156
    %1253 = vmatpush.bf16.msra.mxu0 %v1152
    %1254 = vmatpush.bf16.msra.mxu0 %v1148
    %1255 = vmatpush.bf16.msra.mxu0 %v1144
    %1256 = vmatpush.bf16.msra.mxu0 %v1140
    %1257 = vmatmul.bf16.gmra.mxu0 0
    %v1258 = vpop.f32.mrf.mxu0
    %v1259 = vadd.f32 %v1246, %v1258
    %v1260 = vpop.f32.mrf.mxu0
    %1261 = vdwg.mxu0
    %1262 = vmatpush.bf16.msra.mxu0 %v1137
    %1263 = vmatpush.bf16.msra.mxu0 %v1133
    %1264 = vmatpush.bf16.msra.mxu0 %v1129
    %1265 = vmatpush.bf16.msra.mxu0 %v1125
    %1266 = vmatpush.bf16.msra.mxu0 %v1121
    %1267 = vmatpush.bf16.msra.mxu0 %v1117
    %1268 = vmatpush.bf16.msra.mxu0 %v1113
    %1269 = vmatpush.bf16.msra.mxu0 %v1109
    %1270 = vmatmul.bf16.gmra.mxu0 0
    %v1271 = vpop.f32.mrf.mxu0
    %v1272 = vadd.f32 0.0, %v1271
    %v1273 = vpop.f32.mrf.mxu0
    %1274 = vdwg.mxu0
    %1275 = vmatpush.bf16.msra.mxu0 %v1169
    %1276 = vmatpush.bf16.msra.mxu0 %v1165
    %1277 = vmatpush.bf16.msra.mxu0 %v1161
    %1278 = vmatpush.bf16.msra.mxu0 %v1157
    %1279 = vmatpush.bf16.msra.mxu0 %v1153
    %1280 = vmatpush.bf16.msra.mxu0 %v1149
    %1281 = vmatpush.bf16.msra.mxu0 %v1145
    %1282 = vmatpush.bf16.msra.mxu0 %v1141
    %1283 = vmatmul.bf16.gmra.mxu0 0
    %v1284 = vpop.f32.mrf.mxu0
    %v1285 = vadd.f32 %v1272, %v1284
    %v1286 = vpop.f32.mrf.mxu0
    %1287 = vdwg.mxu0
    %1288 = vmatpush.bf16.msra.mxu0 %v1138
    %1289 = vmatpush.bf16.msra.mxu0 %v1134
    %1290 = vmatpush.bf16.msra.mxu0 %v1130
    %1291 = vmatpush.bf16.msra.mxu0 %v1126
    %1292 = vmatpush.bf16.msra.mxu0 %v1122
    %1293 = vmatpush.bf16.msra.mxu0 %v1118
    %1294 = vmatpush.bf16.msra.mxu0 %v1114
    %1295 = vmatpush.bf16.msra.mxu0 %v1110
    %1296 = vmatmul.bf16.gmra.mxu0 0
    %v1297 = vpop.f32.mrf.mxu0
    %v1298 = vadd.f32 0.0, %v1297
    %v1299 = vpop.f32.mrf.mxu0
    %1300 = vdwg.mxu0
    %1301 = vmatpush.bf16.msra.mxu0 %v1170
    %1302 = vmatpush.bf16.msra.mxu0 %v1166
    %1303 = vmatpush.bf16.msra.mxu0 %v1162
    %1304 = vmatpush.bf16.msra.mxu0 %v1158
    %1305 = vmatpush.bf16.msra.mxu0 %v1154
    %1306 = vmatpush.bf16.msra.mxu0 %v1150
    %1307 = vmatpush.bf16.msra.mxu0 %v1146
    %1308 = vmatpush.bf16.msra.mxu0 %v1142
    %1309 = vmatmul.bf16.gmra.mxu0 0
    %v1310 = vpop.f32.mrf.mxu0
    %v1311 = vadd.f32 %v1298, %v1310
    %v1312 = vpop.f32.mrf.mxu0
    %1313 = vdwg.mxu0
    %1314 = vmatpush.bf16.msra.mxu0 %v1139
    %1315 = vmatpush.bf16.msra.mxu0 %v1135
    %1316 = vmatpush.bf16.msra.mxu0 %v1131
    %1317 = vmatpush.bf16.msra.mxu0 %v1127
    %1318 = vmatpush.bf16.msra.mxu0 %v1123
    %1319 = vmatpush.bf16.msra.mxu0 %v1119
    %1320 = vmatpush.bf16.msra.mxu0 %v1115
    %1321 = vmatpush.bf16.msra.mxu0 %v1111
    %1322 = vmatmul.bf16.gmra.mxu0 0
    %v1323 = vpop.f32.mrf.mxu0
    %v1324 = vadd.f32 0.0, %v1323
    %v1325 = vpop.f32.mrf.mxu0
    %1326 = vdwg.mxu0
    %1327 = vmatpush.bf16.msra.mxu0 %v1171
    %1328 = vmatpush.bf16.msra.mxu0 %v1167
    %1329 = vmatpush.bf16.msra.mxu0 %v1163
    %1330 = vmatpush.bf16.msra.mxu0 %v1159
    %1331 = vmatpush.bf16.msra.mxu0 %v1155
    %1332 = vmatpush.bf16.msra.mxu0 %v1151
    %1333 = vmatpush.bf16.msra.mxu0 %v1147
    %1334 = vmatpush.bf16.msra.mxu0 %v1143
    %1335 = vmatmul.bf16.gmra.mxu0 0
    %v1336 = vpop.f32.mrf.mxu0
    %v1337 = vadd.f32 %v1324, %v1336
    %v1338 = vpop.f32.mrf.mxu0
    %1339 = vdwg.mxu0
    %v1340 = vadd.f32 %v861, %v1259
    %v1341 = vadd.f32 %v874, %v1285
    %v1342 = vadd.f32 %v887, %v1311
    %v1343 = vadd.f32 %v900, %v1337
    %v1344 = vxor.u32 %v1340, 2147483648
    %v1345 = vxor.u32 %v1341, 2147483648
    %v1346 = vmul.f32 %v1344, 1.442695
    %v1347 = vpow.pop %v1346
    %v1348 = vmul.f32 %v1345, 1.442695
    %v1349 = vpow.pop %v1348
    %v1350 = vadd.f32 %v1347, 1.0
    %v1351 = vadd.f32 %v1349, 1.0
    %v1352 = vrcp.pop %v1350
    %v1353 = vmul.f32 %v1350, %v1352
    %v1354 = vsub.f32 1.0, %v1353
    %v1355 = vmul.f32 %v1352, %v1354
    %v1356 = vadd.f32 %v1352, %v1355
    %vm1357 = vweird.f32 %v1350
    %vm1358 = vweird.f32 %v1352
    %vm1359 = vmor %vm1357, %vm1358
    %v1360 = vsel %vm1359, %v1352, %v1356
    %v1361 = vand.u32 2147483647, %v1350
    %vm1362 = vcmp.eq.f32.partialorder %v1361, 8.507059e+37
    %v1363 = vand.u32 %v1350, 2147483648
    %v1364 = vor.u32 1.1754944e-38, %v1363
    %v1365 = vsel %vm1362, %v1364, %v1360
    %v1366 = vmul.f32 1.0, %v1365
    %v1367 = vrcp.pop %v1351
    %v1368 = vmul.f32 %v1351, %v1367
    %v1369 = vsub.f32 1.0, %v1368
    %v1370 = vmul.f32 %v1367, %v1369
    %v1371 = vadd.f32 %v1367, %v1370
    %vm1372 = vweird.f32 %v1351
    %vm1373 = vweird.f32 %v1367
    %vm1374 = vmor %vm1372, %vm1373
    %v1375 = vsel %vm1374, %v1367, %v1371
    %v1376 = vand.u32 2147483647, %v1351
    %vm1377 = vcmp.eq.f32.partialorder %v1376, 8.507059e+37
    %v1378 = vand.u32 %v1351, 2147483648
    %v1379 = vor.u32 1.1754944e-38, %v1378
    %v1380 = vsel %vm1377, %v1379, %v1375
    %v1381 = vmul.f32 1.0, %v1380
    %v1382 = vtanh.pop %v1342
    %v1383 = vxor.u32 %v1343, 2147483648
    %v1384 = vmul.f32 %v1383, 1.442695
    %v1385 = vpow.pop %v1384
    %v1386 = vadd.f32 %v1385, 1.0
    %v1387 = vrcp.pop %v1386
    %v1388 = vmul.f32 %v1386, %v1387
    %v1389 = vsub.f32 1.0, %v1388
    %v1390 = vmul.f32 %v1387, %v1389
    %v1391 = vadd.f32 %v1387, %v1390
    %vm1392 = vweird.f32 %v1386
    %vm1393 = vweird.f32 %v1387
    %vm1394 = vmor %vm1392, %vm1393
    %v1395 = vsel %vm1394, %v1387, %v1391
    %v1396 = vand.u32 2147483647, %v1386
    %vm1397 = vcmp.eq.f32.partialorder %v1396, 8.507059e+37
    %v1398 = vand.u32 %v1386, 2147483648
    %v1399 = vor.u32 1.1754944e-38, %v1398
    %v1400 = vsel %vm1397, %v1399, %v1395
    %v1401 = vmul.f32 1.0, %v1400
    %v1402 = vxor.u32 %v913, 2147483648
    %v1403 = vmul.f32 %v1402, 1.442695
    %v1404 = vpow.pop %v1403
    %v1405 = vadd.f32 %v1404, 1.0
    %v1406 = vrcp.pop %v1405
    %v1407 = vmul.f32 %v1405, %v1406
    %v1408 = vsub.f32 1.0, %v1407
    %v1409 = vmul.f32 %v1406, %v1408
    %v1410 = vadd.f32 %v1406, %v1409
    %vm1411 = vweird.f32 %v1405
    %vm1412 = vweird.f32 %v1406
    %vm1413 = vmor %vm1411, %vm1412
    %v1414 = vsel %vm1413, %v1406, %v1410
    %v1415 = vand.u32 2147483647, %v1405
    %vm1416 = vcmp.eq.f32.partialorder %v1415, 8.507059e+37
    %v1417 = vand.u32 %v1405, 2147483648
    %v1418 = vor.u32 1.1754944e-38, %v1417
    %v1419 = vsel %vm1416, %v1418, %v1414
    %v1420 = vmul.f32 1.0, %v1419
    %v1421 = vmul.f32 %v1366, %v1420
    %v1422 = vmul.f32 %v1421, %v1382
    %v1423 = vmul.f32 %v1381, 0.0
    %v1424 = vadd.f32 %v1422, %v1423
    %v1425 = vtanh.pop %v1424
    %v1426 = vmul.f32 %v1401, %v1425
    %v1427 = vpack.c.bf16 %v1426, %v1426
    %v1428 = vpack.c.bf16 %v1424, %v1424
    %v1493 = vunpack.c.l.b16 %v577
    %v1494 = vunpack.c.h.b16 %v577
    %v1495 = vunpack.c.l.b16 %v578
    %v1496 = vunpack.c.h.b16 %v578
    %v1497 = vunpack.c.l.b16 %v579
    %v1498 = vunpack.c.h.b16 %v579
    %v1499 = vunpack.c.l.b16 %v580
    %v1500 = vunpack.c.h.b16 %v580
    %v1501 = vunpack.c.l.b16 %v581
    %v1502 = vunpack.c.h.b16 %v581
    %v1503 = vunpack.c.l.b16 %v582
    %v1504 = vunpack.c.h.b16 %v582
    %v1505 = vunpack.c.l.b16 %v583
    %v1506 = vunpack.c.h.b16 %v583
    %v1507 = vunpack.c.l.b16 %v584
    %v1508 = vunpack.c.h.b16 %v584
    %v1509 = vunpack.c.l.b16 %v585
    %v1510 = vunpack.c.h.b16 %v585
    %v1511 = vunpack.c.l.b16 %v586
    %v1512 = vunpack.c.h.b16 %v586
    %v1513 = vunpack.c.l.b16 %v587
    %v1514 = vunpack.c.h.b16 %v587
    %v1515 = vunpack.c.l.b16 %v588
    %v1516 = vunpack.c.h.b16 %v588
    %v1517 = vunpack.c.l.b16 %v589
    %v1518 = vunpack.c.h.b16 %v589
    %v1519 = vunpack.c.l.b16 %v590
    %v1520 = vunpack.c.h.b16 %v590
    %v1521 = vunpack.c.l.b16 %v591
    %v1522 = vunpack.c.h.b16 %v591
    %v1523 = vunpack.c.l.b16 %v592
    %v1524 = vunpack.c.h.b16 %v592
    %v1525 = vunpack.c.l.b16 %v593
    %v1526 = vunpack.c.h.b16 %v593
    %v1527 = vunpack.c.l.b16 %v594
    %v1528 = vunpack.c.h.b16 %v594
    %v1529 = vunpack.c.l.b16 %v595
    %v1530 = vunpack.c.h.b16 %v595
    %v1531 = vunpack.c.l.b16 %v596
    %v1532 = vunpack.c.h.b16 %v596
    %v1533 = vunpack.c.l.b16 %v597
    %v1534 = vunpack.c.h.b16 %v597
    %v1535 = vunpack.c.l.b16 %v598
    %v1536 = vunpack.c.h.b16 %v598
    %v1537 = vunpack.c.l.b16 %v599
    %v1538 = vunpack.c.h.b16 %v599
    %v1539 = vunpack.c.l.b16 %v600
    %v1540 = vunpack.c.h.b16 %v600
    %v1541 = vunpack.c.l.b16 %v601
    %v1542 = vunpack.c.h.b16 %v601
    %v1543 = vunpack.c.l.b16 %v602
    %v1544 = vunpack.c.h.b16 %v602
    %v1545 = vunpack.c.l.b16 %v603
    %v1546 = vunpack.c.h.b16 %v603
    %v1547 = vunpack.c.l.b16 %v604
    %v1548 = vunpack.c.h.b16 %v604
    %v1549 = vunpack.c.l.b16 %v605
    %v1550 = vunpack.c.h.b16 %v605
    %v1551 = vunpack.c.l.b16 %v606
    %v1552 = vunpack.c.h.b16 %v606
    %v1553 = vunpack.c.l.b16 %v607
    %v1554 = vunpack.c.h.b16 %v607
    %v1555 = vunpack.c.l.b16 %v608
    %v1556 = vunpack.c.h.b16 %v608
    %v1557 = vunpack.c.l.b16 %v609
    %v1558 = vunpack.c.h.b16 %v609
    %v1559 = vunpack.c.l.b16 %v610
    %v1560 = vunpack.c.h.b16 %v610
    %v1561 = vunpack.c.l.b16 %v611
    %v1562 = vunpack.c.h.b16 %v611
    %v1563 = vunpack.c.l.b16 %v612
    %v1564 = vunpack.c.h.b16 %v612
    %v1565 = vunpack.c.l.b16 %v613
    %v1566 = vunpack.c.h.b16 %v613
    %v1567 = vunpack.c.l.b16 %v614
    %v1568 = vunpack.c.h.b16 %v614
    %v1569 = vunpack.c.l.b16 %v615
    %v1570 = vunpack.c.h.b16 %v615
    %v1571 = vunpack.c.l.b16 %v616
    %v1572 = vunpack.c.h.b16 %v616
    %v1573 = vunpack.c.l.b16 %v617
    %v1574 = vunpack.c.h.b16 %v617
    %v1575 = vunpack.c.l.b16 %v618
    %v1576 = vunpack.c.h.b16 %v618
    %v1577 = vunpack.c.l.b16 %v619
    %v1578 = vunpack.c.h.b16 %v619
    %v1579 = vunpack.c.l.b16 %v620
    %v1580 = vunpack.c.h.b16 %v620
    %v1581 = vunpack.c.l.b16 %v621
    %v1582 = vunpack.c.h.b16 %v621
    %v1583 = vunpack.c.l.b16 %v622
    %v1584 = vunpack.c.h.b16 %v622
    %v1585 = vunpack.c.l.b16 %v623
    %v1586 = vunpack.c.h.b16 %v623
    %v1587 = vunpack.c.l.b16 %v624
    %v1588 = vunpack.c.h.b16 %v624
    %v1589 = vunpack.c.l.b16 %v625
    %v1590 = vunpack.c.h.b16 %v625
    %v1591 = vunpack.c.l.b16 %v626
    %v1592 = vunpack.c.h.b16 %v626
    %v1593 = vunpack.c.l.b16 %v627
    %v1594 = vunpack.c.h.b16 %v627
    %v1595 = vunpack.c.l.b16 %v628
    %v1596 = vunpack.c.h.b16 %v628
    %v1597 = vunpack.c.l.b16 %v629
    %v1598 = vunpack.c.h.b16 %v629
    %v1599 = vunpack.c.l.b16 %v630
    %v1600 = vunpack.c.h.b16 %v630
    %v1601 = vunpack.c.l.b16 %v631
    %v1602 = vunpack.c.h.b16 %v631
    %v1603 = vunpack.c.l.b16 %v632
    %v1604 = vunpack.c.h.b16 %v632
    %v1605 = vunpack.c.l.b16 %v633
    %v1606 = vunpack.c.h.b16 %v633
    %v1607 = vunpack.c.l.b16 %v634
    %v1608 = vunpack.c.h.b16 %v634
    %v1609 = vunpack.c.l.b16 %v635
    %v1610 = vunpack.c.h.b16 %v635
    %v1611 = vunpack.c.l.b16 %v636
    %v1612 = vunpack.c.h.b16 %v636
    %v1613 = vunpack.c.l.b16 %v637
    %v1614 = vunpack.c.h.b16 %v637
    %v1615 = vunpack.c.l.b16 %v638
    %v1616 = vunpack.c.h.b16 %v638
    %v1617 = vunpack.c.l.b16 %v639
    %v1618 = vunpack.c.h.b16 %v639
    %v1619 = vunpack.c.l.b16 %v640
    %v1620 = vunpack.c.h.b16 %v640
    %v1621 = vpack.c.b16 %v1497, %v1493
    %v1622 = vpack.c.b16 %v1498, %v1494
    %v1623 = vpack.c.b16 %v1499, %v1495
    %v1624 = vpack.c.b16 %v1500, %v1496
    %v1625 = vpack.c.b16 %v1505, %v1501
    %v1626 = vpack.c.b16 %v1506, %v1502
    %v1627 = vpack.c.b16 %v1507, %v1503
    %v1628 = vpack.c.b16 %v1508, %v1504
    %v1629 = vpack.c.b16 %v1513, %v1509
    %v1630 = vpack.c.b16 %v1514, %v1510
    %v1631 = vpack.c.b16 %v1515, %v1511
    %v1632 = vpack.c.b16 %v1516, %v1512
    %v1633 = vpack.c.b16 %v1521, %v1517
    %v1634 = vpack.c.b16 %v1522, %v1518
    %v1635 = vpack.c.b16 %v1523, %v1519
    %v1636 = vpack.c.b16 %v1524, %v1520
    %v1637 = vpack.c.b16 %v1529, %v1525
    %v1638 = vpack.c.b16 %v1530, %v1526
    %v1639 = vpack.c.b16 %v1531, %v1527
    %v1640 = vpack.c.b16 %v1532, %v1528
    %v1641 = vpack.c.b16 %v1537, %v1533
    %v1642 = vpack.c.b16 %v1538, %v1534
    %v1643 = vpack.c.b16 %v1539, %v1535
    %v1644 = vpack.c.b16 %v1540, %v1536
    %v1645 = vpack.c.b16 %v1545, %v1541
    %v1646 = vpack.c.b16 %v1546, %v1542
    %v1647 = vpack.c.b16 %v1547, %v1543
    %v1648 = vpack.c.b16 %v1548, %v1544
    %v1649 = vpack.c.b16 %v1553, %v1549
    %v1650 = vpack.c.b16 %v1554, %v1550
    %v1651 = vpack.c.b16 %v1555, %v1551
    %v1652 = vpack.c.b16 %v1556, %v1552
    %v1653 = vpack.c.b16 %v1561, %v1557
    %v1654 = vpack.c.b16 %v1562, %v1558
    %v1655 = vpack.c.b16 %v1563, %v1559
    %v1656 = vpack.c.b16 %v1564, %v1560
    %v1657 = vpack.c.b16 %v1569, %v1565
    %v1658 = vpack.c.b16 %v1570, %v1566
    %v1659 = vpack.c.b16 %v1571, %v1567
    %v1660 = vpack.c.b16 %v1572, %v1568
    %v1661 = vpack.c.b16 %v1577, %v1573
    %v1662 = vpack.c.b16 %v1578, %v1574
    %v1663 = vpack.c.b16 %v1579, %v1575
    %v1664 = vpack.c.b16 %v1580, %v1576
    %v1665 = vpack.c.b16 %v1585, %v1581
    %v1666 = vpack.c.b16 %v1586, %v1582
    %v1667 = vpack.c.b16 %v1587, %v1583
    %v1668 = vpack.c.b16 %v1588, %v1584
    %v1669 = vpack.c.b16 %v1593, %v1589
    %v1670 = vpack.c.b16 %v1594, %v1590
    %v1671 = vpack.c.b16 %v1595, %v1591
    %v1672 = vpack.c.b16 %v1596, %v1592
    %v1673 = vpack.c.b16 %v1601, %v1597
    %v1674 = vpack.c.b16 %v1602, %v1598
    %v1675 = vpack.c.b16 %v1603, %v1599
    %v1676 = vpack.c.b16 %v1604, %v1600
    %v1677 = vpack.c.b16 %v1609, %v1605
    %v1678 = vpack.c.b16 %v1610, %v1606
    %v1679 = vpack.c.b16 %v1611, %v1607
    %v1680 = vpack.c.b16 %v1612, %v1608
    %v1681 = vpack.c.b16 %v1617, %v1613
    %v1682 = vpack.c.b16 %v1618, %v1614
    %v1683 = vpack.c.b16 %v1619, %v1615
    %v1684 = vpack.c.b16 %v1620, %v1616
    %1749 = vmatpush.bf16.msra.mxu0 %v1649
    %1750 = vmatpush.bf16.msra.mxu0 %v1645
    %1751 = vmatpush.bf16.msra.mxu0 %v1641
    %1752 = vmatpush.bf16.msra.mxu0 %v1637
    %1753 = vmatpush.bf16.msra.mxu0 %v1633
    %1754 = vmatpush.bf16.msra.mxu0 %v1629
    %1755 = vmatpush.bf16.msra.mxu0 %v1625
    %1756 = vmatpush.bf16.msra.mxu0 %v1621
    %1757 = vmatmul.bf16.gmra.mxu0 0
    %v1758 = vpop.f32.mrf.mxu0
    %v1759 = vadd.f32 0.0, %v1758
    %v1760 = vpop.f32.mrf.mxu0
    %1761 = vdwg.mxu0
    %1762 = vmatpush.bf16.msra.mxu0 %v1681
    %1763 = vmatpush.bf16.msra.mxu0 %v1677
    %1764 = vmatpush.bf16.msra.mxu0 %v1673
    %1765 = vmatpush.bf16.msra.mxu0 %v1669
    %1766 = vmatpush.bf16.msra.mxu0 %v1665
    %1767 = vmatpush.bf16.msra.mxu0 %v1661
    %1768 = vmatpush.bf16.msra.mxu0 %v1657
    %1769 = vmatpush.bf16.msra.mxu0 %v1653
    %1770 = vmatmul.bf16.gmra.mxu0 0
    %v1771 = vpop.f32.mrf.mxu0
    %v1772 = vadd.f32 %v1759, %v1771
    %v1773 = vpop.f32.mrf.mxu0
    %1774 = vdwg.mxu0
    %1775 = vmatpush.bf16.msra.mxu0 %v1650
    %1776 = vmatpush.bf16.msra.mxu0 %v1646
    %1777 = vmatpush.bf16.msra.mxu0 %v1642
    %1778 = vmatpush.bf16.msra.mxu0 %v1638
    %1779 = vmatpush.bf16.msra.mxu0 %v1634
    %1780 = vmatpush.bf16.msra.mxu0 %v1630
    %1781 = vmatpush.bf16.msra.mxu0 %v1626
    %1782 = vmatpush.bf16.msra.mxu0 %v1622
    %1783 = vmatmul.bf16.gmra.mxu0 0
    %v1784 = vpop.f32.mrf.mxu0
    %v1785 = vadd.f32 0.0, %v1784
    %v1786 = vpop.f32.mrf.mxu0
    %1787 = vdwg.mxu0
    %1788 = vmatpush.bf16.msra.mxu0 %v1682
    %1789 = vmatpush.bf16.msra.mxu0 %v1678
    %1790 = vmatpush.bf16.msra.mxu0 %v1674
    %1791 = vmatpush.bf16.msra.mxu0 %v1670
    %1792 = vmatpush.bf16.msra.mxu0 %v1666
    %1793 = vmatpush.bf16.msra.mxu0 %v1662
    %1794 = vmatpush.bf16.msra.mxu0 %v1658
    %1795 = vmatpush.bf16.msra.mxu0 %v1654
    %1796 = vmatmul.bf16.gmra.mxu0 0
    %v1797 = vpop.f32.mrf.mxu0
    %v1798 = vadd.f32 %v1785, %v1797
    %v1799 = vpop.f32.mrf.mxu0
    %1800 = vdwg.mxu0
    %1801 = vmatpush.bf16.msra.mxu0 %v1651
    %1802 = vmatpush.bf16.msra.mxu0 %v1647
    %1803 = vmatpush.bf16.msra.mxu0 %v1643
    %1804 = vmatpush.bf16.msra.mxu0 %v1639
    %1805 = vmatpush.bf16.msra.mxu0 %v1635
    %1806 = vmatpush.bf16.msra.mxu0 %v1631
    %1807 = vmatpush.bf16.msra.mxu0 %v1627
    %1808 = vmatpush.bf16.msra.mxu0 %v1623
    %1809 = vmatmul.bf16.gmra.mxu0 0
    %v1810 = vpop.f32.mrf.mxu0
    %v1811 = vadd.f32 0.0, %v1810
    %v1812 = vpop.f32.mrf.mxu0
    %1813 = vdwg.mxu0
    %1814 = vmatpush.bf16.msra.mxu0 %v1683
    %1815 = vmatpush.bf16.msra.mxu0 %v1679
    %1816 = vmatpush.bf16.msra.mxu0 %v1675
    %1817 = vmatpush.bf16.msra.mxu0 %v1671
    %1818 = vmatpush.bf16.msra.mxu0 %v1667
    %1819 = vmatpush.bf16.msra.mxu0 %v1663
    %1820 = vmatpush.bf16.msra.mxu0 %v1659
    %1821 = vmatpush.bf16.msra.mxu0 %v1655
    %1822 = vmatmul.bf16.gmra.mxu0 0
    %v1823 = vpop.f32.mrf.mxu0
    %v1824 = vadd.f32 %v1811, %v1823
    %v1825 = vpop.f32.mrf.mxu0
    %1826 = vdwg.mxu0
    %1827 = vmatpush.bf16.msra.mxu0 %v1652
    %1828 = vmatpush.bf16.msra.mxu0 %v1648
    %1829 = vmatpush.bf16.msra.mxu0 %v1644
    %1830 = vmatpush.bf16.msra.mxu0 %v1640
    %1831 = vmatpush.bf16.msra.mxu0 %v1636
    %1832 = vmatpush.bf16.msra.mxu0 %v1632
    %1833 = vmatpush.bf16.msra.mxu0 %v1628
    %1834 = vmatpush.bf16.msra.mxu0 %v1624
    %1835 = vmatmul.bf16.gmra.mxu0 0
    %v1836 = vpop.f32.mrf.mxu0
    %v1837 = vadd.f32 0.0, %v1836
    %v1838 = vpop.f32.mrf.mxu0
    %1839 = vdwg.mxu0
    %1840 = vmatpush.bf16.msra.mxu0 %v1684
    %1841 = vmatpush.bf16.msra.mxu0 %v1680
    %1842 = vmatpush.bf16.msra.mxu0 %v1676
    %1843 = vmatpush.bf16.msra.mxu0 %v1672
    %1844 = vmatpush.bf16.msra.mxu0 %v1668
    %1845 = vmatpush.bf16.msra.mxu0 %v1664
    %1846 = vmatpush.bf16.msra.mxu0 %v1660
    %1847 = vmatpush.bf16.msra.mxu0 %v1656
    %1848 = vmatmul.bf16.gmra.mxu0 0
    %v1849 = vpop.f32.mrf.mxu0
    %v1850 = vadd.f32 %v1837, %v1849
    %v1851 = vpop.f32.mrf.mxu0
    %1852 = vdwg.mxu0
    %v1901 = vunpack.c.l.b16 %v529
    %v1902 = vunpack.c.h.b16 %v529
    %v1903 = vunpack.c.l.b16 %v530
    %v1904 = vunpack.c.h.b16 %v530
    %v1905 = vunpack.c.l.b16 %v531
    %v1906 = vunpack.c.l.b16 %v532
    %v1907 = vunpack.c.h.b16 %v532
    %v1908 = vunpack.c.l.b16 %v533
    %v1909 = vunpack.c.h.b16 %v533
    %v1910 = vunpack.c.l.b16 %v534
    %v1911 = vunpack.c.l.b16 %v535
    %v1912 = vunpack.c.h.b16 %v535
    %v1913 = vunpack.c.l.b16 %v536
    %v1914 = vunpack.c.h.b16 %v536
    %v1915 = vunpack.c.l.b16 %v537
    %v1916 = vunpack.c.l.b16 %v538
    %v1917 = vunpack.c.h.b16 %v538
    %v1918 = vunpack.c.l.b16 %v539
    %v1919 = vunpack.c.h.b16 %v539
    %v1920 = vunpack.c.l.b16 %v540
    %v1921 = vunpack.c.l.b16 %v541
    %v1922 = vunpack.c.h.b16 %v541
    %v1923 = vunpack.c.l.b16 %v542
    %v1924 = vunpack.c.h.b16 %v542
    %v1925 = vunpack.c.l.b16 %v543
    %v1926 = vunpack.c.l.b16 %v544
    %v1927 = vunpack.c.h.b16 %v544
    %v1928 = vunpack.c.l.b16 %v545
    %v1929 = vunpack.c.h.b16 %v545
    %v1930 = vunpack.c.l.b16 %v546
    %v1931 = vunpack.c.l.b16 %v547
    %v1932 = vunpack.c.h.b16 %v547
    %v1933 = vunpack.c.l.b16 %v548
    %v1934 = vunpack.c.h.b16 %v548
    %v1935 = vunpack.c.l.b16 %v549
    %v1936 = vunpack.c.l.b16 %v550
    %v1937 = vunpack.c.h.b16 %v550
    %v1938 = vunpack.c.l.b16 %v551
    %v1939 = vunpack.c.h.b16 %v551
    %v1940 = vunpack.c.l.b16 %v552
    %v1941 = vunpack.c.l.b16 %v553
    %v1942 = vunpack.c.h.b16 %v553
    %v1943 = vunpack.c.l.b16 %v554
    %v1944 = vunpack.c.h.b16 %v554
    %v1945 = vunpack.c.l.b16 %v555
    %v1946 = vunpack.c.l.b16 %v556
    %v1947 = vunpack.c.h.b16 %v556
    %v1948 = vunpack.c.l.b16 %v557
    %v1949 = vunpack.c.h.b16 %v557
    %v1950 = vunpack.c.l.b16 %v558
    %v1951 = vunpack.c.l.b16 %v559
    %v1952 = vunpack.c.h.b16 %v559
    %v1953 = vunpack.c.l.b16 %v560
    %v1954 = vunpack.c.h.b16 %v560
    %v1955 = vunpack.c.l.b16 %v561
    %v1956 = vunpack.c.l.b16 %v562
    %v1957 = vunpack.c.h.b16 %v562
    %v1958 = vunpack.c.l.b16 %v563
    %v1959 = vunpack.c.h.b16 %v563
    %v1960 = vunpack.c.l.b16 %v564
    %v1961 = vunpack.c.l.b16 %v565
    %v1962 = vunpack.c.h.b16 %v565
    %v1963 = vunpack.c.l.b16 %v566
    %v1964 = vunpack.c.h.b16 %v566
    %v1965 = vunpack.c.l.b16 %v567
    %v1966 = vunpack.c.l.b16 %v568
    %v1967 = vunpack.c.h.b16 %v568
    %v1968 = vunpack.c.l.b16 %v569
    %v1969 = vunpack.c.h.b16 %v569
    %v1970 = vunpack.c.l.b16 %v570
    %v1971 = vunpack.c.l.b16 %v571
    %v1972 = vunpack.c.h.b16 %v571
    %v1973 = vunpack.c.l.b16 %v572
    %v1974 = vunpack.c.h.b16 %v572
    %v1975 = vunpack.c.l.b16 %v573
    %v1976 = vunpack.c.l.b16 %v574
    %v1977 = vunpack.c.h.b16 %v574
    %v1978 = vunpack.c.l.b16 %v575
    %v1979 = vunpack.c.h.b16 %v575
    %v1980 = vunpack.c.l.b16 %v576
    %v1981 = vpack.c.b16 %v1906, %v1901
    %v1982 = vpack.c.b16 %v1907, %v1902
    %v1983 = vpack.c.b16 %v1908, %v1903
    %v1984 = vpack.c.b16 %v1909, %v1904
    %v1985 = vpack.c.b16 %v1910, %v1905
    %v1986 = vpack.c.b16 %v1916, %v1911
    %v1987 = vpack.c.b16 %v1917, %v1912
    %v1988 = vpack.c.b16 %v1918, %v1913
    %v1989 = vpack.c.b16 %v1919, %v1914
    %v1990 = vpack.c.b16 %v1920, %v1915
    %v1991 = vpack.c.b16 %v1926, %v1921
    %v1992 = vpack.c.b16 %v1927, %v1922
    %v1993 = vpack.c.b16 %v1928, %v1923
    %v1994 = vpack.c.b16 %v1929, %v1924
    %v1995 = vpack.c.b16 %v1930, %v1925
    %v1996 = vpack.c.b16 %v1936, %v1931
    %v1997 = vpack.c.b16 %v1937, %v1932
    %v1998 = vpack.c.b16 %v1938, %v1933
    %v1999 = vpack.c.b16 %v1939, %v1934
    %v2000 = vpack.c.b16 %v1940, %v1935
    %v2001 = vpack.c.b16 %v1946, %v1941
    %v2002 = vpack.c.b16 %v1947, %v1942
    %v2003 = vpack.c.b16 %v1948, %v1943
    %v2004 = vpack.c.b16 %v1949, %v1944
    %v2005 = vpack.c.b16 %v1950, %v1945
    %v2006 = vpack.c.b16 %v1956, %v1951
    %v2007 = vpack.c.b16 %v1957, %v1952
    %v2008 = vpack.c.b16 %v1958, %v1953
    %v2009 = vpack.c.b16 %v1959, %v1954
    %v2010 = vpack.c.b16 %v1960, %v1955
    %v2011 = vpack.c.b16 %v1966, %v1961
    %v2012 = vpack.c.b16 %v1967, %v1962
    %v2013 = vpack.c.b16 %v1968, %v1963
    %v2014 = vpack.c.b16 %v1969, %v1964
    %v2015 = vpack.c.b16 %v1970, %v1965
    %v2016 = vpack.c.b16 %v1976, %v1971
    %v2017 = vpack.c.b16 %v1977, %v1972
    %v2018 = vpack.c.b16 %v1978, %v1973
    %v2019 = vpack.c.b16 %v1979, %v1974
    %v2020 = vpack.c.b16 %v1980, %v1975
    %2061 = vmatpush.bf16.msra.mxu0 %v2016
    %2062 = vmatpush.bf16.msra.mxu0 %v2011
    %2063 = vmatpush.bf16.msra.mxu0 %v2006
    %2064 = vmatpush.bf16.msra.mxu0 %v2001
    %2065 = vmatpush.bf16.msra.mxu0 %v1996
    %2066 = vmatpush.bf16.msra.mxu0 %v1991
    %2067 = vmatpush.bf16.msra.mxu0 %v1986
    %2068 = vmatpush.bf16.msra.mxu0 %v1981
    %2069 = vmatmul.bf16.gmra.mxu0 %v1427
    %v2070 = vpop.f32.mrf.mxu0
    %v2071 = vadd.f32 0.0, %v2070
    %v2072 = vpop.f32.mrf.mxu0
    %2073 = vdwg.mxu0
    %2074 = vmatpush.bf16.msra.mxu0 %v2017
    %2075 = vmatpush.bf16.msra.mxu0 %v2012
    %2076 = vmatpush.bf16.msra.mxu0 %v2007
    %2077 = vmatpush.bf16.msra.mxu0 %v2002
    %2078 = vmatpush.bf16.msra.mxu0 %v1997
    %2079 = vmatpush.bf16.msra.mxu0 %v1992
    %2080 = vmatpush.bf16.msra.mxu0 %v1987
    %2081 = vmatpush.bf16.msra.mxu0 %v1982
    %2082 = vmatmul.bf16.gmra.mxu0 %v1427
    %v2083 = vpop.f32.mrf.mxu0
    %v2084 = vadd.f32 0.0, %v2083
    %v2085 = vpop.f32.mrf.mxu0
    %2086 = vdwg.mxu0
    %2087 = vmatpush.bf16.msra.mxu0 %v2018
    %2088 = vmatpush.bf16.msra.mxu0 %v2013
    %2089 = vmatpush.bf16.msra.mxu0 %v2008
    %2090 = vmatpush.bf16.msra.mxu0 %v2003
    %2091 = vmatpush.bf16.msra.mxu0 %v1998
    %2092 = vmatpush.bf16.msra.mxu0 %v1993
    %2093 = vmatpush.bf16.msra.mxu0 %v1988
    %2094 = vmatpush.bf16.msra.mxu0 %v1983
    %2095 = vmatmul.bf16.gmra.mxu0 %v1427
    %v2096 = vpop.f32.mrf.mxu0
    %v2097 = vadd.f32 0.0, %v2096
    %v2098 = vpop.f32.mrf.mxu0
    %2099 = vdwg.mxu0
    %2100 = vmatpush.bf16.msra.mxu0 %v2019
    %2101 = vmatpush.bf16.msra.mxu0 %v2014
    %2102 = vmatpush.bf16.msra.mxu0 %v2009
    %2103 = vmatpush.bf16.msra.mxu0 %v2004
    %2104 = vmatpush.bf16.msra.mxu0 %v1999
    %2105 = vmatpush.bf16.msra.mxu0 %v1994
    %2106 = vmatpush.bf16.msra.mxu0 %v1989
    %2107 = vmatpush.bf16.msra.mxu0 %v1984
    %2108 = vmatmul.bf16.gmra.mxu0 %v1427
    %v2109 = vpop.f32.mrf.mxu0
    %v2110 = vadd.f32 0.0, %v2109
    %v2111 = vpop.f32.mrf.mxu0
    %2112 = vdwg.mxu0
    %2113 = vmatpush.bf16.msra.mxu0 %v2020
    %2114 = vmatpush.bf16.msra.mxu0 %v2015
    %2115 = vmatpush.bf16.msra.mxu0 %v2010
    %2116 = vmatpush.bf16.msra.mxu0 %v2005
    %2117 = vmatpush.bf16.msra.mxu0 %v2000
    %2118 = vmatpush.bf16.msra.mxu0 %v1995
    %2119 = vmatpush.bf16.msra.mxu0 %v1990
    %2120 = vmatpush.bf16.msra.mxu0 %v1985
    %2121 = vmatmul.bf16.gmra.mxu0 %v1427
    %v2122 = vpop.f32.mrf.mxu0
    %v2123 = vadd.f32 0.0, %v2122
    %v2124 = vpop.f32.mrf.mxu0
    %2125 = vdwg.mxu0
    %v2126 = vadd.f32 %v2071, %v1772
    %v2127 = vadd.f32 %v2084, %v1798
    %v2128 = vadd.f32 %v2097, %v1824
    %v2129 = vadd.f32 %v2110, %v1850
    %v2130 = vadd.f32 %v2126, %v314
    %v2131 = vadd.f32 %v2127, %v315
    %v2132 = vadd.f32 %v2128, %v316
    %v2133 = vadd.f32 %v2129, %v324
    %v2134 = vadd.f32 %v2123, %v348
    %v2135 = vxor.u32 %v2130, 2147483648
    %v2136 = vxor.u32 %v2131, 2147483648
    %v2137 = vmul.f32 %v2135, 1.442695
    %v2138 = vpow.pop %v2137
    %v2139 = vmul.f32 %v2136, 1.442695
    %v2140 = vpow.pop %v2139
    %v2141 = vadd.f32 %v2138, 1.0
    %v2142 = vadd.f32 %v2140, 1.0
    %v2143 = vrcp.pop %v2141
    %v2144 = vmul.f32 %v2141, %v2143
    %v2145 = vsub.f32 1.0, %v2144
    %v2146 = vmul.f32 %v2143, %v2145
    %v2147 = vadd.f32 %v2143, %v2146
    %vm2148 = vweird.f32 %v2141
    %vm2149 = vweird.f32 %v2143
    %vm2150 = vmor %vm2148, %vm2149
    %v2151 = vsel %vm2150, %v2143, %v2147
    %v2152 = vand.u32 2147483647, %v2141
    %vm2153 = vcmp.eq.f32.partialorder %v2152, 8.507059e+37
    %v2154 = vand.u32 %v2141, 2147483648
    %v2155 = vor.u32 1.1754944e-38, %v2154
    %v2156 = vsel %vm2153, %v2155, %v2151
    %v2157 = vmul.f32 1.0, %v2156
    %v2158 = vrcp.pop %v2142
    %v2159 = vmul.f32 %v2142, %v2158
    %v2160 = vsub.f32 1.0, %v2159
    %v2161 = vmul.f32 %v2158, %v2160
    %v2162 = vadd.f32 %v2158, %v2161
    %vm2163 = vweird.f32 %v2142
    %vm2164 = vweird.f32 %v2158
    %vm2165 = vmor %vm2163, %vm2164
    %v2166 = vsel %vm2165, %v2158, %v2162
    %v2167 = vand.u32 2147483647, %v2142
    %vm2168 = vcmp.eq.f32.partialorder %v2167, 8.507059e+37
    %v2169 = vand.u32 %v2142, 2147483648
    %v2170 = vor.u32 1.1754944e-38, %v2169
    %v2171 = vsel %vm2168, %v2170, %v2166
    %v2172 = vmul.f32 1.0, %v2171
    %v2173 = vtanh.pop %v2132
    %v2174 = vxor.u32 %v2133, 2147483648
    %v2175 = vmul.f32 %v2174, 1.442695
    %v2176 = vpow.pop %v2175
    %v2177 = vadd.f32 %v2176, 1.0
    %v2178 = vrcp.pop %v2177
    %v2179 = vmul.f32 %v2177, %v2178
    %v2180 = vsub.f32 1.0, %v2179
    %v2181 = vmul.f32 %v2178, %v2180
    %v2182 = vadd.f32 %v2178, %v2181
    %vm2183 = vweird.f32 %v2177
    %vm2184 = vweird.f32 %v2178
    %vm2185 = vmor %vm2183, %vm2184
    %v2186 = vsel %vm2185, %v2178, %v2182
    %v2187 = vand.u32 2147483647, %v2177
    %vm2188 = vcmp.eq.f32.partialorder %v2187, 8.507059e+37
    %v2189 = vand.u32 %v2177, 2147483648
    %v2190 = vor.u32 1.1754944e-38, %v2189
    %v2191 = vsel %vm2188, %v2190, %v2186
    %v2192 = vmul.f32 1.0, %v2191
    %v2193 = vxor.u32 %v2134, 2147483648
    %v2194 = vmul.f32 %v2193, 1.442695
    %v2195 = vpow.pop %v2194
    %v2196 = vadd.f32 %v2195, 1.0
    %v2197 = vrcp.pop %v2196
    %v2198 = vmul.f32 %v2196, %v2197
    %v2199 = vsub.f32 1.0, %v2198
    %v2200 = vmul.f32 %v2197, %v2199
    %v2201 = vadd.f32 %v2197, %v2200
    %vm2202 = vweird.f32 %v2196
    %vm2203 = vweird.f32 %v2197
    %vm2204 = vmor %vm2202, %vm2203
    %v2205 = vsel %vm2204, %v2197, %v2201
    %v2206 = vand.u32 2147483647, %v2196
    %vm2207 = vcmp.eq.f32.partialorder %v2206, 8.507059e+37
    %v2208 = vand.u32 %v2196, 2147483648
    %v2209 = vor.u32 1.1754944e-38, %v2208
    %v2210 = vsel %vm2207, %v2209, %v2205
    %v2211 = vmul.f32 1.0, %v2210
    %v2212 = vmul.f32 %v2157, %v2211
    %v2213 = vmul.f32 %v2212, %v2173
    %v2214 = vmul.f32 %v2172, 0.0
    %v2215 = vadd.f32 %v2213, %v2214
    %v2216 = vtanh.pop %v2215
    %v2217 = vmul.f32 %v2192, %v2216
    %v2218 = vpack.c.bf16 %v2217, %v2217
    %v2219 = vpack.c.bf16 %v2215, %v2215
    %2220 = vmatpush.bf16.msra.mxu0 %v1136
    %2221 = vmatpush.bf16.msra.mxu0 %v1132
    %2222 = vmatpush.bf16.msra.mxu0 %v1128
    %2223 = vmatpush.bf16.msra.mxu0 %v1124
    %2224 = vmatpush.bf16.msra.mxu0 %v1120
    %2225 = vmatpush.bf16.msra.mxu0 %v1116
    %2226 = vmatpush.bf16.msra.mxu0 %v1112
    %2227 = vmatpush.bf16.msra.mxu0 %v1108
    %2228 = vmatmul.bf16.gmra.mxu0 %v1427
    %v2229 = vpop.f32.mrf.mxu0
    %v2230 = vadd.f32 0.0, %v2229
    %v2231 = vpop.f32.mrf.mxu0
    %2232 = vdwg.mxu0
    %2233 = vmatpush.bf16.msra.mxu0 %v1168
    %2234 = vmatpush.bf16.msra.mxu0 %v1164
    %2235 = vmatpush.bf16.msra.mxu0 %v1160
    %2236 = vmatpush.bf16.msra.mxu0 %v1156
    %2237 = vmatpush.bf16.msra.mxu0 %v1152
    %2238 = vmatpush.bf16.msra.mxu0 %v1148
    %2239 = vmatpush.bf16.msra.mxu0 %v1144
    %2240 = vmatpush.bf16.msra.mxu0 %v1140
    %2241 = vmatmul.bf16.gmra.mxu0 %v1428
    %v2242 = vpop.f32.mrf.mxu0
    %v2243 = vadd.f32 %v2230, %v2242
    %v2244 = vpop.f32.mrf.mxu0
    %2245 = vdwg.mxu0
    %2246 = vmatpush.bf16.msra.mxu0 %v1137
    %2247 = vmatpush.bf16.msra.mxu0 %v1133
    %2248 = vmatpush.bf16.msra.mxu0 %v1129
    %2249 = vmatpush.bf16.msra.mxu0 %v1125
    %2250 = vmatpush.bf16.msra.mxu0 %v1121
    %2251 = vmatpush.bf16.msra.mxu0 %v1117
    %2252 = vmatpush.bf16.msra.mxu0 %v1113
    %2253 = vmatpush.bf16.msra.mxu0 %v1109
    %2254 = vmatmul.bf16.gmra.mxu0 %v1427
    %v2255 = vpop.f32.mrf.mxu0
    %v2256 = vadd.f32 0.0, %v2255
    %v2257 = vpop.f32.mrf.mxu0
    %2258 = vdwg.mxu0
    %2259 = vmatpush.bf16.msra.mxu0 %v1169
    %2260 = vmatpush.bf16.msra.mxu0 %v1165
    %2261 = vmatpush.bf16.msra.mxu0 %v1161
    %2262 = vmatpush.bf16.msra.mxu0 %v1157
    %2263 = vmatpush.bf16.msra.mxu0 %v1153
    %2264 = vmatpush.bf16.msra.mxu0 %v1149
    %2265 = vmatpush.bf16.msra.mxu0 %v1145
    %2266 = vmatpush.bf16.msra.mxu0 %v1141
    %2267 = vmatmul.bf16.gmra.mxu0 %v1428
    %v2268 = vpop.f32.mrf.mxu0
    %v2269 = vadd.f32 %v2256, %v2268
    %v2270 = vpop.f32.mrf.mxu0
    %2271 = vdwg.mxu0
    %2272 = vmatpush.bf16.msra.mxu0 %v1138
    %2273 = vmatpush.bf16.msra.mxu0 %v1134
    %2274 = vmatpush.bf16.msra.mxu0 %v1130
    %2275 = vmatpush.bf16.msra.mxu0 %v1126
    %2276 = vmatpush.bf16.msra.mxu0 %v1122
    %2277 = vmatpush.bf16.msra.mxu0 %v1118
    %2278 = vmatpush.bf16.msra.mxu0 %v1114
    %2279 = vmatpush.bf16.msra.mxu0 %v1110
    %2280 = vmatmul.bf16.gmra.mxu0 %v1427
    %v2281 = vpop.f32.mrf.mxu0
    %v2282 = vadd.f32 0.0, %v2281
    %v2283 = vpop.f32.mrf.mxu0
    %2284 = vdwg.mxu0
    %2285 = vmatpush.bf16.msra.mxu0 %v1170
    %2286 = vmatpush.bf16.msra.mxu0 %v1166
    %2287 = vmatpush.bf16.msra.mxu0 %v1162
    %2288 = vmatpush.bf16.msra.mxu0 %v1158
    %2289 = vmatpush.bf16.msra.mxu0 %v1154
    %2290 = vmatpush.bf16.msra.mxu0 %v1150
    %2291 = vmatpush.bf16.msra.mxu0 %v1146
    %2292 = vmatpush.bf16.msra.mxu0 %v1142
    %2293 = vmatmul.bf16.gmra.mxu0 %v1428
    %v2294 = vpop.f32.mrf.mxu0
    %v2295 = vadd.f32 %v2282, %v2294
    %v2296 = vpop.f32.mrf.mxu0
    %2297 = vdwg.mxu0
    %2298 = vmatpush.bf16.msra.mxu0 %v1139
    %2299 = vmatpush.bf16.msra.mxu0 %v1135
    %2300 = vmatpush.bf16.msra.mxu0 %v1131
    %2301 = vmatpush.bf16.msra.mxu0 %v1127
    %2302 = vmatpush.bf16.msra.mxu0 %v1123
    %2303 = vmatpush.bf16.msra.mxu0 %v1119
    %2304 = vmatpush.bf16.msra.mxu0 %v1115
    %2305 = vmatpush.bf16.msra.mxu0 %v1111
    %2306 = vmatmul.bf16.gmra.mxu0 %v1427
    %v2307 = vpop.f32.mrf.mxu0
    %v2308 = vadd.f32 0.0, %v2307
    %v2309 = vpop.f32.mrf.mxu0
    %2310 = vdwg.mxu0
    %2311 = vmatpush.bf16.msra.mxu0 %v1171
    %2312 = vmatpush.bf16.msra.mxu0 %v1167
    %2313 = vmatpush.bf16.msra.mxu0 %v1163
    %2314 = vmatpush.bf16.msra.mxu0 %v1159
    %2315 = vmatpush.bf16.msra.mxu0 %v1155
    %2316 = vmatpush.bf16.msra.mxu0 %v1151
    %2317 = vmatpush.bf16.msra.mxu0 %v1147
    %2318 = vmatpush.bf16.msra.mxu0 %v1143
    %2319 = vmatmul.bf16.gmra.mxu0 %v1428
    %v2320 = vpop.f32.mrf.mxu0
    %v2321 = vadd.f32 %v2308, %v2320
    %v2322 = vpop.f32.mrf.mxu0
    %2323 = vdwg.mxu0
    %v2328 = vrot.slane %v2243, 7
    %v2329 = vrot.slane %v2269, 7
    %v2330 = vrot.slane %v2295, 7
    %v2331 = vrot.slane %v2321, 7
    %v2336 = vadd.f32 %v861, %v2328
    %v2337 = vadd.f32 %v874, %v2329
    %v2338 = vadd.f32 %v887, %v2330
    %v2339 = vadd.f32 %v900, %v2331
    %v2340 = vxor.u32 %v2336, 2147483648
    %v2341 = vxor.u32 %v2337, 2147483648
    %v2342 = vmul.f32 %v2340, 1.442695
    %v2343 = vpow.pop %v2342
    %v2344 = vmul.f32 %v2341, 1.442695
    %v2345 = vpow.pop %v2344
    %v2346 = vadd.f32 %v2343, 1.0
    %v2347 = vadd.f32 %v2345, 1.0
    %v2348 = vrcp.pop %v2346
    %v2349 = vmul.f32 %v2346, %v2348
    %v2350 = vsub.f32 1.0, %v2349
    %v2351 = vmul.f32 %v2348, %v2350
    %v2352 = vadd.f32 %v2348, %v2351
    %vm2353 = vweird.f32 %v2346
    %vm2354 = vweird.f32 %v2348
    %vm2355 = vmor %vm2353, %vm2354
    %v2356 = vsel %vm2355, %v2348, %v2352
    %v2357 = vand.u32 2147483647, %v2346
    %vm2358 = vcmp.eq.f32.partialorder %v2357, 8.507059e+37
    %v2359 = vand.u32 %v2346, 2147483648
    %v2360 = vor.u32 1.1754944e-38, %v2359
    %v2361 = vsel %vm2358, %v2360, %v2356
    %v2362 = vmul.f32 1.0, %v2361
    %v2363 = vrcp.pop %v2347
    %v2364 = vmul.f32 %v2347, %v2363
    %v2365 = vsub.f32 1.0, %v2364
    %v2366 = vmul.f32 %v2363, %v2365
    %v2367 = vadd.f32 %v2363, %v2366
    %vm2368 = vweird.f32 %v2347
    %vm2369 = vweird.f32 %v2363
    %vm2370 = vmor %vm2368, %vm2369
    %v2371 = vsel %vm2370, %v2363, %v2367
    %v2372 = vand.u32 2147483647, %v2347
    %vm2373 = vcmp.eq.f32.partialorder %v2372, 8.507059e+37
    %v2374 = vand.u32 %v2347, 2147483648
    %v2375 = vor.u32 1.1754944e-38, %v2374
    %v2376 = vsel %vm2373, %v2375, %v2371
    %v2377 = vmul.f32 1.0, %v2376
    %v2378 = vtanh.pop %v2338
    %v2379 = vxor.u32 %v2339, 2147483648
    %v2380 = vmul.f32 %v2379, 1.442695
    %v2381 = vpow.pop %v2380
    %v2382 = vadd.f32 %v2381, 1.0
    %v2383 = vrcp.pop %v2382
    %v2384 = vmul.f32 %v2382, %v2383
    %v2385 = vsub.f32 1.0, %v2384
    %v2386 = vmul.f32 %v2383, %v2385
    %v2387 = vadd.f32 %v2383, %v2386
    %vm2388 = vweird.f32 %v2382
    %vm2389 = vweird.f32 %v2383
    %vm2390 = vmor %vm2388, %vm2389
    %v2391 = vsel %vm2390, %v2383, %v2387
    %v2392 = vand.u32 2147483647, %v2382
    %vm2393 = vcmp.eq.f32.partialorder %v2392, 8.507059e+37
    %v2394 = vand.u32 %v2382, 2147483648
    %v2395 = vor.u32 1.1754944e-38, %v2394
    %v2396 = vsel %vm2393, %v2395, %v2391
    %v2397 = vmul.f32 1.0, %v2396
    %v2398 = vmul.f32 %v2362, %v1420
    %v2399 = vmul.f32 %v2398, %v2378
    %v2401 = vrot.slane %v1424, 7
    %v2403 = vmul.f32 %v2377, %v2401
    %v2404 = vadd.f32 %v2399, %v2403
    %v2405 = vtanh.pop %v2404
    %v2406 = vmul.f32 %v2397, %v2405
    %v2407 = vpack.c.bf16 %v2406, %v2406
    %v2408 = vpack.c.bf16 %v2404, %v2404
    %2409 = vmatpush.bf16.msra.mxu0 %v1649
    %2410 = vmatpush.bf16.msra.mxu0 %v1645
    %2411 = vmatpush.bf16.msra.mxu0 %v1641
    %2412 = vmatpush.bf16.msra.mxu0 %v1637
    %2413 = vmatpush.bf16.msra.mxu0 %v1633
    %2414 = vmatpush.bf16.msra.mxu0 %v1629
    %2415 = vmatpush.bf16.msra.mxu0 %v1625
    %2416 = vmatpush.bf16.msra.mxu0 %v1621
    %2417 = vmatmul.bf16.gmra.mxu0 %v2218
    %v2418 = vpop.f32.mrf.mxu0
    %v2419 = vadd.f32 0.0, %v2418
    %v2420 = vpop.f32.mrf.mxu0
    %2421 = vdwg.mxu0
    %2422 = vmatpush.bf16.msra.mxu0 %v1681
    %2423 = vmatpush.bf16.msra.mxu0 %v1677
    %2424 = vmatpush.bf16.msra.mxu0 %v1673
    %2425 = vmatpush.bf16.msra.mxu0 %v1669
    %2426 = vmatpush.bf16.msra.mxu0 %v1665
    %2427 = vmatpush.bf16.msra.mxu0 %v1661
    %2428 = vmatpush.bf16.msra.mxu0 %v1657
    %2429 = vmatpush.bf16.msra.mxu0 %v1653
    %2430 = vmatmul.bf16.gmra.mxu0 %v2219
    %v2431 = vpop.f32.mrf.mxu0
    %v2432 = vadd.f32 %v2419, %v2431
    %v2433 = vpop.f32.mrf.mxu0
    %2434 = vdwg.mxu0
    %2435 = vmatpush.bf16.msra.mxu0 %v1650
    %2436 = vmatpush.bf16.msra.mxu0 %v1646
    %2437 = vmatpush.bf16.msra.mxu0 %v1642
    %2438 = vmatpush.bf16.msra.mxu0 %v1638
    %2439 = vmatpush.bf16.msra.mxu0 %v1634
    %2440 = vmatpush.bf16.msra.mxu0 %v1630
    %2441 = vmatpush.bf16.msra.mxu0 %v1626
    %2442 = vmatpush.bf16.msra.mxu0 %v1622
    %2443 = vmatmul.bf16.gmra.mxu0 %v2218
    %v2444 = vpop.f32.mrf.mxu0
    %v2445 = vadd.f32 0.0, %v2444
    %v2446 = vpop.f32.mrf.mxu0
    %2447 = vdwg.mxu0
    %2448 = vmatpush.bf16.msra.mxu0 %v1682
    %2449 = vmatpush.bf16.msra.mxu0 %v1678
    %2450 = vmatpush.bf16.msra.mxu0 %v1674
    %2451 = vmatpush.bf16.msra.mxu0 %v1670
    %2452 = vmatpush.bf16.msra.mxu0 %v1666
    %2453 = vmatpush.bf16.msra.mxu0 %v1662
    %2454 = vmatpush.bf16.msra.mxu0 %v1658
    %2455 = vmatpush.bf16.msra.mxu0 %v1654
    %2456 = vmatmul.bf16.gmra.mxu0 %v2219
    %v2457 = vpop.f32.mrf.mxu0
    %v2458 = vadd.f32 %v2445, %v2457
    %v2459 = vpop.f32.mrf.mxu0
    %2460 = vdwg.mxu0
    %2461 = vmatpush.bf16.msra.mxu0 %v1651
    %2462 = vmatpush.bf16.msra.mxu0 %v1647
    %2463 = vmatpush.bf16.msra.mxu0 %v1643
    %2464 = vmatpush.bf16.msra.mxu0 %v1639
    %2465 = vmatpush.bf16.msra.mxu0 %v1635
    %2466 = vmatpush.bf16.msra.mxu0 %v1631
    %2467 = vmatpush.bf16.msra.mxu0 %v1627
    %2468 = vmatpush.bf16.msra.mxu0 %v1623
    %2469 = vmatmul.bf16.gmra.mxu0 %v2218
    %v2470 = vpop.f32.mrf.mxu0
    %v2471 = vadd.f32 0.0, %v2470
    %v2472 = vpop.f32.mrf.mxu0
    %2473 = vdwg.mxu0
    %2474 = vmatpush.bf16.msra.mxu0 %v1683
    %2475 = vmatpush.bf16.msra.mxu0 %v1679
    %2476 = vmatpush.bf16.msra.mxu0 %v1675
    %2477 = vmatpush.bf16.msra.mxu0 %v1671
    %2478 = vmatpush.bf16.msra.mxu0 %v1667
    %2479 = vmatpush.bf16.msra.mxu0 %v1663
    %2480 = vmatpush.bf16.msra.mxu0 %v1659
    %2481 = vmatpush.bf16.msra.mxu0 %v1655
    %2482 = vmatmul.bf16.gmra.mxu0 %v2219
    %v2483 = vpop.f32.mrf.mxu0
    %v2484 = vadd.f32 %v2471, %v2483
    %v2485 = vpop.f32.mrf.mxu0
    %2486 = vdwg.mxu0
    %2487 = vmatpush.bf16.msra.mxu0 %v1652
    %2488 = vmatpush.bf16.msra.mxu0 %v1648
    %2489 = vmatpush.bf16.msra.mxu0 %v1644
    %2490 = vmatpush.bf16.msra.mxu0 %v1640
    %2491 = vmatpush.bf16.msra.mxu0 %v1636
    %2492 = vmatpush.bf16.msra.mxu0 %v1632
    %2493 = vmatpush.bf16.msra.mxu0 %v1628
    %2494 = vmatpush.bf16.msra.mxu0 %v1624
    %2495 = vmatmul.bf16.gmra.mxu0 %v2218
    %v2496 = vpop.f32.mrf.mxu0
    %v2497 = vadd.f32 0.0, %v2496
    %v2498 = vpop.f32.mrf.mxu0
    %2499 = vdwg.mxu0
    %2500 = vmatpush.bf16.msra.mxu0 %v1684
    %2501 = vmatpush.bf16.msra.mxu0 %v1680
    %2502 = vmatpush.bf16.msra.mxu0 %v1676
    %2503 = vmatpush.bf16.msra.mxu0 %v1672
    %2504 = vmatpush.bf16.msra.mxu0 %v1668
    %2505 = vmatpush.bf16.msra.mxu0 %v1664
    %2506 = vmatpush.bf16.msra.mxu0 %v1660
    %2507 = vmatpush.bf16.msra.mxu0 %v1656
    %2508 = vmatmul.bf16.gmra.mxu0 %v2219
    %v2509 = vpop.f32.mrf.mxu0
    %v2510 = vadd.f32 %v2497, %v2509
    %v2511 = vpop.f32.mrf.mxu0
    %2512 = vdwg.mxu0
    %v2514 = vunpack.c.l.b16 %v2407
    %v2515 = vpack.c.b16 %v2514, %v2514
    %v2517 = vshrl.u32 %v2515, 16
    %2520 = vmatpush.bf16.msra.mxu0 %v2016
    %2521 = vmatpush.bf16.msra.mxu0 %v2011
    %2522 = vmatpush.bf16.msra.mxu0 %v2006
    %2523 = vmatpush.bf16.msra.mxu0 %v2001
    %2524 = vmatpush.bf16.msra.mxu0 %v1996
    %2525 = vmatpush.bf16.msra.mxu0 %v1991
    %2526 = vmatpush.bf16.msra.mxu0 %v1986
    %2527 = vmatpush.bf16.msra.mxu0 %v1981
    %2528 = vmatmul.bf16.gmra.mxu0 %v2517
    %v2529 = vpop.f32.mrf.mxu0
    %v2530 = vadd.f32 0.0, %v2529
    %v2531 = vpop.f32.mrf.mxu0
    %2532 = vdwg.mxu0
    %2533 = vmatpush.bf16.msra.mxu0 %v2017
    %2534 = vmatpush.bf16.msra.mxu0 %v2012
    %2535 = vmatpush.bf16.msra.mxu0 %v2007
    %2536 = vmatpush.bf16.msra.mxu0 %v2002
    %2537 = vmatpush.bf16.msra.mxu0 %v1997
    %2538 = vmatpush.bf16.msra.mxu0 %v1992
    %2539 = vmatpush.bf16.msra.mxu0 %v1987
    %2540 = vmatpush.bf16.msra.mxu0 %v1982
    %2541 = vmatmul.bf16.gmra.mxu0 %v2517
    %v2542 = vpop.f32.mrf.mxu0
    %v2543 = vadd.f32 0.0, %v2542
    %v2544 = vpop.f32.mrf.mxu0
    %2545 = vdwg.mxu0
    %2546 = vmatpush.bf16.msra.mxu0 %v2018
    %2547 = vmatpush.bf16.msra.mxu0 %v2013
    %2548 = vmatpush.bf16.msra.mxu0 %v2008
    %2549 = vmatpush.bf16.msra.mxu0 %v2003
    %2550 = vmatpush.bf16.msra.mxu0 %v1998
    %2551 = vmatpush.bf16.msra.mxu0 %v1993
    %2552 = vmatpush.bf16.msra.mxu0 %v1988
    %2553 = vmatpush.bf16.msra.mxu0 %v1983
    %2554 = vmatmul.bf16.gmra.mxu0 %v2517
    %v2555 = vpop.f32.mrf.mxu0
    %v2556 = vadd.f32 0.0, %v2555
    %v2557 = vpop.f32.mrf.mxu0
    %2558 = vdwg.mxu0
    %2559 = vmatpush.bf16.msra.mxu0 %v2019
    %2560 = vmatpush.bf16.msra.mxu0 %v2014
    %2561 = vmatpush.bf16.msra.mxu0 %v2009
    %2562 = vmatpush.bf16.msra.mxu0 %v2004
    %2563 = vmatpush.bf16.msra.mxu0 %v1999
    %2564 = vmatpush.bf16.msra.mxu0 %v1994
    %2565 = vmatpush.bf16.msra.mxu0 %v1989
    %2566 = vmatpush.bf16.msra.mxu0 %v1984
    %2567 = vmatmul.bf16.gmra.mxu0 %v2517
    %v2568 = vpop.f32.mrf.mxu0
    %v2569 = vadd.f32 0.0, %v2568
    %v2570 = vpop.f32.mrf.mxu0
    %2571 = vdwg.mxu0
    %2572 = vmatpush.bf16.msra.mxu0 %v2020
    %2573 = vmatpush.bf16.msra.mxu0 %v2015
    %2574 = vmatpush.bf16.msra.mxu0 %v2010
    %2575 = vmatpush.bf16.msra.mxu0 %v2005
    %2576 = vmatpush.bf16.msra.mxu0 %v2000
    %2577 = vmatpush.bf16.msra.mxu0 %v1995
    %2578 = vmatpush.bf16.msra.mxu0 %v1990
    %2579 = vmatpush.bf16.msra.mxu0 %v1985
    %2580 = vmatmul.bf16.gmra.mxu0 %v2517
    %v2581 = vpop.f32.mrf.mxu0
    %v2582 = vadd.f32 0.0, %v2581
    %v2583 = vpop.f32.mrf.mxu0
    %2584 = vdwg.mxu0
    %v2585 = vadd.f32 %v2530, %v2432
    %v2586 = vadd.f32 %v2543, %v2458
    %v2587 = vadd.f32 %v2556, %v2484
    %v2588 = vadd.f32 %v2569, %v2510
    %v2590 = vrot.slane %v314, 1
    %v2591 = vrot.slane %v315, 1
    %v2592 = vrot.slane %v316, 1
    %v2593 = vrot.slane %v324, 1
    %v2598 = vadd.f32 %v2585, %v2590
    %v2599 = vadd.f32 %v2586, %v2591
    %v2600 = vadd.f32 %v2587, %v2592
    %v2601 = vadd.f32 %v2588, %v2593
    %v2603 = vrot.slane %v348, 1
    %v2605 = vadd.f32 %v2582, %v2603
    %v2606 = vxor.u32 %v2598, 2147483648
    %v2607 = vxor.u32 %v2599, 2147483648
    %v2608 = vmul.f32 %v2606, 1.442695
    %v2609 = vpow.pop %v2608
    %v2610 = vmul.f32 %v2607, 1.442695
    %v2611 = vpow.pop %v2610
    %v2612 = vadd.f32 %v2609, 1.0
    %v2613 = vadd.f32 %v2611, 1.0
    %v2614 = vrcp.pop %v2612
    %v2615 = vmul.f32 %v2612, %v2614
    %v2616 = vsub.f32 1.0, %v2615
    %v2617 = vmul.f32 %v2614, %v2616
    %v2618 = vadd.f32 %v2614, %v2617
    %vm2619 = vweird.f32 %v2612
    %vm2620 = vweird.f32 %v2614
    %vm2621 = vmor %vm2619, %vm2620
    %v2622 = vsel %vm2621, %v2614, %v2618
    %v2623 = vand.u32 2147483647, %v2612
    %vm2624 = vcmp.eq.f32.partialorder %v2623, 8.507059e+37
    %v2625 = vand.u32 %v2612, 2147483648
    %v2626 = vor.u32 1.1754944e-38, %v2625
    %v2627 = vsel %vm2624, %v2626, %v2622
    %v2628 = vmul.f32 1.0, %v2627
    %v2629 = vrcp.pop %v2613
    %v2630 = vmul.f32 %v2613, %v2629
    %v2631 = vsub.f32 1.0, %v2630
    %v2632 = vmul.f32 %v2629, %v2631
    %v2633 = vadd.f32 %v2629, %v2632
    %vm2634 = vweird.f32 %v2613
    %vm2635 = vweird.f32 %v2629
    %vm2636 = vmor %vm2634, %vm2635
    %v2637 = vsel %vm2636, %v2629, %v2633
    %v2638 = vand.u32 2147483647, %v2613
    %vm2639 = vcmp.eq.f32.partialorder %v2638, 8.507059e+37
    %v2640 = vand.u32 %v2613, 2147483648
    %v2641 = vor.u32 1.1754944e-38, %v2640
    %v2642 = vsel %vm2639, %v2641, %v2637
    %v2643 = vmul.f32 1.0, %v2642
    %v2644 = vtanh.pop %v2600
    %v2645 = vxor.u32 %v2601, 2147483648
    %v2646 = vmul.f32 %v2645, 1.442695
    %v2647 = vpow.pop %v2646
    %v2648 = vadd.f32 %v2647, 1.0
    %v2649 = vrcp.pop %v2648
    %v2650 = vmul.f32 %v2648, %v2649
    %v2651 = vsub.f32 1.0, %v2650
    %v2652 = vmul.f32 %v2649, %v2651
    %v2653 = vadd.f32 %v2649, %v2652
    %vm2654 = vweird.f32 %v2648
    %vm2655 = vweird.f32 %v2649
    %vm2656 = vmor %vm2654, %vm2655
    %v2657 = vsel %vm2656, %v2649, %v2653
    %v2658 = vand.u32 2147483647, %v2648
    %vm2659 = vcmp.eq.f32.partialorder %v2658, 8.507059e+37
    %v2660 = vand.u32 %v2648, 2147483648
    %v2661 = vor.u32 1.1754944e-38, %v2660
    %v2662 = vsel %vm2659, %v2661, %v2657
    %v2663 = vmul.f32 1.0, %v2662
    %v2664 = vxor.u32 %v2605, 2147483648
    %v2665 = vmul.f32 %v2664, 1.442695
    %v2666 = vpow.pop %v2665
    %v2667 = vadd.f32 %v2666, 1.0
    %v2668 = vrcp.pop %v2667
    %v2669 = vmul.f32 %v2667, %v2668
    %v2670 = vsub.f32 1.0, %v2669
    %v2671 = vmul.f32 %v2668, %v2670
    %v2672 = vadd.f32 %v2668, %v2671
    %vm2673 = vweird.f32 %v2667
    %vm2674 = vweird.f32 %v2668
    %vm2675 = vmor %vm2673, %vm2674
    %v2676 = vsel %vm2675, %v2668, %v2672
    %v2677 = vand.u32 2147483647, %v2667
    %vm2678 = vcmp.eq.f32.partialorder %v2677, 8.507059e+37
    %v2679 = vand.u32 %v2667, 2147483648
    %v2680 = vor.u32 1.1754944e-38, %v2679
    %v2681 = vsel %vm2678, %v2680, %v2676
    %v2682 = vmul.f32 1.0, %v2681
    %v2683 = vmul.f32 %v2628, %v2682
    %v2684 = vmul.f32 %v2683, %v2644
    %v2685 = vmul.f32 %v2643, %v2215
    %v2686 = vadd.f32 %v2684, %v2685
    %v2687 = vtanh.pop %v2686
    %v2688 = vmul.f32 %v2663, %v2687
    %v2689 = vpack.c.bf16 %v2688, %v2688
    %v2690 = vpack.c.bf16 %v2686, %v2686
    %v2692 = vshrl.u32 %v2407, 16
    %v2695 = vshrl.u32 %v2408, 16
    %2699 = vmatpush.bf16.msra.mxu0 %v1136
    %2700 = vmatpush.bf16.msra.mxu0 %v1132
    %2701 = vmatpush.bf16.msra.mxu0 %v1128
    %2702 = vmatpush.bf16.msra.mxu0 %v1124
    %2703 = vmatpush.bf16.msra.mxu0 %v1120
    %2704 = vmatpush.bf16.msra.mxu0 %v1116
    %2705 = vmatpush.bf16.msra.mxu0 %v1112
    %2706 = vmatpush.bf16.msra.mxu0 %v1108
    %2707 = vmatmul.bf16.gmra.mxu0 %v2692
    %v2708 = vpop.f32.mrf.mxu0
    %v2709 = vadd.f32 0.0, %v2708
    %v2710 = vpop.f32.mrf.mxu0
    %2711 = vdwg.mxu0
    %2712 = vmatpush.bf16.msra.mxu0 %v1168
    %2713 = vmatpush.bf16.msra.mxu0 %v1164
    %2714 = vmatpush.bf16.msra.mxu0 %v1160
    %2715 = vmatpush.bf16.msra.mxu0 %v1156
    %2716 = vmatpush.bf16.msra.mxu0 %v1152
    %2717 = vmatpush.bf16.msra.mxu0 %v1148
    %2718 = vmatpush.bf16.msra.mxu0 %v1144
    %2719 = vmatpush.bf16.msra.mxu0 %v1140
    %2720 = vmatmul.bf16.gmra.mxu0 %v2695
    %v2721 = vpop.f32.mrf.mxu0
    %v2722 = vadd.f32 %v2709, %v2721
    %v2723 = vpop.f32.mrf.mxu0
    %2724 = vdwg.mxu0
    %2725 = vmatpush.bf16.msra.mxu0 %v1137
    %2726 = vmatpush.bf16.msra.mxu0 %v1133
    %2727 = vmatpush.bf16.msra.mxu0 %v1129
    %2728 = vmatpush.bf16.msra.mxu0 %v1125
    %2729 = vmatpush.bf16.msra.mxu0 %v1121
    %2730 = vmatpush.bf16.msra.mxu0 %v1117
    %2731 = vmatpush.bf16.msra.mxu0 %v1113
    %2732 = vmatpush.bf16.msra.mxu0 %v1109
    %2733 = vmatmul.bf16.gmra.mxu0 %v2692
    %v2734 = vpop.f32.mrf.mxu0
    %v2735 = vadd.f32 0.0, %v2734
    %v2736 = vpop.f32.mrf.mxu0
    %2737 = vdwg.mxu0
    %2738 = vmatpush.bf16.msra.mxu0 %v1169
    %2739 = vmatpush.bf16.msra.mxu0 %v1165
    %2740 = vmatpush.bf16.msra.mxu0 %v1161
    %2741 = vmatpush.bf16.msra.mxu0 %v1157
    %2742 = vmatpush.bf16.msra.mxu0 %v1153
    %2743 = vmatpush.bf16.msra.mxu0 %v1149
    %2744 = vmatpush.bf16.msra.mxu0 %v1145
    %2745 = vmatpush.bf16.msra.mxu0 %v1141
    %2746 = vmatmul.bf16.gmra.mxu0 %v2695
    %v2747 = vpop.f32.mrf.mxu0
    %v2748 = vadd.f32 %v2735, %v2747
    %v2749 = vpop.f32.mrf.mxu0
    %2750 = vdwg.mxu0
    %2751 = vmatpush.bf16.msra.mxu0 %v1138
    %2752 = vmatpush.bf16.msra.mxu0 %v1134
    %2753 = vmatpush.bf16.msra.mxu0 %v1130
    %2754 = vmatpush.bf16.msra.mxu0 %v1126
    %2755 = vmatpush.bf16.msra.mxu0 %v1122
    %2756 = vmatpush.bf16.msra.mxu0 %v1118
    %2757 = vmatpush.bf16.msra.mxu0 %v1114
    %2758 = vmatpush.bf16.msra.mxu0 %v1110
    %2759 = vmatmul.bf16.gmra.mxu0 %v2692
    %v2760 = vpop.f32.mrf.mxu0
    %v2761 = vadd.f32 0.0, %v2760
    %v2762 = vpop.f32.mrf.mxu0
    %2763 = vdwg.mxu0
    %2764 = vmatpush.bf16.msra.mxu0 %v1170
    %2765 = vmatpush.bf16.msra.mxu0 %v1166
    %2766 = vmatpush.bf16.msra.mxu0 %v1162
    %2767 = vmatpush.bf16.msra.mxu0 %v1158
    %2768 = vmatpush.bf16.msra.mxu0 %v1154
    %2769 = vmatpush.bf16.msra.mxu0 %v1150
    %2770 = vmatpush.bf16.msra.mxu0 %v1146
    %2771 = vmatpush.bf16.msra.mxu0 %v1142
    %2772 = vmatmul.bf16.gmra.mxu0 %v2695
    %v2773 = vpop.f32.mrf.mxu0
    %v2774 = vadd.f32 %v2761, %v2773
    %v2775 = vpop.f32.mrf.mxu0
    %2776 = vdwg.mxu0
    %2777 = vmatpush.bf16.msra.mxu0 %v1139
    %2778 = vmatpush.bf16.msra.mxu0 %v1135
    %2779 = vmatpush.bf16.msra.mxu0 %v1131
    %2780 = vmatpush.bf16.msra.mxu0 %v1127
    %2781 = vmatpush.bf16.msra.mxu0 %v1123
    %2782 = vmatpush.bf16.msra.mxu0 %v1119
    %2783 = vmatpush.bf16.msra.mxu0 %v1115
    %2784 = vmatpush.bf16.msra.mxu0 %v1111
    %2785 = vmatmul.bf16.gmra.mxu0 %v2692
    %v2786 = vpop.f32.mrf.mxu0
    %v2787 = vadd.f32 0.0, %v2786
    %v2788 = vpop.f32.mrf.mxu0
    %2789 = vdwg.mxu0
    %2790 = vmatpush.bf16.msra.mxu0 %v1171
    %2791 = vmatpush.bf16.msra.mxu0 %v1167
    %2792 = vmatpush.bf16.msra.mxu0 %v1163
    %2793 = vmatpush.bf16.msra.mxu0 %v1159
    %2794 = vmatpush.bf16.msra.mxu0 %v1155
    %2795 = vmatpush.bf16.msra.mxu0 %v1151
    %2796 = vmatpush.bf16.msra.mxu0 %v1147
    %2797 = vmatpush.bf16.msra.mxu0 %v1143
    %2798 = vmatmul.bf16.gmra.mxu0 %v2695
    %v2799 = vpop.f32.mrf.mxu0
    %v2800 = vadd.f32 %v2787, %v2799
    %v2801 = vpop.f32.mrf.mxu0
    %2802 = vdwg.mxu0
    %v2807 = vrot.slane %v2722, 6
    %v2808 = vrot.slane %v2748, 6
    %v2809 = vrot.slane %v2774, 6
    %v2810 = vrot.slane %v2800, 6
    %v2815 = vadd.f32 %v861, %v2807
    %v2816 = vadd.f32 %v874, %v2808
    %v2817 = vadd.f32 %v887, %v2809
    %v2818 = vadd.f32 %v900, %v2810
    %v2819 = vxor.u32 %v2815, 2147483648
    %v2820 = vxor.u32 %v2816, 2147483648
    %v2821 = vmul.f32 %v2819, 1.442695
    %v2822 = vpow.pop %v2821
    %v2823 = vmul.f32 %v2820, 1.442695
    %v2824 = vpow.pop %v2823
    %v2825 = vadd.f32 %v2822, 1.0
    %v2826 = vadd.f32 %v2824, 1.0
    %v2827 = vrcp.pop %v2825
    %v2828 = vmul.f32 %v2825, %v2827
    %v2829 = vsub.f32 1.0, %v2828
    %v2830 = vmul.f32 %v2827, %v2829
    %v2831 = vadd.f32 %v2827, %v2830
    %vm2832 = vweird.f32 %v2825
    %vm2833 = vweird.f32 %v2827
    %vm2834 = vmor %vm2832, %vm2833
    %v2835 = vsel %vm2834, %v2827, %v2831
    %v2836 = vand.u32 2147483647, %v2825
    %vm2837 = vcmp.eq.f32.partialorder %v2836, 8.507059e+37
    %v2838 = vand.u32 %v2825, 2147483648
    %v2839 = vor.u32 1.1754944e-38, %v2838
    %v2840 = vsel %vm2837, %v2839, %v2835
    %v2841 = vmul.f32 1.0, %v2840
    %v2842 = vrcp.pop %v2826
    %v2843 = vmul.f32 %v2826, %v2842
    %v2844 = vsub.f32 1.0, %v2843
    %v2845 = vmul.f32 %v2842, %v2844
    %v2846 = vadd.f32 %v2842, %v2845
    %vm2847 = vweird.f32 %v2826
    %vm2848 = vweird.f32 %v2842
    %vm2849 = vmor %vm2847, %vm2848
    %v2850 = vsel %vm2849, %v2842, %v2846
    %v2851 = vand.u32 2147483647, %v2826
    %vm2852 = vcmp.eq.f32.partialorder %v2851, 8.507059e+37
    %v2853 = vand.u32 %v2826, 2147483648
    %v2854 = vor.u32 1.1754944e-38, %v2853
    %v2855 = vsel %vm2852, %v2854, %v2850
    %v2856 = vmul.f32 1.0, %v2855
    %v2857 = vtanh.pop %v2817
    %v2858 = vxor.u32 %v2818, 2147483648
    %v2859 = vmul.f32 %v2858, 1.442695
    %v2860 = vpow.pop %v2859
    %v2861 = vadd.f32 %v2860, 1.0
    %v2862 = vrcp.pop %v2861
    %v2863 = vmul.f32 %v2861, %v2862
    %v2864 = vsub.f32 1.0, %v2863
    %v2865 = vmul.f32 %v2862, %v2864
    %v2866 = vadd.f32 %v2862, %v2865
    %vm2867 = vweird.f32 %v2861
    %vm2868 = vweird.f32 %v2862
    %vm2869 = vmor %vm2867, %vm2868
    %v2870 = vsel %vm2869, %v2862, %v2866
    %v2871 = vand.u32 2147483647, %v2861
    %vm2872 = vcmp.eq.f32.partialorder %v2871, 8.507059e+37
    %v2873 = vand.u32 %v2861, 2147483648
    %v2874 = vor.u32 1.1754944e-38, %v2873
    %v2875 = vsel %vm2872, %v2874, %v2870
    %v2876 = vmul.f32 1.0, %v2875
    %v2877 = vmul.f32 %v2841, %v1420
    %v2878 = vmul.f32 %v2877, %v2857
    %v2880 = vrot.slane %v2404, 7
    %v2882 = vmul.f32 %v2856, %v2880
    %v2883 = vadd.f32 %v2878, %v2882
    %v2884 = vtanh.pop %v2883
    %v2885 = vmul.f32 %v2876, %v2884
    %v2886 = vpack.c.bf16 %v2885, %v2885
    %v2887 = vpack.c.bf16 %v2883, %v2883
    %2888 = vmatpush.bf16.msra.mxu0 %v1649
    %2889 = vmatpush.bf16.msra.mxu0 %v1645
    %2890 = vmatpush.bf16.msra.mxu0 %v1641
    %2891 = vmatpush.bf16.msra.mxu0 %v1637
    %2892 = vmatpush.bf16.msra.mxu0 %v1633
    %2893 = vmatpush.bf16.msra.mxu0 %v1629
    %2894 = vmatpush.bf16.msra.mxu0 %v1625
    %2895 = vmatpush.bf16.msra.mxu0 %v1621
    %2896 = vmatmul.bf16.gmra.mxu0 %v2689
    %v2897 = vpop.f32.mrf.mxu0
    %v2898 = vadd.f32 0.0, %v2897
    %v2899 = vpop.f32.mrf.mxu0
    %2900 = vdwg.mxu0
    %2901 = vmatpush.bf16.msra.mxu0 %v1681
    %2902 = vmatpush.bf16.msra.mxu0 %v1677
    %2903 = vmatpush.bf16.msra.mxu0 %v1673
    %2904 = vmatpush.bf16.msra.mxu0 %v1669
    %2905 = vmatpush.bf16.msra.mxu0 %v1665
    %2906 = vmatpush.bf16.msra.mxu0 %v1661
    %2907 = vmatpush.bf16.msra.mxu0 %v1657
    %2908 = vmatpush.bf16.msra.mxu0 %v1653
    %2909 = vmatmul.bf16.gmra.mxu0 %v2690
    %v2910 = vpop.f32.mrf.mxu0
    %v2911 = vadd.f32 %v2898, %v2910
    %v2912 = vpop.f32.mrf.mxu0
    %2913 = vdwg.mxu0
    %2914 = vmatpush.bf16.msra.mxu0 %v1650
    %2915 = vmatpush.bf16.msra.mxu0 %v1646
    %2916 = vmatpush.bf16.msra.mxu0 %v1642
    %2917 = vmatpush.bf16.msra.mxu0 %v1638
    %2918 = vmatpush.bf16.msra.mxu0 %v1634
    %2919 = vmatpush.bf16.msra.mxu0 %v1630
    %2920 = vmatpush.bf16.msra.mxu0 %v1626
    %2921 = vmatpush.bf16.msra.mxu0 %v1622
    %2922 = vmatmul.bf16.gmra.mxu0 %v2689
    %v2923 = vpop.f32.mrf.mxu0
    %v2924 = vadd.f32 0.0, %v2923
    %v2925 = vpop.f32.mrf.mxu0
    %2926 = vdwg.mxu0
    %2927 = vmatpush.bf16.msra.mxu0 %v1682
    %2928 = vmatpush.bf16.msra.mxu0 %v1678
    %2929 = vmatpush.bf16.msra.mxu0 %v1674
    %2930 = vmatpush.bf16.msra.mxu0 %v1670
    %2931 = vmatpush.bf16.msra.mxu0 %v1666
    %2932 = vmatpush.bf16.msra.mxu0 %v1662
    %2933 = vmatpush.bf16.msra.mxu0 %v1658
    %2934 = vmatpush.bf16.msra.mxu0 %v1654
    %2935 = vmatmul.bf16.gmra.mxu0 %v2690
    %v2936 = vpop.f32.mrf.mxu0
    %v2937 = vadd.f32 %v2924, %v2936
    %v2938 = vpop.f32.mrf.mxu0
    %2939 = vdwg.mxu0
    %2940 = vmatpush.bf16.msra.mxu0 %v1651
    %2941 = vmatpush.bf16.msra.mxu0 %v1647
    %2942 = vmatpush.bf16.msra.mxu0 %v1643
    %2943 = vmatpush.bf16.msra.mxu0 %v1639
    %2944 = vmatpush.bf16.msra.mxu0 %v1635
    %2945 = vmatpush.bf16.msra.mxu0 %v1631
    %2946 = vmatpush.bf16.msra.mxu0 %v1627
    %2947 = vmatpush.bf16.msra.mxu0 %v1623
    %2948 = vmatmul.bf16.gmra.mxu0 %v2689
    %v2949 = vpop.f32.mrf.mxu0
    %v2950 = vadd.f32 0.0, %v2949
    %v2951 = vpop.f32.mrf.mxu0
    %2952 = vdwg.mxu0
    %2953 = vmatpush.bf16.msra.mxu0 %v1683
    %2954 = vmatpush.bf16.msra.mxu0 %v1679
    %2955 = vmatpush.bf16.msra.mxu0 %v1675
    %2956 = vmatpush.bf16.msra.mxu0 %v1671
    %2957 = vmatpush.bf16.msra.mxu0 %v1667
    %2958 = vmatpush.bf16.msra.mxu0 %v1663
    %2959 = vmatpush.bf16.msra.mxu0 %v1659
    %2960 = vmatpush.bf16.msra.mxu0 %v1655
    %2961 = vmatmul.bf16.gmra.mxu0 %v2690
    %v2962 = vpop.f32.mrf.mxu0
    %v2963 = vadd.f32 %v2950, %v2962
    %v2964 = vpop.f32.mrf.mxu0
    %2965 = vdwg.mxu0
    %2966 = vmatpush.bf16.msra.mxu0 %v1652
    %2967 = vmatpush.bf16.msra.mxu0 %v1648
    %2968 = vmatpush.bf16.msra.mxu0 %v1644
    %2969 = vmatpush.bf16.msra.mxu0 %v1640
    %2970 = vmatpush.bf16.msra.mxu0 %v1636
    %2971 = vmatpush.bf16.msra.mxu0 %v1632
    %2972 = vmatpush.bf16.msra.mxu0 %v1628
    %2973 = vmatpush.bf16.msra.mxu0 %v1624
    %2974 = vmatmul.bf16.gmra.mxu0 %v2689
    %v2975 = vpop.f32.mrf.mxu0
    %v2976 = vadd.f32 0.0, %v2975
    %v2977 = vpop.f32.mrf.mxu0
    %2978 = vdwg.mxu0
    %2979 = vmatpush.bf16.msra.mxu0 %v1684
    %2980 = vmatpush.bf16.msra.mxu0 %v1680
    %2981 = vmatpush.bf16.msra.mxu0 %v1676
    %2982 = vmatpush.bf16.msra.mxu0 %v1672
    %2983 = vmatpush.bf16.msra.mxu0 %v1668
    %2984 = vmatpush.bf16.msra.mxu0 %v1664
    %2985 = vmatpush.bf16.msra.mxu0 %v1660
    %2986 = vmatpush.bf16.msra.mxu0 %v1656
    %2987 = vmatmul.bf16.gmra.mxu0 %v2690
    %v2988 = vpop.f32.mrf.mxu0
    %v2989 = vadd.f32 %v2976, %v2988
    %v2990 = vpop.f32.mrf.mxu0
    %2991 = vdwg.mxu0
    %v2993 = vunpack.c.l.b16 %v2886
    %v2994 = vpack.c.b16 %v2993, %v2993
    %v2995 = vrot.slane %v2994, 1
    %2997 = vmatpush.bf16.msra.mxu0 %v2016
    %2998 = vmatpush.bf16.msra.mxu0 %v2011
    %2999 = vmatpush.bf16.msra.mxu0 %v2006
    %3000 = vmatpush.bf16.msra.mxu0 %v2001
    %3001 = vmatpush.bf16.msra.mxu0 %v1996
    %3002 = vmatpush.bf16.msra.mxu0 %v1991
    %3003 = vmatpush.bf16.msra.mxu0 %v1986
    %3004 = vmatpush.bf16.msra.mxu0 %v1981
    %3005 = vmatmul.bf16.gmra.mxu0 %v2995
    %v3006 = vpop.f32.mrf.mxu0
    %v3007 = vadd.f32 0.0, %v3006
    %v3008 = vpop.f32.mrf.mxu0
    %3009 = vdwg.mxu0
    %3010 = vmatpush.bf16.msra.mxu0 %v2017
    %3011 = vmatpush.bf16.msra.mxu0 %v2012
    %3012 = vmatpush.bf16.msra.mxu0 %v2007
    %3013 = vmatpush.bf16.msra.mxu0 %v2002
    %3014 = vmatpush.bf16.msra.mxu0 %v1997
    %3015 = vmatpush.bf16.msra.mxu0 %v1992
    %3016 = vmatpush.bf16.msra.mxu0 %v1987
    %3017 = vmatpush.bf16.msra.mxu0 %v1982
    %3018 = vmatmul.bf16.gmra.mxu0 %v2995
    %v3019 = vpop.f32.mrf.mxu0
    %v3020 = vadd.f32 0.0, %v3019
    %v3021 = vpop.f32.mrf.mxu0
    %3022 = vdwg.mxu0
    %3023 = vmatpush.bf16.msra.mxu0 %v2018
    %3024 = vmatpush.bf16.msra.mxu0 %v2013
    %3025 = vmatpush.bf16.msra.mxu0 %v2008
    %3026 = vmatpush.bf16.msra.mxu0 %v2003
    %3027 = vmatpush.bf16.msra.mxu0 %v1998
    %3028 = vmatpush.bf16.msra.mxu0 %v1993
    %3029 = vmatpush.bf16.msra.mxu0 %v1988
    %3030 = vmatpush.bf16.msra.mxu0 %v1983
    %3031 = vmatmul.bf16.gmra.mxu0 %v2995
    %v3032 = vpop.f32.mrf.mxu0
    %v3033 = vadd.f32 0.0, %v3032
    %v3034 = vpop.f32.mrf.mxu0
    %3035 = vdwg.mxu0
    %3036 = vmatpush.bf16.msra.mxu0 %v2019
    %3037 = vmatpush.bf16.msra.mxu0 %v2014
    %3038 = vmatpush.bf16.msra.mxu0 %v2009
    %3039 = vmatpush.bf16.msra.mxu0 %v2004
    %3040 = vmatpush.bf16.msra.mxu0 %v1999
    %3041 = vmatpush.bf16.msra.mxu0 %v1994
    %3042 = vmatpush.bf16.msra.mxu0 %v1989
    %3043 = vmatpush.bf16.msra.mxu0 %v1984
    %3044 = vmatmul.bf16.gmra.mxu0 %v2995
    %v3045 = vpop.f32.mrf.mxu0
    %v3046 = vadd.f32 0.0, %v3045
    %v3047 = vpop.f32.mrf.mxu0
    %3048 = vdwg.mxu0
    %3049 = vmatpush.bf16.msra.mxu0 %v2020
    %3050 = vmatpush.bf16.msra.mxu0 %v2015
    %3051 = vmatpush.bf16.msra.mxu0 %v2010
    %3052 = vmatpush.bf16.msra.mxu0 %v2005
    %3053 = vmatpush.bf16.msra.mxu0 %v2000
    %3054 = vmatpush.bf16.msra.mxu0 %v1995
    %3055 = vmatpush.bf16.msra.mxu0 %v1990
    %3056 = vmatpush.bf16.msra.mxu0 %v1985
    %3057 = vmatmul.bf16.gmra.mxu0 %v2995
    %v3058 = vpop.f32.mrf.mxu0
    %v3059 = vadd.f32 0.0, %v3058
    %v3060 = vpop.f32.mrf.mxu0
    %3061 = vdwg.mxu0
    %v3062 = vadd.f32 %v3007, %v2911
    %v3063 = vadd.f32 %v3020, %v2937
    %v3064 = vadd.f32 %v3033, %v2963
    %v3065 = vadd.f32 %v3046, %v2989
    %v3066 = vrot.slane %v314, 2
    %v3067 = vrot.slane %v315, 2
    %v3068 = vrot.slane %v316, 2
    %v3069 = vrot.slane %v324, 2
    %v3074 = vadd.f32 %v3062, %v3066
    %v3075 = vadd.f32 %v3063, %v3067
    %v3076 = vadd.f32 %v3064, %v3068
    %v3077 = vadd.f32 %v3065, %v3069
    %v3078 = vrot.slane %v348, 2
    %v3080 = vadd.f32 %v3059, %v3078
    %v3081 = vxor.u32 %v3074, 2147483648
    %v3082 = vxor.u32 %v3075, 2147483648
    %v3083 = vmul.f32 %v3081, 1.442695
    %v3084 = vpow.pop %v3083
    %v3085 = vmul.f32 %v3082, 1.442695
    %v3086 = vpow.pop %v3085
    %v3087 = vadd.f32 %v3084, 1.0
    %v3088 = vadd.f32 %v3086, 1.0
    %v3089 = vrcp.pop %v3087
    %v3090 = vmul.f32 %v3087, %v3089
    %v3091 = vsub.f32 1.0, %v3090
    %v3092 = vmul.f32 %v3089, %v3091
    %v3093 = vadd.f32 %v3089, %v3092
    %vm3094 = vweird.f32 %v3087
    %vm3095 = vweird.f32 %v3089
    %vm3096 = vmor %vm3094, %vm3095
    %v3097 = vsel %vm3096, %v3089, %v3093
    %v3098 = vand.u32 2147483647, %v3087
    %vm3099 = vcmp.eq.f32.partialorder %v3098, 8.507059e+37
    %v3100 = vand.u32 %v3087, 2147483648
    %v3101 = vor.u32 1.1754944e-38, %v3100
    %v3102 = vsel %vm3099, %v3101, %v3097
    %v3103 = vmul.f32 1.0, %v3102
    %v3104 = vrcp.pop %v3088
    %v3105 = vmul.f32 %v3088, %v3104
    %v3106 = vsub.f32 1.0, %v3105
    %v3107 = vmul.f32 %v3104, %v3106
    %v3108 = vadd.f32 %v3104, %v3107
    %vm3109 = vweird.f32 %v3088
    %vm3110 = vweird.f32 %v3104
    %vm3111 = vmor %vm3109, %vm3110
    %v3112 = vsel %vm3111, %v3104, %v3108
    %v3113 = vand.u32 2147483647, %v3088
    %vm3114 = vcmp.eq.f32.partialorder %v3113, 8.507059e+37
    %v3115 = vand.u32 %v3088, 2147483648
    %v3116 = vor.u32 1.1754944e-38, %v3115
    %v3117 = vsel %vm3114, %v3116, %v3112
    %v3118 = vmul.f32 1.0, %v3117
    %v3119 = vtanh.pop %v3076
    %v3120 = vxor.u32 %v3077, 2147483648
    %v3121 = vmul.f32 %v3120, 1.442695
    %v3122 = vpow.pop %v3121
    %v3123 = vadd.f32 %v3122, 1.0
    %v3124 = vrcp.pop %v3123
    %v3125 = vmul.f32 %v3123, %v3124
    %v3126 = vsub.f32 1.0, %v3125
    %v3127 = vmul.f32 %v3124, %v3126
    %v3128 = vadd.f32 %v3124, %v3127
    %vm3129 = vweird.f32 %v3123
    %vm3130 = vweird.f32 %v3124
    %vm3131 = vmor %vm3129, %vm3130
    %v3132 = vsel %vm3131, %v3124, %v3128
    %v3133 = vand.u32 2147483647, %v3123
    %vm3134 = vcmp.eq.f32.partialorder %v3133, 8.507059e+37
    %v3135 = vand.u32 %v3123, 2147483648
    %v3136 = vor.u32 1.1754944e-38, %v3135
    %v3137 = vsel %vm3134, %v3136, %v3132
    %v3138 = vmul.f32 1.0, %v3137
    %v3139 = vxor.u32 %v3080, 2147483648
    %v3140 = vmul.f32 %v3139, 1.442695
    %v3141 = vpow.pop %v3140
    %v3142 = vadd.f32 %v3141, 1.0
    %v3143 = vrcp.pop %v3142
    %v3144 = vmul.f32 %v3142, %v3143
    %v3145 = vsub.f32 1.0, %v3144
    %v3146 = vmul.f32 %v3143, %v3145
    %v3147 = vadd.f32 %v3143, %v3146
    %vm3148 = vweird.f32 %v3142
    %vm3149 = vweird.f32 %v3143
    %vm3150 = vmor %vm3148, %vm3149
    %v3151 = vsel %vm3150, %v3143, %v3147
    %v3152 = vand.u32 2147483647, %v3142
    %vm3153 = vcmp.eq.f32.partialorder %v3152, 8.507059e+37
    %v3154 = vand.u32 %v3142, 2147483648
    %v3155 = vor.u32 1.1754944e-38, %v3154
    %v3156 = vsel %vm3153, %v3155, %v3151
    %v3157 = vmul.f32 1.0, %v3156
    %v3158 = vmul.f32 %v3103, %v3157
    %v3159 = vmul.f32 %v3158, %v3119
    %v3160 = vmul.f32 %v3118, %v2686
    %v3161 = vadd.f32 %v3159, %v3160
    %v3162 = vtanh.pop %v3161
    %v3163 = vmul.f32 %v3138, %v3162
    %v3164 = vpack.c.bf16 %v3163, %v3163
    %v3165 = vpack.c.bf16 %v3161, %v3161
    %v3167 = vrot.slane %v2886, 1
    %v3168 = vrot.slane %v2887, 1
    %3171 = vmatpush.bf16.msra.mxu0 %v1136
    %3172 = vmatpush.bf16.msra.mxu0 %v1132
    %3173 = vmatpush.bf16.msra.mxu0 %v1128
    %3174 = vmatpush.bf16.msra.mxu0 %v1124
    %3175 = vmatpush.bf16.msra.mxu0 %v1120
    %3176 = vmatpush.bf16.msra.mxu0 %v1116
    %3177 = vmatpush.bf16.msra.mxu0 %v1112
    %3178 = vmatpush.bf16.msra.mxu0 %v1108
    %3179 = vmatmul.bf16.gmra.mxu0 %v3167
    %v3180 = vpop.f32.mrf.mxu0
    %v3181 = vadd.f32 0.0, %v3180
    %v3182 = vpop.f32.mrf.mxu0
    %3183 = vdwg.mxu0
    %3184 = vmatpush.bf16.msra.mxu0 %v1168
    %3185 = vmatpush.bf16.msra.mxu0 %v1164
    %3186 = vmatpush.bf16.msra.mxu0 %v1160
    %3187 = vmatpush.bf16.msra.mxu0 %v1156
    %3188 = vmatpush.bf16.msra.mxu0 %v1152
    %3189 = vmatpush.bf16.msra.mxu0 %v1148
    %3190 = vmatpush.bf16.msra.mxu0 %v1144
    %3191 = vmatpush.bf16.msra.mxu0 %v1140
    %3192 = vmatmul.bf16.gmra.mxu0 %v3168
    %v3193 = vpop.f32.mrf.mxu0
    %v3194 = vadd.f32 %v3181, %v3193
    %v3195 = vpop.f32.mrf.mxu0
    %3196 = vdwg.mxu0
    %3197 = vmatpush.bf16.msra.mxu0 %v1137
    %3198 = vmatpush.bf16.msra.mxu0 %v1133
    %3199 = vmatpush.bf16.msra.mxu0 %v1129
    %3200 = vmatpush.bf16.msra.mxu0 %v1125
    %3201 = vmatpush.bf16.msra.mxu0 %v1121
    %3202 = vmatpush.bf16.msra.mxu0 %v1117
    %3203 = vmatpush.bf16.msra.mxu0 %v1113
    %3204 = vmatpush.bf16.msra.mxu0 %v1109
    %3205 = vmatmul.bf16.gmra.mxu0 %v3167
    %v3206 = vpop.f32.mrf.mxu0
    %v3207 = vadd.f32 0.0, %v3206
    %v3208 = vpop.f32.mrf.mxu0
    %3209 = vdwg.mxu0
    %3210 = vmatpush.bf16.msra.mxu0 %v1169
    %3211 = vmatpush.bf16.msra.mxu0 %v1165
    %3212 = vmatpush.bf16.msra.mxu0 %v1161
    %3213 = vmatpush.bf16.msra.mxu0 %v1157
    %3214 = vmatpush.bf16.msra.mxu0 %v1153
    %3215 = vmatpush.bf16.msra.mxu0 %v1149
    %3216 = vmatpush.bf16.msra.mxu0 %v1145
    %3217 = vmatpush.bf16.msra.mxu0 %v1141
    %3218 = vmatmul.bf16.gmra.mxu0 %v3168
    %v3219 = vpop.f32.mrf.mxu0
    %v3220 = vadd.f32 %v3207, %v3219
    %v3221 = vpop.f32.mrf.mxu0
    %3222 = vdwg.mxu0
    %3223 = vmatpush.bf16.msra.mxu0 %v1138
    %3224 = vmatpush.bf16.msra.mxu0 %v1134
    %3225 = vmatpush.bf16.msra.mxu0 %v1130
    %3226 = vmatpush.bf16.msra.mxu0 %v1126
    %3227 = vmatpush.bf16.msra.mxu0 %v1122
    %3228 = vmatpush.bf16.msra.mxu0 %v1118
    %3229 = vmatpush.bf16.msra.mxu0 %v1114
    %3230 = vmatpush.bf16.msra.mxu0 %v1110
    %3231 = vmatmul.bf16.gmra.mxu0 %v3167
    %v3232 = vpop.f32.mrf.mxu0
    %v3233 = vadd.f32 0.0, %v3232
    %v3234 = vpop.f32.mrf.mxu0
    %3235 = vdwg.mxu0
    %3236 = vmatpush.bf16.msra.mxu0 %v1170
    %3237 = vmatpush.bf16.msra.mxu0 %v1166
    %3238 = vmatpush.bf16.msra.mxu0 %v1162
    %3239 = vmatpush.bf16.msra.mxu0 %v1158
    %3240 = vmatpush.bf16.msra.mxu0 %v1154
    %3241 = vmatpush.bf16.msra.mxu0 %v1150
    %3242 = vmatpush.bf16.msra.mxu0 %v1146
    %3243 = vmatpush.bf16.msra.mxu0 %v1142
    %3244 = vmatmul.bf16.gmra.mxu0 %v3168
    %v3245 = vpop.f32.mrf.mxu0
    %v3246 = vadd.f32 %v3233, %v3245
    %v3247 = vpop.f32.mrf.mxu0
    %3248 = vdwg.mxu0
    %3249 = vmatpush.bf16.msra.mxu0 %v1139
    %3250 = vmatpush.bf16.msra.mxu0 %v1135
    %3251 = vmatpush.bf16.msra.mxu0 %v1131
    %3252 = vmatpush.bf16.msra.mxu0 %v1127
    %3253 = vmatpush.bf16.msra.mxu0 %v1123
    %3254 = vmatpush.bf16.msra.mxu0 %v1119
    %3255 = vmatpush.bf16.msra.mxu0 %v1115
    %3256 = vmatpush.bf16.msra.mxu0 %v1111
    %3257 = vmatmul.bf16.gmra.mxu0 %v3167
    %v3258 = vpop.f32.mrf.mxu0
    %v3259 = vadd.f32 0.0, %v3258
    %v3260 = vpop.f32.mrf.mxu0
    %3261 = vdwg.mxu0
    %3262 = vmatpush.bf16.msra.mxu0 %v1171
    %3263 = vmatpush.bf16.msra.mxu0 %v1167
    %3264 = vmatpush.bf16.msra.mxu0 %v1163
    %3265 = vmatpush.bf16.msra.mxu0 %v1159
    %3266 = vmatpush.bf16.msra.mxu0 %v1155
    %3267 = vmatpush.bf16.msra.mxu0 %v1151
    %3268 = vmatpush.bf16.msra.mxu0 %v1147
    %3269 = vmatpush.bf16.msra.mxu0 %v1143
    %3270 = vmatmul.bf16.gmra.mxu0 %v3168
    %v3271 = vpop.f32.mrf.mxu0
    %v3272 = vadd.f32 %v3259, %v3271
    %v3273 = vpop.f32.mrf.mxu0
    %3274 = vdwg.mxu0
    %v3279 = vrot.slane %v3194, 5
    %v3280 = vrot.slane %v3220, 5
    %v3281 = vrot.slane %v3246, 5
    %v3282 = vrot.slane %v3272, 5
    %v3287 = vadd.f32 %v861, %v3279
    %v3288 = vadd.f32 %v874, %v3280
    %v3289 = vadd.f32 %v887, %v3281
    %v3290 = vadd.f32 %v900, %v3282
    %v3291 = vxor.u32 %v3287, 2147483648
    %v3292 = vxor.u32 %v3288, 2147483648
    %v3293 = vmul.f32 %v3291, 1.442695
    %v3294 = vpow.pop %v3293
    %v3295 = vmul.f32 %v3292, 1.442695
    %v3296 = vpow.pop %v3295
    %v3297 = vadd.f32 %v3294, 1.0
    %v3298 = vadd.f32 %v3296, 1.0
    %v3299 = vrcp.pop %v3297
    %v3300 = vmul.f32 %v3297, %v3299
    %v3301 = vsub.f32 1.0, %v3300
    %v3302 = vmul.f32 %v3299, %v3301
    %v3303 = vadd.f32 %v3299, %v3302
    %vm3304 = vweird.f32 %v3297
    %vm3305 = vweird.f32 %v3299
    %vm3306 = vmor %vm3304, %vm3305
    %v3307 = vsel %vm3306, %v3299, %v3303
    %v3308 = vand.u32 2147483647, %v3297
    %vm3309 = vcmp.eq.f32.partialorder %v3308, 8.507059e+37
    %v3310 = vand.u32 %v3297, 2147483648
    %v3311 = vor.u32 1.1754944e-38, %v3310
    %v3312 = vsel %vm3309, %v3311, %v3307
    %v3313 = vmul.f32 1.0, %v3312
    %v3314 = vrcp.pop %v3298
    %v3315 = vmul.f32 %v3298, %v3314
    %v3316 = vsub.f32 1.0, %v3315
    %v3317 = vmul.f32 %v3314, %v3316
    %v3318 = vadd.f32 %v3314, %v3317
    %vm3319 = vweird.f32 %v3298
    %vm3320 = vweird.f32 %v3314
    %vm3321 = vmor %vm3319, %vm3320
    %v3322 = vsel %vm3321, %v3314, %v3318
    %v3323 = vand.u32 2147483647, %v3298
    %vm3324 = vcmp.eq.f32.partialorder %v3323, 8.507059e+37
    %v3325 = vand.u32 %v3298, 2147483648
    %v3326 = vor.u32 1.1754944e-38, %v3325
    %v3327 = vsel %vm3324, %v3326, %v3322
    %v3328 = vmul.f32 1.0, %v3327
    %v3329 = vtanh.pop %v3289
    %v3330 = vxor.u32 %v3290, 2147483648
    %v3331 = vmul.f32 %v3330, 1.442695
    %v3332 = vpow.pop %v3331
    %v3333 = vadd.f32 %v3332, 1.0
    %v3334 = vrcp.pop %v3333
    %v3335 = vmul.f32 %v3333, %v3334
    %v3336 = vsub.f32 1.0, %v3335
    %v3337 = vmul.f32 %v3334, %v3336
    %v3338 = vadd.f32 %v3334, %v3337
    %vm3339 = vweird.f32 %v3333
    %vm3340 = vweird.f32 %v3334
    %vm3341 = vmor %vm3339, %vm3340
    %v3342 = vsel %vm3341, %v3334, %v3338
    %v3343 = vand.u32 2147483647, %v3333
    %vm3344 = vcmp.eq.f32.partialorder %v3343, 8.507059e+37
    %v3345 = vand.u32 %v3333, 2147483648
    %v3346 = vor.u32 1.1754944e-38, %v3345
    %v3347 = vsel %vm3344, %v3346, %v3342
    %v3348 = vmul.f32 1.0, %v3347
    %v3349 = vmul.f32 %v3313, %v1420
    %v3350 = vmul.f32 %v3349, %v3329
    %v3352 = vrot.slane %v2883, 7
    %v3354 = vmul.f32 %v3328, %v3352
    %v3355 = vadd.f32 %v3350, %v3354
    %v3356 = vtanh.pop %v3355
    %v3357 = vmul.f32 %v3348, %v3356
    %v3358 = vpack.c.bf16 %v3357, %v3357
    %v3359 = vpack.c.bf16 %v3355, %v3355
    %3360 = vmatpush.bf16.msra.mxu0 %v1649
    %3361 = vmatpush.bf16.msra.mxu0 %v1645
    %3362 = vmatpush.bf16.msra.mxu0 %v1641
    %3363 = vmatpush.bf16.msra.mxu0 %v1637
    %3364 = vmatpush.bf16.msra.mxu0 %v1633
    %3365 = vmatpush.bf16.msra.mxu0 %v1629
    %3366 = vmatpush.bf16.msra.mxu0 %v1625
    %3367 = vmatpush.bf16.msra.mxu0 %v1621
    %3368 = vmatmul.bf16.gmra.mxu0 %v3164
    %v3369 = vpop.f32.mrf.mxu0
    %v3370 = vadd.f32 0.0, %v3369
    %v3371 = vpop.f32.mrf.mxu0
    %3372 = vdwg.mxu0
    %3373 = vmatpush.bf16.msra.mxu0 %v1681
    %3374 = vmatpush.bf16.msra.mxu0 %v1677
    %3375 = vmatpush.bf16.msra.mxu0 %v1673
    %3376 = vmatpush.bf16.msra.mxu0 %v1669
    %3377 = vmatpush.bf16.msra.mxu0 %v1665
    %3378 = vmatpush.bf16.msra.mxu0 %v1661
    %3379 = vmatpush.bf16.msra.mxu0 %v1657
    %3380 = vmatpush.bf16.msra.mxu0 %v1653
    %3381 = vmatmul.bf16.gmra.mxu0 %v3165
    %v3382 = vpop.f32.mrf.mxu0
    %v3383 = vadd.f32 %v3370, %v3382
    %v3384 = vpop.f32.mrf.mxu0
    %3385 = vdwg.mxu0
    %3386 = vmatpush.bf16.msra.mxu0 %v1650
    %3387 = vmatpush.bf16.msra.mxu0 %v1646
    %3388 = vmatpush.bf16.msra.mxu0 %v1642
    %3389 = vmatpush.bf16.msra.mxu0 %v1638
    %3390 = vmatpush.bf16.msra.mxu0 %v1634
    %3391 = vmatpush.bf16.msra.mxu0 %v1630
    %3392 = vmatpush.bf16.msra.mxu0 %v1626
    %3393 = vmatpush.bf16.msra.mxu0 %v1622
    %3394 = vmatmul.bf16.gmra.mxu0 %v3164
    %v3395 = vpop.f32.mrf.mxu0
    %v3396 = vadd.f32 0.0, %v3395
    %v3397 = vpop.f32.mrf.mxu0
    %3398 = vdwg.mxu0
    %3399 = vmatpush.bf16.msra.mxu0 %v1682
    %3400 = vmatpush.bf16.msra.mxu0 %v1678
    %3401 = vmatpush.bf16.msra.mxu0 %v1674
    %3402 = vmatpush.bf16.msra.mxu0 %v1670
    %3403 = vmatpush.bf16.msra.mxu0 %v1666
    %3404 = vmatpush.bf16.msra.mxu0 %v1662
    %3405 = vmatpush.bf16.msra.mxu0 %v1658
    %3406 = vmatpush.bf16.msra.mxu0 %v1654
    %3407 = vmatmul.bf16.gmra.mxu0 %v3165
    %v3408 = vpop.f32.mrf.mxu0
    %v3409 = vadd.f32 %v3396, %v3408
    %v3410 = vpop.f32.mrf.mxu0
    %3411 = vdwg.mxu0
    %3412 = vmatpush.bf16.msra.mxu0 %v1651
    %3413 = vmatpush.bf16.msra.mxu0 %v1647
    %3414 = vmatpush.bf16.msra.mxu0 %v1643
    %3415 = vmatpush.bf16.msra.mxu0 %v1639
    %3416 = vmatpush.bf16.msra.mxu0 %v1635
    %3417 = vmatpush.bf16.msra.mxu0 %v1631
    %3418 = vmatpush.bf16.msra.mxu0 %v1627
    %3419 = vmatpush.bf16.msra.mxu0 %v1623
    %3420 = vmatmul.bf16.gmra.mxu0 %v3164
    %v3421 = vpop.f32.mrf.mxu0
    %v3422 = vadd.f32 0.0, %v3421
    %v3423 = vpop.f32.mrf.mxu0
    %3424 = vdwg.mxu0
    %3425 = vmatpush.bf16.msra.mxu0 %v1683
    %3426 = vmatpush.bf16.msra.mxu0 %v1679
    %3427 = vmatpush.bf16.msra.mxu0 %v1675
    %3428 = vmatpush.bf16.msra.mxu0 %v1671
    %3429 = vmatpush.bf16.msra.mxu0 %v1667
    %3430 = vmatpush.bf16.msra.mxu0 %v1663
    %3431 = vmatpush.bf16.msra.mxu0 %v1659
    %3432 = vmatpush.bf16.msra.mxu0 %v1655
    %3433 = vmatmul.bf16.gmra.mxu0 %v3165
    %v3434 = vpop.f32.mrf.mxu0
    %v3435 = vadd.f32 %v3422, %v3434
    %v3436 = vpop.f32.mrf.mxu0
    %3437 = vdwg.mxu0
    %3438 = vmatpush.bf16.msra.mxu0 %v1652
    %3439 = vmatpush.bf16.msra.mxu0 %v1648
    %3440 = vmatpush.bf16.msra.mxu0 %v1644
    %3441 = vmatpush.bf16.msra.mxu0 %v1640
    %3442 = vmatpush.bf16.msra.mxu0 %v1636
    %3443 = vmatpush.bf16.msra.mxu0 %v1632
    %3444 = vmatpush.bf16.msra.mxu0 %v1628
    %3445 = vmatpush.bf16.msra.mxu0 %v1624
    %3446 = vmatmul.bf16.gmra.mxu0 %v3164
    %v3447 = vpop.f32.mrf.mxu0
    %v3448 = vadd.f32 0.0, %v3447
    %v3449 = vpop.f32.mrf.mxu0
    %3450 = vdwg.mxu0
    %3451 = vmatpush.bf16.msra.mxu0 %v1684
    %3452 = vmatpush.bf16.msra.mxu0 %v1680
    %3453 = vmatpush.bf16.msra.mxu0 %v1676
    %3454 = vmatpush.bf16.msra.mxu0 %v1672
    %3455 = vmatpush.bf16.msra.mxu0 %v1668
    %3456 = vmatpush.bf16.msra.mxu0 %v1664
    %3457 = vmatpush.bf16.msra.mxu0 %v1660
    %3458 = vmatpush.bf16.msra.mxu0 %v1656
    %3459 = vmatmul.bf16.gmra.mxu0 %v3165
    %v3460 = vpop.f32.mrf.mxu0
    %v3461 = vadd.f32 %v3448, %v3460
    %v3462 = vpop.f32.mrf.mxu0
    %3463 = vdwg.mxu0
    %v3465 = vunpack.c.l.b16 %v3358
    %v3466 = vpack.c.b16 %v3465, %v3465
    %v3468 = vshrl.u32 %v3466, 16
    %v3470 = vrot.slane %v3468, 1
    %3472 = vmatpush.bf16.msra.mxu0 %v2016
    %3473 = vmatpush.bf16.msra.mxu0 %v2011
    %3474 = vmatpush.bf16.msra.mxu0 %v2006
    %3475 = vmatpush.bf16.msra.mxu0 %v2001
    %3476 = vmatpush.bf16.msra.mxu0 %v1996
    %3477 = vmatpush.bf16.msra.mxu0 %v1991
    %3478 = vmatpush.bf16.msra.mxu0 %v1986
    %3479 = vmatpush.bf16.msra.mxu0 %v1981
    %3480 = vmatmul.bf16.gmra.mxu0 %v3470
    %v3481 = vpop.f32.mrf.mxu0
    %v3482 = vadd.f32 0.0, %v3481
    %v3483 = vpop.f32.mrf.mxu0
    %3484 = vdwg.mxu0
    %3485 = vmatpush.bf16.msra.mxu0 %v2017
    %3486 = vmatpush.bf16.msra.mxu0 %v2012
    %3487 = vmatpush.bf16.msra.mxu0 %v2007
    %3488 = vmatpush.bf16.msra.mxu0 %v2002
    %3489 = vmatpush.bf16.msra.mxu0 %v1997
    %3490 = vmatpush.bf16.msra.mxu0 %v1992
    %3491 = vmatpush.bf16.msra.mxu0 %v1987
    %3492 = vmatpush.bf16.msra.mxu0 %v1982
    %3493 = vmatmul.bf16.gmra.mxu0 %v3470
    %v3494 = vpop.f32.mrf.mxu0
    %v3495 = vadd.f32 0.0, %v3494
    %v3496 = vpop.f32.mrf.mxu0
    %3497 = vdwg.mxu0
    %3498 = vmatpush.bf16.msra.mxu0 %v2018
    %3499 = vmatpush.bf16.msra.mxu0 %v2013
    %3500 = vmatpush.bf16.msra.mxu0 %v2008
    %3501 = vmatpush.bf16.msra.mxu0 %v2003
    %3502 = vmatpush.bf16.msra.mxu0 %v1998
    %3503 = vmatpush.bf16.msra.mxu0 %v1993
    %3504 = vmatpush.bf16.msra.mxu0 %v1988
    %3505 = vmatpush.bf16.msra.mxu0 %v1983
    %3506 = vmatmul.bf16.gmra.mxu0 %v3470
    %v3507 = vpop.f32.mrf.mxu0
    %v3508 = vadd.f32 0.0, %v3507
    %v3509 = vpop.f32.mrf.mxu0
    %3510 = vdwg.mxu0
    %3511 = vmatpush.bf16.msra.mxu0 %v2019
    %3512 = vmatpush.bf16.msra.mxu0 %v2014
    %3513 = vmatpush.bf16.msra.mxu0 %v2009
    %3514 = vmatpush.bf16.msra.mxu0 %v2004
    %3515 = vmatpush.bf16.msra.mxu0 %v1999
    %3516 = vmatpush.bf16.msra.mxu0 %v1994
    %3517 = vmatpush.bf16.msra.mxu0 %v1989
    %3518 = vmatpush.bf16.msra.mxu0 %v1984
    %3519 = vmatmul.bf16.gmra.mxu0 %v3470
    %v3520 = vpop.f32.mrf.mxu0
    %v3521 = vadd.f32 0.0, %v3520
    %v3522 = vpop.f32.mrf.mxu0
    %3523 = vdwg.mxu0
    %3524 = vmatpush.bf16.msra.mxu0 %v2020
    %3525 = vmatpush.bf16.msra.mxu0 %v2015
    %3526 = vmatpush.bf16.msra.mxu0 %v2010
    %3527 = vmatpush.bf16.msra.mxu0 %v2005
    %3528 = vmatpush.bf16.msra.mxu0 %v2000
    %3529 = vmatpush.bf16.msra.mxu0 %v1995
    %3530 = vmatpush.bf16.msra.mxu0 %v1990
    %3531 = vmatpush.bf16.msra.mxu0 %v1985
    %3532 = vmatmul.bf16.gmra.mxu0 %v3470
    %v3533 = vpop.f32.mrf.mxu0
    %v3534 = vadd.f32 0.0, %v3533
    %v3535 = vpop.f32.mrf.mxu0
    %3536 = vdwg.mxu0
    %v3537 = vadd.f32 %v3482, %v3383
    %v3538 = vadd.f32 %v3495, %v3409
    %v3539 = vadd.f32 %v3508, %v3435
    %v3540 = vadd.f32 %v3521, %v3461
    %v3541 = vrot.slane %v314, 3
    %v3542 = vrot.slane %v315, 3
    %v3543 = vrot.slane %v316, 3
    %v3544 = vrot.slane %v324, 3
    %v3549 = vadd.f32 %v3537, %v3541
    %v3550 = vadd.f32 %v3538, %v3542
    %v3551 = vadd.f32 %v3539, %v3543
    %v3552 = vadd.f32 %v3540, %v3544
    %v3553 = vrot.slane %v348, 3
    %v3555 = vadd.f32 %v3534, %v3553
    %v3556 = vxor.u32 %v3549, 2147483648
    %v3557 = vxor.u32 %v3550, 2147483648
    %v3558 = vmul.f32 %v3556, 1.442695
    %v3559 = vpow.pop %v3558
    %v3560 = vmul.f32 %v3557, 1.442695
    %v3561 = vpow.pop %v3560
    %v3562 = vadd.f32 %v3559, 1.0
    %v3563 = vadd.f32 %v3561, 1.0
    %v3564 = vrcp.pop %v3562
    %v3565 = vmul.f32 %v3562, %v3564
    %v3566 = vsub.f32 1.0, %v3565
    %v3567 = vmul.f32 %v3564, %v3566
    %v3568 = vadd.f32 %v3564, %v3567
    %vm3569 = vweird.f32 %v3562
    %vm3570 = vweird.f32 %v3564
    %vm3571 = vmor %vm3569, %vm3570
    %v3572 = vsel %vm3571, %v3564, %v3568
    %v3573 = vand.u32 2147483647, %v3562
    %vm3574 = vcmp.eq.f32.partialorder %v3573, 8.507059e+37
    %v3575 = vand.u32 %v3562, 2147483648
    %v3576 = vor.u32 1.1754944e-38, %v3575
    %v3577 = vsel %vm3574, %v3576, %v3572
    %v3578 = vmul.f32 1.0, %v3577
    %v3579 = vrcp.pop %v3563
    %v3580 = vmul.f32 %v3563, %v3579
    %v3581 = vsub.f32 1.0, %v3580
    %v3582 = vmul.f32 %v3579, %v3581
    %v3583 = vadd.f32 %v3579, %v3582
    %vm3584 = vweird.f32 %v3563
    %vm3585 = vweird.f32 %v3579
    %vm3586 = vmor %vm3584, %vm3585
    %v3587 = vsel %vm3586, %v3579, %v3583
    %v3588 = vand.u32 2147483647, %v3563
    %vm3589 = vcmp.eq.f32.partialorder %v3588, 8.507059e+37
    %v3590 = vand.u32 %v3563, 2147483648
    %v3591 = vor.u32 1.1754944e-38, %v3590
    %v3592 = vsel %vm3589, %v3591, %v3587
    %v3593 = vmul.f32 1.0, %v3592
    %v3594 = vtanh.pop %v3551
    %v3595 = vxor.u32 %v3552, 2147483648
    %v3596 = vmul.f32 %v3595, 1.442695
    %v3597 = vpow.pop %v3596
    %v3598 = vadd.f32 %v3597, 1.0
    %v3599 = vrcp.pop %v3598
    %v3600 = vmul.f32 %v3598, %v3599
    %v3601 = vsub.f32 1.0, %v3600
    %v3602 = vmul.f32 %v3599, %v3601
    %v3603 = vadd.f32 %v3599, %v3602
    %vm3604 = vweird.f32 %v3598
    %vm3605 = vweird.f32 %v3599
    %vm3606 = vmor %vm3604, %vm3605
    %v3607 = vsel %vm3606, %v3599, %v3603
    %v3608 = vand.u32 2147483647, %v3598
    %vm3609 = vcmp.eq.f32.partialorder %v3608, 8.507059e+37
    %v3610 = vand.u32 %v3598, 2147483648
    %v3611 = vor.u32 1.1754944e-38, %v3610
    %v3612 = vsel %vm3609, %v3611, %v3607
    %v3613 = vmul.f32 1.0, %v3612
    %v3614 = vxor.u32 %v3555, 2147483648
    %v3615 = vmul.f32 %v3614, 1.442695
    %v3616 = vpow.pop %v3615
    %v3617 = vadd.f32 %v3616, 1.0
    %v3618 = vrcp.pop %v3617
    %v3619 = vmul.f32 %v3617, %v3618
    %v3620 = vsub.f32 1.0, %v3619
    %v3621 = vmul.f32 %v3618, %v3620
    %v3622 = vadd.f32 %v3618, %v3621
    %vm3623 = vweird.f32 %v3617
    %vm3624 = vweird.f32 %v3618
    %vm3625 = vmor %vm3623, %vm3624
    %v3626 = vsel %vm3625, %v3618, %v3622
    %v3627 = vand.u32 2147483647, %v3617
    %vm3628 = vcmp.eq.f32.partialorder %v3627, 8.507059e+37
    %v3629 = vand.u32 %v3617, 2147483648
    %v3630 = vor.u32 1.1754944e-38, %v3629
    %v3631 = vsel %vm3628, %v3630, %v3626
    %v3632 = vmul.f32 1.0, %v3631
    %v3633 = vmul.f32 %v3578, %v3632
    %v3634 = vmul.f32 %v3633, %v3594
    %v3635 = vmul.f32 %v3593, %v3161
    %v3636 = vadd.f32 %v3634, %v3635
    %v3637 = vtanh.pop %v3636
    %v3638 = vmul.f32 %v3613, %v3637
    %v3639 = vpack.c.bf16 %v3638, %v3638
    %v3640 = vpack.c.bf16 %v3636, %v3636
    %v3642 = vshrl.u32 %v3358, 16
    %v3644 = vrot.slane %v3642, 1
    %v3646 = vshrl.u32 %v3359, 16
    %v3648 = vrot.slane %v3646, 1
    %3651 = vmatpush.bf16.msra.mxu0 %v1136
    %3652 = vmatpush.bf16.msra.mxu0 %v1132
    %3653 = vmatpush.bf16.msra.mxu0 %v1128
    %3654 = vmatpush.bf16.msra.mxu0 %v1124
    %3655 = vmatpush.bf16.msra.mxu0 %v1120
    %3656 = vmatpush.bf16.msra.mxu0 %v1116
    %3657 = vmatpush.bf16.msra.mxu0 %v1112
    %3658 = vmatpush.bf16.msra.mxu0 %v1108
    %3659 = vmatmul.bf16.gmra.mxu0 %v3644
    %v3660 = vpop.f32.mrf.mxu0
    %v3661 = vadd.f32 0.0, %v3660
    %v3662 = vpop.f32.mrf.mxu0
    %3663 = vdwg.mxu0
    %3664 = vmatpush.bf16.msra.mxu0 %v1168
    %3665 = vmatpush.bf16.msra.mxu0 %v1164
    %3666 = vmatpush.bf16.msra.mxu0 %v1160
    %3667 = vmatpush.bf16.msra.mxu0 %v1156
    %3668 = vmatpush.bf16.msra.mxu0 %v1152
    %3669 = vmatpush.bf16.msra.mxu0 %v1148
    %3670 = vmatpush.bf16.msra.mxu0 %v1144
    %3671 = vmatpush.bf16.msra.mxu0 %v1140
    %3672 = vmatmul.bf16.gmra.mxu0 %v3648
    %v3673 = vpop.f32.mrf.mxu0
    %v3674 = vadd.f32 %v3661, %v3673
    %v3675 = vpop.f32.mrf.mxu0
    %3676 = vdwg.mxu0
    %3677 = vmatpush.bf16.msra.mxu0 %v1137
    %3678 = vmatpush.bf16.msra.mxu0 %v1133
    %3679 = vmatpush.bf16.msra.mxu0 %v1129
    %3680 = vmatpush.bf16.msra.mxu0 %v1125
    %3681 = vmatpush.bf16.msra.mxu0 %v1121
    %3682 = vmatpush.bf16.msra.mxu0 %v1117
    %3683 = vmatpush.bf16.msra.mxu0 %v1113
    %3684 = vmatpush.bf16.msra.mxu0 %v1109
    %3685 = vmatmul.bf16.gmra.mxu0 %v3644
    %v3686 = vpop.f32.mrf.mxu0
    %v3687 = vadd.f32 0.0, %v3686
    %v3688 = vpop.f32.mrf.mxu0
    %3689 = vdwg.mxu0
    %3690 = vmatpush.bf16.msra.mxu0 %v1169
    %3691 = vmatpush.bf16.msra.mxu0 %v1165
    %3692 = vmatpush.bf16.msra.mxu0 %v1161
    %3693 = vmatpush.bf16.msra.mxu0 %v1157
    %3694 = vmatpush.bf16.msra.mxu0 %v1153
    %3695 = vmatpush.bf16.msra.mxu0 %v1149
    %3696 = vmatpush.bf16.msra.mxu0 %v1145
    %3697 = vmatpush.bf16.msra.mxu0 %v1141
    %3698 = vmatmul.bf16.gmra.mxu0 %v3648
    %v3699 = vpop.f32.mrf.mxu0
    %v3700 = vadd.f32 %v3687, %v3699
    %v3701 = vpop.f32.mrf.mxu0
    %3702 = vdwg.mxu0
    %3703 = vmatpush.bf16.msra.mxu0 %v1138
    %3704 = vmatpush.bf16.msra.mxu0 %v1134
    %3705 = vmatpush.bf16.msra.mxu0 %v1130
    %3706 = vmatpush.bf16.msra.mxu0 %v1126
    %3707 = vmatpush.bf16.msra.mxu0 %v1122
    %3708 = vmatpush.bf16.msra.mxu0 %v1118
    %3709 = vmatpush.bf16.msra.mxu0 %v1114
    %3710 = vmatpush.bf16.msra.mxu0 %v1110
    %3711 = vmatmul.bf16.gmra.mxu0 %v3644
    %v3712 = vpop.f32.mrf.mxu0
    %v3713 = vadd.f32 0.0, %v3712
    %v3714 = vpop.f32.mrf.mxu0
    %3715 = vdwg.mxu0
    %3716 = vmatpush.bf16.msra.mxu0 %v1170
    %3717 = vmatpush.bf16.msra.mxu0 %v1166
    %3718 = vmatpush.bf16.msra.mxu0 %v1162
    %3719 = vmatpush.bf16.msra.mxu0 %v1158
    %3720 = vmatpush.bf16.msra.mxu0 %v1154
    %3721 = vmatpush.bf16.msra.mxu0 %v1150
    %3722 = vmatpush.bf16.msra.mxu0 %v1146
    %3723 = vmatpush.bf16.msra.mxu0 %v1142
    %3724 = vmatmul.bf16.gmra.mxu0 %v3648
    %v3725 = vpop.f32.mrf.mxu0
    %v3726 = vadd.f32 %v3713, %v3725
    %v3727 = vpop.f32.mrf.mxu0
    %3728 = vdwg.mxu0
    %3729 = vmatpush.bf16.msra.mxu0 %v1139
    %3730 = vmatpush.bf16.msra.mxu0 %v1135
    %3731 = vmatpush.bf16.msra.mxu0 %v1131
    %3732 = vmatpush.bf16.msra.mxu0 %v1127
    %3733 = vmatpush.bf16.msra.mxu0 %v1123
    %3734 = vmatpush.bf16.msra.mxu0 %v1119
    %3735 = vmatpush.bf16.msra.mxu0 %v1115
    %3736 = vmatpush.bf16.msra.mxu0 %v1111
    %3737 = vmatmul.bf16.gmra.mxu0 %v3644
    %v3738 = vpop.f32.mrf.mxu0
    %v3739 = vadd.f32 0.0, %v3738
    %v3740 = vpop.f32.mrf.mxu0
    %3741 = vdwg.mxu0
    %3742 = vmatpush.bf16.msra.mxu0 %v1171
    %3743 = vmatpush.bf16.msra.mxu0 %v1167
    %3744 = vmatpush.bf16.msra.mxu0 %v1163
    %3745 = vmatpush.bf16.msra.mxu0 %v1159
    %3746 = vmatpush.bf16.msra.mxu0 %v1155
    %3747 = vmatpush.bf16.msra.mxu0 %v1151
    %3748 = vmatpush.bf16.msra.mxu0 %v1147
    %3749 = vmatpush.bf16.msra.mxu0 %v1143
    %3750 = vmatmul.bf16.gmra.mxu0 %v3648
    %v3751 = vpop.f32.mrf.mxu0
    %v3752 = vadd.f32 %v3739, %v3751
    %v3753 = vpop.f32.mrf.mxu0
    %3754 = vdwg.mxu0
    %v3759 = vrot.slane %v3674, 4
    %v3760 = vrot.slane %v3700, 4
    %v3761 = vrot.slane %v3726, 4
    %v3762 = vrot.slane %v3752, 4
    %v3767 = vadd.f32 %v861, %v3759
    %v3768 = vadd.f32 %v874, %v3760
    %v3769 = vadd.f32 %v887, %v3761
    %v3770 = vadd.f32 %v900, %v3762
    %v3771 = vxor.u32 %v3767, 2147483648
    %v3772 = vxor.u32 %v3768, 2147483648
    %v3773 = vmul.f32 %v3771, 1.442695
    %v3774 = vpow.pop %v3773
    %v3775 = vmul.f32 %v3772, 1.442695
    %v3776 = vpow.pop %v3775
    %v3777 = vadd.f32 %v3774, 1.0
    %v3778 = vadd.f32 %v3776, 1.0
    %v3779 = vrcp.pop %v3777
    %v3780 = vmul.f32 %v3777, %v3779
    %v3781 = vsub.f32 1.0, %v3780
    %v3782 = vmul.f32 %v3779, %v3781
    %v3783 = vadd.f32 %v3779, %v3782
    %vm3784 = vweird.f32 %v3777
    %vm3785 = vweird.f32 %v3779
    %vm3786 = vmor %vm3784, %vm3785
    %v3787 = vsel %vm3786, %v3779, %v3783
    %v3788 = vand.u32 2147483647, %v3777
    %vm3789 = vcmp.eq.f32.partialorder %v3788, 8.507059e+37
    %v3790 = vand.u32 %v3777, 2147483648
    %v3791 = vor.u32 1.1754944e-38, %v3790
    %v3792 = vsel %vm3789, %v3791, %v3787
    %v3793 = vmul.f32 1.0, %v3792
    %v3794 = vrcp.pop %v3778
    %v3795 = vmul.f32 %v3778, %v3794
    %v3796 = vsub.f32 1.0, %v3795
    %v3797 = vmul.f32 %v3794, %v3796
    %v3798 = vadd.f32 %v3794, %v3797
    %vm3799 = vweird.f32 %v3778
    %vm3800 = vweird.f32 %v3794
    %vm3801 = vmor %vm3799, %vm3800
    %v3802 = vsel %vm3801, %v3794, %v3798
    %v3803 = vand.u32 2147483647, %v3778
    %vm3804 = vcmp.eq.f32.partialorder %v3803, 8.507059e+37
    %v3805 = vand.u32 %v3778, 2147483648
    %v3806 = vor.u32 1.1754944e-38, %v3805
    %v3807 = vsel %vm3804, %v3806, %v3802
    %v3808 = vmul.f32 1.0, %v3807
    %v3809 = vtanh.pop %v3769
    %v3810 = vxor.u32 %v3770, 2147483648
    %v3811 = vmul.f32 %v3810, 1.442695
    %v3812 = vpow.pop %v3811
    %v3813 = vadd.f32 %v3812, 1.0
    %v3814 = vrcp.pop %v3813
    %v3815 = vmul.f32 %v3813, %v3814
    %v3816 = vsub.f32 1.0, %v3815
    %v3817 = vmul.f32 %v3814, %v3816
    %v3818 = vadd.f32 %v3814, %v3817
    %vm3819 = vweird.f32 %v3813
    %vm3820 = vweird.f32 %v3814
    %vm3821 = vmor %vm3819, %vm3820
    %v3822 = vsel %vm3821, %v3814, %v3818
    %v3823 = vand.u32 2147483647, %v3813
    %vm3824 = vcmp.eq.f32.partialorder %v3823, 8.507059e+37
    %v3825 = vand.u32 %v3813, 2147483648
    %v3826 = vor.u32 1.1754944e-38, %v3825
    %v3827 = vsel %vm3824, %v3826, %v3822
    %v3828 = vmul.f32 1.0, %v3827
    %v3829 = vmul.f32 %v3793, %v1420
    %v3830 = vmul.f32 %v3829, %v3809
    %v3832 = vrot.slane %v3355, 7
    %v3834 = vmul.f32 %v3808, %v3832
    %v3835 = vadd.f32 %v3830, %v3834
    %v3836 = vtanh.pop %v3835
    %v3837 = vmul.f32 %v3828, %v3836
    %v3838 = vpack.c.bf16 %v3837, %v3837
    %v3839 = vpack.c.bf16 %v3835, %v3835
    %3840 = vmatpush.bf16.msra.mxu0 %v1649
    %3841 = vmatpush.bf16.msra.mxu0 %v1645
    %3842 = vmatpush.bf16.msra.mxu0 %v1641
    %3843 = vmatpush.bf16.msra.mxu0 %v1637
    %3844 = vmatpush.bf16.msra.mxu0 %v1633
    %3845 = vmatpush.bf16.msra.mxu0 %v1629
    %3846 = vmatpush.bf16.msra.mxu0 %v1625
    %3847 = vmatpush.bf16.msra.mxu0 %v1621
    %3848 = vmatmul.bf16.gmra.mxu0 %v3639
    %v3849 = vpop.f32.mrf.mxu0
    %v3850 = vadd.f32 0.0, %v3849
    %v3851 = vpop.f32.mrf.mxu0
    %3852 = vdwg.mxu0
    %3853 = vmatpush.bf16.msra.mxu0 %v1681
    %3854 = vmatpush.bf16.msra.mxu0 %v1677
    %3855 = vmatpush.bf16.msra.mxu0 %v1673
    %3856 = vmatpush.bf16.msra.mxu0 %v1669
    %3857 = vmatpush.bf16.msra.mxu0 %v1665
    %3858 = vmatpush.bf16.msra.mxu0 %v1661
    %3859 = vmatpush.bf16.msra.mxu0 %v1657
    %3860 = vmatpush.bf16.msra.mxu0 %v1653
    %3861 = vmatmul.bf16.gmra.mxu0 %v3640
    %v3862 = vpop.f32.mrf.mxu0
    %v3863 = vadd.f32 %v3850, %v3862
    %v3864 = vpop.f32.mrf.mxu0
    %3865 = vdwg.mxu0
    %3866 = vmatpush.bf16.msra.mxu0 %v1650
    %3867 = vmatpush.bf16.msra.mxu0 %v1646
    %3868 = vmatpush.bf16.msra.mxu0 %v1642
    %3869 = vmatpush.bf16.msra.mxu0 %v1638
    %3870 = vmatpush.bf16.msra.mxu0 %v1634
    %3871 = vmatpush.bf16.msra.mxu0 %v1630
    %3872 = vmatpush.bf16.msra.mxu0 %v1626
    %3873 = vmatpush.bf16.msra.mxu0 %v1622
    %3874 = vmatmul.bf16.gmra.mxu0 %v3639
    %v3875 = vpop.f32.mrf.mxu0
    %v3876 = vadd.f32 0.0, %v3875
    %v3877 = vpop.f32.mrf.mxu0
    %3878 = vdwg.mxu0
    %3879 = vmatpush.bf16.msra.mxu0 %v1682
    %3880 = vmatpush.bf16.msra.mxu0 %v1678
    %3881 = vmatpush.bf16.msra.mxu0 %v1674
    %3882 = vmatpush.bf16.msra.mxu0 %v1670
    %3883 = vmatpush.bf16.msra.mxu0 %v1666
    %3884 = vmatpush.bf16.msra.mxu0 %v1662
    %3885 = vmatpush.bf16.msra.mxu0 %v1658
    %3886 = vmatpush.bf16.msra.mxu0 %v1654
    %3887 = vmatmul.bf16.gmra.mxu0 %v3640
    %v3888 = vpop.f32.mrf.mxu0
    %v3889 = vadd.f32 %v3876, %v3888
    %v3890 = vpop.f32.mrf.mxu0
    %3891 = vdwg.mxu0
    %3892 = vmatpush.bf16.msra.mxu0 %v1651
    %3893 = vmatpush.bf16.msra.mxu0 %v1647
    %3894 = vmatpush.bf16.msra.mxu0 %v1643
    %3895 = vmatpush.bf16.msra.mxu0 %v1639
    %3896 = vmatpush.bf16.msra.mxu0 %v1635
    %3897 = vmatpush.bf16.msra.mxu0 %v1631
    %3898 = vmatpush.bf16.msra.mxu0 %v1627
    %3899 = vmatpush.bf16.msra.mxu0 %v1623
    %3900 = vmatmul.bf16.gmra.mxu0 %v3639
    %v3901 = vpop.f32.mrf.mxu0
    %v3902 = vadd.f32 0.0, %v3901
    %v3903 = vpop.f32.mrf.mxu0
    %3904 = vdwg.mxu0
    %3905 = vmatpush.bf16.msra.mxu0 %v1683
    %3906 = vmatpush.bf16.msra.mxu0 %v1679
    %3907 = vmatpush.bf16.msra.mxu0 %v1675
    %3908 = vmatpush.bf16.msra.mxu0 %v1671
    %3909 = vmatpush.bf16.msra.mxu0 %v1667
    %3910 = vmatpush.bf16.msra.mxu0 %v1663
    %3911 = vmatpush.bf16.msra.mxu0 %v1659
    %3912 = vmatpush.bf16.msra.mxu0 %v1655
    %3913 = vmatmul.bf16.gmra.mxu0 %v3640
    %v3914 = vpop.f32.mrf.mxu0
    %v3915 = vadd.f32 %v3902, %v3914
    %v3916 = vpop.f32.mrf.mxu0
    %3917 = vdwg.mxu0
    %3918 = vmatpush.bf16.msra.mxu0 %v1652
    %3919 = vmatpush.bf16.msra.mxu0 %v1648
    %3920 = vmatpush.bf16.msra.mxu0 %v1644
    %3921 = vmatpush.bf16.msra.mxu0 %v1640
    %3922 = vmatpush.bf16.msra.mxu0 %v1636
    %3923 = vmatpush.bf16.msra.mxu0 %v1632
    %3924 = vmatpush.bf16.msra.mxu0 %v1628
    %3925 = vmatpush.bf16.msra.mxu0 %v1624
    %3926 = vmatmul.bf16.gmra.mxu0 %v3639
    %v3927 = vpop.f32.mrf.mxu0
    %v3928 = vadd.f32 0.0, %v3927
    %v3929 = vpop.f32.mrf.mxu0
    %3930 = vdwg.mxu0
    %3931 = vmatpush.bf16.msra.mxu0 %v1684
    %3932 = vmatpush.bf16.msra.mxu0 %v1680
    %3933 = vmatpush.bf16.msra.mxu0 %v1676
    %3934 = vmatpush.bf16.msra.mxu0 %v1672
    %3935 = vmatpush.bf16.msra.mxu0 %v1668
    %3936 = vmatpush.bf16.msra.mxu0 %v1664
    %3937 = vmatpush.bf16.msra.mxu0 %v1660
    %3938 = vmatpush.bf16.msra.mxu0 %v1656
    %3939 = vmatmul.bf16.gmra.mxu0 %v3640
    %v3940 = vpop.f32.mrf.mxu0
    %v3941 = vadd.f32 %v3928, %v3940
    %v3942 = vpop.f32.mrf.mxu0
    %3943 = vdwg.mxu0
    %v3945 = vunpack.c.l.b16 %v3838
    %v3946 = vpack.c.b16 %v3945, %v3945
    %v3947 = vrot.slane %v3946, 2
    %3949 = vmatpush.bf16.msra.mxu0 %v2016
    %3950 = vmatpush.bf16.msra.mxu0 %v2011
    %3951 = vmatpush.bf16.msra.mxu0 %v2006
    %3952 = vmatpush.bf16.msra.mxu0 %v2001
    %3953 = vmatpush.bf16.msra.mxu0 %v1996
    %3954 = vmatpush.bf16.msra.mxu0 %v1991
    %3955 = vmatpush.bf16.msra.mxu0 %v1986
    %3956 = vmatpush.bf16.msra.mxu0 %v1981
    %3957 = vmatmul.bf16.gmra.mxu0 %v3947
    %v3958 = vpop.f32.mrf.mxu0
    %v3959 = vadd.f32 0.0, %v3958
    %v3960 = vpop.f32.mrf.mxu0
    %3961 = vdwg.mxu0
    %3962 = vmatpush.bf16.msra.mxu0 %v2017
    %3963 = vmatpush.bf16.msra.mxu0 %v2012
    %3964 = vmatpush.bf16.msra.mxu0 %v2007
    %3965 = vmatpush.bf16.msra.mxu0 %v2002
    %3966 = vmatpush.bf16.msra.mxu0 %v1997
    %3967 = vmatpush.bf16.msra.mxu0 %v1992
    %3968 = vmatpush.bf16.msra.mxu0 %v1987
    %3969 = vmatpush.bf16.msra.mxu0 %v1982
    %3970 = vmatmul.bf16.gmra.mxu0 %v3947
    %v3971 = vpop.f32.mrf.mxu0
    %v3972 = vadd.f32 0.0, %v3971
    %v3973 = vpop.f32.mrf.mxu0
    %3974 = vdwg.mxu0
    %3975 = vmatpush.bf16.msra.mxu0 %v2018
    %3976 = vmatpush.bf16.msra.mxu0 %v2013
    %3977 = vmatpush.bf16.msra.mxu0 %v2008
    %3978 = vmatpush.bf16.msra.mxu0 %v2003
    %3979 = vmatpush.bf16.msra.mxu0 %v1998
    %3980 = vmatpush.bf16.msra.mxu0 %v1993
    %3981 = vmatpush.bf16.msra.mxu0 %v1988
    %3982 = vmatpush.bf16.msra.mxu0 %v1983
    %3983 = vmatmul.bf16.gmra.mxu0 %v3947
    %v3984 = vpop.f32.mrf.mxu0
    %v3985 = vadd.f32 0.0, %v3984
    %v3986 = vpop.f32.mrf.mxu0
    %3987 = vdwg.mxu0
    %3988 = vmatpush.bf16.msra.mxu0 %v2019
    %3989 = vmatpush.bf16.msra.mxu0 %v2014
    %3990 = vmatpush.bf16.msra.mxu0 %v2009
    %3991 = vmatpush.bf16.msra.mxu0 %v2004
    %3992 = vmatpush.bf16.msra.mxu0 %v1999
    %3993 = vmatpush.bf16.msra.mxu0 %v1994
    %3994 = vmatpush.bf16.msra.mxu0 %v1989
    %3995 = vmatpush.bf16.msra.mxu0 %v1984
    %3996 = vmatmul.bf16.gmra.mxu0 %v3947
    %v3997 = vpop.f32.mrf.mxu0
    %v3998 = vadd.f32 0.0, %v3997
    %v3999 = vpop.f32.mrf.mxu0
    %4000 = vdwg.mxu0
    %4001 = vmatpush.bf16.msra.mxu0 %v2020
    %4002 = vmatpush.bf16.msra.mxu0 %v2015
    %4003 = vmatpush.bf16.msra.mxu0 %v2010
    %4004 = vmatpush.bf16.msra.mxu0 %v2005
    %4005 = vmatpush.bf16.msra.mxu0 %v2000
    %4006 = vmatpush.bf16.msra.mxu0 %v1995
    %4007 = vmatpush.bf16.msra.mxu0 %v1990
    %4008 = vmatpush.bf16.msra.mxu0 %v1985
    %4009 = vmatmul.bf16.gmra.mxu0 %v3947
    %v4010 = vpop.f32.mrf.mxu0
    %v4011 = vadd.f32 0.0, %v4010
    %v4012 = vpop.f32.mrf.mxu0
    %4013 = vdwg.mxu0
    %v4014 = vadd.f32 %v3959, %v3863
    %v4015 = vadd.f32 %v3972, %v3889
    %v4016 = vadd.f32 %v3985, %v3915
    %v4017 = vadd.f32 %v3998, %v3941
    %v4018 = vrot.slane %v314, 4
    %v4019 = vrot.slane %v315, 4
    %v4020 = vrot.slane %v316, 4
    %v4021 = vrot.slane %v324, 4
    %v4026 = vadd.f32 %v4014, %v4018
    %v4027 = vadd.f32 %v4015, %v4019
    %v4028 = vadd.f32 %v4016, %v4020
    %v4029 = vadd.f32 %v4017, %v4021
    %v4030 = vrot.slane %v348, 4
    %v4032 = vadd.f32 %v4011, %v4030
    %v4033 = vxor.u32 %v4026, 2147483648
    %v4034 = vxor.u32 %v4027, 2147483648
    %v4035 = vmul.f32 %v4033, 1.442695
    %v4036 = vpow.pop %v4035
    %v4037 = vmul.f32 %v4034, 1.442695
    %v4038 = vpow.pop %v4037
    %v4039 = vadd.f32 %v4036, 1.0
    %v4040 = vadd.f32 %v4038, 1.0
    %v4041 = vrcp.pop %v4039
    %v4042 = vmul.f32 %v4039, %v4041
    %v4043 = vsub.f32 1.0, %v4042
    %v4044 = vmul.f32 %v4041, %v4043
    %v4045 = vadd.f32 %v4041, %v4044
    %vm4046 = vweird.f32 %v4039
    %vm4047 = vweird.f32 %v4041
    %vm4048 = vmor %vm4046, %vm4047
    %v4049 = vsel %vm4048, %v4041, %v4045
    %v4050 = vand.u32 2147483647, %v4039
    %vm4051 = vcmp.eq.f32.partialorder %v4050, 8.507059e+37
    %v4052 = vand.u32 %v4039, 2147483648
    %v4053 = vor.u32 1.1754944e-38, %v4052
    %v4054 = vsel %vm4051, %v4053, %v4049
    %v4055 = vmul.f32 1.0, %v4054
    %v4056 = vrcp.pop %v4040
    %v4057 = vmul.f32 %v4040, %v4056
    %v4058 = vsub.f32 1.0, %v4057
    %v4059 = vmul.f32 %v4056, %v4058
    %v4060 = vadd.f32 %v4056, %v4059
    %vm4061 = vweird.f32 %v4040
    %vm4062 = vweird.f32 %v4056
    %vm4063 = vmor %vm4061, %vm4062
    %v4064 = vsel %vm4063, %v4056, %v4060
    %v4065 = vand.u32 2147483647, %v4040
    %vm4066 = vcmp.eq.f32.partialorder %v4065, 8.507059e+37
    %v4067 = vand.u32 %v4040, 2147483648
    %v4068 = vor.u32 1.1754944e-38, %v4067
    %v4069 = vsel %vm4066, %v4068, %v4064
    %v4070 = vmul.f32 1.0, %v4069
    %v4071 = vtanh.pop %v4028
    %v4072 = vxor.u32 %v4029, 2147483648
    %v4073 = vmul.f32 %v4072, 1.442695
    %v4074 = vpow.pop %v4073
    %v4075 = vadd.f32 %v4074, 1.0
    %v4076 = vrcp.pop %v4075
    %v4077 = vmul.f32 %v4075, %v4076
    %v4078 = vsub.f32 1.0, %v4077
    %v4079 = vmul.f32 %v4076, %v4078
    %v4080 = vadd.f32 %v4076, %v4079
    %vm4081 = vweird.f32 %v4075
    %vm4082 = vweird.f32 %v4076
    %vm4083 = vmor %vm4081, %vm4082
    %v4084 = vsel %vm4083, %v4076, %v4080
    %v4085 = vand.u32 2147483647, %v4075
    %vm4086 = vcmp.eq.f32.partialorder %v4085, 8.507059e+37
    %v4087 = vand.u32 %v4075, 2147483648
    %v4088 = vor.u32 1.1754944e-38, %v4087
    %v4089 = vsel %vm4086, %v4088, %v4084
    %v4090 = vmul.f32 1.0, %v4089
    %v4091 = vxor.u32 %v4032, 2147483648
    %v4092 = vmul.f32 %v4091, 1.442695
    %v4093 = vpow.pop %v4092
    %v4094 = vadd.f32 %v4093, 1.0
    %v4095 = vrcp.pop %v4094
    %v4096 = vmul.f32 %v4094, %v4095
    %v4097 = vsub.f32 1.0, %v4096
    %v4098 = vmul.f32 %v4095, %v4097
    %v4099 = vadd.f32 %v4095, %v4098
    %vm4100 = vweird.f32 %v4094
    %vm4101 = vweird.f32 %v4095
    %vm4102 = vmor %vm4100, %vm4101
    %v4103 = vsel %vm4102, %v4095, %v4099
    %v4104 = vand.u32 2147483647, %v4094
    %vm4105 = vcmp.eq.f32.partialorder %v4104, 8.507059e+37
    %v4106 = vand.u32 %v4094, 2147483648
    %v4107 = vor.u32 1.1754944e-38, %v4106
    %v4108 = vsel %vm4105, %v4107, %v4103
    %v4109 = vmul.f32 1.0, %v4108
    %v4110 = vmul.f32 %v4055, %v4109
    %v4111 = vmul.f32 %v4110, %v4071
    %v4112 = vmul.f32 %v4070, %v3636
    %v4113 = vadd.f32 %v4111, %v4112
    %v4114 = vtanh.pop %v4113
    %v4115 = vmul.f32 %v4090, %v4114
    %v4116 = vpack.c.bf16 %v4115, %v4115
    %v4117 = vpack.c.bf16 %v4113, %v4113
    %v4119 = vrot.slane %v3838, 2
    %v4120 = vrot.slane %v3839, 2
    %4123 = vmatpush.bf16.msra.mxu0 %v1136
    %4124 = vmatpush.bf16.msra.mxu0 %v1132
    %4125 = vmatpush.bf16.msra.mxu0 %v1128
    %4126 = vmatpush.bf16.msra.mxu0 %v1124
    %4127 = vmatpush.bf16.msra.mxu0 %v1120
    %4128 = vmatpush.bf16.msra.mxu0 %v1116
    %4129 = vmatpush.bf16.msra.mxu0 %v1112
    %4130 = vmatpush.bf16.msra.mxu0 %v1108
    %4131 = vmatmul.bf16.gmra.mxu0 %v4119
    %v4132 = vpop.f32.mrf.mxu0
    %v4133 = vadd.f32 0.0, %v4132
    %v4134 = vpop.f32.mrf.mxu0
    %4135 = vdwg.mxu0
    %4136 = vmatpush.bf16.msra.mxu0 %v1168
    %4137 = vmatpush.bf16.msra.mxu0 %v1164
    %4138 = vmatpush.bf16.msra.mxu0 %v1160
    %4139 = vmatpush.bf16.msra.mxu0 %v1156
    %4140 = vmatpush.bf16.msra.mxu0 %v1152
    %4141 = vmatpush.bf16.msra.mxu0 %v1148
    %4142 = vmatpush.bf16.msra.mxu0 %v1144
    %4143 = vmatpush.bf16.msra.mxu0 %v1140
    %4144 = vmatmul.bf16.gmra.mxu0 %v4120
    %v4145 = vpop.f32.mrf.mxu0
    %v4146 = vadd.f32 %v4133, %v4145
    %v4147 = vpop.f32.mrf.mxu0
    %4148 = vdwg.mxu0
    %4149 = vmatpush.bf16.msra.mxu0 %v1137
    %4150 = vmatpush.bf16.msra.mxu0 %v1133
    %4151 = vmatpush.bf16.msra.mxu0 %v1129
    %4152 = vmatpush.bf16.msra.mxu0 %v1125
    %4153 = vmatpush.bf16.msra.mxu0 %v1121
    %4154 = vmatpush.bf16.msra.mxu0 %v1117
    %4155 = vmatpush.bf16.msra.mxu0 %v1113
    %4156 = vmatpush.bf16.msra.mxu0 %v1109
    %4157 = vmatmul.bf16.gmra.mxu0 %v4119
    %v4158 = vpop.f32.mrf.mxu0
    %v4159 = vadd.f32 0.0, %v4158
    %v4160 = vpop.f32.mrf.mxu0
    %4161 = vdwg.mxu0
    %4162 = vmatpush.bf16.msra.mxu0 %v1169
    %4163 = vmatpush.bf16.msra.mxu0 %v1165
    %4164 = vmatpush.bf16.msra.mxu0 %v1161
    %4165 = vmatpush.bf16.msra.mxu0 %v1157
    %4166 = vmatpush.bf16.msra.mxu0 %v1153
    %4167 = vmatpush.bf16.msra.mxu0 %v1149
    %4168 = vmatpush.bf16.msra.mxu0 %v1145
    %4169 = vmatpush.bf16.msra.mxu0 %v1141
    %4170 = vmatmul.bf16.gmra.mxu0 %v4120
    %v4171 = vpop.f32.mrf.mxu0
    %v4172 = vadd.f32 %v4159, %v4171
    %v4173 = vpop.f32.mrf.mxu0
    %4174 = vdwg.mxu0
    %4175 = vmatpush.bf16.msra.mxu0 %v1138
    %4176 = vmatpush.bf16.msra.mxu0 %v1134
    %4177 = vmatpush.bf16.msra.mxu0 %v1130
    %4178 = vmatpush.bf16.msra.mxu0 %v1126
    %4179 = vmatpush.bf16.msra.mxu0 %v1122
    %4180 = vmatpush.bf16.msra.mxu0 %v1118
    %4181 = vmatpush.bf16.msra.mxu0 %v1114
    %4182 = vmatpush.bf16.msra.mxu0 %v1110
    %4183 = vmatmul.bf16.gmra.mxu0 %v4119
    %v4184 = vpop.f32.mrf.mxu0
    %v4185 = vadd.f32 0.0, %v4184
    %v4186 = vpop.f32.mrf.mxu0
    %4187 = vdwg.mxu0
    %4188 = vmatpush.bf16.msra.mxu0 %v1170
    %4189 = vmatpush.bf16.msra.mxu0 %v1166
    %4190 = vmatpush.bf16.msra.mxu0 %v1162
    %4191 = vmatpush.bf16.msra.mxu0 %v1158
    %4192 = vmatpush.bf16.msra.mxu0 %v1154
    %4193 = vmatpush.bf16.msra.mxu0 %v1150
    %4194 = vmatpush.bf16.msra.mxu0 %v1146
    %4195 = vmatpush.bf16.msra.mxu0 %v1142
    %4196 = vmatmul.bf16.gmra.mxu0 %v4120
    %v4197 = vpop.f32.mrf.mxu0
    %v4198 = vadd.f32 %v4185, %v4197
    %v4199 = vpop.f32.mrf.mxu0
    %4200 = vdwg.mxu0
    %4201 = vmatpush.bf16.msra.mxu0 %v1139
    %4202 = vmatpush.bf16.msra.mxu0 %v1135
    %4203 = vmatpush.bf16.msra.mxu0 %v1131
    %4204 = vmatpush.bf16.msra.mxu0 %v1127
    %4205 = vmatpush.bf16.msra.mxu0 %v1123
    %4206 = vmatpush.bf16.msra.mxu0 %v1119
    %4207 = vmatpush.bf16.msra.mxu0 %v1115
    %4208 = vmatpush.bf16.msra.mxu0 %v1111
    %4209 = vmatmul.bf16.gmra.mxu0 %v4119
    %v4210 = vpop.f32.mrf.mxu0
    %v4211 = vadd.f32 0.0, %v4210
    %v4212 = vpop.f32.mrf.mxu0
    %4213 = vdwg.mxu0
    %4214 = vmatpush.bf16.msra.mxu0 %v1171
    %4215 = vmatpush.bf16.msra.mxu0 %v1167
    %4216 = vmatpush.bf16.msra.mxu0 %v1163
    %4217 = vmatpush.bf16.msra.mxu0 %v1159
    %4218 = vmatpush.bf16.msra.mxu0 %v1155
    %4219 = vmatpush.bf16.msra.mxu0 %v1151
    %4220 = vmatpush.bf16.msra.mxu0 %v1147
    %4221 = vmatpush.bf16.msra.mxu0 %v1143
    %4222 = vmatmul.bf16.gmra.mxu0 %v4120
    %v4223 = vpop.f32.mrf.mxu0
    %v4224 = vadd.f32 %v4211, %v4223
    %v4225 = vpop.f32.mrf.mxu0
    %4226 = vdwg.mxu0
    %v4231 = vrot.slane %v4146, 3
    %v4232 = vrot.slane %v4172, 3
    %v4233 = vrot.slane %v4198, 3
    %v4234 = vrot.slane %v4224, 3
    %v4239 = vadd.f32 %v861, %v4231
    %v4240 = vadd.f32 %v874, %v4232
    %v4241 = vadd.f32 %v887, %v4233
    %v4242 = vadd.f32 %v900, %v4234
    %v4243 = vxor.u32 %v4239, 2147483648
    %v4244 = vxor.u32 %v4240, 2147483648
    %v4245 = vmul.f32 %v4243, 1.442695
    %v4246 = vpow.pop %v4245
    %v4247 = vmul.f32 %v4244, 1.442695
    %v4248 = vpow.pop %v4247
    %v4249 = vadd.f32 %v4246, 1.0
    %v4250 = vadd.f32 %v4248, 1.0
    %v4251 = vrcp.pop %v4249
    %v4252 = vmul.f32 %v4249, %v4251
    %v4253 = vsub.f32 1.0, %v4252
    %v4254 = vmul.f32 %v4251, %v4253
    %v4255 = vadd.f32 %v4251, %v4254
    %vm4256 = vweird.f32 %v4249
    %vm4257 = vweird.f32 %v4251
    %vm4258 = vmor %vm4256, %vm4257
    %v4259 = vsel %vm4258, %v4251, %v4255
    %v4260 = vand.u32 2147483647, %v4249
    %vm4261 = vcmp.eq.f32.partialorder %v4260, 8.507059e+37
    %v4262 = vand.u32 %v4249, 2147483648
    %v4263 = vor.u32 1.1754944e-38, %v4262
    %v4264 = vsel %vm4261, %v4263, %v4259
    %v4265 = vmul.f32 1.0, %v4264
    %v4266 = vrcp.pop %v4250
    %v4267 = vmul.f32 %v4250, %v4266
    %v4268 = vsub.f32 1.0, %v4267
    %v4269 = vmul.f32 %v4266, %v4268
    %v4270 = vadd.f32 %v4266, %v4269
    %vm4271 = vweird.f32 %v4250
    %vm4272 = vweird.f32 %v4266
    %vm4273 = vmor %vm4271, %vm4272
    %v4274 = vsel %vm4273, %v4266, %v4270
    %v4275 = vand.u32 2147483647, %v4250
    %vm4276 = vcmp.eq.f32.partialorder %v4275, 8.507059e+37
    %v4277 = vand.u32 %v4250, 2147483648
    %v4278 = vor.u32 1.1754944e-38, %v4277
    %v4279 = vsel %vm4276, %v4278, %v4274
    %v4280 = vmul.f32 1.0, %v4279
    %v4281 = vtanh.pop %v4241
    %v4282 = vxor.u32 %v4242, 2147483648
    %v4283 = vmul.f32 %v4282, 1.442695
    %v4284 = vpow.pop %v4283
    %v4285 = vadd.f32 %v4284, 1.0
    %v4286 = vrcp.pop %v4285
    %v4287 = vmul.f32 %v4285, %v4286
    %v4288 = vsub.f32 1.0, %v4287
    %v4289 = vmul.f32 %v4286, %v4288
    %v4290 = vadd.f32 %v4286, %v4289
    %vm4291 = vweird.f32 %v4285
    %vm4292 = vweird.f32 %v4286
    %vm4293 = vmor %vm4291, %vm4292
    %v4294 = vsel %vm4293, %v4286, %v4290
    %v4295 = vand.u32 2147483647, %v4285
    %vm4296 = vcmp.eq.f32.partialorder %v4295, 8.507059e+37
    %v4297 = vand.u32 %v4285, 2147483648
    %v4298 = vor.u32 1.1754944e-38, %v4297
    %v4299 = vsel %vm4296, %v4298, %v4294
    %v4300 = vmul.f32 1.0, %v4299
    %v4301 = vmul.f32 %v4265, %v1420
    %v4302 = vmul.f32 %v4301, %v4281
    %v4304 = vrot.slane %v3835, 7
    %v4306 = vmul.f32 %v4280, %v4304
    %v4307 = vadd.f32 %v4302, %v4306
    %v4308 = vtanh.pop %v4307
    %v4309 = vmul.f32 %v4300, %v4308
    %v4310 = vpack.c.bf16 %v4309, %v4309
    %v4311 = vpack.c.bf16 %v4307, %v4307
    %4312 = vmatpush.bf16.msra.mxu0 %v1649
    %4313 = vmatpush.bf16.msra.mxu0 %v1645
    %4314 = vmatpush.bf16.msra.mxu0 %v1641
    %4315 = vmatpush.bf16.msra.mxu0 %v1637
    %4316 = vmatpush.bf16.msra.mxu0 %v1633
    %4317 = vmatpush.bf16.msra.mxu0 %v1629
    %4318 = vmatpush.bf16.msra.mxu0 %v1625
    %4319 = vmatpush.bf16.msra.mxu0 %v1621
    %4320 = vmatmul.bf16.gmra.mxu0 %v4116
    %v4321 = vpop.f32.mrf.mxu0
    %v4322 = vadd.f32 0.0, %v4321
    %v4323 = vpop.f32.mrf.mxu0
    %4324 = vdwg.mxu0
    %4325 = vmatpush.bf16.msra.mxu0 %v1681
    %4326 = vmatpush.bf16.msra.mxu0 %v1677
    %4327 = vmatpush.bf16.msra.mxu0 %v1673
    %4328 = vmatpush.bf16.msra.mxu0 %v1669
    %4329 = vmatpush.bf16.msra.mxu0 %v1665
    %4330 = vmatpush.bf16.msra.mxu0 %v1661
    %4331 = vmatpush.bf16.msra.mxu0 %v1657
    %4332 = vmatpush.bf16.msra.mxu0 %v1653
    %4333 = vmatmul.bf16.gmra.mxu0 %v4117
    %v4334 = vpop.f32.mrf.mxu0
    %v4335 = vadd.f32 %v4322, %v4334
    %v4336 = vpop.f32.mrf.mxu0
    %4337 = vdwg.mxu0
    %4338 = vmatpush.bf16.msra.mxu0 %v1650
    %4339 = vmatpush.bf16.msra.mxu0 %v1646
    %4340 = vmatpush.bf16.msra.mxu0 %v1642
    %4341 = vmatpush.bf16.msra.mxu0 %v1638
    %4342 = vmatpush.bf16.msra.mxu0 %v1634
    %4343 = vmatpush.bf16.msra.mxu0 %v1630
    %4344 = vmatpush.bf16.msra.mxu0 %v1626
    %4345 = vmatpush.bf16.msra.mxu0 %v1622
    %4346 = vmatmul.bf16.gmra.mxu0 %v4116
    %v4347 = vpop.f32.mrf.mxu0
    %v4348 = vadd.f32 0.0, %v4347
    %v4349 = vpop.f32.mrf.mxu0
    %4350 = vdwg.mxu0
    %4351 = vmatpush.bf16.msra.mxu0 %v1682
    %4352 = vmatpush.bf16.msra.mxu0 %v1678
    %4353 = vmatpush.bf16.msra.mxu0 %v1674
    %4354 = vmatpush.bf16.msra.mxu0 %v1670
    %4355 = vmatpush.bf16.msra.mxu0 %v1666
    %4356 = vmatpush.bf16.msra.mxu0 %v1662
    %4357 = vmatpush.bf16.msra.mxu0 %v1658
    %4358 = vmatpush.bf16.msra.mxu0 %v1654
    %4359 = vmatmul.bf16.gmra.mxu0 %v4117
    %v4360 = vpop.f32.mrf.mxu0
    %v4361 = vadd.f32 %v4348, %v4360
    %v4362 = vpop.f32.mrf.mxu0
    %4363 = vdwg.mxu0
    %4364 = vmatpush.bf16.msra.mxu0 %v1651
    %4365 = vmatpush.bf16.msra.mxu0 %v1647
    %4366 = vmatpush.bf16.msra.mxu0 %v1643
    %4367 = vmatpush.bf16.msra.mxu0 %v1639
    %4368 = vmatpush.bf16.msra.mxu0 %v1635
    %4369 = vmatpush.bf16.msra.mxu0 %v1631
    %4370 = vmatpush.bf16.msra.mxu0 %v1627
    %4371 = vmatpush.bf16.msra.mxu0 %v1623
    %4372 = vmatmul.bf16.gmra.mxu0 %v4116
    %v4373 = vpop.f32.mrf.mxu0
    %v4374 = vadd.f32 0.0, %v4373
    %v4375 = vpop.f32.mrf.mxu0
    %4376 = vdwg.mxu0
    %4377 = vmatpush.bf16.msra.mxu0 %v1683
    %4378 = vmatpush.bf16.msra.mxu0 %v1679
    %4379 = vmatpush.bf16.msra.mxu0 %v1675
    %4380 = vmatpush.bf16.msra.mxu0 %v1671
    %4381 = vmatpush.bf16.msra.mxu0 %v1667
    %4382 = vmatpush.bf16.msra.mxu0 %v1663
    %4383 = vmatpush.bf16.msra.mxu0 %v1659
    %4384 = vmatpush.bf16.msra.mxu0 %v1655
    %4385 = vmatmul.bf16.gmra.mxu0 %v4117
    %v4386 = vpop.f32.mrf.mxu0
    %v4387 = vadd.f32 %v4374, %v4386
    %v4388 = vpop.f32.mrf.mxu0
    %4389 = vdwg.mxu0
    %4390 = vmatpush.bf16.msra.mxu0 %v1652
    %4391 = vmatpush.bf16.msra.mxu0 %v1648
    %4392 = vmatpush.bf16.msra.mxu0 %v1644
    %4393 = vmatpush.bf16.msra.mxu0 %v1640
    %4394 = vmatpush.bf16.msra.mxu0 %v1636
    %4395 = vmatpush.bf16.msra.mxu0 %v1632
    %4396 = vmatpush.bf16.msra.mxu0 %v1628
    %4397 = vmatpush.bf16.msra.mxu0 %v1624
    %4398 = vmatmul.bf16.gmra.mxu0 %v4116
    %v4399 = vpop.f32.mrf.mxu0
    %v4400 = vadd.f32 0.0, %v4399
    %v4401 = vpop.f32.mrf.mxu0
    %4402 = vdwg.mxu0
    %4403 = vmatpush.bf16.msra.mxu0 %v1684
    %4404 = vmatpush.bf16.msra.mxu0 %v1680
    %4405 = vmatpush.bf16.msra.mxu0 %v1676
    %4406 = vmatpush.bf16.msra.mxu0 %v1672
    %4407 = vmatpush.bf16.msra.mxu0 %v1668
    %4408 = vmatpush.bf16.msra.mxu0 %v1664
    %4409 = vmatpush.bf16.msra.mxu0 %v1660
    %4410 = vmatpush.bf16.msra.mxu0 %v1656
    %4411 = vmatmul.bf16.gmra.mxu0 %v4117
    %v4412 = vpop.f32.mrf.mxu0
    %v4413 = vadd.f32 %v4400, %v4412
    %v4414 = vpop.f32.mrf.mxu0
    %4415 = vdwg.mxu0
    %v4417 = vunpack.c.l.b16 %v4310
    %v4418 = vpack.c.b16 %v4417, %v4417
    %v4420 = vshrl.u32 %v4418, 16
    %v4422 = vrot.slane %v4420, 2
    %4424 = vmatpush.bf16.msra.mxu0 %v2016
    %4425 = vmatpush.bf16.msra.mxu0 %v2011
    %4426 = vmatpush.bf16.msra.mxu0 %v2006
    %4427 = vmatpush.bf16.msra.mxu0 %v2001
    %4428 = vmatpush.bf16.msra.mxu0 %v1996
    %4429 = vmatpush.bf16.msra.mxu0 %v1991
    %4430 = vmatpush.bf16.msra.mxu0 %v1986
    %4431 = vmatpush.bf16.msra.mxu0 %v1981
    %4432 = vmatmul.bf16.gmra.mxu0 %v4422
    %v4433 = vpop.f32.mrf.mxu0
    %v4434 = vadd.f32 0.0, %v4433
    %v4435 = vpop.f32.mrf.mxu0
    %4436 = vdwg.mxu0
    %4437 = vmatpush.bf16.msra.mxu0 %v2017
    %4438 = vmatpush.bf16.msra.mxu0 %v2012
    %4439 = vmatpush.bf16.msra.mxu0 %v2007
    %4440 = vmatpush.bf16.msra.mxu0 %v2002
    %4441 = vmatpush.bf16.msra.mxu0 %v1997
    %4442 = vmatpush.bf16.msra.mxu0 %v1992
    %4443 = vmatpush.bf16.msra.mxu0 %v1987
    %4444 = vmatpush.bf16.msra.mxu0 %v1982
    %4445 = vmatmul.bf16.gmra.mxu0 %v4422
    %v4446 = vpop.f32.mrf.mxu0
    %v4447 = vadd.f32 0.0, %v4446
    %v4448 = vpop.f32.mrf.mxu0
    %4449 = vdwg.mxu0
    %4450 = vmatpush.bf16.msra.mxu0 %v2018
    %4451 = vmatpush.bf16.msra.mxu0 %v2013
    %4452 = vmatpush.bf16.msra.mxu0 %v2008
    %4453 = vmatpush.bf16.msra.mxu0 %v2003
    %4454 = vmatpush.bf16.msra.mxu0 %v1998
    %4455 = vmatpush.bf16.msra.mxu0 %v1993
    %4456 = vmatpush.bf16.msra.mxu0 %v1988
    %4457 = vmatpush.bf16.msra.mxu0 %v1983
    %4458 = vmatmul.bf16.gmra.mxu0 %v4422
    %v4459 = vpop.f32.mrf.mxu0
    %v4460 = vadd.f32 0.0, %v4459
    %v4461 = vpop.f32.mrf.mxu0
    %4462 = vdwg.mxu0
    %4463 = vmatpush.bf16.msra.mxu0 %v2019
    %4464 = vmatpush.bf16.msra.mxu0 %v2014
    %4465 = vmatpush.bf16.msra.mxu0 %v2009
    %4466 = vmatpush.bf16.msra.mxu0 %v2004
    %4467 = vmatpush.bf16.msra.mxu0 %v1999
    %4468 = vmatpush.bf16.msra.mxu0 %v1994
    %4469 = vmatpush.bf16.msra.mxu0 %v1989
    %4470 = vmatpush.bf16.msra.mxu0 %v1984
    %4471 = vmatmul.bf16.gmra.mxu0 %v4422
    %v4472 = vpop.f32.mrf.mxu0
    %v4473 = vadd.f32 0.0, %v4472
    %v4474 = vpop.f32.mrf.mxu0
    %4475 = vdwg.mxu0
    %4476 = vmatpush.bf16.msra.mxu0 %v2020
    %4477 = vmatpush.bf16.msra.mxu0 %v2015
    %4478 = vmatpush.bf16.msra.mxu0 %v2010
    %4479 = vmatpush.bf16.msra.mxu0 %v2005
    %4480 = vmatpush.bf16.msra.mxu0 %v2000
    %4481 = vmatpush.bf16.msra.mxu0 %v1995
    %4482 = vmatpush.bf16.msra.mxu0 %v1990
    %4483 = vmatpush.bf16.msra.mxu0 %v1985
    %4484 = vmatmul.bf16.gmra.mxu0 %v4422
    %v4485 = vpop.f32.mrf.mxu0
    %v4486 = vadd.f32 0.0, %v4485
    %v4487 = vpop.f32.mrf.mxu0
    %4488 = vdwg.mxu0
    %v4489 = vadd.f32 %v4434, %v4335
    %v4490 = vadd.f32 %v4447, %v4361
    %v4491 = vadd.f32 %v4460, %v4387
    %v4492 = vadd.f32 %v4473, %v4413
    %v4493 = vrot.slane %v314, 5
    %v4494 = vrot.slane %v315, 5
    %v4495 = vrot.slane %v316, 5
    %v4496 = vrot.slane %v324, 5
    %v4501 = vadd.f32 %v4489, %v4493
    %v4502 = vadd.f32 %v4490, %v4494
    %v4503 = vadd.f32 %v4491, %v4495
    %v4504 = vadd.f32 %v4492, %v4496
    %v4505 = vrot.slane %v348, 5
    %v4507 = vadd.f32 %v4486, %v4505
    %v4508 = vxor.u32 %v4501, 2147483648
    %v4509 = vxor.u32 %v4502, 2147483648
    %v4510 = vmul.f32 %v4508, 1.442695
    %v4511 = vpow.pop %v4510
    %v4512 = vmul.f32 %v4509, 1.442695
    %v4513 = vpow.pop %v4512
    %v4514 = vadd.f32 %v4511, 1.0
    %v4515 = vadd.f32 %v4513, 1.0
    %v4516 = vrcp.pop %v4514
    %v4517 = vmul.f32 %v4514, %v4516
    %v4518 = vsub.f32 1.0, %v4517
    %v4519 = vmul.f32 %v4516, %v4518
    %v4520 = vadd.f32 %v4516, %v4519
    %vm4521 = vweird.f32 %v4514
    %vm4522 = vweird.f32 %v4516
    %vm4523 = vmor %vm4521, %vm4522
    %v4524 = vsel %vm4523, %v4516, %v4520
    %v4525 = vand.u32 2147483647, %v4514
    %vm4526 = vcmp.eq.f32.partialorder %v4525, 8.507059e+37
    %v4527 = vand.u32 %v4514, 2147483648
    %v4528 = vor.u32 1.1754944e-38, %v4527
    %v4529 = vsel %vm4526, %v4528, %v4524
    %v4530 = vmul.f32 1.0, %v4529
    %v4531 = vrcp.pop %v4515
    %v4532 = vmul.f32 %v4515, %v4531
    %v4533 = vsub.f32 1.0, %v4532
    %v4534 = vmul.f32 %v4531, %v4533
    %v4535 = vadd.f32 %v4531, %v4534
    %vm4536 = vweird.f32 %v4515
    %vm4537 = vweird.f32 %v4531
    %vm4538 = vmor %vm4536, %vm4537
    %v4539 = vsel %vm4538, %v4531, %v4535
    %v4540 = vand.u32 2147483647, %v4515
    %vm4541 = vcmp.eq.f32.partialorder %v4540, 8.507059e+37
    %v4542 = vand.u32 %v4515, 2147483648
    %v4543 = vor.u32 1.1754944e-38, %v4542
    %v4544 = vsel %vm4541, %v4543, %v4539
    %v4545 = vmul.f32 1.0, %v4544
    %v4546 = vtanh.pop %v4503
    %v4547 = vxor.u32 %v4504, 2147483648
    %v4548 = vmul.f32 %v4547, 1.442695
    %v4549 = vpow.pop %v4548
    %v4550 = vadd.f32 %v4549, 1.0
    %v4551 = vrcp.pop %v4550
    %v4552 = vmul.f32 %v4550, %v4551
    %v4553 = vsub.f32 1.0, %v4552
    %v4554 = vmul.f32 %v4551, %v4553
    %v4555 = vadd.f32 %v4551, %v4554
    %vm4556 = vweird.f32 %v4550
    %vm4557 = vweird.f32 %v4551
    %vm4558 = vmor %vm4556, %vm4557
    %v4559 = vsel %vm4558, %v4551, %v4555
    %v4560 = vand.u32 2147483647, %v4550
    %vm4561 = vcmp.eq.f32.partialorder %v4560, 8.507059e+37
    %v4562 = vand.u32 %v4550, 2147483648
    %v4563 = vor.u32 1.1754944e-38, %v4562
    %v4564 = vsel %vm4561, %v4563, %v4559
    %v4565 = vmul.f32 1.0, %v4564
    %v4566 = vxor.u32 %v4507, 2147483648
    %v4567 = vmul.f32 %v4566, 1.442695
    %v4568 = vpow.pop %v4567
    %v4569 = vadd.f32 %v4568, 1.0
    %v4570 = vrcp.pop %v4569
    %v4571 = vmul.f32 %v4569, %v4570
    %v4572 = vsub.f32 1.0, %v4571
    %v4573 = vmul.f32 %v4570, %v4572
    %v4574 = vadd.f32 %v4570, %v4573
    %vm4575 = vweird.f32 %v4569
    %vm4576 = vweird.f32 %v4570
    %vm4577 = vmor %vm4575, %vm4576
    %v4578 = vsel %vm4577, %v4570, %v4574
    %v4579 = vand.u32 2147483647, %v4569
    %vm4580 = vcmp.eq.f32.partialorder %v4579, 8.507059e+37
    %v4581 = vand.u32 %v4569, 2147483648
    %v4582 = vor.u32 1.1754944e-38, %v4581
    %v4583 = vsel %vm4580, %v4582, %v4578
    %v4584 = vmul.f32 1.0, %v4583
    %v4585 = vmul.f32 %v4530, %v4584
    %v4586 = vmul.f32 %v4585, %v4546
    %v4587 = vmul.f32 %v4545, %v4113
    %v4588 = vadd.f32 %v4586, %v4587
    %v4589 = vtanh.pop %v4588
    %v4590 = vmul.f32 %v4565, %v4589
    %v4591 = vpack.c.bf16 %v4590, %v4590
    %v4592 = vpack.c.bf16 %v4588, %v4588
    %v4594 = vshrl.u32 %v4310, 16
    %v4596 = vrot.slane %v4594, 2
    %v4598 = vshrl.u32 %v4311, 16
    %v4600 = vrot.slane %v4598, 2
    %4603 = vmatpush.bf16.msra.mxu0 %v1136
    %4604 = vmatpush.bf16.msra.mxu0 %v1132
    %4605 = vmatpush.bf16.msra.mxu0 %v1128
    %4606 = vmatpush.bf16.msra.mxu0 %v1124
    %4607 = vmatpush.bf16.msra.mxu0 %v1120
    %4608 = vmatpush.bf16.msra.mxu0 %v1116
    %4609 = vmatpush.bf16.msra.mxu0 %v1112
    %4610 = vmatpush.bf16.msra.mxu0 %v1108
    %4611 = vmatmul.bf16.gmra.mxu0 %v4596
    %v4612 = vpop.f32.mrf.mxu0
    %v4613 = vadd.f32 0.0, %v4612
    %v4614 = vpop.f32.mrf.mxu0
    %4615 = vdwg.mxu0
    %4616 = vmatpush.bf16.msra.mxu0 %v1168
    %4617 = vmatpush.bf16.msra.mxu0 %v1164
    %4618 = vmatpush.bf16.msra.mxu0 %v1160
    %4619 = vmatpush.bf16.msra.mxu0 %v1156
    %4620 = vmatpush.bf16.msra.mxu0 %v1152
    %4621 = vmatpush.bf16.msra.mxu0 %v1148
    %4622 = vmatpush.bf16.msra.mxu0 %v1144
    %4623 = vmatpush.bf16.msra.mxu0 %v1140
    %4624 = vmatmul.bf16.gmra.mxu0 %v4600
    %v4625 = vpop.f32.mrf.mxu0
    %v4626 = vadd.f32 %v4613, %v4625
    %v4627 = vpop.f32.mrf.mxu0
    %4628 = vdwg.mxu0
    %4629 = vmatpush.bf16.msra.mxu0 %v1137
    %4630 = vmatpush.bf16.msra.mxu0 %v1133
    %4631 = vmatpush.bf16.msra.mxu0 %v1129
    %4632 = vmatpush.bf16.msra.mxu0 %v1125
    %4633 = vmatpush.bf16.msra.mxu0 %v1121
    %4634 = vmatpush.bf16.msra.mxu0 %v1117
    %4635 = vmatpush.bf16.msra.mxu0 %v1113
    %4636 = vmatpush.bf16.msra.mxu0 %v1109
    %4637 = vmatmul.bf16.gmra.mxu0 %v4596
    %v4638 = vpop.f32.mrf.mxu0
    %v4639 = vadd.f32 0.0, %v4638
    %v4640 = vpop.f32.mrf.mxu0
    %4641 = vdwg.mxu0
    %4642 = vmatpush.bf16.msra.mxu0 %v1169
    %4643 = vmatpush.bf16.msra.mxu0 %v1165
    %4644 = vmatpush.bf16.msra.mxu0 %v1161
    %4645 = vmatpush.bf16.msra.mxu0 %v1157
    %4646 = vmatpush.bf16.msra.mxu0 %v1153
    %4647 = vmatpush.bf16.msra.mxu0 %v1149
    %4648 = vmatpush.bf16.msra.mxu0 %v1145
    %4649 = vmatpush.bf16.msra.mxu0 %v1141
    %4650 = vmatmul.bf16.gmra.mxu0 %v4600
    %v4651 = vpop.f32.mrf.mxu0
    %v4652 = vadd.f32 %v4639, %v4651
    %v4653 = vpop.f32.mrf.mxu0
    %4654 = vdwg.mxu0
    %4655 = vmatpush.bf16.msra.mxu0 %v1138
    %4656 = vmatpush.bf16.msra.mxu0 %v1134
    %4657 = vmatpush.bf16.msra.mxu0 %v1130
    %4658 = vmatpush.bf16.msra.mxu0 %v1126
    %4659 = vmatpush.bf16.msra.mxu0 %v1122
    %4660 = vmatpush.bf16.msra.mxu0 %v1118
    %4661 = vmatpush.bf16.msra.mxu0 %v1114
    %4662 = vmatpush.bf16.msra.mxu0 %v1110
    %4663 = vmatmul.bf16.gmra.mxu0 %v4596
    %v4664 = vpop.f32.mrf.mxu0
    %v4665 = vadd.f32 0.0, %v4664
    %v4666 = vpop.f32.mrf.mxu0
    %4667 = vdwg.mxu0
    %4668 = vmatpush.bf16.msra.mxu0 %v1170
    %4669 = vmatpush.bf16.msra.mxu0 %v1166
    %4670 = vmatpush.bf16.msra.mxu0 %v1162
    %4671 = vmatpush.bf16.msra.mxu0 %v1158
    %4672 = vmatpush.bf16.msra.mxu0 %v1154
    %4673 = vmatpush.bf16.msra.mxu0 %v1150
    %4674 = vmatpush.bf16.msra.mxu0 %v1146
    %4675 = vmatpush.bf16.msra.mxu0 %v1142
    %4676 = vmatmul.bf16.gmra.mxu0 %v4600
    %v4677 = vpop.f32.mrf.mxu0
    %v4678 = vadd.f32 %v4665, %v4677
    %v4679 = vpop.f32.mrf.mxu0
    %4680 = vdwg.mxu0
    %4681 = vmatpush.bf16.msra.mxu0 %v1139
    %4682 = vmatpush.bf16.msra.mxu0 %v1135
    %4683 = vmatpush.bf16.msra.mxu0 %v1131
    %4684 = vmatpush.bf16.msra.mxu0 %v1127
    %4685 = vmatpush.bf16.msra.mxu0 %v1123
    %4686 = vmatpush.bf16.msra.mxu0 %v1119
    %4687 = vmatpush.bf16.msra.mxu0 %v1115
    %4688 = vmatpush.bf16.msra.mxu0 %v1111
    %4689 = vmatmul.bf16.gmra.mxu0 %v4596
    %v4690 = vpop.f32.mrf.mxu0
    %v4691 = vadd.f32 0.0, %v4690
    %v4692 = vpop.f32.mrf.mxu0
    %4693 = vdwg.mxu0
    %4694 = vmatpush.bf16.msra.mxu0 %v1171
    %4695 = vmatpush.bf16.msra.mxu0 %v1167
    %4696 = vmatpush.bf16.msra.mxu0 %v1163
    %4697 = vmatpush.bf16.msra.mxu0 %v1159
    %4698 = vmatpush.bf16.msra.mxu0 %v1155
    %4699 = vmatpush.bf16.msra.mxu0 %v1151
    %4700 = vmatpush.bf16.msra.mxu0 %v1147
    %4701 = vmatpush.bf16.msra.mxu0 %v1143
    %4702 = vmatmul.bf16.gmra.mxu0 %v4600
    %v4703 = vpop.f32.mrf.mxu0
    %v4704 = vadd.f32 %v4691, %v4703
    %v4705 = vpop.f32.mrf.mxu0
    %4706 = vdwg.mxu0
    %v4711 = vrot.slane %v4626, 2
    %v4712 = vrot.slane %v4652, 2
    %v4713 = vrot.slane %v4678, 2
    %v4714 = vrot.slane %v4704, 2
    %v4719 = vadd.f32 %v861, %v4711
    %v4720 = vadd.f32 %v874, %v4712
    %v4721 = vadd.f32 %v887, %v4713
    %v4722 = vadd.f32 %v900, %v4714
    %v4723 = vxor.u32 %v4719, 2147483648
    %v4724 = vxor.u32 %v4720, 2147483648
    %v4725 = vmul.f32 %v4723, 1.442695
    %v4726 = vpow.pop %v4725
    %v4727 = vmul.f32 %v4724, 1.442695
    %v4728 = vpow.pop %v4727
    %v4729 = vadd.f32 %v4726, 1.0
    %v4730 = vadd.f32 %v4728, 1.0
    %v4731 = vrcp.pop %v4729
    %v4732 = vmul.f32 %v4729, %v4731
    %v4733 = vsub.f32 1.0, %v4732
    %v4734 = vmul.f32 %v4731, %v4733
    %v4735 = vadd.f32 %v4731, %v4734
    %vm4736 = vweird.f32 %v4729
    %vm4737 = vweird.f32 %v4731
    %vm4738 = vmor %vm4736, %vm4737
    %v4739 = vsel %vm4738, %v4731, %v4735
    %v4740 = vand.u32 2147483647, %v4729
    %vm4741 = vcmp.eq.f32.partialorder %v4740, 8.507059e+37
    %v4742 = vand.u32 %v4729, 2147483648
    %v4743 = vor.u32 1.1754944e-38, %v4742
    %v4744 = vsel %vm4741, %v4743, %v4739
    %v4745 = vmul.f32 1.0, %v4744
    %v4746 = vrcp.pop %v4730
    %v4747 = vmul.f32 %v4730, %v4746
    %v4748 = vsub.f32 1.0, %v4747
    %v4749 = vmul.f32 %v4746, %v4748
    %v4750 = vadd.f32 %v4746, %v4749
    %vm4751 = vweird.f32 %v4730
    %vm4752 = vweird.f32 %v4746
    %vm4753 = vmor %vm4751, %vm4752
    %v4754 = vsel %vm4753, %v4746, %v4750
    %v4755 = vand.u32 2147483647, %v4730
    %vm4756 = vcmp.eq.f32.partialorder %v4755, 8.507059e+37
    %v4757 = vand.u32 %v4730, 2147483648
    %v4758 = vor.u32 1.1754944e-38, %v4757
    %v4759 = vsel %vm4756, %v4758, %v4754
    %v4760 = vmul.f32 1.0, %v4759
    %v4761 = vtanh.pop %v4721
    %v4762 = vxor.u32 %v4722, 2147483648
    %v4763 = vmul.f32 %v4762, 1.442695
    %v4764 = vpow.pop %v4763
    %v4765 = vadd.f32 %v4764, 1.0
    %v4766 = vrcp.pop %v4765
    %v4767 = vmul.f32 %v4765, %v4766
    %v4768 = vsub.f32 1.0, %v4767
    %v4769 = vmul.f32 %v4766, %v4768
    %v4770 = vadd.f32 %v4766, %v4769
    %vm4771 = vweird.f32 %v4765
    %vm4772 = vweird.f32 %v4766
    %vm4773 = vmor %vm4771, %vm4772
    %v4774 = vsel %vm4773, %v4766, %v4770
    %v4775 = vand.u32 2147483647, %v4765
    %vm4776 = vcmp.eq.f32.partialorder %v4775, 8.507059e+37
    %v4777 = vand.u32 %v4765, 2147483648
    %v4778 = vor.u32 1.1754944e-38, %v4777
    %v4779 = vsel %vm4776, %v4778, %v4774
    %v4780 = vmul.f32 1.0, %v4779
    %v4781 = vmul.f32 %v4745, %v1420
    %v4782 = vmul.f32 %v4781, %v4761
    %v4784 = vrot.slane %v4307, 7
    %v4786 = vmul.f32 %v4760, %v4784
    %v4787 = vadd.f32 %v4782, %v4786
    %v4788 = vtanh.pop %v4787
    %v4789 = vmul.f32 %v4780, %v4788
    %v4790 = vpack.c.bf16 %v4789, %v4789
    %v4791 = vpack.c.bf16 %v4787, %v4787
    %4792 = vmatpush.bf16.msra.mxu0 %v1649
    %4793 = vmatpush.bf16.msra.mxu0 %v1645
    %4794 = vmatpush.bf16.msra.mxu0 %v1641
    %4795 = vmatpush.bf16.msra.mxu0 %v1637
    %4796 = vmatpush.bf16.msra.mxu0 %v1633
    %4797 = vmatpush.bf16.msra.mxu0 %v1629
    %4798 = vmatpush.bf16.msra.mxu0 %v1625
    %4799 = vmatpush.bf16.msra.mxu0 %v1621
    %4800 = vmatmul.bf16.gmra.mxu0 %v4591
    %v4801 = vpop.f32.mrf.mxu0
    %v4802 = vadd.f32 0.0, %v4801
    %v4803 = vpop.f32.mrf.mxu0
    %4804 = vdwg.mxu0
    %4805 = vmatpush.bf16.msra.mxu0 %v1681
    %4806 = vmatpush.bf16.msra.mxu0 %v1677
    %4807 = vmatpush.bf16.msra.mxu0 %v1673
    %4808 = vmatpush.bf16.msra.mxu0 %v1669
    %4809 = vmatpush.bf16.msra.mxu0 %v1665
    %4810 = vmatpush.bf16.msra.mxu0 %v1661
    %4811 = vmatpush.bf16.msra.mxu0 %v1657
    %4812 = vmatpush.bf16.msra.mxu0 %v1653
    %4813 = vmatmul.bf16.gmra.mxu0 %v4592
    %v4814 = vpop.f32.mrf.mxu0
    %v4815 = vadd.f32 %v4802, %v4814
    %v4816 = vpop.f32.mrf.mxu0
    %4817 = vdwg.mxu0
    %4818 = vmatpush.bf16.msra.mxu0 %v1650
    %4819 = vmatpush.bf16.msra.mxu0 %v1646
    %4820 = vmatpush.bf16.msra.mxu0 %v1642
    %4821 = vmatpush.bf16.msra.mxu0 %v1638
    %4822 = vmatpush.bf16.msra.mxu0 %v1634
    %4823 = vmatpush.bf16.msra.mxu0 %v1630
    %4824 = vmatpush.bf16.msra.mxu0 %v1626
    %4825 = vmatpush.bf16.msra.mxu0 %v1622
    %4826 = vmatmul.bf16.gmra.mxu0 %v4591
    %v4827 = vpop.f32.mrf.mxu0
    %v4828 = vadd.f32 0.0, %v4827
    %v4829 = vpop.f32.mrf.mxu0
    %4830 = vdwg.mxu0
    %4831 = vmatpush.bf16.msra.mxu0 %v1682
    %4832 = vmatpush.bf16.msra.mxu0 %v1678
    %4833 = vmatpush.bf16.msra.mxu0 %v1674
    %4834 = vmatpush.bf16.msra.mxu0 %v1670
    %4835 = vmatpush.bf16.msra.mxu0 %v1666
    %4836 = vmatpush.bf16.msra.mxu0 %v1662
    %4837 = vmatpush.bf16.msra.mxu0 %v1658
    %4838 = vmatpush.bf16.msra.mxu0 %v1654
    %4839 = vmatmul.bf16.gmra.mxu0 %v4592
    %v4840 = vpop.f32.mrf.mxu0
    %v4841 = vadd.f32 %v4828, %v4840
    %v4842 = vpop.f32.mrf.mxu0
    %4843 = vdwg.mxu0
    %4844 = vmatpush.bf16.msra.mxu0 %v1651
    %4845 = vmatpush.bf16.msra.mxu0 %v1647
    %4846 = vmatpush.bf16.msra.mxu0 %v1643
    %4847 = vmatpush.bf16.msra.mxu0 %v1639
    %4848 = vmatpush.bf16.msra.mxu0 %v1635
    %4849 = vmatpush.bf16.msra.mxu0 %v1631
    %4850 = vmatpush.bf16.msra.mxu0 %v1627
    %4851 = vmatpush.bf16.msra.mxu0 %v1623
    %4852 = vmatmul.bf16.gmra.mxu0 %v4591
    %v4853 = vpop.f32.mrf.mxu0
    %v4854 = vadd.f32 0.0, %v4853
    %v4855 = vpop.f32.mrf.mxu0
    %4856 = vdwg.mxu0
    %4857 = vmatpush.bf16.msra.mxu0 %v1683
    %4858 = vmatpush.bf16.msra.mxu0 %v1679
    %4859 = vmatpush.bf16.msra.mxu0 %v1675
    %4860 = vmatpush.bf16.msra.mxu0 %v1671
    %4861 = vmatpush.bf16.msra.mxu0 %v1667
    %4862 = vmatpush.bf16.msra.mxu0 %v1663
    %4863 = vmatpush.bf16.msra.mxu0 %v1659
    %4864 = vmatpush.bf16.msra.mxu0 %v1655
    %4865 = vmatmul.bf16.gmra.mxu0 %v4592
    %v4866 = vpop.f32.mrf.mxu0
    %v4867 = vadd.f32 %v4854, %v4866
    %v4868 = vpop.f32.mrf.mxu0
    %4869 = vdwg.mxu0
    %4870 = vmatpush.bf16.msra.mxu0 %v1652
    %4871 = vmatpush.bf16.msra.mxu0 %v1648
    %4872 = vmatpush.bf16.msra.mxu0 %v1644
    %4873 = vmatpush.bf16.msra.mxu0 %v1640
    %4874 = vmatpush.bf16.msra.mxu0 %v1636
    %4875 = vmatpush.bf16.msra.mxu0 %v1632
    %4876 = vmatpush.bf16.msra.mxu0 %v1628
    %4877 = vmatpush.bf16.msra.mxu0 %v1624
    %4878 = vmatmul.bf16.gmra.mxu0 %v4591
    %v4879 = vpop.f32.mrf.mxu0
    %v4880 = vadd.f32 0.0, %v4879
    %v4881 = vpop.f32.mrf.mxu0
    %4882 = vdwg.mxu0
    %4883 = vmatpush.bf16.msra.mxu0 %v1684
    %4884 = vmatpush.bf16.msra.mxu0 %v1680
    %4885 = vmatpush.bf16.msra.mxu0 %v1676
    %4886 = vmatpush.bf16.msra.mxu0 %v1672
    %4887 = vmatpush.bf16.msra.mxu0 %v1668
    %4888 = vmatpush.bf16.msra.mxu0 %v1664
    %4889 = vmatpush.bf16.msra.mxu0 %v1660
    %4890 = vmatpush.bf16.msra.mxu0 %v1656
    %4891 = vmatmul.bf16.gmra.mxu0 %v4592
    %v4892 = vpop.f32.mrf.mxu0
    %v4893 = vadd.f32 %v4880, %v4892
    %v4894 = vpop.f32.mrf.mxu0
    %4895 = vdwg.mxu0
    %v4897 = vunpack.c.l.b16 %v4790
    %v4898 = vpack.c.b16 %v4897, %v4897
    %v4899 = vrot.slane %v4898, 3
    %4901 = vmatpush.bf16.msra.mxu0 %v2016
    %4902 = vmatpush.bf16.msra.mxu0 %v2011
    %4903 = vmatpush.bf16.msra.mxu0 %v2006
    %4904 = vmatpush.bf16.msra.mxu0 %v2001
    %4905 = vmatpush.bf16.msra.mxu0 %v1996
    %4906 = vmatpush.bf16.msra.mxu0 %v1991
    %4907 = vmatpush.bf16.msra.mxu0 %v1986
    %4908 = vmatpush.bf16.msra.mxu0 %v1981
    %4909 = vmatmul.bf16.gmra.mxu0 %v4899
    %v4910 = vpop.f32.mrf.mxu0
    %v4911 = vadd.f32 0.0, %v4910
    %v4912 = vpop.f32.mrf.mxu0
    %4913 = vdwg.mxu0
    %4914 = vmatpush.bf16.msra.mxu0 %v2017
    %4915 = vmatpush.bf16.msra.mxu0 %v2012
    %4916 = vmatpush.bf16.msra.mxu0 %v2007
    %4917 = vmatpush.bf16.msra.mxu0 %v2002
    %4918 = vmatpush.bf16.msra.mxu0 %v1997
    %4919 = vmatpush.bf16.msra.mxu0 %v1992
    %4920 = vmatpush.bf16.msra.mxu0 %v1987
    %4921 = vmatpush.bf16.msra.mxu0 %v1982
    %4922 = vmatmul.bf16.gmra.mxu0 %v4899
    %v4923 = vpop.f32.mrf.mxu0
    %v4924 = vadd.f32 0.0, %v4923
    %v4925 = vpop.f32.mrf.mxu0
    %4926 = vdwg.mxu0
    %4927 = vmatpush.bf16.msra.mxu0 %v2018
    %4928 = vmatpush.bf16.msra.mxu0 %v2013
    %4929 = vmatpush.bf16.msra.mxu0 %v2008
    %4930 = vmatpush.bf16.msra.mxu0 %v2003
    %4931 = vmatpush.bf16.msra.mxu0 %v1998
    %4932 = vmatpush.bf16.msra.mxu0 %v1993
    %4933 = vmatpush.bf16.msra.mxu0 %v1988
    %4934 = vmatpush.bf16.msra.mxu0 %v1983
    %4935 = vmatmul.bf16.gmra.mxu0 %v4899
    %v4936 = vpop.f32.mrf.mxu0
    %v4937 = vadd.f32 0.0, %v4936
    %v4938 = vpop.f32.mrf.mxu0
    %4939 = vdwg.mxu0
    %4940 = vmatpush.bf16.msra.mxu0 %v2019
    %4941 = vmatpush.bf16.msra.mxu0 %v2014
    %4942 = vmatpush.bf16.msra.mxu0 %v2009
    %4943 = vmatpush.bf16.msra.mxu0 %v2004
    %4944 = vmatpush.bf16.msra.mxu0 %v1999
    %4945 = vmatpush.bf16.msra.mxu0 %v1994
    %4946 = vmatpush.bf16.msra.mxu0 %v1989
    %4947 = vmatpush.bf16.msra.mxu0 %v1984
    %4948 = vmatmul.bf16.gmra.mxu0 %v4899
    %v4949 = vpop.f32.mrf.mxu0
    %v4950 = vadd.f32 0.0, %v4949
    %v4951 = vpop.f32.mrf.mxu0
    %4952 = vdwg.mxu0
    %4953 = vmatpush.bf16.msra.mxu0 %v2020
    %4954 = vmatpush.bf16.msra.mxu0 %v2015
    %4955 = vmatpush.bf16.msra.mxu0 %v2010
    %4956 = vmatpush.bf16.msra.mxu0 %v2005
    %4957 = vmatpush.bf16.msra.mxu0 %v2000
    %4958 = vmatpush.bf16.msra.mxu0 %v1995
    %4959 = vmatpush.bf16.msra.mxu0 %v1990
    %4960 = vmatpush.bf16.msra.mxu0 %v1985
    %4961 = vmatmul.bf16.gmra.mxu0 %v4899
    %v4962 = vpop.f32.mrf.mxu0
    %v4963 = vadd.f32 0.0, %v4962
    %v4964 = vpop.f32.mrf.mxu0
    %4965 = vdwg.mxu0
    %v4966 = vadd.f32 %v4911, %v4815
    %v4967 = vadd.f32 %v4924, %v4841
    %v4968 = vadd.f32 %v4937, %v4867
    %v4969 = vadd.f32 %v4950, %v4893
    %v4970 = vrot.slane %v314, 6
    %v4971 = vrot.slane %v315, 6
    %v4972 = vrot.slane %v316, 6
    %v4973 = vrot.slane %v324, 6
    %v4978 = vadd.f32 %v4966, %v4970
    %v4979 = vadd.f32 %v4967, %v4971
    %v4980 = vadd.f32 %v4968, %v4972
    %v4981 = vadd.f32 %v4969, %v4973
    %v4982 = vrot.slane %v348, 6
    %v4984 = vadd.f32 %v4963, %v4982
    %v4985 = vxor.u32 %v4978, 2147483648
    %v4986 = vxor.u32 %v4979, 2147483648
    %v4987 = vmul.f32 %v4985, 1.442695
    %v4988 = vpow.pop %v4987
    %v4989 = vmul.f32 %v4986, 1.442695
    %v4990 = vpow.pop %v4989
    %v4991 = vadd.f32 %v4988, 1.0
    %v4992 = vadd.f32 %v4990, 1.0
    %v4993 = vrcp.pop %v4991
    %v4994 = vmul.f32 %v4991, %v4993
    %v4995 = vsub.f32 1.0, %v4994
    %v4996 = vmul.f32 %v4993, %v4995
    %v4997 = vadd.f32 %v4993, %v4996
    %vm4998 = vweird.f32 %v4991
    %vm4999 = vweird.f32 %v4993
    %vm5000 = vmor %vm4998, %vm4999
    %v5001 = vsel %vm5000, %v4993, %v4997
    %v5002 = vand.u32 2147483647, %v4991
    %vm5003 = vcmp.eq.f32.partialorder %v5002, 8.507059e+37
    %v5004 = vand.u32 %v4991, 2147483648
    %v5005 = vor.u32 1.1754944e-38, %v5004
    %v5006 = vsel %vm5003, %v5005, %v5001
    %v5007 = vmul.f32 1.0, %v5006
    %v5008 = vrcp.pop %v4992
    %v5009 = vmul.f32 %v4992, %v5008
    %v5010 = vsub.f32 1.0, %v5009
    %v5011 = vmul.f32 %v5008, %v5010
    %v5012 = vadd.f32 %v5008, %v5011
    %vm5013 = vweird.f32 %v4992
    %vm5014 = vweird.f32 %v5008
    %vm5015 = vmor %vm5013, %vm5014
    %v5016 = vsel %vm5015, %v5008, %v5012
    %v5017 = vand.u32 2147483647, %v4992
    %vm5018 = vcmp.eq.f32.partialorder %v5017, 8.507059e+37
    %v5019 = vand.u32 %v4992, 2147483648
    %v5020 = vor.u32 1.1754944e-38, %v5019
    %v5021 = vsel %vm5018, %v5020, %v5016
    %v5022 = vmul.f32 1.0, %v5021
    %v5023 = vtanh.pop %v4980
    %v5024 = vxor.u32 %v4981, 2147483648
    %v5025 = vmul.f32 %v5024, 1.442695
    %v5026 = vpow.pop %v5025
    %v5027 = vadd.f32 %v5026, 1.0
    %v5028 = vrcp.pop %v5027
    %v5029 = vmul.f32 %v5027, %v5028
    %v5030 = vsub.f32 1.0, %v5029
    %v5031 = vmul.f32 %v5028, %v5030
    %v5032 = vadd.f32 %v5028, %v5031
    %vm5033 = vweird.f32 %v5027
    %vm5034 = vweird.f32 %v5028
    %vm5035 = vmor %vm5033, %vm5034
    %v5036 = vsel %vm5035, %v5028, %v5032
    %v5037 = vand.u32 2147483647, %v5027
    %vm5038 = vcmp.eq.f32.partialorder %v5037, 8.507059e+37
    %v5039 = vand.u32 %v5027, 2147483648
    %v5040 = vor.u32 1.1754944e-38, %v5039
    %v5041 = vsel %vm5038, %v5040, %v5036
    %v5042 = vmul.f32 1.0, %v5041
    %v5043 = vxor.u32 %v4984, 2147483648
    %v5044 = vmul.f32 %v5043, 1.442695
    %v5045 = vpow.pop %v5044
    %v5046 = vadd.f32 %v5045, 1.0
    %v5047 = vrcp.pop %v5046
    %v5048 = vmul.f32 %v5046, %v5047
    %v5049 = vsub.f32 1.0, %v5048
    %v5050 = vmul.f32 %v5047, %v5049
    %v5051 = vadd.f32 %v5047, %v5050
    %vm5052 = vweird.f32 %v5046
    %vm5053 = vweird.f32 %v5047
    %vm5054 = vmor %vm5052, %vm5053
    %v5055 = vsel %vm5054, %v5047, %v5051
    %v5056 = vand.u32 2147483647, %v5046
    %vm5057 = vcmp.eq.f32.partialorder %v5056, 8.507059e+37
    %v5058 = vand.u32 %v5046, 2147483648
    %v5059 = vor.u32 1.1754944e-38, %v5058
    %v5060 = vsel %vm5057, %v5059, %v5055
    %v5061 = vmul.f32 1.0, %v5060
    %v5062 = vmul.f32 %v5007, %v5061
    %v5063 = vmul.f32 %v5062, %v5023
    %v5064 = vmul.f32 %v5022, %v4588
    %v5065 = vadd.f32 %v5063, %v5064
    %v5066 = vtanh.pop %v5065
    %v5067 = vmul.f32 %v5042, %v5066
    %v5068 = vpack.c.bf16 %v5067, %v5067
    %v5069 = vpack.c.bf16 %v5065, %v5065
    %v5071 = vrot.slane %v4790, 3
    %v5072 = vrot.slane %v4791, 3
    %5075 = vmatpush.bf16.msra.mxu0 %v1136
    %5076 = vmatpush.bf16.msra.mxu0 %v1132
    %5077 = vmatpush.bf16.msra.mxu0 %v1128
    %5078 = vmatpush.bf16.msra.mxu0 %v1124
    %5079 = vmatpush.bf16.msra.mxu0 %v1120
    %5080 = vmatpush.bf16.msra.mxu0 %v1116
    %5081 = vmatpush.bf16.msra.mxu0 %v1112
    %5082 = vmatpush.bf16.msra.mxu0 %v1108
    %5083 = vmatmul.bf16.gmra.mxu0 %v5071
    %v5084 = vpop.f32.mrf.mxu0
    %v5085 = vadd.f32 0.0, %v5084
    %v5086 = vpop.f32.mrf.mxu0
    %5087 = vdwg.mxu0
    %5088 = vmatpush.bf16.msra.mxu0 %v1168
    %5089 = vmatpush.bf16.msra.mxu0 %v1164
    %5090 = vmatpush.bf16.msra.mxu0 %v1160
    %5091 = vmatpush.bf16.msra.mxu0 %v1156
    %5092 = vmatpush.bf16.msra.mxu0 %v1152
    %5093 = vmatpush.bf16.msra.mxu0 %v1148
    %5094 = vmatpush.bf16.msra.mxu0 %v1144
    %5095 = vmatpush.bf16.msra.mxu0 %v1140
    %5096 = vmatmul.bf16.gmra.mxu0 %v5072
    %v5097 = vpop.f32.mrf.mxu0
    %v5098 = vadd.f32 %v5085, %v5097
    %v5099 = vpop.f32.mrf.mxu0
    %5100 = vdwg.mxu0
    %5101 = vmatpush.bf16.msra.mxu0 %v1137
    %5102 = vmatpush.bf16.msra.mxu0 %v1133
    %5103 = vmatpush.bf16.msra.mxu0 %v1129
    %5104 = vmatpush.bf16.msra.mxu0 %v1125
    %5105 = vmatpush.bf16.msra.mxu0 %v1121
    %5106 = vmatpush.bf16.msra.mxu0 %v1117
    %5107 = vmatpush.bf16.msra.mxu0 %v1113
    %5108 = vmatpush.bf16.msra.mxu0 %v1109
    %5109 = vmatmul.bf16.gmra.mxu0 %v5071
    %v5110 = vpop.f32.mrf.mxu0
    %v5111 = vadd.f32 0.0, %v5110
    %v5112 = vpop.f32.mrf.mxu0
    %5113 = vdwg.mxu0
    %5114 = vmatpush.bf16.msra.mxu0 %v1169
    %5115 = vmatpush.bf16.msra.mxu0 %v1165
    %5116 = vmatpush.bf16.msra.mxu0 %v1161
    %5117 = vmatpush.bf16.msra.mxu0 %v1157
    %5118 = vmatpush.bf16.msra.mxu0 %v1153
    %5119 = vmatpush.bf16.msra.mxu0 %v1149
    %5120 = vmatpush.bf16.msra.mxu0 %v1145
    %5121 = vmatpush.bf16.msra.mxu0 %v1141
    %5122 = vmatmul.bf16.gmra.mxu0 %v5072
    %v5123 = vpop.f32.mrf.mxu0
    %v5124 = vadd.f32 %v5111, %v5123
    %v5125 = vpop.f32.mrf.mxu0
    %5126 = vdwg.mxu0
    %5127 = vmatpush.bf16.msra.mxu0 %v1138
    %5128 = vmatpush.bf16.msra.mxu0 %v1134
    %5129 = vmatpush.bf16.msra.mxu0 %v1130
    %5130 = vmatpush.bf16.msra.mxu0 %v1126
    %5131 = vmatpush.bf16.msra.mxu0 %v1122
    %5132 = vmatpush.bf16.msra.mxu0 %v1118
    %5133 = vmatpush.bf16.msra.mxu0 %v1114
    %5134 = vmatpush.bf16.msra.mxu0 %v1110
    %5135 = vmatmul.bf16.gmra.mxu0 %v5071
    %v5136 = vpop.f32.mrf.mxu0
    %v5137 = vadd.f32 0.0, %v5136
    %v5138 = vpop.f32.mrf.mxu0
    %5139 = vdwg.mxu0
    %5140 = vmatpush.bf16.msra.mxu0 %v1170
    %5141 = vmatpush.bf16.msra.mxu0 %v1166
    %5142 = vmatpush.bf16.msra.mxu0 %v1162
    %5143 = vmatpush.bf16.msra.mxu0 %v1158
    %5144 = vmatpush.bf16.msra.mxu0 %v1154
    %5145 = vmatpush.bf16.msra.mxu0 %v1150
    %5146 = vmatpush.bf16.msra.mxu0 %v1146
    %5147 = vmatpush.bf16.msra.mxu0 %v1142
    %5148 = vmatmul.bf16.gmra.mxu0 %v5072
    %v5149 = vpop.f32.mrf.mxu0
    %v5150 = vadd.f32 %v5137, %v5149
    %v5151 = vpop.f32.mrf.mxu0
    %5152 = vdwg.mxu0
    %5153 = vmatpush.bf16.msra.mxu0 %v1139
    %5154 = vmatpush.bf16.msra.mxu0 %v1135
    %5155 = vmatpush.bf16.msra.mxu0 %v1131
    %5156 = vmatpush.bf16.msra.mxu0 %v1127
    %5157 = vmatpush.bf16.msra.mxu0 %v1123
    %5158 = vmatpush.bf16.msra.mxu0 %v1119
    %5159 = vmatpush.bf16.msra.mxu0 %v1115
    %5160 = vmatpush.bf16.msra.mxu0 %v1111
    %5161 = vmatmul.bf16.gmra.mxu0 %v5071
    %v5162 = vpop.f32.mrf.mxu0
    %v5163 = vadd.f32 0.0, %v5162
    %v5164 = vpop.f32.mrf.mxu0
    %5165 = vdwg.mxu0
    %5166 = vmatpush.bf16.msra.mxu0 %v1171
    %5167 = vmatpush.bf16.msra.mxu0 %v1167
    %5168 = vmatpush.bf16.msra.mxu0 %v1163
    %5169 = vmatpush.bf16.msra.mxu0 %v1159
    %5170 = vmatpush.bf16.msra.mxu0 %v1155
    %5171 = vmatpush.bf16.msra.mxu0 %v1151
    %5172 = vmatpush.bf16.msra.mxu0 %v1147
    %5173 = vmatpush.bf16.msra.mxu0 %v1143
    %5174 = vmatmul.bf16.gmra.mxu0 %v5072
    %v5175 = vpop.f32.mrf.mxu0
    %v5176 = vadd.f32 %v5163, %v5175
    %v5177 = vpop.f32.mrf.mxu0
    %5178 = vdwg.mxu0
    %v5183 = vrot.slane %v5098, 1
    %v5184 = vrot.slane %v5124, 1
    %v5185 = vrot.slane %v5150, 1
    %v5186 = vrot.slane %v5176, 1
    %v5191 = vadd.f32 %v861, %v5183
    %v5192 = vadd.f32 %v874, %v5184
    %v5193 = vadd.f32 %v887, %v5185
    %v5194 = vadd.f32 %v900, %v5186
    %v5195 = vxor.u32 %v5191, 2147483648
    %v5196 = vxor.u32 %v5192, 2147483648
    %v5197 = vmul.f32 %v5195, 1.442695
    %v5198 = vpow.pop %v5197
    %v5199 = vmul.f32 %v5196, 1.442695
    %v5200 = vpow.pop %v5199
    %v5201 = vadd.f32 %v5198, 1.0
    %v5202 = vadd.f32 %v5200, 1.0
    %v5203 = vrcp.pop %v5201
    %v5204 = vmul.f32 %v5201, %v5203
    %v5205 = vsub.f32 1.0, %v5204
    %v5206 = vmul.f32 %v5203, %v5205
    %v5207 = vadd.f32 %v5203, %v5206
    %vm5208 = vweird.f32 %v5201
    %vm5209 = vweird.f32 %v5203
    %vm5210 = vmor %vm5208, %vm5209
    %v5211 = vsel %vm5210, %v5203, %v5207
    %v5212 = vand.u32 2147483647, %v5201
    %vm5213 = vcmp.eq.f32.partialorder %v5212, 8.507059e+37
    %v5214 = vand.u32 %v5201, 2147483648
    %v5215 = vor.u32 1.1754944e-38, %v5214
    %v5216 = vsel %vm5213, %v5215, %v5211
    %v5217 = vmul.f32 1.0, %v5216
    %v5218 = vrcp.pop %v5202
    %v5219 = vmul.f32 %v5202, %v5218
    %v5220 = vsub.f32 1.0, %v5219
    %v5221 = vmul.f32 %v5218, %v5220
    %v5222 = vadd.f32 %v5218, %v5221
    %vm5223 = vweird.f32 %v5202
    %vm5224 = vweird.f32 %v5218
    %vm5225 = vmor %vm5223, %vm5224
    %v5226 = vsel %vm5225, %v5218, %v5222
    %v5227 = vand.u32 2147483647, %v5202
    %vm5228 = vcmp.eq.f32.partialorder %v5227, 8.507059e+37
    %v5229 = vand.u32 %v5202, 2147483648
    %v5230 = vor.u32 1.1754944e-38, %v5229
    %v5231 = vsel %vm5228, %v5230, %v5226
    %v5232 = vmul.f32 1.0, %v5231
    %v5233 = vtanh.pop %v5193
    %v5234 = vxor.u32 %v5194, 2147483648
    %v5235 = vmul.f32 %v5234, 1.442695
    %v5236 = vpow.pop %v5235
    %v5237 = vadd.f32 %v5236, 1.0
    %v5238 = vrcp.pop %v5237
    %v5239 = vmul.f32 %v5237, %v5238
    %v5240 = vsub.f32 1.0, %v5239
    %v5241 = vmul.f32 %v5238, %v5240
    %v5242 = vadd.f32 %v5238, %v5241
    %vm5243 = vweird.f32 %v5237
    %vm5244 = vweird.f32 %v5238
    %vm5245 = vmor %vm5243, %vm5244
    %v5246 = vsel %vm5245, %v5238, %v5242
    %v5247 = vand.u32 2147483647, %v5237
    %vm5248 = vcmp.eq.f32.partialorder %v5247, 8.507059e+37
    %v5249 = vand.u32 %v5237, 2147483648
    %v5250 = vor.u32 1.1754944e-38, %v5249
    %v5251 = vsel %vm5248, %v5250, %v5246
    %v5252 = vmul.f32 1.0, %v5251
    %v5253 = vmul.f32 %v5217, %v1420
    %v5254 = vmul.f32 %v5253, %v5233
    %v5256 = vrot.slane %v4787, 7
    %v5258 = vmul.f32 %v5232, %v5256
    %v5259 = vadd.f32 %v5254, %v5258
    %v5260 = vtanh.pop %v5259
    %v5261 = vmul.f32 %v5252, %v5260
    %v5262 = vpack.c.bf16 %v5261, %v5261
    %v5263 = vpack.c.bf16 %v5259, %v5259
    %5264 = vmatpush.bf16.msra.mxu0 %v1649
    %5265 = vmatpush.bf16.msra.mxu0 %v1645
    %5266 = vmatpush.bf16.msra.mxu0 %v1641
    %5267 = vmatpush.bf16.msra.mxu0 %v1637
    %5268 = vmatpush.bf16.msra.mxu0 %v1633
    %5269 = vmatpush.bf16.msra.mxu0 %v1629
    %5270 = vmatpush.bf16.msra.mxu0 %v1625
    %5271 = vmatpush.bf16.msra.mxu0 %v1621
    %5272 = vmatmul.bf16.gmra.mxu0 %v5068
    %v5273 = vpop.f32.mrf.mxu0
    %v5274 = vadd.f32 0.0, %v5273
    %v5275 = vpop.f32.mrf.mxu0
    %5276 = vdwg.mxu0
    %5277 = vmatpush.bf16.msra.mxu0 %v1681
    %5278 = vmatpush.bf16.msra.mxu0 %v1677
    %5279 = vmatpush.bf16.msra.mxu0 %v1673
    %5280 = vmatpush.bf16.msra.mxu0 %v1669
    %5281 = vmatpush.bf16.msra.mxu0 %v1665
    %5282 = vmatpush.bf16.msra.mxu0 %v1661
    %5283 = vmatpush.bf16.msra.mxu0 %v1657
    %5284 = vmatpush.bf16.msra.mxu0 %v1653
    %5285 = vmatmul.bf16.gmra.mxu0 %v5069
    %v5286 = vpop.f32.mrf.mxu0
    %v5287 = vadd.f32 %v5274, %v5286
    %v5288 = vpop.f32.mrf.mxu0
    %5289 = vdwg.mxu0
    %5290 = vmatpush.bf16.msra.mxu0 %v1650
    %5291 = vmatpush.bf16.msra.mxu0 %v1646
    %5292 = vmatpush.bf16.msra.mxu0 %v1642
    %5293 = vmatpush.bf16.msra.mxu0 %v1638
    %5294 = vmatpush.bf16.msra.mxu0 %v1634
    %5295 = vmatpush.bf16.msra.mxu0 %v1630
    %5296 = vmatpush.bf16.msra.mxu0 %v1626
    %5297 = vmatpush.bf16.msra.mxu0 %v1622
    %5298 = vmatmul.bf16.gmra.mxu0 %v5068
    %v5299 = vpop.f32.mrf.mxu0
    %v5300 = vadd.f32 0.0, %v5299
    %v5301 = vpop.f32.mrf.mxu0
    %5302 = vdwg.mxu0
    %5303 = vmatpush.bf16.msra.mxu0 %v1682
    %5304 = vmatpush.bf16.msra.mxu0 %v1678
    %5305 = vmatpush.bf16.msra.mxu0 %v1674
    %5306 = vmatpush.bf16.msra.mxu0 %v1670
    %5307 = vmatpush.bf16.msra.mxu0 %v1666
    %5308 = vmatpush.bf16.msra.mxu0 %v1662
    %5309 = vmatpush.bf16.msra.mxu0 %v1658
    %5310 = vmatpush.bf16.msra.mxu0 %v1654
    %5311 = vmatmul.bf16.gmra.mxu0 %v5069
    %v5312 = vpop.f32.mrf.mxu0
    %v5313 = vadd.f32 %v5300, %v5312
    %v5314 = vpop.f32.mrf.mxu0
    %5315 = vdwg.mxu0
    %5316 = vmatpush.bf16.msra.mxu0 %v1651
    %5317 = vmatpush.bf16.msra.mxu0 %v1647
    %5318 = vmatpush.bf16.msra.mxu0 %v1643
    %5319 = vmatpush.bf16.msra.mxu0 %v1639
    %5320 = vmatpush.bf16.msra.mxu0 %v1635
    %5321 = vmatpush.bf16.msra.mxu0 %v1631
    %5322 = vmatpush.bf16.msra.mxu0 %v1627
    %5323 = vmatpush.bf16.msra.mxu0 %v1623
    %5324 = vmatmul.bf16.gmra.mxu0 %v5068
    %v5325 = vpop.f32.mrf.mxu0
    %v5326 = vadd.f32 0.0, %v5325
    %v5327 = vpop.f32.mrf.mxu0
    %5328 = vdwg.mxu0
    %5329 = vmatpush.bf16.msra.mxu0 %v1683
    %5330 = vmatpush.bf16.msra.mxu0 %v1679
    %5331 = vmatpush.bf16.msra.mxu0 %v1675
    %5332 = vmatpush.bf16.msra.mxu0 %v1671
    %5333 = vmatpush.bf16.msra.mxu0 %v1667
    %5334 = vmatpush.bf16.msra.mxu0 %v1663
    %5335 = vmatpush.bf16.msra.mxu0 %v1659
    %5336 = vmatpush.bf16.msra.mxu0 %v1655
    %5337 = vmatmul.bf16.gmra.mxu0 %v5069
    %v5338 = vpop.f32.mrf.mxu0
    %v5339 = vadd.f32 %v5326, %v5338
    %v5340 = vpop.f32.mrf.mxu0
    %5341 = vdwg.mxu0
    %5342 = vmatpush.bf16.msra.mxu0 %v1652
    %5343 = vmatpush.bf16.msra.mxu0 %v1648
    %5344 = vmatpush.bf16.msra.mxu0 %v1644
    %5345 = vmatpush.bf16.msra.mxu0 %v1640
    %5346 = vmatpush.bf16.msra.mxu0 %v1636
    %5347 = vmatpush.bf16.msra.mxu0 %v1632
    %5348 = vmatpush.bf16.msra.mxu0 %v1628
    %5349 = vmatpush.bf16.msra.mxu0 %v1624
    %5350 = vmatmul.bf16.gmra.mxu0 %v5068
    %v5351 = vpop.f32.mrf.mxu0
    %v5352 = vadd.f32 0.0, %v5351
    %v5353 = vpop.f32.mrf.mxu0
    %5354 = vdwg.mxu0
    %5355 = vmatpush.bf16.msra.mxu0 %v1684
    %5356 = vmatpush.bf16.msra.mxu0 %v1680
    %5357 = vmatpush.bf16.msra.mxu0 %v1676
    %5358 = vmatpush.bf16.msra.mxu0 %v1672
    %5359 = vmatpush.bf16.msra.mxu0 %v1668
    %5360 = vmatpush.bf16.msra.mxu0 %v1664
    %5361 = vmatpush.bf16.msra.mxu0 %v1660
    %5362 = vmatpush.bf16.msra.mxu0 %v1656
    %5363 = vmatmul.bf16.gmra.mxu0 %v5069
    %v5364 = vpop.f32.mrf.mxu0
    %v5365 = vadd.f32 %v5352, %v5364
    %v5366 = vpop.f32.mrf.mxu0
    %5367 = vdwg.mxu0
    %v5369 = vunpack.c.l.b16 %v5262
    %v5370 = vpack.c.b16 %v5369, %v5369
    %v5372 = vshrl.u32 %v5370, 16
    %v5374 = vrot.slane %v5372, 3
    %5376 = vmatpush.bf16.msra.mxu0 %v2016
    %5377 = vmatpush.bf16.msra.mxu0 %v2011
    %5378 = vmatpush.bf16.msra.mxu0 %v2006
    %5379 = vmatpush.bf16.msra.mxu0 %v2001
    %5380 = vmatpush.bf16.msra.mxu0 %v1996
    %5381 = vmatpush.bf16.msra.mxu0 %v1991
    %5382 = vmatpush.bf16.msra.mxu0 %v1986
    %5383 = vmatpush.bf16.msra.mxu0 %v1981
    %5384 = vmatmul.bf16.gmra.mxu0 %v5374
    %v5385 = vpop.f32.mrf.mxu0
    %v5386 = vadd.f32 0.0, %v5385
    %v5387 = vpop.f32.mrf.mxu0
    %5388 = vdwg.mxu0
    %5389 = vmatpush.bf16.msra.mxu0 %v2017
    %5390 = vmatpush.bf16.msra.mxu0 %v2012
    %5391 = vmatpush.bf16.msra.mxu0 %v2007
    %5392 = vmatpush.bf16.msra.mxu0 %v2002
    %5393 = vmatpush.bf16.msra.mxu0 %v1997
    %5394 = vmatpush.bf16.msra.mxu0 %v1992
    %5395 = vmatpush.bf16.msra.mxu0 %v1987
    %5396 = vmatpush.bf16.msra.mxu0 %v1982
    %5397 = vmatmul.bf16.gmra.mxu0 %v5374
    %v5398 = vpop.f32.mrf.mxu0
    %v5399 = vadd.f32 0.0, %v5398
    %v5400 = vpop.f32.mrf.mxu0
    %5401 = vdwg.mxu0
    %5402 = vmatpush.bf16.msra.mxu0 %v2018
    %5403 = vmatpush.bf16.msra.mxu0 %v2013
    %5404 = vmatpush.bf16.msra.mxu0 %v2008
    %5405 = vmatpush.bf16.msra.mxu0 %v2003
    %5406 = vmatpush.bf16.msra.mxu0 %v1998
    %5407 = vmatpush.bf16.msra.mxu0 %v1993
    %5408 = vmatpush.bf16.msra.mxu0 %v1988
    %5409 = vmatpush.bf16.msra.mxu0 %v1983
    %5410 = vmatmul.bf16.gmra.mxu0 %v5374
    %v5411 = vpop.f32.mrf.mxu0
    %v5412 = vadd.f32 0.0, %v5411
    %v5413 = vpop.f32.mrf.mxu0
    %5414 = vdwg.mxu0
    %5415 = vmatpush.bf16.msra.mxu0 %v2019
    %5416 = vmatpush.bf16.msra.mxu0 %v2014
    %5417 = vmatpush.bf16.msra.mxu0 %v2009
    %5418 = vmatpush.bf16.msra.mxu0 %v2004
    %5419 = vmatpush.bf16.msra.mxu0 %v1999
    %5420 = vmatpush.bf16.msra.mxu0 %v1994
    %5421 = vmatpush.bf16.msra.mxu0 %v1989
    %5422 = vmatpush.bf16.msra.mxu0 %v1984
    %5423 = vmatmul.bf16.gmra.mxu0 %v5374
    %v5424 = vpop.f32.mrf.mxu0
    %v5425 = vadd.f32 0.0, %v5424
    %v5426 = vpop.f32.mrf.mxu0
    %5427 = vdwg.mxu0
    %5428 = vmatpush.bf16.msra.mxu0 %v2020
    %5429 = vmatpush.bf16.msra.mxu0 %v2015
    %5430 = vmatpush.bf16.msra.mxu0 %v2010
    %5431 = vmatpush.bf16.msra.mxu0 %v2005
    %5432 = vmatpush.bf16.msra.mxu0 %v2000
    %5433 = vmatpush.bf16.msra.mxu0 %v1995
    %5434 = vmatpush.bf16.msra.mxu0 %v1990
    %5435 = vmatpush.bf16.msra.mxu0 %v1985
    %5436 = vmatmul.bf16.gmra.mxu0 %v5374
    %v5437 = vpop.f32.mrf.mxu0
    %v5438 = vadd.f32 0.0, %v5437
    %v5439 = vpop.f32.mrf.mxu0
    %5440 = vdwg.mxu0
    %v5441 = vadd.f32 %v5386, %v5287
    %v5442 = vadd.f32 %v5399, %v5313
    %v5443 = vadd.f32 %v5412, %v5339
    %v5444 = vadd.f32 %v5425, %v5365
    %v5445 = vrot.slane %v314, 7
    %v5446 = vrot.slane %v315, 7
    %v5447 = vrot.slane %v316, 7
    %v5448 = vrot.slane %v324, 7
    %v5453 = vadd.f32 %v5441, %v5445
    %v5454 = vadd.f32 %v5442, %v5446
    %v5455 = vadd.f32 %v5443, %v5447
    %v5456 = vadd.f32 %v5444, %v5448
    %v5457 = vrot.slane %v348, 7
    %v5459 = vadd.f32 %v5438, %v5457
    %v5460 = vxor.u32 %v5453, 2147483648
    %v5461 = vxor.u32 %v5454, 2147483648
    %v5462 = vmul.f32 %v5460, 1.442695
    %v5463 = vpow.pop %v5462
    %v5464 = vmul.f32 %v5461, 1.442695
    %v5465 = vpow.pop %v5464
    %v5466 = vadd.f32 %v5463, 1.0
    %v5467 = vadd.f32 %v5465, 1.0
    %v5468 = vrcp.pop %v5466
    %v5469 = vmul.f32 %v5466, %v5468
    %v5470 = vsub.f32 1.0, %v5469
    %v5471 = vmul.f32 %v5468, %v5470
    %v5472 = vadd.f32 %v5468, %v5471
    %vm5473 = vweird.f32 %v5466
    %vm5474 = vweird.f32 %v5468
    %vm5475 = vmor %vm5473, %vm5474
    %v5476 = vsel %vm5475, %v5468, %v5472
    %v5477 = vand.u32 2147483647, %v5466
    %vm5478 = vcmp.eq.f32.partialorder %v5477, 8.507059e+37
    %v5479 = vand.u32 %v5466, 2147483648
    %v5480 = vor.u32 1.1754944e-38, %v5479
    %v5481 = vsel %vm5478, %v5480, %v5476
    %v5482 = vmul.f32 1.0, %v5481
    %v5483 = vrcp.pop %v5467
    %v5484 = vmul.f32 %v5467, %v5483
    %v5485 = vsub.f32 1.0, %v5484
    %v5486 = vmul.f32 %v5483, %v5485
    %v5487 = vadd.f32 %v5483, %v5486
    %vm5488 = vweird.f32 %v5467
    %vm5489 = vweird.f32 %v5483
    %vm5490 = vmor %vm5488, %vm5489
    %v5491 = vsel %vm5490, %v5483, %v5487
    %v5492 = vand.u32 2147483647, %v5467
    %vm5493 = vcmp.eq.f32.partialorder %v5492, 8.507059e+37
    %v5494 = vand.u32 %v5467, 2147483648
    %v5495 = vor.u32 1.1754944e-38, %v5494
    %v5496 = vsel %vm5493, %v5495, %v5491
    %v5497 = vmul.f32 1.0, %v5496
    %v5498 = vtanh.pop %v5455
    %v5499 = vxor.u32 %v5456, 2147483648
    %v5500 = vmul.f32 %v5499, 1.442695
    %v5501 = vpow.pop %v5500
    %v5502 = vadd.f32 %v5501, 1.0
    %v5503 = vrcp.pop %v5502
    %v5504 = vmul.f32 %v5502, %v5503
    %v5505 = vsub.f32 1.0, %v5504
    %v5506 = vmul.f32 %v5503, %v5505
    %v5507 = vadd.f32 %v5503, %v5506
    %vm5508 = vweird.f32 %v5502
    %vm5509 = vweird.f32 %v5503
    %vm5510 = vmor %vm5508, %vm5509
    %v5511 = vsel %vm5510, %v5503, %v5507
    %v5512 = vand.u32 2147483647, %v5502
    %vm5513 = vcmp.eq.f32.partialorder %v5512, 8.507059e+37
    %v5514 = vand.u32 %v5502, 2147483648
    %v5515 = vor.u32 1.1754944e-38, %v5514
    %v5516 = vsel %vm5513, %v5515, %v5511
    %v5517 = vmul.f32 1.0, %v5516
    %v5518 = vxor.u32 %v5459, 2147483648
    %v5519 = vmul.f32 %v5518, 1.442695
    %v5520 = vpow.pop %v5519
    %v5521 = vadd.f32 %v5520, 1.0
    %v5522 = vrcp.pop %v5521
    %v5523 = vmul.f32 %v5521, %v5522
    %v5524 = vsub.f32 1.0, %v5523
    %v5525 = vmul.f32 %v5522, %v5524
    %v5526 = vadd.f32 %v5522, %v5525
    %vm5527 = vweird.f32 %v5521
    %vm5528 = vweird.f32 %v5522
    %vm5529 = vmor %vm5527, %vm5528
    %v5530 = vsel %vm5529, %v5522, %v5526
    %v5531 = vand.u32 2147483647, %v5521
    %vm5532 = vcmp.eq.f32.partialorder %v5531, 8.507059e+37
    %v5533 = vand.u32 %v5521, 2147483648
    %v5534 = vor.u32 1.1754944e-38, %v5533
    %v5535 = vsel %vm5532, %v5534, %v5530
    %v5536 = vmul.f32 1.0, %v5535
    %v5537 = vmul.f32 %v5482, %v5536
    %v5538 = vmul.f32 %v5537, %v5498
    %v5539 = vmul.f32 %v5497, %v5065
    %v5540 = vadd.f32 %v5538, %v5539
    %v5541 = vtanh.pop %v5540
    %v5542 = vmul.f32 %v5517, %v5541
    %v5543 = vpack.c.bf16 %v5542, %v5542
    %v5544 = vpack.c.bf16 %v5540, %v5540
    %5545 = vmatpush.bf16.msra.mxu0 %v806
    %5546 = vmatpush.bf16.msra.mxu0 %v801
    %5547 = vmatpush.bf16.msra.mxu0 %v796
    %5548 = vmatpush.bf16.msra.mxu0 %v791
    %5549 = vmatpush.bf16.msra.mxu0 %v786
    %5550 = vmatpush.bf16.msra.mxu0 %v781
    %5551 = vmatpush.bf16.msra.mxu0 %v776
    %5552 = vmatpush.bf16.msra.mxu0 %v771
    %5553 = vmatmul.bf16.gmra.mxu0 %v5543
    %v5554 = vpop.f32.mrf.mxu0
    %v5555 = vadd.f32 0.0, %v5554
    %v5556 = vpop.f32.mrf.mxu0
    %5557 = vdwg.mxu0
    %5558 = vmatpush.bf16.msra.mxu0 %v807
    %5559 = vmatpush.bf16.msra.mxu0 %v802
    %5560 = vmatpush.bf16.msra.mxu0 %v797
    %5561 = vmatpush.bf16.msra.mxu0 %v792
    %5562 = vmatpush.bf16.msra.mxu0 %v787
    %5563 = vmatpush.bf16.msra.mxu0 %v782
    %5564 = vmatpush.bf16.msra.mxu0 %v777
    %5565 = vmatpush.bf16.msra.mxu0 %v772
    %5566 = vmatmul.bf16.gmra.mxu0 %v5543
    %v5567 = vpop.f32.mrf.mxu0
    %v5568 = vadd.f32 0.0, %v5567
    %v5569 = vpop.f32.mrf.mxu0
    %5570 = vdwg.mxu0
    %5571 = vmatpush.bf16.msra.mxu0 %v808
    %5572 = vmatpush.bf16.msra.mxu0 %v803
    %5573 = vmatpush.bf16.msra.mxu0 %v798
    %5574 = vmatpush.bf16.msra.mxu0 %v793
    %5575 = vmatpush.bf16.msra.mxu0 %v788
    %5576 = vmatpush.bf16.msra.mxu0 %v783
    %5577 = vmatpush.bf16.msra.mxu0 %v778
    %5578 = vmatpush.bf16.msra.mxu0 %v773
    %5579 = vmatmul.bf16.gmra.mxu0 %v5543
    %v5580 = vpop.f32.mrf.mxu0
    %v5581 = vadd.f32 0.0, %v5580
    %v5582 = vpop.f32.mrf.mxu0
    %5583 = vdwg.mxu0
    %5584 = vmatpush.bf16.msra.mxu0 %v809
    %5585 = vmatpush.bf16.msra.mxu0 %v804
    %5586 = vmatpush.bf16.msra.mxu0 %v799
    %5587 = vmatpush.bf16.msra.mxu0 %v794
    %5588 = vmatpush.bf16.msra.mxu0 %v789
    %5589 = vmatpush.bf16.msra.mxu0 %v784
    %5590 = vmatpush.bf16.msra.mxu0 %v779
    %5591 = vmatpush.bf16.msra.mxu0 %v774
    %5592 = vmatmul.bf16.gmra.mxu0 %v5543
    %v5593 = vpop.f32.mrf.mxu0
    %v5594 = vadd.f32 0.0, %v5593
    %v5595 = vpop.f32.mrf.mxu0
    %5596 = vdwg.mxu0
    %5597 = vmatpush.bf16.msra.mxu0 %v810
    %5598 = vmatpush.bf16.msra.mxu0 %v805
    %5599 = vmatpush.bf16.msra.mxu0 %v800
    %5600 = vmatpush.bf16.msra.mxu0 %v795
    %5601 = vmatpush.bf16.msra.mxu0 %v790
    %5602 = vmatpush.bf16.msra.mxu0 %v785
    %5603 = vmatpush.bf16.msra.mxu0 %v780
    %5604 = vmatpush.bf16.msra.mxu0 %v775
    %5605 = vmatmul.bf16.gmra.mxu0 %v5543
    %v5606 = vpop.f32.mrf.mxu0
    %v5607 = vadd.f32 0.0, %v5606
    %v5608 = vpop.f32.mrf.mxu0
    %5609 = vdwg.mxu0
    %v5611 = vshrl.u32 %v5262, 16
    %v5613 = vrot.slane %v5611, 3
    %v5615 = vshrl.u32 %v5263, 16
    %v5617 = vrot.slane %v5615, 3
    %5620 = vmatpush.bf16.msra.mxu0 %v1136
    %5621 = vmatpush.bf16.msra.mxu0 %v1132
    %5622 = vmatpush.bf16.msra.mxu0 %v1128
    %5623 = vmatpush.bf16.msra.mxu0 %v1124
    %5624 = vmatpush.bf16.msra.mxu0 %v1120
    %5625 = vmatpush.bf16.msra.mxu0 %v1116
    %5626 = vmatpush.bf16.msra.mxu0 %v1112
    %5627 = vmatpush.bf16.msra.mxu0 %v1108
    %5628 = vmatmul.bf16.gmra.mxu0 %v5613
    %v5629 = vpop.f32.mrf.mxu0
    %v5630 = vadd.f32 0.0, %v5629
    %v5631 = vpop.f32.mrf.mxu0
    %5632 = vdwg.mxu0
    %5633 = vmatpush.bf16.msra.mxu0 %v1168
    %5634 = vmatpush.bf16.msra.mxu0 %v1164
    %5635 = vmatpush.bf16.msra.mxu0 %v1160
    %5636 = vmatpush.bf16.msra.mxu0 %v1156
    %5637 = vmatpush.bf16.msra.mxu0 %v1152
    %5638 = vmatpush.bf16.msra.mxu0 %v1148
    %5639 = vmatpush.bf16.msra.mxu0 %v1144
    %5640 = vmatpush.bf16.msra.mxu0 %v1140
    %5641 = vmatmul.bf16.gmra.mxu0 %v5617
    %v5642 = vpop.f32.mrf.mxu0
    %v5643 = vadd.f32 %v5630, %v5642
    %v5644 = vpop.f32.mrf.mxu0
    %5645 = vdwg.mxu0
    %5646 = vmatpush.bf16.msra.mxu0 %v1137
    %5647 = vmatpush.bf16.msra.mxu0 %v1133
    %5648 = vmatpush.bf16.msra.mxu0 %v1129
    %5649 = vmatpush.bf16.msra.mxu0 %v1125
    %5650 = vmatpush.bf16.msra.mxu0 %v1121
    %5651 = vmatpush.bf16.msra.mxu0 %v1117
    %5652 = vmatpush.bf16.msra.mxu0 %v1113
    %5653 = vmatpush.bf16.msra.mxu0 %v1109
    %5654 = vmatmul.bf16.gmra.mxu0 %v5613
    %v5655 = vpop.f32.mrf.mxu0
    %v5656 = vadd.f32 0.0, %v5655
    %v5657 = vpop.f32.mrf.mxu0
    %5658 = vdwg.mxu0
    %5659 = vmatpush.bf16.msra.mxu0 %v1169
    %5660 = vmatpush.bf16.msra.mxu0 %v1165
    %5661 = vmatpush.bf16.msra.mxu0 %v1161
    %5662 = vmatpush.bf16.msra.mxu0 %v1157
    %5663 = vmatpush.bf16.msra.mxu0 %v1153
    %5664 = vmatpush.bf16.msra.mxu0 %v1149
    %5665 = vmatpush.bf16.msra.mxu0 %v1145
    %5666 = vmatpush.bf16.msra.mxu0 %v1141
    %5667 = vmatmul.bf16.gmra.mxu0 %v5617
    %v5668 = vpop.f32.mrf.mxu0
    %v5669 = vadd.f32 %v5656, %v5668
    %v5670 = vpop.f32.mrf.mxu0
    %5671 = vdwg.mxu0
    %5672 = vmatpush.bf16.msra.mxu0 %v1138
    %5673 = vmatpush.bf16.msra.mxu0 %v1134
    %5674 = vmatpush.bf16.msra.mxu0 %v1130
    %5675 = vmatpush.bf16.msra.mxu0 %v1126
    %5676 = vmatpush.bf16.msra.mxu0 %v1122
    %5677 = vmatpush.bf16.msra.mxu0 %v1118
    %5678 = vmatpush.bf16.msra.mxu0 %v1114
    %5679 = vmatpush.bf16.msra.mxu0 %v1110
    %5680 = vmatmul.bf16.gmra.mxu0 %v5613
    %v5681 = vpop.f32.mrf.mxu0
    %v5682 = vadd.f32 0.0, %v5681
    %v5683 = vpop.f32.mrf.mxu0
    %5684 = vdwg.mxu0
    %5685 = vmatpush.bf16.msra.mxu0 %v1170
    %5686 = vmatpush.bf16.msra.mxu0 %v1166
    %5687 = vmatpush.bf16.msra.mxu0 %v1162
    %5688 = vmatpush.bf16.msra.mxu0 %v1158
    %5689 = vmatpush.bf16.msra.mxu0 %v1154
    %5690 = vmatpush.bf16.msra.mxu0 %v1150
    %5691 = vmatpush.bf16.msra.mxu0 %v1146
    %5692 = vmatpush.bf16.msra.mxu0 %v1142
    %5693 = vmatmul.bf16.gmra.mxu0 %v5617
    %v5694 = vpop.f32.mrf.mxu0
    %v5695 = vadd.f32 %v5682, %v5694
    %v5696 = vpop.f32.mrf.mxu0
    %5697 = vdwg.mxu0
    %5698 = vmatpush.bf16.msra.mxu0 %v1139
    %5699 = vmatpush.bf16.msra.mxu0 %v1135
    %5700 = vmatpush.bf16.msra.mxu0 %v1131
    %5701 = vmatpush.bf16.msra.mxu0 %v1127
    %5702 = vmatpush.bf16.msra.mxu0 %v1123
    %5703 = vmatpush.bf16.msra.mxu0 %v1119
    %5704 = vmatpush.bf16.msra.mxu0 %v1115
    %5705 = vmatpush.bf16.msra.mxu0 %v1111
    %5706 = vmatmul.bf16.gmra.mxu0 %v5613
    %v5707 = vpop.f32.mrf.mxu0
    %v5708 = vadd.f32 0.0, %v5707
    %v5709 = vpop.f32.mrf.mxu0
    %5710 = vdwg.mxu0
    %5711 = vmatpush.bf16.msra.mxu0 %v1171
    %5712 = vmatpush.bf16.msra.mxu0 %v1167
    %5713 = vmatpush.bf16.msra.mxu0 %v1163
    %5714 = vmatpush.bf16.msra.mxu0 %v1159
    %5715 = vmatpush.bf16.msra.mxu0 %v1155
    %5716 = vmatpush.bf16.msra.mxu0 %v1151
    %5717 = vmatpush.bf16.msra.mxu0 %v1147
    %5718 = vmatpush.bf16.msra.mxu0 %v1143
    %5719 = vmatmul.bf16.gmra.mxu0 %v5617
    %v5720 = vpop.f32.mrf.mxu0
    %v5721 = vadd.f32 %v5708, %v5720
    %v5722 = vpop.f32.mrf.mxu0
    %5723 = vdwg.mxu0
    %v5724 = vadd.f32 %v5555, %v5643
    %v5725 = vadd.f32 %v5568, %v5669
    %v5726 = vadd.f32 %v5581, %v5695
    %v5727 = vadd.f32 %v5594, %v5721
    %v5728 = vadd.f32 %v5724, %v157
    %v5729 = vadd.f32 %v5725, %v158
    %v5730 = vadd.f32 %v5726, %v159
    %v5731 = vadd.f32 %v5727, %v242
    %v5732 = vadd.f32 %v5607, %v262
    %v5733 = vxor.u32 %v5728, 2147483648
    %v5734 = vxor.u32 %v5729, 2147483648
    %v5735 = vmul.f32 %v5733, 1.442695
    %v5736 = vpow.pop %v5735
    %v5737 = vmul.f32 %v5734, 1.442695
    %v5738 = vpow.pop %v5737
    %v5739 = vadd.f32 %v5736, 1.0
    %v5740 = vadd.f32 %v5738, 1.0
    %v5741 = vrcp.pop %v5739
    %v5742 = vmul.f32 %v5739, %v5741
    %v5743 = vsub.f32 1.0, %v5742
    %v5744 = vmul.f32 %v5741, %v5743
    %v5745 = vadd.f32 %v5741, %v5744
    %vm5746 = vweird.f32 %v5739
    %vm5747 = vweird.f32 %v5741
    %vm5748 = vmor %vm5746, %vm5747
    %v5749 = vsel %vm5748, %v5741, %v5745
    %v5750 = vand.u32 2147483647, %v5739
    %vm5751 = vcmp.eq.f32.partialorder %v5750, 8.507059e+37
    %v5752 = vand.u32 %v5739, 2147483648
    %v5753 = vor.u32 1.1754944e-38, %v5752
    %v5754 = vsel %vm5751, %v5753, %v5749
    %v5755 = vmul.f32 1.0, %v5754
    %v5756 = vrcp.pop %v5740
    %v5757 = vmul.f32 %v5740, %v5756
    %v5758 = vsub.f32 1.0, %v5757
    %v5759 = vmul.f32 %v5756, %v5758
    %v5760 = vadd.f32 %v5756, %v5759
    %vm5761 = vweird.f32 %v5740
    %vm5762 = vweird.f32 %v5756
    %vm5763 = vmor %vm5761, %vm5762
    %v5764 = vsel %vm5763, %v5756, %v5760
    %v5765 = vand.u32 2147483647, %v5740
    %vm5766 = vcmp.eq.f32.partialorder %v5765, 8.507059e+37
    %v5767 = vand.u32 %v5740, 2147483648
    %v5768 = vor.u32 1.1754944e-38, %v5767
    %v5769 = vsel %vm5766, %v5768, %v5764
    %v5770 = vmul.f32 1.0, %v5769
    %v5771 = vtanh.pop %v5730
    %v5772 = vxor.u32 %v5731, 2147483648
    %v5773 = vmul.f32 %v5772, 1.442695
    %v5774 = vpow.pop %v5773
    %v5775 = vadd.f32 %v5774, 1.0
    %v5776 = vrcp.pop %v5775
    %v5777 = vmul.f32 %v5775, %v5776
    %v5778 = vsub.f32 1.0, %v5777
    %v5779 = vmul.f32 %v5776, %v5778
    %v5780 = vadd.f32 %v5776, %v5779
    %vm5781 = vweird.f32 %v5775
    %vm5782 = vweird.f32 %v5776
    %vm5783 = vmor %vm5781, %vm5782
    %v5784 = vsel %vm5783, %v5776, %v5780
    %v5785 = vand.u32 2147483647, %v5775
    %vm5786 = vcmp.eq.f32.partialorder %v5785, 8.507059e+37
    %v5787 = vand.u32 %v5775, 2147483648
    %v5788 = vor.u32 1.1754944e-38, %v5787
    %v5789 = vsel %vm5786, %v5788, %v5784
    %v5790 = vmul.f32 1.0, %v5789
    %v5791 = vxor.u32 %v5732, 2147483648
    %v5792 = vmul.f32 %v5791, 1.442695
    %v5793 = vpow.pop %v5792
    %v5794 = vadd.f32 %v5793, 1.0
    %v5795 = vrcp.pop %v5794
    %v5796 = vmul.f32 %v5794, %v5795
    %v5797 = vsub.f32 1.0, %v5796
    %v5798 = vmul.f32 %v5795, %v5797
    %v5799 = vadd.f32 %v5795, %v5798
    %vm5800 = vweird.f32 %v5794
    %vm5801 = vweird.f32 %v5795
    %vm5802 = vmor %vm5800, %vm5801
    %v5803 = vsel %vm5802, %v5795, %v5799
    %v5804 = vand.u32 2147483647, %v5794
    %vm5805 = vcmp.eq.f32.partialorder %v5804, 8.507059e+37
    %v5806 = vand.u32 %v5794, 2147483648
    %v5807 = vor.u32 1.1754944e-38, %v5806
    %v5808 = vsel %vm5805, %v5807, %v5803
    %v5809 = vmul.f32 1.0, %v5808
    %v5810 = vmul.f32 %v5755, %v5809
    %v5811 = vmul.f32 %v5810, %v5771
    %v5813 = vrot.slane %v5259, 7
    %v5815 = vmul.f32 %v5770, %v5813
    %v5816 = vadd.f32 %v5811, %v5815
    %v5817 = vtanh.pop %v5816
    %v5818 = vmul.f32 %v5790, %v5817
    %v5819 = vpack.c.bf16 %v5818, %v5818
    %v5820 = vpack.c.bf16 %v5816, %v5816
    %5821 = vmatpush.bf16.msra.mxu0 %v1649
    %5822 = vmatpush.bf16.msra.mxu0 %v1645
    %5823 = vmatpush.bf16.msra.mxu0 %v1641
    %5824 = vmatpush.bf16.msra.mxu0 %v1637
    %5825 = vmatpush.bf16.msra.mxu0 %v1633
    %5826 = vmatpush.bf16.msra.mxu0 %v1629
    %5827 = vmatpush.bf16.msra.mxu0 %v1625
    %5828 = vmatpush.bf16.msra.mxu0 %v1621
    %5829 = vmatmul.bf16.gmra.mxu0 %v5543
    %v5830 = vpop.f32.mrf.mxu0
    %v5831 = vadd.f32 0.0, %v5830
    %v5832 = vpop.f32.mrf.mxu0
    %5833 = vdwg.mxu0
    %5834 = vmatpush.bf16.msra.mxu0 %v1681
    %5835 = vmatpush.bf16.msra.mxu0 %v1677
    %5836 = vmatpush.bf16.msra.mxu0 %v1673
    %5837 = vmatpush.bf16.msra.mxu0 %v1669
    %5838 = vmatpush.bf16.msra.mxu0 %v1665
    %5839 = vmatpush.bf16.msra.mxu0 %v1661
    %5840 = vmatpush.bf16.msra.mxu0 %v1657
    %5841 = vmatpush.bf16.msra.mxu0 %v1653
    %5842 = vmatmul.bf16.gmra.mxu0 %v5544
    %v5843 = vpop.f32.mrf.mxu0
    %v5844 = vadd.f32 %v5831, %v5843
    %v5845 = vpop.f32.mrf.mxu0
    %5846 = vdwg.mxu0
    %5847 = vmatpush.bf16.msra.mxu0 %v1650
    %5848 = vmatpush.bf16.msra.mxu0 %v1646
    %5849 = vmatpush.bf16.msra.mxu0 %v1642
    %5850 = vmatpush.bf16.msra.mxu0 %v1638
    %5851 = vmatpush.bf16.msra.mxu0 %v1634
    %5852 = vmatpush.bf16.msra.mxu0 %v1630
    %5853 = vmatpush.bf16.msra.mxu0 %v1626
    %5854 = vmatpush.bf16.msra.mxu0 %v1622
    %5855 = vmatmul.bf16.gmra.mxu0 %v5543
    %v5856 = vpop.f32.mrf.mxu0
    %v5857 = vadd.f32 0.0, %v5856
    %v5858 = vpop.f32.mrf.mxu0
    %5859 = vdwg.mxu0
    %5860 = vmatpush.bf16.msra.mxu0 %v1682
    %5861 = vmatpush.bf16.msra.mxu0 %v1678
    %5862 = vmatpush.bf16.msra.mxu0 %v1674
    %5863 = vmatpush.bf16.msra.mxu0 %v1670
    %5864 = vmatpush.bf16.msra.mxu0 %v1666
    %5865 = vmatpush.bf16.msra.mxu0 %v1662
    %5866 = vmatpush.bf16.msra.mxu0 %v1658
    %5867 = vmatpush.bf16.msra.mxu0 %v1654
    %5868 = vmatmul.bf16.gmra.mxu0 %v5544
    %v5869 = vpop.f32.mrf.mxu0
    %v5870 = vadd.f32 %v5857, %v5869
    %v5871 = vpop.f32.mrf.mxu0
    %5872 = vdwg.mxu0
    %5873 = vmatpush.bf16.msra.mxu0 %v1651
    %5874 = vmatpush.bf16.msra.mxu0 %v1647
    %5875 = vmatpush.bf16.msra.mxu0 %v1643
    %5876 = vmatpush.bf16.msra.mxu0 %v1639
    %5877 = vmatpush.bf16.msra.mxu0 %v1635
    %5878 = vmatpush.bf16.msra.mxu0 %v1631
    %5879 = vmatpush.bf16.msra.mxu0 %v1627
    %5880 = vmatpush.bf16.msra.mxu0 %v1623
    %5881 = vmatmul.bf16.gmra.mxu0 %v5543
    %v5882 = vpop.f32.mrf.mxu0
    %v5883 = vadd.f32 0.0, %v5882
    %v5884 = vpop.f32.mrf.mxu0
    %5885 = vdwg.mxu0
    %5886 = vmatpush.bf16.msra.mxu0 %v1683
    %5887 = vmatpush.bf16.msra.mxu0 %v1679
    %5888 = vmatpush.bf16.msra.mxu0 %v1675
    %5889 = vmatpush.bf16.msra.mxu0 %v1671
    %5890 = vmatpush.bf16.msra.mxu0 %v1667
    %5891 = vmatpush.bf16.msra.mxu0 %v1663
    %5892 = vmatpush.bf16.msra.mxu0 %v1659
    %5893 = vmatpush.bf16.msra.mxu0 %v1655
    %5894 = vmatmul.bf16.gmra.mxu0 %v5544
    %v5895 = vpop.f32.mrf.mxu0
    %v5896 = vadd.f32 %v5883, %v5895
    %v5897 = vpop.f32.mrf.mxu0
    %5898 = vdwg.mxu0
    %5899 = vmatpush.bf16.msra.mxu0 %v1652
    %5900 = vmatpush.bf16.msra.mxu0 %v1648
    %5901 = vmatpush.bf16.msra.mxu0 %v1644
    %5902 = vmatpush.bf16.msra.mxu0 %v1640
    %5903 = vmatpush.bf16.msra.mxu0 %v1636
    %5904 = vmatpush.bf16.msra.mxu0 %v1632
    %5905 = vmatpush.bf16.msra.mxu0 %v1628
    %5906 = vmatpush.bf16.msra.mxu0 %v1624
    %5907 = vmatmul.bf16.gmra.mxu0 %v5543
    %v5908 = vpop.f32.mrf.mxu0
    %v5909 = vadd.f32 0.0, %v5908
    %v5910 = vpop.f32.mrf.mxu0
    %5911 = vdwg.mxu0
    %5912 = vmatpush.bf16.msra.mxu0 %v1684
    %5913 = vmatpush.bf16.msra.mxu0 %v1680
    %5914 = vmatpush.bf16.msra.mxu0 %v1676
    %5915 = vmatpush.bf16.msra.mxu0 %v1672
    %5916 = vmatpush.bf16.msra.mxu0 %v1668
    %5917 = vmatpush.bf16.msra.mxu0 %v1664
    %5918 = vmatpush.bf16.msra.mxu0 %v1660
    %5919 = vmatpush.bf16.msra.mxu0 %v1656
    %5920 = vmatmul.bf16.gmra.mxu0 %v5544
    %v5921 = vpop.f32.mrf.mxu0
    %v5922 = vadd.f32 %v5909, %v5921
    %v5923 = vpop.f32.mrf.mxu0
    %5924 = vdwg.mxu0
    %5925 = vmatpush.bf16.msra.mxu0 %v2016
    %5926 = vmatpush.bf16.msra.mxu0 %v2011
    %5927 = vmatpush.bf16.msra.mxu0 %v2006
    %5928 = vmatpush.bf16.msra.mxu0 %v2001
    %5929 = vmatpush.bf16.msra.mxu0 %v1996
    %5930 = vmatpush.bf16.msra.mxu0 %v1991
    %5931 = vmatpush.bf16.msra.mxu0 %v1986
    %5932 = vmatpush.bf16.msra.mxu0 %v1981
    %5933 = vmatmul.bf16.gmra.mxu0 %v5819
    %v5934 = vpop.f32.mrf.mxu0
    %v5935 = vadd.f32 0.0, %v5934
    %v5936 = vpop.f32.mrf.mxu0
    %5937 = vdwg.mxu0
    %5938 = vmatpush.bf16.msra.mxu0 %v2017
    %5939 = vmatpush.bf16.msra.mxu0 %v2012
    %5940 = vmatpush.bf16.msra.mxu0 %v2007
    %5941 = vmatpush.bf16.msra.mxu0 %v2002
    %5942 = vmatpush.bf16.msra.mxu0 %v1997
    %5943 = vmatpush.bf16.msra.mxu0 %v1992
    %5944 = vmatpush.bf16.msra.mxu0 %v1987
    %5945 = vmatpush.bf16.msra.mxu0 %v1982
    %5946 = vmatmul.bf16.gmra.mxu0 %v5819
    %v5947 = vpop.f32.mrf.mxu0
    %v5948 = vadd.f32 0.0, %v5947
    %v5949 = vpop.f32.mrf.mxu0
    %5950 = vdwg.mxu0
    %5951 = vmatpush.bf16.msra.mxu0 %v2018
    %5952 = vmatpush.bf16.msra.mxu0 %v2013
    %5953 = vmatpush.bf16.msra.mxu0 %v2008
    %5954 = vmatpush.bf16.msra.mxu0 %v2003
    %5955 = vmatpush.bf16.msra.mxu0 %v1998
    %5956 = vmatpush.bf16.msra.mxu0 %v1993
    %5957 = vmatpush.bf16.msra.mxu0 %v1988
    %5958 = vmatpush.bf16.msra.mxu0 %v1983
    %5959 = vmatmul.bf16.gmra.mxu0 %v5819
    %v5960 = vpop.f32.mrf.mxu0
    %v5961 = vadd.f32 0.0, %v5960
    %v5962 = vpop.f32.mrf.mxu0
    %5963 = vdwg.mxu0
    %5964 = vmatpush.bf16.msra.mxu0 %v2019
    %5965 = vmatpush.bf16.msra.mxu0 %v2014
    %5966 = vmatpush.bf16.msra.mxu0 %v2009
    %5967 = vmatpush.bf16.msra.mxu0 %v2004
    %5968 = vmatpush.bf16.msra.mxu0 %v1999
    %5969 = vmatpush.bf16.msra.mxu0 %v1994
    %5970 = vmatpush.bf16.msra.mxu0 %v1989
    %5971 = vmatpush.bf16.msra.mxu0 %v1984
    %5972 = vmatmul.bf16.gmra.mxu0 %v5819
    %v5973 = vpop.f32.mrf.mxu0
    %v5974 = vadd.f32 0.0, %v5973
    %v5975 = vpop.f32.mrf.mxu0
    %5976 = vdwg.mxu0
    %5977 = vmatpush.bf16.msra.mxu0 %v2020
    %5978 = vmatpush.bf16.msra.mxu0 %v2015
    %5979 = vmatpush.bf16.msra.mxu0 %v2010
    %5980 = vmatpush.bf16.msra.mxu0 %v2005
    %5981 = vmatpush.bf16.msra.mxu0 %v2000
    %5982 = vmatpush.bf16.msra.mxu0 %v1995
    %5983 = vmatpush.bf16.msra.mxu0 %v1990
    %5984 = vmatpush.bf16.msra.mxu0 %v1985
    %5985 = vmatmul.bf16.gmra.mxu0 %v5819
    %v5986 = vpop.f32.mrf.mxu0
    %v5987 = vadd.f32 0.0, %v5986
    %v5988 = vpop.f32.mrf.mxu0
    %5989 = vdwg.mxu0
    %v5990 = vadd.f32 %v5935, %v5844
    %v5991 = vadd.f32 %v5948, %v5870
    %v5992 = vadd.f32 %v5961, %v5896
    %v5993 = vadd.f32 %v5974, %v5922
    %v5994 = vadd.f32 %v5990, %v314
    %v5995 = vadd.f32 %v5991, %v315
    %v5996 = vadd.f32 %v5992, %v316
    %v5997 = vadd.f32 %v5993, %v396
    %v5998 = vadd.f32 %v5987, %v416
    %v5999 = vxor.u32 %v5994, 2147483648
    %v6000 = vxor.u32 %v5995, 2147483648
    %v6001 = vmul.f32 %v5999, 1.442695
    %v6002 = vpow.pop %v6001
    %v6003 = vmul.f32 %v6000, 1.442695
    %v6004 = vpow.pop %v6003
    %v6005 = vadd.f32 %v6002, 1.0
    %v6006 = vadd.f32 %v6004, 1.0
    %v6007 = vrcp.pop %v6005
    %v6008 = vmul.f32 %v6005, %v6007
    %v6009 = vsub.f32 1.0, %v6008
    %v6010 = vmul.f32 %v6007, %v6009
    %v6011 = vadd.f32 %v6007, %v6010
    %vm6012 = vweird.f32 %v6005
    %vm6013 = vweird.f32 %v6007
    %vm6014 = vmor %vm6012, %vm6013
    %v6015 = vsel %vm6014, %v6007, %v6011
    %v6016 = vand.u32 2147483647, %v6005
    %vm6017 = vcmp.eq.f32.partialorder %v6016, 8.507059e+37
    %v6018 = vand.u32 %v6005, 2147483648
    %v6019 = vor.u32 1.1754944e-38, %v6018
    %v6020 = vsel %vm6017, %v6019, %v6015
    %v6021 = vmul.f32 1.0, %v6020
    %v6022 = vrcp.pop %v6006
    %v6023 = vmul.f32 %v6006, %v6022
    %v6024 = vsub.f32 1.0, %v6023
    %v6025 = vmul.f32 %v6022, %v6024
    %v6026 = vadd.f32 %v6022, %v6025
    %vm6027 = vweird.f32 %v6006
    %vm6028 = vweird.f32 %v6022
    %vm6029 = vmor %vm6027, %vm6028
    %v6030 = vsel %vm6029, %v6022, %v6026
    %v6031 = vand.u32 2147483647, %v6006
    %vm6032 = vcmp.eq.f32.partialorder %v6031, 8.507059e+37
    %v6033 = vand.u32 %v6006, 2147483648
    %v6034 = vor.u32 1.1754944e-38, %v6033
    %v6035 = vsel %vm6032, %v6034, %v6030
    %v6036 = vmul.f32 1.0, %v6035
    %v6037 = vtanh.pop %v5996
    %v6038 = vxor.u32 %v5997, 2147483648
    %v6039 = vmul.f32 %v6038, 1.442695
    %v6040 = vpow.pop %v6039
    %v6041 = vadd.f32 %v6040, 1.0
    %v6042 = vrcp.pop %v6041
    %v6043 = vmul.f32 %v6041, %v6042
    %v6044 = vsub.f32 1.0, %v6043
    %v6045 = vmul.f32 %v6042, %v6044
    %v6046 = vadd.f32 %v6042, %v6045
    %vm6047 = vweird.f32 %v6041
    %vm6048 = vweird.f32 %v6042
    %vm6049 = vmor %vm6047, %vm6048
    %v6050 = vsel %vm6049, %v6042, %v6046
    %v6051 = vand.u32 2147483647, %v6041
    %vm6052 = vcmp.eq.f32.partialorder %v6051, 8.507059e+37
    %v6053 = vand.u32 %v6041, 2147483648
    %v6054 = vor.u32 1.1754944e-38, %v6053
    %v6055 = vsel %vm6052, %v6054, %v6050
    %v6056 = vmul.f32 1.0, %v6055
    %v6057 = vxor.u32 %v5998, 2147483648
    %v6058 = vmul.f32 %v6057, 1.442695
    %v6059 = vpow.pop %v6058
    %v6060 = vadd.f32 %v6059, 1.0
    %v6061 = vrcp.pop %v6060
    %v6062 = vmul.f32 %v6060, %v6061
    %v6063 = vsub.f32 1.0, %v6062
    %v6064 = vmul.f32 %v6061, %v6063
    %v6065 = vadd.f32 %v6061, %v6064
    %vm6066 = vweird.f32 %v6060
    %vm6067 = vweird.f32 %v6061
    %vm6068 = vmor %vm6066, %vm6067
    %v6069 = vsel %vm6068, %v6061, %v6065
    %v6070 = vand.u32 2147483647, %v6060
    %vm6071 = vcmp.eq.f32.partialorder %v6070, 8.507059e+37
    %v6072 = vand.u32 %v6060, 2147483648
    %v6073 = vor.u32 1.1754944e-38, %v6072
    %v6074 = vsel %vm6071, %v6073, %v6069
    %v6075 = vmul.f32 1.0, %v6074
    %v6076 = vmul.f32 %v6021, %v6075
    %v6077 = vmul.f32 %v6076, %v6037
    %v6078 = vmul.f32 %v6036, %v5540
    %v6079 = vadd.f32 %v6077, %v6078
    %v6080 = vtanh.pop %v6079
    %v6081 = vmul.f32 %v6056, %v6080
    %v6082 = vpack.c.bf16 %v6081, %v6081
    %v6083 = vpack.c.bf16 %v6079, %v6079
    %6084 = vmatpush.bf16.msra.mxu0 %v806
    %6085 = vmatpush.bf16.msra.mxu0 %v801
    %6086 = vmatpush.bf16.msra.mxu0 %v796
    %6087 = vmatpush.bf16.msra.mxu0 %v791
    %6088 = vmatpush.bf16.msra.mxu0 %v786
    %6089 = vmatpush.bf16.msra.mxu0 %v781
    %6090 = vmatpush.bf16.msra.mxu0 %v776
    %6091 = vmatpush.bf16.msra.mxu0 %v771
    %6092 = vmatmul.bf16.gmra.mxu0 %v6082
    %v6093 = vpop.f32.mrf.mxu0
    %v6094 = vadd.f32 0.0, %v6093
    %v6095 = vpop.f32.mrf.mxu0
    %6096 = vdwg.mxu0
    %6097 = vmatpush.bf16.msra.mxu0 %v807
    %6098 = vmatpush.bf16.msra.mxu0 %v802
    %6099 = vmatpush.bf16.msra.mxu0 %v797
    %6100 = vmatpush.bf16.msra.mxu0 %v792
    %6101 = vmatpush.bf16.msra.mxu0 %v787
    %6102 = vmatpush.bf16.msra.mxu0 %v782
    %6103 = vmatpush.bf16.msra.mxu0 %v777
    %6104 = vmatpush.bf16.msra.mxu0 %v772
    %6105 = vmatmul.bf16.gmra.mxu0 %v6082
    %v6106 = vpop.f32.mrf.mxu0
    %v6107 = vadd.f32 0.0, %v6106
    %v6108 = vpop.f32.mrf.mxu0
    %6109 = vdwg.mxu0
    %6110 = vmatpush.bf16.msra.mxu0 %v808
    %6111 = vmatpush.bf16.msra.mxu0 %v803
    %6112 = vmatpush.bf16.msra.mxu0 %v798
    %6113 = vmatpush.bf16.msra.mxu0 %v793
    %6114 = vmatpush.bf16.msra.mxu0 %v788
    %6115 = vmatpush.bf16.msra.mxu0 %v783
    %6116 = vmatpush.bf16.msra.mxu0 %v778
    %6117 = vmatpush.bf16.msra.mxu0 %v773
    %6118 = vmatmul.bf16.gmra.mxu0 %v6082
    %v6119 = vpop.f32.mrf.mxu0
    %v6120 = vadd.f32 0.0, %v6119
    %v6121 = vpop.f32.mrf.mxu0
    %6122 = vdwg.mxu0
    %6123 = vmatpush.bf16.msra.mxu0 %v809
    %6124 = vmatpush.bf16.msra.mxu0 %v804
    %6125 = vmatpush.bf16.msra.mxu0 %v799
    %6126 = vmatpush.bf16.msra.mxu0 %v794
    %6127 = vmatpush.bf16.msra.mxu0 %v789
    %6128 = vmatpush.bf16.msra.mxu0 %v784
    %6129 = vmatpush.bf16.msra.mxu0 %v779
    %6130 = vmatpush.bf16.msra.mxu0 %v774
    %6131 = vmatmul.bf16.gmra.mxu0 %v6082
    %v6132 = vpop.f32.mrf.mxu0
    %v6133 = vadd.f32 0.0, %v6132
    %v6134 = vpop.f32.mrf.mxu0
    %6135 = vdwg.mxu0
    %6136 = vmatpush.bf16.msra.mxu0 %v810
    %6137 = vmatpush.bf16.msra.mxu0 %v805
    %6138 = vmatpush.bf16.msra.mxu0 %v800
    %6139 = vmatpush.bf16.msra.mxu0 %v795
    %6140 = vmatpush.bf16.msra.mxu0 %v790
    %6141 = vmatpush.bf16.msra.mxu0 %v785
    %6142 = vmatpush.bf16.msra.mxu0 %v780
    %6143 = vmatpush.bf16.msra.mxu0 %v775
    %6144 = vmatmul.bf16.gmra.mxu0 %v6082
    %v6145 = vpop.f32.mrf.mxu0
    %v6146 = vadd.f32 0.0, %v6145
    %v6147 = vpop.f32.mrf.mxu0
    %6148 = vdwg.mxu0
    %6149 = vmatpush.bf16.msra.mxu0 %v1136
    %6150 = vmatpush.bf16.msra.mxu0 %v1132
    %6151 = vmatpush.bf16.msra.mxu0 %v1128
    %6152 = vmatpush.bf16.msra.mxu0 %v1124
    %6153 = vmatpush.bf16.msra.mxu0 %v1120
    %6154 = vmatpush.bf16.msra.mxu0 %v1116
    %6155 = vmatpush.bf16.msra.mxu0 %v1112
    %6156 = vmatpush.bf16.msra.mxu0 %v1108
    %6157 = vmatmul.bf16.gmra.mxu0 %v5819
    %v6158 = vpop.f32.mrf.mxu0
    %v6159 = vadd.f32 0.0, %v6158
    %v6160 = vpop.f32.mrf.mxu0
    %6161 = vdwg.mxu0
    %6162 = vmatpush.bf16.msra.mxu0 %v1168
    %6163 = vmatpush.bf16.msra.mxu0 %v1164
    %6164 = vmatpush.bf16.msra.mxu0 %v1160
    %6165 = vmatpush.bf16.msra.mxu0 %v1156
    %6166 = vmatpush.bf16.msra.mxu0 %v1152
    %6167 = vmatpush.bf16.msra.mxu0 %v1148
    %6168 = vmatpush.bf16.msra.mxu0 %v1144
    %6169 = vmatpush.bf16.msra.mxu0 %v1140
    %6170 = vmatmul.bf16.gmra.mxu0 %v5820
    %v6171 = vpop.f32.mrf.mxu0
    %v6172 = vadd.f32 %v6159, %v6171
    %v6173 = vpop.f32.mrf.mxu0
    %6174 = vdwg.mxu0
    %6175 = vmatpush.bf16.msra.mxu0 %v1137
    %6176 = vmatpush.bf16.msra.mxu0 %v1133
    %6177 = vmatpush.bf16.msra.mxu0 %v1129
    %6178 = vmatpush.bf16.msra.mxu0 %v1125
    %6179 = vmatpush.bf16.msra.mxu0 %v1121
    %6180 = vmatpush.bf16.msra.mxu0 %v1117
    %6181 = vmatpush.bf16.msra.mxu0 %v1113
    %6182 = vmatpush.bf16.msra.mxu0 %v1109
    %6183 = vmatmul.bf16.gmra.mxu0 %v5819
    %v6184 = vpop.f32.mrf.mxu0
    %v6185 = vadd.f32 0.0, %v6184
    %v6186 = vpop.f32.mrf.mxu0
    %6187 = vdwg.mxu0
    %6188 = vmatpush.bf16.msra.mxu0 %v1169
    %6189 = vmatpush.bf16.msra.mxu0 %v1165
    %6190 = vmatpush.bf16.msra.mxu0 %v1161
    %6191 = vmatpush.bf16.msra.mxu0 %v1157
    %6192 = vmatpush.bf16.msra.mxu0 %v1153
    %6193 = vmatpush.bf16.msra.mxu0 %v1149
    %6194 = vmatpush.bf16.msra.mxu0 %v1145
    %6195 = vmatpush.bf16.msra.mxu0 %v1141
    %6196 = vmatmul.bf16.gmra.mxu0 %v5820
    %v6197 = vpop.f32.mrf.mxu0
    %v6198 = vadd.f32 %v6185, %v6197
    %v6199 = vpop.f32.mrf.mxu0
    %6200 = vdwg.mxu0
    %6201 = vmatpush.bf16.msra.mxu0 %v1138
    %6202 = vmatpush.bf16.msra.mxu0 %v1134
    %6203 = vmatpush.bf16.msra.mxu0 %v1130
    %6204 = vmatpush.bf16.msra.mxu0 %v1126
    %6205 = vmatpush.bf16.msra.mxu0 %v1122
    %6206 = vmatpush.bf16.msra.mxu0 %v1118
    %6207 = vmatpush.bf16.msra.mxu0 %v1114
    %6208 = vmatpush.bf16.msra.mxu0 %v1110
    %6209 = vmatmul.bf16.gmra.mxu0 %v5819
    %v6210 = vpop.f32.mrf.mxu0
    %v6211 = vadd.f32 0.0, %v6210
    %v6212 = vpop.f32.mrf.mxu0
    %6213 = vdwg.mxu0
    %6214 = vmatpush.bf16.msra.mxu0 %v1170
    %6215 = vmatpush.bf16.msra.mxu0 %v1166
    %6216 = vmatpush.bf16.msra.mxu0 %v1162
    %6217 = vmatpush.bf16.msra.mxu0 %v1158
    %6218 = vmatpush.bf16.msra.mxu0 %v1154
    %6219 = vmatpush.bf16.msra.mxu0 %v1150
    %6220 = vmatpush.bf16.msra.mxu0 %v1146
    %6221 = vmatpush.bf16.msra.mxu0 %v1142
    %6222 = vmatmul.bf16.gmra.mxu0 %v5820
    %v6223 = vpop.f32.mrf.mxu0
    %v6224 = vadd.f32 %v6211, %v6223
    %v6225 = vpop.f32.mrf.mxu0
    %6226 = vdwg.mxu0
    %6227 = vmatpush.bf16.msra.mxu0 %v1139
    %6228 = vmatpush.bf16.msra.mxu0 %v1135
    %6229 = vmatpush.bf16.msra.mxu0 %v1131
    %6230 = vmatpush.bf16.msra.mxu0 %v1127
    %6231 = vmatpush.bf16.msra.mxu0 %v1123
    %6232 = vmatpush.bf16.msra.mxu0 %v1119
    %6233 = vmatpush.bf16.msra.mxu0 %v1115
    %6234 = vmatpush.bf16.msra.mxu0 %v1111
    %6235 = vmatmul.bf16.gmra.mxu0 %v5819
    %v6236 = vpop.f32.mrf.mxu0
    %v6237 = vadd.f32 0.0, %v6236
    %v6238 = vpop.f32.mrf.mxu0
    %6239 = vdwg.mxu0
    %6240 = vmatpush.bf16.msra.mxu0 %v1171
    %6241 = vmatpush.bf16.msra.mxu0 %v1167
    %6242 = vmatpush.bf16.msra.mxu0 %v1163
    %6243 = vmatpush.bf16.msra.mxu0 %v1159
    %6244 = vmatpush.bf16.msra.mxu0 %v1155
    %6245 = vmatpush.bf16.msra.mxu0 %v1151
    %6246 = vmatpush.bf16.msra.mxu0 %v1147
    %6247 = vmatpush.bf16.msra.mxu0 %v1143
    %6248 = vmatmul.bf16.gmra.mxu0 %v5820
    %v6249 = vpop.f32.mrf.mxu0
    %v6250 = vadd.f32 %v6237, %v6249
    %v6251 = vpop.f32.mrf.mxu0
    %6252 = vdwg.mxu0
    %v6253 = vadd.f32 %v6094, %v6172
    %v6254 = vadd.f32 %v6107, %v6198
    %v6255 = vadd.f32 %v6120, %v6224
    %v6256 = vadd.f32 %v6133, %v6250
    %v6258 = vrot.slane %v157, 1
    %v6259 = vrot.slane %v158, 1
    %v6260 = vrot.slane %v159, 1
    %v6261 = vrot.slane %v242, 1
    %v6266 = vadd.f32 %v6253, %v6258
    %v6267 = vadd.f32 %v6254, %v6259
    %v6268 = vadd.f32 %v6255, %v6260
    %v6269 = vadd.f32 %v6256, %v6261
    %v6271 = vrot.slane %v262, 1
    %v6273 = vadd.f32 %v6146, %v6271
    %v6274 = vxor.u32 %v6266, 2147483648
    %v6275 = vxor.u32 %v6267, 2147483648
    %v6276 = vmul.f32 %v6274, 1.442695
    %v6277 = vpow.pop %v6276
    %v6278 = vmul.f32 %v6275, 1.442695
    %v6279 = vpow.pop %v6278
    %v6280 = vadd.f32 %v6277, 1.0
    %v6281 = vadd.f32 %v6279, 1.0
    %v6282 = vrcp.pop %v6280
    %v6283 = vmul.f32 %v6280, %v6282
    %v6284 = vsub.f32 1.0, %v6283
    %v6285 = vmul.f32 %v6282, %v6284
    %v6286 = vadd.f32 %v6282, %v6285
    %vm6287 = vweird.f32 %v6280
    %vm6288 = vweird.f32 %v6282
    %vm6289 = vmor %vm6287, %vm6288
    %v6290 = vsel %vm6289, %v6282, %v6286
    %v6291 = vand.u32 2147483647, %v6280
    %vm6292 = vcmp.eq.f32.partialorder %v6291, 8.507059e+37
    %v6293 = vand.u32 %v6280, 2147483648
    %v6294 = vor.u32 1.1754944e-38, %v6293
    %v6295 = vsel %vm6292, %v6294, %v6290
    %v6296 = vmul.f32 1.0, %v6295
    %v6297 = vrcp.pop %v6281
    %v6298 = vmul.f32 %v6281, %v6297
    %v6299 = vsub.f32 1.0, %v6298
    %v6300 = vmul.f32 %v6297, %v6299
    %v6301 = vadd.f32 %v6297, %v6300
    %vm6302 = vweird.f32 %v6281
    %vm6303 = vweird.f32 %v6297
    %vm6304 = vmor %vm6302, %vm6303
    %v6305 = vsel %vm6304, %v6297, %v6301
    %v6306 = vand.u32 2147483647, %v6281
    %vm6307 = vcmp.eq.f32.partialorder %v6306, 8.507059e+37
    %v6308 = vand.u32 %v6281, 2147483648
    %v6309 = vor.u32 1.1754944e-38, %v6308
    %v6310 = vsel %vm6307, %v6309, %v6305
    %v6311 = vmul.f32 1.0, %v6310
    %v6312 = vtanh.pop %v6268
    %v6313 = vxor.u32 %v6269, 2147483648
    %v6314 = vmul.f32 %v6313, 1.442695
    %v6315 = vpow.pop %v6314
    %v6316 = vadd.f32 %v6315, 1.0
    %v6317 = vrcp.pop %v6316
    %v6318 = vmul.f32 %v6316, %v6317
    %v6319 = vsub.f32 1.0, %v6318
    %v6320 = vmul.f32 %v6317, %v6319
    %v6321 = vadd.f32 %v6317, %v6320
    %vm6322 = vweird.f32 %v6316
    %vm6323 = vweird.f32 %v6317
    %vm6324 = vmor %vm6322, %vm6323
    %v6325 = vsel %vm6324, %v6317, %v6321
    %v6326 = vand.u32 2147483647, %v6316
    %vm6327 = vcmp.eq.f32.partialorder %v6326, 8.507059e+37
    %v6328 = vand.u32 %v6316, 2147483648
    %v6329 = vor.u32 1.1754944e-38, %v6328
    %v6330 = vsel %vm6327, %v6329, %v6325
    %v6331 = vmul.f32 1.0, %v6330
    %v6332 = vxor.u32 %v6273, 2147483648
    %v6333 = vmul.f32 %v6332, 1.442695
    %v6334 = vpow.pop %v6333
    %v6335 = vadd.f32 %v6334, 1.0
    %v6336 = vrcp.pop %v6335
    %v6337 = vmul.f32 %v6335, %v6336
    %v6338 = vsub.f32 1.0, %v6337
    %v6339 = vmul.f32 %v6336, %v6338
    %v6340 = vadd.f32 %v6336, %v6339
    %vm6341 = vweird.f32 %v6335
    %vm6342 = vweird.f32 %v6336
    %vm6343 = vmor %vm6341, %vm6342
    %v6344 = vsel %vm6343, %v6336, %v6340
    %v6345 = vand.u32 2147483647, %v6335
    %vm6346 = vcmp.eq.f32.partialorder %v6345, 8.507059e+37
    %v6347 = vand.u32 %v6335, 2147483648
    %v6348 = vor.u32 1.1754944e-38, %v6347
    %v6349 = vsel %vm6346, %v6348, %v6344
    %v6350 = vmul.f32 1.0, %v6349
    %v6351 = vmul.f32 %v6296, %v6350
    %v6352 = vmul.f32 %v6351, %v6312
    %v6353 = vmul.f32 %v6311, %v5816
    %v6354 = vadd.f32 %v6352, %v6353
    %v6355 = vtanh.pop %v6354
    %v6356 = vmul.f32 %v6331, %v6355
    %v6357 = vpack.c.bf16 %v6356, %v6356
    %v6358 = vpack.c.bf16 %v6354, %v6354
    %6359 = vmatpush.bf16.msra.mxu0 %v1649
    %6360 = vmatpush.bf16.msra.mxu0 %v1645
    %6361 = vmatpush.bf16.msra.mxu0 %v1641
    %6362 = vmatpush.bf16.msra.mxu0 %v1637
    %6363 = vmatpush.bf16.msra.mxu0 %v1633
    %6364 = vmatpush.bf16.msra.mxu0 %v1629
    %6365 = vmatpush.bf16.msra.mxu0 %v1625
    %6366 = vmatpush.bf16.msra.mxu0 %v1621
    %6367 = vmatmul.bf16.gmra.mxu0 %v6082
    %v6368 = vpop.f32.mrf.mxu0
    %v6369 = vadd.f32 0.0, %v6368
    %v6370 = vpop.f32.mrf.mxu0
    %6371 = vdwg.mxu0
    %6372 = vmatpush.bf16.msra.mxu0 %v1681
    %6373 = vmatpush.bf16.msra.mxu0 %v1677
    %6374 = vmatpush.bf16.msra.mxu0 %v1673
    %6375 = vmatpush.bf16.msra.mxu0 %v1669
    %6376 = vmatpush.bf16.msra.mxu0 %v1665
    %6377 = vmatpush.bf16.msra.mxu0 %v1661
    %6378 = vmatpush.bf16.msra.mxu0 %v1657
    %6379 = vmatpush.bf16.msra.mxu0 %v1653
    %6380 = vmatmul.bf16.gmra.mxu0 %v6083
    %v6381 = vpop.f32.mrf.mxu0
    %v6382 = vadd.f32 %v6369, %v6381
    %v6383 = vpop.f32.mrf.mxu0
    %6384 = vdwg.mxu0
    %6385 = vmatpush.bf16.msra.mxu0 %v1650
    %6386 = vmatpush.bf16.msra.mxu0 %v1646
    %6387 = vmatpush.bf16.msra.mxu0 %v1642
    %6388 = vmatpush.bf16.msra.mxu0 %v1638
    %6389 = vmatpush.bf16.msra.mxu0 %v1634
    %6390 = vmatpush.bf16.msra.mxu0 %v1630
    %6391 = vmatpush.bf16.msra.mxu0 %v1626
    %6392 = vmatpush.bf16.msra.mxu0 %v1622
    %6393 = vmatmul.bf16.gmra.mxu0 %v6082
    %v6394 = vpop.f32.mrf.mxu0
    %v6395 = vadd.f32 0.0, %v6394
    %v6396 = vpop.f32.mrf.mxu0
    %6397 = vdwg.mxu0
    %6398 = vmatpush.bf16.msra.mxu0 %v1682
    %6399 = vmatpush.bf16.msra.mxu0 %v1678
    %6400 = vmatpush.bf16.msra.mxu0 %v1674
    %6401 = vmatpush.bf16.msra.mxu0 %v1670
    %6402 = vmatpush.bf16.msra.mxu0 %v1666
    %6403 = vmatpush.bf16.msra.mxu0 %v1662
    %6404 = vmatpush.bf16.msra.mxu0 %v1658
    %6405 = vmatpush.bf16.msra.mxu0 %v1654
    %6406 = vmatmul.bf16.gmra.mxu0 %v6083
    %v6407 = vpop.f32.mrf.mxu0
    %v6408 = vadd.f32 %v6395, %v6407
    %v6409 = vpop.f32.mrf.mxu0
    %6410 = vdwg.mxu0
    %6411 = vmatpush.bf16.msra.mxu0 %v1651
    %6412 = vmatpush.bf16.msra.mxu0 %v1647
    %6413 = vmatpush.bf16.msra.mxu0 %v1643
    %6414 = vmatpush.bf16.msra.mxu0 %v1639
    %6415 = vmatpush.bf16.msra.mxu0 %v1635
    %6416 = vmatpush.bf16.msra.mxu0 %v1631
    %6417 = vmatpush.bf16.msra.mxu0 %v1627
    %6418 = vmatpush.bf16.msra.mxu0 %v1623
    %6419 = vmatmul.bf16.gmra.mxu0 %v6082
    %v6420 = vpop.f32.mrf.mxu0
    %v6421 = vadd.f32 0.0, %v6420
    %v6422 = vpop.f32.mrf.mxu0
    %6423 = vdwg.mxu0
    %6424 = vmatpush.bf16.msra.mxu0 %v1683
    %6425 = vmatpush.bf16.msra.mxu0 %v1679
    %6426 = vmatpush.bf16.msra.mxu0 %v1675
    %6427 = vmatpush.bf16.msra.mxu0 %v1671
    %6428 = vmatpush.bf16.msra.mxu0 %v1667
    %6429 = vmatpush.bf16.msra.mxu0 %v1663
    %6430 = vmatpush.bf16.msra.mxu0 %v1659
    %6431 = vmatpush.bf16.msra.mxu0 %v1655
    %6432 = vmatmul.bf16.gmra.mxu0 %v6083
    %v6433 = vpop.f32.mrf.mxu0
    %v6434 = vadd.f32 %v6421, %v6433
    %v6435 = vpop.f32.mrf.mxu0
    %6436 = vdwg.mxu0
    %6437 = vmatpush.bf16.msra.mxu0 %v1652
    %6438 = vmatpush.bf16.msra.mxu0 %v1648
    %6439 = vmatpush.bf16.msra.mxu0 %v1644
    %6440 = vmatpush.bf16.msra.mxu0 %v1640
    %6441 = vmatpush.bf16.msra.mxu0 %v1636
    %6442 = vmatpush.bf16.msra.mxu0 %v1632
    %6443 = vmatpush.bf16.msra.mxu0 %v1628
    %6444 = vmatpush.bf16.msra.mxu0 %v1624
    %6445 = vmatmul.bf16.gmra.mxu0 %v6082
    %v6446 = vpop.f32.mrf.mxu0
    %v6447 = vadd.f32 0.0, %v6446
    %v6448 = vpop.f32.mrf.mxu0
    %6449 = vdwg.mxu0
    %6450 = vmatpush.bf16.msra.mxu0 %v1684
    %6451 = vmatpush.bf16.msra.mxu0 %v1680
    %6452 = vmatpush.bf16.msra.mxu0 %v1676
    %6453 = vmatpush.bf16.msra.mxu0 %v1672
    %6454 = vmatpush.bf16.msra.mxu0 %v1668
    %6455 = vmatpush.bf16.msra.mxu0 %v1664
    %6456 = vmatpush.bf16.msra.mxu0 %v1660
    %6457 = vmatpush.bf16.msra.mxu0 %v1656
    %6458 = vmatmul.bf16.gmra.mxu0 %v6083
    %v6459 = vpop.f32.mrf.mxu0
    %v6460 = vadd.f32 %v6447, %v6459
    %v6461 = vpop.f32.mrf.mxu0
    %6462 = vdwg.mxu0
    %6463 = vmatpush.bf16.msra.mxu0 %v2016
    %6464 = vmatpush.bf16.msra.mxu0 %v2011
    %6465 = vmatpush.bf16.msra.mxu0 %v2006
    %6466 = vmatpush.bf16.msra.mxu0 %v2001
    %6467 = vmatpush.bf16.msra.mxu0 %v1996
    %6468 = vmatpush.bf16.msra.mxu0 %v1991
    %6469 = vmatpush.bf16.msra.mxu0 %v1986
    %6470 = vmatpush.bf16.msra.mxu0 %v1981
    %6471 = vmatmul.bf16.gmra.mxu0 %v6357
    %v6472 = vpop.f32.mrf.mxu0
    %v6473 = vadd.f32 0.0, %v6472
    %v6474 = vpop.f32.mrf.mxu0
    %6475 = vdwg.mxu0
    %6476 = vmatpush.bf16.msra.mxu0 %v2017
    %6477 = vmatpush.bf16.msra.mxu0 %v2012
    %6478 = vmatpush.bf16.msra.mxu0 %v2007
    %6479 = vmatpush.bf16.msra.mxu0 %v2002
    %6480 = vmatpush.bf16.msra.mxu0 %v1997
    %6481 = vmatpush.bf16.msra.mxu0 %v1992
    %6482 = vmatpush.bf16.msra.mxu0 %v1987
    %6483 = vmatpush.bf16.msra.mxu0 %v1982
    %6484 = vmatmul.bf16.gmra.mxu0 %v6357
    %v6485 = vpop.f32.mrf.mxu0
    %v6486 = vadd.f32 0.0, %v6485
    %v6487 = vpop.f32.mrf.mxu0
    %6488 = vdwg.mxu0
    %6489 = vmatpush.bf16.msra.mxu0 %v2018
    %6490 = vmatpush.bf16.msra.mxu0 %v2013
    %6491 = vmatpush.bf16.msra.mxu0 %v2008
    %6492 = vmatpush.bf16.msra.mxu0 %v2003
    %6493 = vmatpush.bf16.msra.mxu0 %v1998
    %6494 = vmatpush.bf16.msra.mxu0 %v1993
    %6495 = vmatpush.bf16.msra.mxu0 %v1988
    %6496 = vmatpush.bf16.msra.mxu0 %v1983
    %6497 = vmatmul.bf16.gmra.mxu0 %v6357
    %v6498 = vpop.f32.mrf.mxu0
    %v6499 = vadd.f32 0.0, %v6498
    %v6500 = vpop.f32.mrf.mxu0
    %6501 = vdwg.mxu0
    %6502 = vmatpush.bf16.msra.mxu0 %v2019
    %6503 = vmatpush.bf16.msra.mxu0 %v2014
    %6504 = vmatpush.bf16.msra.mxu0 %v2009
    %6505 = vmatpush.bf16.msra.mxu0 %v2004
    %6506 = vmatpush.bf16.msra.mxu0 %v1999
    %6507 = vmatpush.bf16.msra.mxu0 %v1994
    %6508 = vmatpush.bf16.msra.mxu0 %v1989
    %6509 = vmatpush.bf16.msra.mxu0 %v1984
    %6510 = vmatmul.bf16.gmra.mxu0 %v6357
    %v6511 = vpop.f32.mrf.mxu0
    %v6512 = vadd.f32 0.0, %v6511
    %v6513 = vpop.f32.mrf.mxu0
    %6514 = vdwg.mxu0
    %6515 = vmatpush.bf16.msra.mxu0 %v2020
    %6516 = vmatpush.bf16.msra.mxu0 %v2015
    %6517 = vmatpush.bf16.msra.mxu0 %v2010
    %6518 = vmatpush.bf16.msra.mxu0 %v2005
    %6519 = vmatpush.bf16.msra.mxu0 %v2000
    %6520 = vmatpush.bf16.msra.mxu0 %v1995
    %6521 = vmatpush.bf16.msra.mxu0 %v1990
    %6522 = vmatpush.bf16.msra.mxu0 %v1985
    %6523 = vmatmul.bf16.gmra.mxu0 %v6357
    %v6524 = vpop.f32.mrf.mxu0
    %v6525 = vadd.f32 0.0, %v6524
    %v6526 = vpop.f32.mrf.mxu0
    %6527 = vdwg.mxu0
    %v6528 = vadd.f32 %v6473, %v6382
    %v6529 = vadd.f32 %v6486, %v6408
    %v6530 = vadd.f32 %v6499, %v6434
    %v6531 = vadd.f32 %v6512, %v6460
    %v6533 = vrot.slane %v396, 1
    %v6535 = vadd.f32 %v6528, %v2590
    %v6536 = vadd.f32 %v6529, %v2591
    %v6537 = vadd.f32 %v6530, %v2592
    %v6538 = vadd.f32 %v6531, %v6533
    %v6540 = vrot.slane %v416, 1
    %v6542 = vadd.f32 %v6525, %v6540
    %v6543 = vxor.u32 %v6535, 2147483648
    %v6544 = vxor.u32 %v6536, 2147483648
    %v6545 = vmul.f32 %v6543, 1.442695
    %v6546 = vpow.pop %v6545
    %v6547 = vmul.f32 %v6544, 1.442695
    %v6548 = vpow.pop %v6547
    %v6549 = vadd.f32 %v6546, 1.0
    %v6550 = vadd.f32 %v6548, 1.0
    %v6551 = vrcp.pop %v6549
    %v6552 = vmul.f32 %v6549, %v6551
    %v6553 = vsub.f32 1.0, %v6552
    %v6554 = vmul.f32 %v6551, %v6553
    %v6555 = vadd.f32 %v6551, %v6554
    %vm6556 = vweird.f32 %v6549
    %vm6557 = vweird.f32 %v6551
    %vm6558 = vmor %vm6556, %vm6557
    %v6559 = vsel %vm6558, %v6551, %v6555
    %v6560 = vand.u32 2147483647, %v6549
    %vm6561 = vcmp.eq.f32.partialorder %v6560, 8.507059e+37
    %v6562 = vand.u32 %v6549, 2147483648
    %v6563 = vor.u32 1.1754944e-38, %v6562
    %v6564 = vsel %vm6561, %v6563, %v6559
    %v6565 = vmul.f32 1.0, %v6564
    %v6566 = vrcp.pop %v6550
    %v6567 = vmul.f32 %v6550, %v6566
    %v6568 = vsub.f32 1.0, %v6567
    %v6569 = vmul.f32 %v6566, %v6568
    %v6570 = vadd.f32 %v6566, %v6569
    %vm6571 = vweird.f32 %v6550
    %vm6572 = vweird.f32 %v6566
    %vm6573 = vmor %vm6571, %vm6572
    %v6574 = vsel %vm6573, %v6566, %v6570
    %v6575 = vand.u32 2147483647, %v6550
    %vm6576 = vcmp.eq.f32.partialorder %v6575, 8.507059e+37
    %v6577 = vand.u32 %v6550, 2147483648
    %v6578 = vor.u32 1.1754944e-38, %v6577
    %v6579 = vsel %vm6576, %v6578, %v6574
    %v6580 = vmul.f32 1.0, %v6579
    %v6581 = vtanh.pop %v6537
    %v6582 = vxor.u32 %v6538, 2147483648
    %v6583 = vmul.f32 %v6582, 1.442695
    %v6584 = vpow.pop %v6583
    %v6585 = vadd.f32 %v6584, 1.0
    %v6586 = vrcp.pop %v6585
    %v6587 = vmul.f32 %v6585, %v6586
    %v6588 = vsub.f32 1.0, %v6587
    %v6589 = vmul.f32 %v6586, %v6588
    %v6590 = vadd.f32 %v6586, %v6589
    %vm6591 = vweird.f32 %v6585
    %vm6592 = vweird.f32 %v6586
    %vm6593 = vmor %vm6591, %vm6592
    %v6594 = vsel %vm6593, %v6586, %v6590
    %v6595 = vand.u32 2147483647, %v6585
    %vm6596 = vcmp.eq.f32.partialorder %v6595, 8.507059e+37
    %v6597 = vand.u32 %v6585, 2147483648
    %v6598 = vor.u32 1.1754944e-38, %v6597
    %v6599 = vsel %vm6596, %v6598, %v6594
    %v6600 = vmul.f32 1.0, %v6599
    %v6601 = vxor.u32 %v6542, 2147483648
    %v6602 = vmul.f32 %v6601, 1.442695
    %v6603 = vpow.pop %v6602
    %v6604 = vadd.f32 %v6603, 1.0
    %v6605 = vrcp.pop %v6604
    %v6606 = vmul.f32 %v6604, %v6605
    %v6607 = vsub.f32 1.0, %v6606
    %v6608 = vmul.f32 %v6605, %v6607
    %v6609 = vadd.f32 %v6605, %v6608
    %vm6610 = vweird.f32 %v6604
    %vm6611 = vweird.f32 %v6605
    %vm6612 = vmor %vm6610, %vm6611
    %v6613 = vsel %vm6612, %v6605, %v6609
    %v6614 = vand.u32 2147483647, %v6604
    %vm6615 = vcmp.eq.f32.partialorder %v6614, 8.507059e+37
    %v6616 = vand.u32 %v6604, 2147483648
    %v6617 = vor.u32 1.1754944e-38, %v6616
    %v6618 = vsel %vm6615, %v6617, %v6613
    %v6619 = vmul.f32 1.0, %v6618
    %v6620 = vmul.f32 %v6565, %v6619
    %v6621 = vmul.f32 %v6620, %v6581
    %v6622 = vmul.f32 %v6580, %v6079
    %v6623 = vadd.f32 %v6621, %v6622
    %v6624 = vtanh.pop %v6623
    %v6625 = vmul.f32 %v6600, %v6624
    %v6626 = vpack.c.bf16 %v6625, %v6625
    %v6627 = vpack.c.bf16 %v6623, %v6623
    %6628 = vmatpush.bf16.msra.mxu0 %v806
    %6629 = vmatpush.bf16.msra.mxu0 %v801
    %6630 = vmatpush.bf16.msra.mxu0 %v796
    %6631 = vmatpush.bf16.msra.mxu0 %v791
    %6632 = vmatpush.bf16.msra.mxu0 %v786
    %6633 = vmatpush.bf16.msra.mxu0 %v781
    %6634 = vmatpush.bf16.msra.mxu0 %v776
    %6635 = vmatpush.bf16.msra.mxu0 %v771
    %6636 = vmatmul.bf16.gmra.mxu0 %v6626
    %v6637 = vpop.f32.mrf.mxu0
    %v6638 = vadd.f32 0.0, %v6637
    %v6639 = vpop.f32.mrf.mxu0
    %6640 = vdwg.mxu0
    %6641 = vmatpush.bf16.msra.mxu0 %v807
    %6642 = vmatpush.bf16.msra.mxu0 %v802
    %6643 = vmatpush.bf16.msra.mxu0 %v797
    %6644 = vmatpush.bf16.msra.mxu0 %v792
    %6645 = vmatpush.bf16.msra.mxu0 %v787
    %6646 = vmatpush.bf16.msra.mxu0 %v782
    %6647 = vmatpush.bf16.msra.mxu0 %v777
    %6648 = vmatpush.bf16.msra.mxu0 %v772
    %6649 = vmatmul.bf16.gmra.mxu0 %v6626
    %v6650 = vpop.f32.mrf.mxu0
    %v6651 = vadd.f32 0.0, %v6650
    %v6652 = vpop.f32.mrf.mxu0
    %6653 = vdwg.mxu0
    %6654 = vmatpush.bf16.msra.mxu0 %v808
    %6655 = vmatpush.bf16.msra.mxu0 %v803
    %6656 = vmatpush.bf16.msra.mxu0 %v798
    %6657 = vmatpush.bf16.msra.mxu0 %v793
    %6658 = vmatpush.bf16.msra.mxu0 %v788
    %6659 = vmatpush.bf16.msra.mxu0 %v783
    %6660 = vmatpush.bf16.msra.mxu0 %v778
    %6661 = vmatpush.bf16.msra.mxu0 %v773
    %6662 = vmatmul.bf16.gmra.mxu0 %v6626
    %v6663 = vpop.f32.mrf.mxu0
    %v6664 = vadd.f32 0.0, %v6663
    %v6665 = vpop.f32.mrf.mxu0
    %6666 = vdwg.mxu0
    %6667 = vmatpush.bf16.msra.mxu0 %v809
    %6668 = vmatpush.bf16.msra.mxu0 %v804
    %6669 = vmatpush.bf16.msra.mxu0 %v799
    %6670 = vmatpush.bf16.msra.mxu0 %v794
    %6671 = vmatpush.bf16.msra.mxu0 %v789
    %6672 = vmatpush.bf16.msra.mxu0 %v784
    %6673 = vmatpush.bf16.msra.mxu0 %v779
    %6674 = vmatpush.bf16.msra.mxu0 %v774
    %6675 = vmatmul.bf16.gmra.mxu0 %v6626
    %v6676 = vpop.f32.mrf.mxu0
    %v6677 = vadd.f32 0.0, %v6676
    %v6678 = vpop.f32.mrf.mxu0
    %6679 = vdwg.mxu0
    %6680 = vmatpush.bf16.msra.mxu0 %v810
    %6681 = vmatpush.bf16.msra.mxu0 %v805
    %6682 = vmatpush.bf16.msra.mxu0 %v800
    %6683 = vmatpush.bf16.msra.mxu0 %v795
    %6684 = vmatpush.bf16.msra.mxu0 %v790
    %6685 = vmatpush.bf16.msra.mxu0 %v785
    %6686 = vmatpush.bf16.msra.mxu0 %v780
    %6687 = vmatpush.bf16.msra.mxu0 %v775
    %6688 = vmatmul.bf16.gmra.mxu0 %v6626
    %v6689 = vpop.f32.mrf.mxu0
    %v6690 = vadd.f32 0.0, %v6689
    %v6691 = vpop.f32.mrf.mxu0
    %6692 = vdwg.mxu0
    %6693 = vmatpush.bf16.msra.mxu0 %v1136
    %6694 = vmatpush.bf16.msra.mxu0 %v1132
    %6695 = vmatpush.bf16.msra.mxu0 %v1128
    %6696 = vmatpush.bf16.msra.mxu0 %v1124
    %6697 = vmatpush.bf16.msra.mxu0 %v1120
    %6698 = vmatpush.bf16.msra.mxu0 %v1116
    %6699 = vmatpush.bf16.msra.mxu0 %v1112
    %6700 = vmatpush.bf16.msra.mxu0 %v1108
    %6701 = vmatmul.bf16.gmra.mxu0 %v6357
    %v6702 = vpop.f32.mrf.mxu0
    %v6703 = vadd.f32 0.0, %v6702
    %v6704 = vpop.f32.mrf.mxu0
    %6705 = vdwg.mxu0
    %6706 = vmatpush.bf16.msra.mxu0 %v1168
    %6707 = vmatpush.bf16.msra.mxu0 %v1164
    %6708 = vmatpush.bf16.msra.mxu0 %v1160
    %6709 = vmatpush.bf16.msra.mxu0 %v1156
    %6710 = vmatpush.bf16.msra.mxu0 %v1152
    %6711 = vmatpush.bf16.msra.mxu0 %v1148
    %6712 = vmatpush.bf16.msra.mxu0 %v1144
    %6713 = vmatpush.bf16.msra.mxu0 %v1140
    %6714 = vmatmul.bf16.gmra.mxu0 %v6358
    %v6715 = vpop.f32.mrf.mxu0
    %v6716 = vadd.f32 %v6703, %v6715
    %v6717 = vpop.f32.mrf.mxu0
    %6718 = vdwg.mxu0
    %6719 = vmatpush.bf16.msra.mxu0 %v1137
    %6720 = vmatpush.bf16.msra.mxu0 %v1133
    %6721 = vmatpush.bf16.msra.mxu0 %v1129
    %6722 = vmatpush.bf16.msra.mxu0 %v1125
    %6723 = vmatpush.bf16.msra.mxu0 %v1121
    %6724 = vmatpush.bf16.msra.mxu0 %v1117
    %6725 = vmatpush.bf16.msra.mxu0 %v1113
    %6726 = vmatpush.bf16.msra.mxu0 %v1109
    %6727 = vmatmul.bf16.gmra.mxu0 %v6357
    %v6728 = vpop.f32.mrf.mxu0
    %v6729 = vadd.f32 0.0, %v6728
    %v6730 = vpop.f32.mrf.mxu0
    %6731 = vdwg.mxu0
    %6732 = vmatpush.bf16.msra.mxu0 %v1169
    %6733 = vmatpush.bf16.msra.mxu0 %v1165
    %6734 = vmatpush.bf16.msra.mxu0 %v1161
    %6735 = vmatpush.bf16.msra.mxu0 %v1157
    %6736 = vmatpush.bf16.msra.mxu0 %v1153
    %6737 = vmatpush.bf16.msra.mxu0 %v1149
    %6738 = vmatpush.bf16.msra.mxu0 %v1145
    %6739 = vmatpush.bf16.msra.mxu0 %v1141
    %6740 = vmatmul.bf16.gmra.mxu0 %v6358
    %v6741 = vpop.f32.mrf.mxu0
    %v6742 = vadd.f32 %v6729, %v6741
    %v6743 = vpop.f32.mrf.mxu0
    %6744 = vdwg.mxu0
    %6745 = vmatpush.bf16.msra.mxu0 %v1138
    %6746 = vmatpush.bf16.msra.mxu0 %v1134
    %6747 = vmatpush.bf16.msra.mxu0 %v1130
    %6748 = vmatpush.bf16.msra.mxu0 %v1126
    %6749 = vmatpush.bf16.msra.mxu0 %v1122
    %6750 = vmatpush.bf16.msra.mxu0 %v1118
    %6751 = vmatpush.bf16.msra.mxu0 %v1114
    %6752 = vmatpush.bf16.msra.mxu0 %v1110
    %6753 = vmatmul.bf16.gmra.mxu0 %v6357
    %v6754 = vpop.f32.mrf.mxu0
    %v6755 = vadd.f32 0.0, %v6754
    %v6756 = vpop.f32.mrf.mxu0
    %6757 = vdwg.mxu0
    %6758 = vmatpush.bf16.msra.mxu0 %v1170
    %6759 = vmatpush.bf16.msra.mxu0 %v1166
    %6760 = vmatpush.bf16.msra.mxu0 %v1162
    %6761 = vmatpush.bf16.msra.mxu0 %v1158
    %6762 = vmatpush.bf16.msra.mxu0 %v1154
    %6763 = vmatpush.bf16.msra.mxu0 %v1150
    %6764 = vmatpush.bf16.msra.mxu0 %v1146
    %6765 = vmatpush.bf16.msra.mxu0 %v1142
    %6766 = vmatmul.bf16.gmra.mxu0 %v6358
    %v6767 = vpop.f32.mrf.mxu0
    %v6768 = vadd.f32 %v6755, %v6767
    %v6769 = vpop.f32.mrf.mxu0
    %6770 = vdwg.mxu0
    %6771 = vmatpush.bf16.msra.mxu0 %v1139
    %6772 = vmatpush.bf16.msra.mxu0 %v1135
    %6773 = vmatpush.bf16.msra.mxu0 %v1131
    %6774 = vmatpush.bf16.msra.mxu0 %v1127
    %6775 = vmatpush.bf16.msra.mxu0 %v1123
    %6776 = vmatpush.bf16.msra.mxu0 %v1119
    %6777 = vmatpush.bf16.msra.mxu0 %v1115
    %6778 = vmatpush.bf16.msra.mxu0 %v1111
    %6779 = vmatmul.bf16.gmra.mxu0 %v6357
    %v6780 = vpop.f32.mrf.mxu0
    %v6781 = vadd.f32 0.0, %v6780
    %v6782 = vpop.f32.mrf.mxu0
    %6783 = vdwg.mxu0
    %6784 = vmatpush.bf16.msra.mxu0 %v1171
    %6785 = vmatpush.bf16.msra.mxu0 %v1167
    %6786 = vmatpush.bf16.msra.mxu0 %v1163
    %6787 = vmatpush.bf16.msra.mxu0 %v1159
    %6788 = vmatpush.bf16.msra.mxu0 %v1155
    %6789 = vmatpush.bf16.msra.mxu0 %v1151
    %6790 = vmatpush.bf16.msra.mxu0 %v1147
    %6791 = vmatpush.bf16.msra.mxu0 %v1143
    %6792 = vmatmul.bf16.gmra.mxu0 %v6358
    %v6793 = vpop.f32.mrf.mxu0
    %v6794 = vadd.f32 %v6781, %v6793
    %v6795 = vpop.f32.mrf.mxu0
    %6796 = vdwg.mxu0
    %v6797 = vadd.f32 %v6638, %v6716
    %v6798 = vadd.f32 %v6651, %v6742
    %v6799 = vadd.f32 %v6664, %v6768
    %v6800 = vadd.f32 %v6677, %v6794
    %v6801 = vrot.slane %v157, 2
    %v6802 = vrot.slane %v158, 2
    %v6803 = vrot.slane %v159, 2
    %v6804 = vrot.slane %v242, 2
    %v6809 = vadd.f32 %v6797, %v6801
    %v6810 = vadd.f32 %v6798, %v6802
    %v6811 = vadd.f32 %v6799, %v6803
    %v6812 = vadd.f32 %v6800, %v6804
    %v6813 = vrot.slane %v262, 2
    %v6815 = vadd.f32 %v6690, %v6813
    %v6816 = vxor.u32 %v6809, 2147483648
    %v6817 = vxor.u32 %v6810, 2147483648
    %v6818 = vmul.f32 %v6816, 1.442695
    %v6819 = vpow.pop %v6818
    %v6820 = vmul.f32 %v6817, 1.442695
    %v6821 = vpow.pop %v6820
    %v6822 = vadd.f32 %v6819, 1.0
    %v6823 = vadd.f32 %v6821, 1.0
    %v6824 = vrcp.pop %v6822
    %v6825 = vmul.f32 %v6822, %v6824
    %v6826 = vsub.f32 1.0, %v6825
    %v6827 = vmul.f32 %v6824, %v6826
    %v6828 = vadd.f32 %v6824, %v6827
    %vm6829 = vweird.f32 %v6822
    %vm6830 = vweird.f32 %v6824
    %vm6831 = vmor %vm6829, %vm6830
    %v6832 = vsel %vm6831, %v6824, %v6828
    %v6833 = vand.u32 2147483647, %v6822
    %vm6834 = vcmp.eq.f32.partialorder %v6833, 8.507059e+37
    %v6835 = vand.u32 %v6822, 2147483648
    %v6836 = vor.u32 1.1754944e-38, %v6835
    %v6837 = vsel %vm6834, %v6836, %v6832
    %v6838 = vmul.f32 1.0, %v6837
    %v6839 = vrcp.pop %v6823
    %v6840 = vmul.f32 %v6823, %v6839
    %v6841 = vsub.f32 1.0, %v6840
    %v6842 = vmul.f32 %v6839, %v6841
    %v6843 = vadd.f32 %v6839, %v6842
    %vm6844 = vweird.f32 %v6823
    %vm6845 = vweird.f32 %v6839
    %vm6846 = vmor %vm6844, %vm6845
    %v6847 = vsel %vm6846, %v6839, %v6843
    %v6848 = vand.u32 2147483647, %v6823
    %vm6849 = vcmp.eq.f32.partialorder %v6848, 8.507059e+37
    %v6850 = vand.u32 %v6823, 2147483648
    %v6851 = vor.u32 1.1754944e-38, %v6850
    %v6852 = vsel %vm6849, %v6851, %v6847
    %v6853 = vmul.f32 1.0, %v6852
    %v6854 = vtanh.pop %v6811
    %v6855 = vxor.u32 %v6812, 2147483648
    %v6856 = vmul.f32 %v6855, 1.442695
    %v6857 = vpow.pop %v6856
    %v6858 = vadd.f32 %v6857, 1.0
    %v6859 = vrcp.pop %v6858
    %v6860 = vmul.f32 %v6858, %v6859
    %v6861 = vsub.f32 1.0, %v6860
    %v6862 = vmul.f32 %v6859, %v6861
    %v6863 = vadd.f32 %v6859, %v6862
    %vm6864 = vweird.f32 %v6858
    %vm6865 = vweird.f32 %v6859
    %vm6866 = vmor %vm6864, %vm6865
    %v6867 = vsel %vm6866, %v6859, %v6863
    %v6868 = vand.u32 2147483647, %v6858
    %vm6869 = vcmp.eq.f32.partialorder %v6868, 8.507059e+37
    %v6870 = vand.u32 %v6858, 2147483648
    %v6871 = vor.u32 1.1754944e-38, %v6870
    %v6872 = vsel %vm6869, %v6871, %v6867
    %v6873 = vmul.f32 1.0, %v6872
    %v6874 = vxor.u32 %v6815, 2147483648
    %v6875 = vmul.f32 %v6874, 1.442695
    %v6876 = vpow.pop %v6875
    %v6877 = vadd.f32 %v6876, 1.0
    %v6878 = vrcp.pop %v6877
    %v6879 = vmul.f32 %v6877, %v6878
    %v6880 = vsub.f32 1.0, %v6879
    %v6881 = vmul.f32 %v6878, %v6880
    %v6882 = vadd.f32 %v6878, %v6881
    %vm6883 = vweird.f32 %v6877
    %vm6884 = vweird.f32 %v6878
    %vm6885 = vmor %vm6883, %vm6884
    %v6886 = vsel %vm6885, %v6878, %v6882
    %v6887 = vand.u32 2147483647, %v6877
    %vm6888 = vcmp.eq.f32.partialorder %v6887, 8.507059e+37
    %v6889 = vand.u32 %v6877, 2147483648
    %v6890 = vor.u32 1.1754944e-38, %v6889
    %v6891 = vsel %vm6888, %v6890, %v6886
    %v6892 = vmul.f32 1.0, %v6891
    %v6893 = vmul.f32 %v6838, %v6892
    %v6894 = vmul.f32 %v6893, %v6854
    %v6895 = vmul.f32 %v6853, %v6354
    %v6896 = vadd.f32 %v6894, %v6895
    %v6897 = vtanh.pop %v6896
    %v6898 = vmul.f32 %v6873, %v6897
    %v6899 = vpack.c.bf16 %v6898, %v6898
    %v6900 = vpack.c.bf16 %v6896, %v6896
    %6901 = vmatpush.bf16.msra.mxu0 %v1649
    %6902 = vmatpush.bf16.msra.mxu0 %v1645
    %6903 = vmatpush.bf16.msra.mxu0 %v1641
    %6904 = vmatpush.bf16.msra.mxu0 %v1637
    %6905 = vmatpush.bf16.msra.mxu0 %v1633
    %6906 = vmatpush.bf16.msra.mxu0 %v1629
    %6907 = vmatpush.bf16.msra.mxu0 %v1625
    %6908 = vmatpush.bf16.msra.mxu0 %v1621
    %6909 = vmatmul.bf16.gmra.mxu0 %v6626
    %v6910 = vpop.f32.mrf.mxu0
    %v6911 = vadd.f32 0.0, %v6910
    %v6912 = vpop.f32.mrf.mxu0
    %6913 = vdwg.mxu0
    %6914 = vmatpush.bf16.msra.mxu0 %v1681
    %6915 = vmatpush.bf16.msra.mxu0 %v1677
    %6916 = vmatpush.bf16.msra.mxu0 %v1673
    %6917 = vmatpush.bf16.msra.mxu0 %v1669
    %6918 = vmatpush.bf16.msra.mxu0 %v1665
    %6919 = vmatpush.bf16.msra.mxu0 %v1661
    %6920 = vmatpush.bf16.msra.mxu0 %v1657
    %6921 = vmatpush.bf16.msra.mxu0 %v1653
    %6922 = vmatmul.bf16.gmra.mxu0 %v6627
    %v6923 = vpop.f32.mrf.mxu0
    %v6924 = vadd.f32 %v6911, %v6923
    %v6925 = vpop.f32.mrf.mxu0
    %6926 = vdwg.mxu0
    %6927 = vmatpush.bf16.msra.mxu0 %v1650
    %6928 = vmatpush.bf16.msra.mxu0 %v1646
    %6929 = vmatpush.bf16.msra.mxu0 %v1642
    %6930 = vmatpush.bf16.msra.mxu0 %v1638
    %6931 = vmatpush.bf16.msra.mxu0 %v1634
    %6932 = vmatpush.bf16.msra.mxu0 %v1630
    %6933 = vmatpush.bf16.msra.mxu0 %v1626
    %6934 = vmatpush.bf16.msra.mxu0 %v1622
    %6935 = vmatmul.bf16.gmra.mxu0 %v6626
    %v6936 = vpop.f32.mrf.mxu0
    %v6937 = vadd.f32 0.0, %v6936
    %v6938 = vpop.f32.mrf.mxu0
    %6939 = vdwg.mxu0
    %6940 = vmatpush.bf16.msra.mxu0 %v1682
    %6941 = vmatpush.bf16.msra.mxu0 %v1678
    %6942 = vmatpush.bf16.msra.mxu0 %v1674
    %6943 = vmatpush.bf16.msra.mxu0 %v1670
    %6944 = vmatpush.bf16.msra.mxu0 %v1666
    %6945 = vmatpush.bf16.msra.mxu0 %v1662
    %6946 = vmatpush.bf16.msra.mxu0 %v1658
    %6947 = vmatpush.bf16.msra.mxu0 %v1654
    %6948 = vmatmul.bf16.gmra.mxu0 %v6627
    %v6949 = vpop.f32.mrf.mxu0
    %v6950 = vadd.f32 %v6937, %v6949
    %v6951 = vpop.f32.mrf.mxu0
    %6952 = vdwg.mxu0
    %6953 = vmatpush.bf16.msra.mxu0 %v1651
    %6954 = vmatpush.bf16.msra.mxu0 %v1647
    %6955 = vmatpush.bf16.msra.mxu0 %v1643
    %6956 = vmatpush.bf16.msra.mxu0 %v1639
    %6957 = vmatpush.bf16.msra.mxu0 %v1635
    %6958 = vmatpush.bf16.msra.mxu0 %v1631
    %6959 = vmatpush.bf16.msra.mxu0 %v1627
    %6960 = vmatpush.bf16.msra.mxu0 %v1623
    %6961 = vmatmul.bf16.gmra.mxu0 %v6626
    %v6962 = vpop.f32.mrf.mxu0
    %v6963 = vadd.f32 0.0, %v6962
    %v6964 = vpop.f32.mrf.mxu0
    %6965 = vdwg.mxu0
    %6966 = vmatpush.bf16.msra.mxu0 %v1683
    %6967 = vmatpush.bf16.msra.mxu0 %v1679
    %6968 = vmatpush.bf16.msra.mxu0 %v1675
    %6969 = vmatpush.bf16.msra.mxu0 %v1671
    %6970 = vmatpush.bf16.msra.mxu0 %v1667
    %6971 = vmatpush.bf16.msra.mxu0 %v1663
    %6972 = vmatpush.bf16.msra.mxu0 %v1659
    %6973 = vmatpush.bf16.msra.mxu0 %v1655
    %6974 = vmatmul.bf16.gmra.mxu0 %v6627
    %v6975 = vpop.f32.mrf.mxu0
    %v6976 = vadd.f32 %v6963, %v6975
    %v6977 = vpop.f32.mrf.mxu0
    %6978 = vdwg.mxu0
    %6979 = vmatpush.bf16.msra.mxu0 %v1652
    %6980 = vmatpush.bf16.msra.mxu0 %v1648
    %6981 = vmatpush.bf16.msra.mxu0 %v1644
    %6982 = vmatpush.bf16.msra.mxu0 %v1640
    %6983 = vmatpush.bf16.msra.mxu0 %v1636
    %6984 = vmatpush.bf16.msra.mxu0 %v1632
    %6985 = vmatpush.bf16.msra.mxu0 %v1628
    %6986 = vmatpush.bf16.msra.mxu0 %v1624
    %6987 = vmatmul.bf16.gmra.mxu0 %v6626
    %v6988 = vpop.f32.mrf.mxu0
    %v6989 = vadd.f32 0.0, %v6988
    %v6990 = vpop.f32.mrf.mxu0
    %6991 = vdwg.mxu0
    %6992 = vmatpush.bf16.msra.mxu0 %v1684
    %6993 = vmatpush.bf16.msra.mxu0 %v1680
    %6994 = vmatpush.bf16.msra.mxu0 %v1676
    %6995 = vmatpush.bf16.msra.mxu0 %v1672
    %6996 = vmatpush.bf16.msra.mxu0 %v1668
    %6997 = vmatpush.bf16.msra.mxu0 %v1664
    %6998 = vmatpush.bf16.msra.mxu0 %v1660
    %6999 = vmatpush.bf16.msra.mxu0 %v1656
    %7000 = vmatmul.bf16.gmra.mxu0 %v6627
    %v7001 = vpop.f32.mrf.mxu0
    %v7002 = vadd.f32 %v6989, %v7001
    %v7003 = vpop.f32.mrf.mxu0
    %7004 = vdwg.mxu0
    %7005 = vmatpush.bf16.msra.mxu0 %v2016
    %7006 = vmatpush.bf16.msra.mxu0 %v2011
    %7007 = vmatpush.bf16.msra.mxu0 %v2006
    %7008 = vmatpush.bf16.msra.mxu0 %v2001
    %7009 = vmatpush.bf16.msra.mxu0 %v1996
    %7010 = vmatpush.bf16.msra.mxu0 %v1991
    %7011 = vmatpush.bf16.msra.mxu0 %v1986
    %7012 = vmatpush.bf16.msra.mxu0 %v1981
    %7013 = vmatmul.bf16.gmra.mxu0 %v6899
    %v7014 = vpop.f32.mrf.mxu0
    %v7015 = vadd.f32 0.0, %v7014
    %v7016 = vpop.f32.mrf.mxu0
    %7017 = vdwg.mxu0
    %7018 = vmatpush.bf16.msra.mxu0 %v2017
    %7019 = vmatpush.bf16.msra.mxu0 %v2012
    %7020 = vmatpush.bf16.msra.mxu0 %v2007
    %7021 = vmatpush.bf16.msra.mxu0 %v2002
    %7022 = vmatpush.bf16.msra.mxu0 %v1997
    %7023 = vmatpush.bf16.msra.mxu0 %v1992
    %7024 = vmatpush.bf16.msra.mxu0 %v1987
    %7025 = vmatpush.bf16.msra.mxu0 %v1982
    %7026 = vmatmul.bf16.gmra.mxu0 %v6899
    %v7027 = vpop.f32.mrf.mxu0
    %v7028 = vadd.f32 0.0, %v7027
    %v7029 = vpop.f32.mrf.mxu0
    %7030 = vdwg.mxu0
    %7031 = vmatpush.bf16.msra.mxu0 %v2018
    %7032 = vmatpush.bf16.msra.mxu0 %v2013
    %7033 = vmatpush.bf16.msra.mxu0 %v2008
    %7034 = vmatpush.bf16.msra.mxu0 %v2003
    %7035 = vmatpush.bf16.msra.mxu0 %v1998
    %7036 = vmatpush.bf16.msra.mxu0 %v1993
    %7037 = vmatpush.bf16.msra.mxu0 %v1988
    %7038 = vmatpush.bf16.msra.mxu0 %v1983
    %7039 = vmatmul.bf16.gmra.mxu0 %v6899
    %v7040 = vpop.f32.mrf.mxu0
    %v7041 = vadd.f32 0.0, %v7040
    %v7042 = vpop.f32.mrf.mxu0
    %7043 = vdwg.mxu0
    %7044 = vmatpush.bf16.msra.mxu0 %v2019
    %7045 = vmatpush.bf16.msra.mxu0 %v2014
    %7046 = vmatpush.bf16.msra.mxu0 %v2009
    %7047 = vmatpush.bf16.msra.mxu0 %v2004
    %7048 = vmatpush.bf16.msra.mxu0 %v1999
    %7049 = vmatpush.bf16.msra.mxu0 %v1994
    %7050 = vmatpush.bf16.msra.mxu0 %v1989
    %7051 = vmatpush.bf16.msra.mxu0 %v1984
    %7052 = vmatmul.bf16.gmra.mxu0 %v6899
    %v7053 = vpop.f32.mrf.mxu0
    %v7054 = vadd.f32 0.0, %v7053
    %v7055 = vpop.f32.mrf.mxu0
    %7056 = vdwg.mxu0
    %7057 = vmatpush.bf16.msra.mxu0 %v2020
    %7058 = vmatpush.bf16.msra.mxu0 %v2015
    %7059 = vmatpush.bf16.msra.mxu0 %v2010
    %7060 = vmatpush.bf16.msra.mxu0 %v2005
    %7061 = vmatpush.bf16.msra.mxu0 %v2000
    %7062 = vmatpush.bf16.msra.mxu0 %v1995
    %7063 = vmatpush.bf16.msra.mxu0 %v1990
    %7064 = vmatpush.bf16.msra.mxu0 %v1985
    %7065 = vmatmul.bf16.gmra.mxu0 %v6899
    %v7066 = vpop.f32.mrf.mxu0
    %v7067 = vadd.f32 0.0, %v7066
    %v7068 = vpop.f32.mrf.mxu0
    %7069 = vdwg.mxu0
    %v7070 = vadd.f32 %v7015, %v6924
    %v7071 = vadd.f32 %v7028, %v6950
    %v7072 = vadd.f32 %v7041, %v6976
    %v7073 = vadd.f32 %v7054, %v7002
    %v7074 = vrot.slane %v396, 2
    %v7076 = vadd.f32 %v7070, %v3066
    %v7077 = vadd.f32 %v7071, %v3067
    %v7078 = vadd.f32 %v7072, %v3068
    %v7079 = vadd.f32 %v7073, %v7074
    %v7080 = vrot.slane %v416, 2
    %v7082 = vadd.f32 %v7067, %v7080
    %v7083 = vxor.u32 %v7076, 2147483648
    %v7084 = vxor.u32 %v7077, 2147483648
    %v7085 = vmul.f32 %v7083, 1.442695
    %v7086 = vpow.pop %v7085
    %v7087 = vmul.f32 %v7084, 1.442695
    %v7088 = vpow.pop %v7087
    %v7089 = vadd.f32 %v7086, 1.0
    %v7090 = vadd.f32 %v7088, 1.0
    %v7091 = vrcp.pop %v7089
    %v7092 = vmul.f32 %v7089, %v7091
    %v7093 = vsub.f32 1.0, %v7092
    %v7094 = vmul.f32 %v7091, %v7093
    %v7095 = vadd.f32 %v7091, %v7094
    %vm7096 = vweird.f32 %v7089
    %vm7097 = vweird.f32 %v7091
    %vm7098 = vmor %vm7096, %vm7097
    %v7099 = vsel %vm7098, %v7091, %v7095
    %v7100 = vand.u32 2147483647, %v7089
    %vm7101 = vcmp.eq.f32.partialorder %v7100, 8.507059e+37
    %v7102 = vand.u32 %v7089, 2147483648
    %v7103 = vor.u32 1.1754944e-38, %v7102
    %v7104 = vsel %vm7101, %v7103, %v7099
    %v7105 = vmul.f32 1.0, %v7104
    %v7106 = vrcp.pop %v7090
    %v7107 = vmul.f32 %v7090, %v7106
    %v7108 = vsub.f32 1.0, %v7107
    %v7109 = vmul.f32 %v7106, %v7108
    %v7110 = vadd.f32 %v7106, %v7109
    %vm7111 = vweird.f32 %v7090
    %vm7112 = vweird.f32 %v7106
    %vm7113 = vmor %vm7111, %vm7112
    %v7114 = vsel %vm7113, %v7106, %v7110
    %v7115 = vand.u32 2147483647, %v7090
    %vm7116 = vcmp.eq.f32.partialorder %v7115, 8.507059e+37
    %v7117 = vand.u32 %v7090, 2147483648
    %v7118 = vor.u32 1.1754944e-38, %v7117
    %v7119 = vsel %vm7116, %v7118, %v7114
    %v7120 = vmul.f32 1.0, %v7119
    %v7121 = vtanh.pop %v7078
    %v7122 = vxor.u32 %v7079, 2147483648
    %v7123 = vmul.f32 %v7122, 1.442695
    %v7124 = vpow.pop %v7123
    %v7125 = vadd.f32 %v7124, 1.0
    %v7126 = vrcp.pop %v7125
    %v7127 = vmul.f32 %v7125, %v7126
    %v7128 = vsub.f32 1.0, %v7127
    %v7129 = vmul.f32 %v7126, %v7128
    %v7130 = vadd.f32 %v7126, %v7129
    %vm7131 = vweird.f32 %v7125
    %vm7132 = vweird.f32 %v7126
    %vm7133 = vmor %vm7131, %vm7132
    %v7134 = vsel %vm7133, %v7126, %v7130
    %v7135 = vand.u32 2147483647, %v7125
    %vm7136 = vcmp.eq.f32.partialorder %v7135, 8.507059e+37
    %v7137 = vand.u32 %v7125, 2147483648
    %v7138 = vor.u32 1.1754944e-38, %v7137
    %v7139 = vsel %vm7136, %v7138, %v7134
    %v7140 = vmul.f32 1.0, %v7139
    %v7141 = vxor.u32 %v7082, 2147483648
    %v7142 = vmul.f32 %v7141, 1.442695
    %v7143 = vpow.pop %v7142
    %v7144 = vadd.f32 %v7143, 1.0
    %v7145 = vrcp.pop %v7144
    %v7146 = vmul.f32 %v7144, %v7145
    %v7147 = vsub.f32 1.0, %v7146
    %v7148 = vmul.f32 %v7145, %v7147
    %v7149 = vadd.f32 %v7145, %v7148
    %vm7150 = vweird.f32 %v7144
    %vm7151 = vweird.f32 %v7145
    %vm7152 = vmor %vm7150, %vm7151
    %v7153 = vsel %vm7152, %v7145, %v7149
    %v7154 = vand.u32 2147483647, %v7144
    %vm7155 = vcmp.eq.f32.partialorder %v7154, 8.507059e+37
    %v7156 = vand.u32 %v7144, 2147483648
    %v7157 = vor.u32 1.1754944e-38, %v7156
    %v7158 = vsel %vm7155, %v7157, %v7153
    %v7159 = vmul.f32 1.0, %v7158
    %v7160 = vmul.f32 %v7105, %v7159
    %v7161 = vmul.f32 %v7160, %v7121
    %v7162 = vmul.f32 %v7120, %v6623
    %v7163 = vadd.f32 %v7161, %v7162
    %v7164 = vtanh.pop %v7163
    %v7165 = vmul.f32 %v7140, %v7164
    %v7166 = vpack.c.bf16 %v7165, %v7165
    %v7167 = vpack.c.bf16 %v7163, %v7163
    %7168 = vmatpush.bf16.msra.mxu0 %v806
    %7169 = vmatpush.bf16.msra.mxu0 %v801
    %7170 = vmatpush.bf16.msra.mxu0 %v796
    %7171 = vmatpush.bf16.msra.mxu0 %v791
    %7172 = vmatpush.bf16.msra.mxu0 %v786
    %7173 = vmatpush.bf16.msra.mxu0 %v781
    %7174 = vmatpush.bf16.msra.mxu0 %v776
    %7175 = vmatpush.bf16.msra.mxu0 %v771
    %7176 = vmatmul.bf16.gmra.mxu0 %v7166
    %v7177 = vpop.f32.mrf.mxu0
    %v7178 = vadd.f32 0.0, %v7177
    %v7179 = vpop.f32.mrf.mxu0
    %7180 = vdwg.mxu0
    %7181 = vmatpush.bf16.msra.mxu0 %v807
    %7182 = vmatpush.bf16.msra.mxu0 %v802
    %7183 = vmatpush.bf16.msra.mxu0 %v797
    %7184 = vmatpush.bf16.msra.mxu0 %v792
    %7185 = vmatpush.bf16.msra.mxu0 %v787
    %7186 = vmatpush.bf16.msra.mxu0 %v782
    %7187 = vmatpush.bf16.msra.mxu0 %v777
    %7188 = vmatpush.bf16.msra.mxu0 %v772
    %7189 = vmatmul.bf16.gmra.mxu0 %v7166
    %v7190 = vpop.f32.mrf.mxu0
    %v7191 = vadd.f32 0.0, %v7190
    %v7192 = vpop.f32.mrf.mxu0
    %7193 = vdwg.mxu0
    %7194 = vmatpush.bf16.msra.mxu0 %v808
    %7195 = vmatpush.bf16.msra.mxu0 %v803
    %7196 = vmatpush.bf16.msra.mxu0 %v798
    %7197 = vmatpush.bf16.msra.mxu0 %v793
    %7198 = vmatpush.bf16.msra.mxu0 %v788
    %7199 = vmatpush.bf16.msra.mxu0 %v783
    %7200 = vmatpush.bf16.msra.mxu0 %v778
    %7201 = vmatpush.bf16.msra.mxu0 %v773
    %7202 = vmatmul.bf16.gmra.mxu0 %v7166
    %v7203 = vpop.f32.mrf.mxu0
    %v7204 = vadd.f32 0.0, %v7203
    %v7205 = vpop.f32.mrf.mxu0
    %7206 = vdwg.mxu0
    %7207 = vmatpush.bf16.msra.mxu0 %v809
    %7208 = vmatpush.bf16.msra.mxu0 %v804
    %7209 = vmatpush.bf16.msra.mxu0 %v799
    %7210 = vmatpush.bf16.msra.mxu0 %v794
    %7211 = vmatpush.bf16.msra.mxu0 %v789
    %7212 = vmatpush.bf16.msra.mxu0 %v784
    %7213 = vmatpush.bf16.msra.mxu0 %v779
    %7214 = vmatpush.bf16.msra.mxu0 %v774
    %7215 = vmatmul.bf16.gmra.mxu0 %v7166
    %v7216 = vpop.f32.mrf.mxu0
    %v7217 = vadd.f32 0.0, %v7216
    %v7218 = vpop.f32.mrf.mxu0
    %7219 = vdwg.mxu0
    %7220 = vmatpush.bf16.msra.mxu0 %v810
    %7221 = vmatpush.bf16.msra.mxu0 %v805
    %7222 = vmatpush.bf16.msra.mxu0 %v800
    %7223 = vmatpush.bf16.msra.mxu0 %v795
    %7224 = vmatpush.bf16.msra.mxu0 %v790
    %7225 = vmatpush.bf16.msra.mxu0 %v785
    %7226 = vmatpush.bf16.msra.mxu0 %v780
    %7227 = vmatpush.bf16.msra.mxu0 %v775
    %7228 = vmatmul.bf16.gmra.mxu0 %v7166
    %v7229 = vpop.f32.mrf.mxu0
    %v7230 = vadd.f32 0.0, %v7229
    %v7231 = vpop.f32.mrf.mxu0
    %7232 = vdwg.mxu0
    %7233 = vmatpush.bf16.msra.mxu0 %v1136
    %7234 = vmatpush.bf16.msra.mxu0 %v1132
    %7235 = vmatpush.bf16.msra.mxu0 %v1128
    %7236 = vmatpush.bf16.msra.mxu0 %v1124
    %7237 = vmatpush.bf16.msra.mxu0 %v1120
    %7238 = vmatpush.bf16.msra.mxu0 %v1116
    %7239 = vmatpush.bf16.msra.mxu0 %v1112
    %7240 = vmatpush.bf16.msra.mxu0 %v1108
    %7241 = vmatmul.bf16.gmra.mxu0 %v6899
    %v7242 = vpop.f32.mrf.mxu0
    %v7243 = vadd.f32 0.0, %v7242
    %v7244 = vpop.f32.mrf.mxu0
    %7245 = vdwg.mxu0
    %7246 = vmatpush.bf16.msra.mxu0 %v1168
    %7247 = vmatpush.bf16.msra.mxu0 %v1164
    %7248 = vmatpush.bf16.msra.mxu0 %v1160
    %7249 = vmatpush.bf16.msra.mxu0 %v1156
    %7250 = vmatpush.bf16.msra.mxu0 %v1152
    %7251 = vmatpush.bf16.msra.mxu0 %v1148
    %7252 = vmatpush.bf16.msra.mxu0 %v1144
    %7253 = vmatpush.bf16.msra.mxu0 %v1140
    %7254 = vmatmul.bf16.gmra.mxu0 %v6900
    %v7255 = vpop.f32.mrf.mxu0
    %v7256 = vadd.f32 %v7243, %v7255
    %v7257 = vpop.f32.mrf.mxu0
    %7258 = vdwg.mxu0
    %7259 = vmatpush.bf16.msra.mxu0 %v1137
    %7260 = vmatpush.bf16.msra.mxu0 %v1133
    %7261 = vmatpush.bf16.msra.mxu0 %v1129
    %7262 = vmatpush.bf16.msra.mxu0 %v1125
    %7263 = vmatpush.bf16.msra.mxu0 %v1121
    %7264 = vmatpush.bf16.msra.mxu0 %v1117
    %7265 = vmatpush.bf16.msra.mxu0 %v1113
    %7266 = vmatpush.bf16.msra.mxu0 %v1109
    %7267 = vmatmul.bf16.gmra.mxu0 %v6899
    %v7268 = vpop.f32.mrf.mxu0
    %v7269 = vadd.f32 0.0, %v7268
    %v7270 = vpop.f32.mrf.mxu0
    %7271 = vdwg.mxu0
    %7272 = vmatpush.bf16.msra.mxu0 %v1169
    %7273 = vmatpush.bf16.msra.mxu0 %v1165
    %7274 = vmatpush.bf16.msra.mxu0 %v1161
    %7275 = vmatpush.bf16.msra.mxu0 %v1157
    %7276 = vmatpush.bf16.msra.mxu0 %v1153
    %7277 = vmatpush.bf16.msra.mxu0 %v1149
    %7278 = vmatpush.bf16.msra.mxu0 %v1145
    %7279 = vmatpush.bf16.msra.mxu0 %v1141
    %7280 = vmatmul.bf16.gmra.mxu0 %v6900
    %v7281 = vpop.f32.mrf.mxu0
    %v7282 = vadd.f32 %v7269, %v7281
    %v7283 = vpop.f32.mrf.mxu0
    %7284 = vdwg.mxu0
    %7285 = vmatpush.bf16.msra.mxu0 %v1138
    %7286 = vmatpush.bf16.msra.mxu0 %v1134
    %7287 = vmatpush.bf16.msra.mxu0 %v1130
    %7288 = vmatpush.bf16.msra.mxu0 %v1126
    %7289 = vmatpush.bf16.msra.mxu0 %v1122
    %7290 = vmatpush.bf16.msra.mxu0 %v1118
    %7291 = vmatpush.bf16.msra.mxu0 %v1114
    %7292 = vmatpush.bf16.msra.mxu0 %v1110
    %7293 = vmatmul.bf16.gmra.mxu0 %v6899
    %v7294 = vpop.f32.mrf.mxu0
    %v7295 = vadd.f32 0.0, %v7294
    %v7296 = vpop.f32.mrf.mxu0
    %7297 = vdwg.mxu0
    %7298 = vmatpush.bf16.msra.mxu0 %v1170
    %7299 = vmatpush.bf16.msra.mxu0 %v1166
    %7300 = vmatpush.bf16.msra.mxu0 %v1162
    %7301 = vmatpush.bf16.msra.mxu0 %v1158
    %7302 = vmatpush.bf16.msra.mxu0 %v1154
    %7303 = vmatpush.bf16.msra.mxu0 %v1150
    %7304 = vmatpush.bf16.msra.mxu0 %v1146
    %7305 = vmatpush.bf16.msra.mxu0 %v1142
    %7306 = vmatmul.bf16.gmra.mxu0 %v6900
    %v7307 = vpop.f32.mrf.mxu0
    %v7308 = vadd.f32 %v7295, %v7307
    %v7309 = vpop.f32.mrf.mxu0
    %7310 = vdwg.mxu0
    %7311 = vmatpush.bf16.msra.mxu0 %v1139
    %7312 = vmatpush.bf16.msra.mxu0 %v1135
    %7313 = vmatpush.bf16.msra.mxu0 %v1131
    %7314 = vmatpush.bf16.msra.mxu0 %v1127
    %7315 = vmatpush.bf16.msra.mxu0 %v1123
    %7316 = vmatpush.bf16.msra.mxu0 %v1119
    %7317 = vmatpush.bf16.msra.mxu0 %v1115
    %7318 = vmatpush.bf16.msra.mxu0 %v1111
    %7319 = vmatmul.bf16.gmra.mxu0 %v6899
    %v7320 = vpop.f32.mrf.mxu0
    %v7321 = vadd.f32 0.0, %v7320
    %v7322 = vpop.f32.mrf.mxu0
    %7323 = vdwg.mxu0
    %7324 = vmatpush.bf16.msra.mxu0 %v1171
    %7325 = vmatpush.bf16.msra.mxu0 %v1167
    %7326 = vmatpush.bf16.msra.mxu0 %v1163
    %7327 = vmatpush.bf16.msra.mxu0 %v1159
    %7328 = vmatpush.bf16.msra.mxu0 %v1155
    %7329 = vmatpush.bf16.msra.mxu0 %v1151
    %7330 = vmatpush.bf16.msra.mxu0 %v1147
    %7331 = vmatpush.bf16.msra.mxu0 %v1143
    %7332 = vmatmul.bf16.gmra.mxu0 %v6900
    %v7333 = vpop.f32.mrf.mxu0
    %v7334 = vadd.f32 %v7321, %v7333
    %v7335 = vpop.f32.mrf.mxu0
    %7336 = vdwg.mxu0
    %v7337 = vadd.f32 %v7178, %v7256
    %v7338 = vadd.f32 %v7191, %v7282
    %v7339 = vadd.f32 %v7204, %v7308
    %v7340 = vadd.f32 %v7217, %v7334
    %v7341 = vrot.slane %v157, 3
    %v7342 = vrot.slane %v158, 3
    %v7343 = vrot.slane %v159, 3
    %v7344 = vrot.slane %v242, 3
    %v7349 = vadd.f32 %v7337, %v7341
    %v7350 = vadd.f32 %v7338, %v7342
    %v7351 = vadd.f32 %v7339, %v7343
    %v7352 = vadd.f32 %v7340, %v7344
    %v7353 = vrot.slane %v262, 3
    %v7355 = vadd.f32 %v7230, %v7353
    %v7356 = vxor.u32 %v7349, 2147483648
    %v7357 = vxor.u32 %v7350, 2147483648
    %v7358 = vmul.f32 %v7356, 1.442695
    %v7359 = vpow.pop %v7358
    %v7360 = vmul.f32 %v7357, 1.442695
    %v7361 = vpow.pop %v7360
    %v7362 = vadd.f32 %v7359, 1.0
    %v7363 = vadd.f32 %v7361, 1.0
    %v7364 = vrcp.pop %v7362
    %v7365 = vmul.f32 %v7362, %v7364
    %v7366 = vsub.f32 1.0, %v7365
    %v7367 = vmul.f32 %v7364, %v7366
    %v7368 = vadd.f32 %v7364, %v7367
    %vm7369 = vweird.f32 %v7362
    %vm7370 = vweird.f32 %v7364
    %vm7371 = vmor %vm7369, %vm7370
    %v7372 = vsel %vm7371, %v7364, %v7368
    %v7373 = vand.u32 2147483647, %v7362
    %vm7374 = vcmp.eq.f32.partialorder %v7373, 8.507059e+37
    %v7375 = vand.u32 %v7362, 2147483648
    %v7376 = vor.u32 1.1754944e-38, %v7375
    %v7377 = vsel %vm7374, %v7376, %v7372
    %v7378 = vmul.f32 1.0, %v7377
    %v7379 = vrcp.pop %v7363
    %v7380 = vmul.f32 %v7363, %v7379
    %v7381 = vsub.f32 1.0, %v7380
    %v7382 = vmul.f32 %v7379, %v7381
    %v7383 = vadd.f32 %v7379, %v7382
    %vm7384 = vweird.f32 %v7363
    %vm7385 = vweird.f32 %v7379
    %vm7386 = vmor %vm7384, %vm7385
    %v7387 = vsel %vm7386, %v7379, %v7383
    %v7388 = vand.u32 2147483647, %v7363
    %vm7389 = vcmp.eq.f32.partialorder %v7388, 8.507059e+37
    %v7390 = vand.u32 %v7363, 2147483648
    %v7391 = vor.u32 1.1754944e-38, %v7390
    %v7392 = vsel %vm7389, %v7391, %v7387
    %v7393 = vmul.f32 1.0, %v7392
    %v7394 = vtanh.pop %v7351
    %v7395 = vxor.u32 %v7352, 2147483648
    %v7396 = vmul.f32 %v7395, 1.442695
    %v7397 = vpow.pop %v7396
    %v7398 = vadd.f32 %v7397, 1.0
    %v7399 = vrcp.pop %v7398
    %v7400 = vmul.f32 %v7398, %v7399
    %v7401 = vsub.f32 1.0, %v7400
    %v7402 = vmul.f32 %v7399, %v7401
    %v7403 = vadd.f32 %v7399, %v7402
    %vm7404 = vweird.f32 %v7398
    %vm7405 = vweird.f32 %v7399
    %vm7406 = vmor %vm7404, %vm7405
    %v7407 = vsel %vm7406, %v7399, %v7403
    %v7408 = vand.u32 2147483647, %v7398
    %vm7409 = vcmp.eq.f32.partialorder %v7408, 8.507059e+37
    %v7410 = vand.u32 %v7398, 2147483648
    %v7411 = vor.u32 1.1754944e-38, %v7410
    %v7412 = vsel %vm7409, %v7411, %v7407
    %v7413 = vmul.f32 1.0, %v7412
    %v7414 = vxor.u32 %v7355, 2147483648
    %v7415 = vmul.f32 %v7414, 1.442695
    %v7416 = vpow.pop %v7415
    %v7417 = vadd.f32 %v7416, 1.0
    %v7418 = vrcp.pop %v7417
    %v7419 = vmul.f32 %v7417, %v7418
    %v7420 = vsub.f32 1.0, %v7419
    %v7421 = vmul.f32 %v7418, %v7420
    %v7422 = vadd.f32 %v7418, %v7421
    %vm7423 = vweird.f32 %v7417
    %vm7424 = vweird.f32 %v7418
    %vm7425 = vmor %vm7423, %vm7424
    %v7426 = vsel %vm7425, %v7418, %v7422
    %v7427 = vand.u32 2147483647, %v7417
    %vm7428 = vcmp.eq.f32.partialorder %v7427, 8.507059e+37
    %v7429 = vand.u32 %v7417, 2147483648
    %v7430 = vor.u32 1.1754944e-38, %v7429
    %v7431 = vsel %vm7428, %v7430, %v7426
    %v7432 = vmul.f32 1.0, %v7431
    %v7433 = vmul.f32 %v7378, %v7432
    %v7434 = vmul.f32 %v7433, %v7394
    %v7435 = vmul.f32 %v7393, %v6896
    %v7436 = vadd.f32 %v7434, %v7435
    %v7437 = vtanh.pop %v7436
    %v7438 = vmul.f32 %v7413, %v7437
    %v7439 = vpack.c.bf16 %v7438, %v7438
    %7440 = vmatpush.bf16.msra.mxu0 %v1649
    %7441 = vmatpush.bf16.msra.mxu0 %v1645
    %7442 = vmatpush.bf16.msra.mxu0 %v1641
    %7443 = vmatpush.bf16.msra.mxu0 %v1637
    %7444 = vmatpush.bf16.msra.mxu0 %v1633
    %7445 = vmatpush.bf16.msra.mxu0 %v1629
    %7446 = vmatpush.bf16.msra.mxu0 %v1625
    %7447 = vmatpush.bf16.msra.mxu0 %v1621
    %7448 = vmatmul.bf16.gmra.mxu0 %v7166
    %v7449 = vpop.f32.mrf.mxu0
    %v7450 = vadd.f32 0.0, %v7449
    %v7451 = vpop.f32.mrf.mxu0
    %7452 = vdwg.mxu0
    %7453 = vmatpush.bf16.msra.mxu0 %v1681
    %7454 = vmatpush.bf16.msra.mxu0 %v1677
    %7455 = vmatpush.bf16.msra.mxu0 %v1673
    %7456 = vmatpush.bf16.msra.mxu0 %v1669
    %7457 = vmatpush.bf16.msra.mxu0 %v1665
    %7458 = vmatpush.bf16.msra.mxu0 %v1661
    %7459 = vmatpush.bf16.msra.mxu0 %v1657
    %7460 = vmatpush.bf16.msra.mxu0 %v1653
    %7461 = vmatmul.bf16.gmra.mxu0 %v7167
    %v7462 = vpop.f32.mrf.mxu0
    %v7463 = vadd.f32 %v7450, %v7462
    %v7464 = vpop.f32.mrf.mxu0
    %7465 = vdwg.mxu0
    %7466 = vmatpush.bf16.msra.mxu0 %v1650
    %7467 = vmatpush.bf16.msra.mxu0 %v1646
    %7468 = vmatpush.bf16.msra.mxu0 %v1642
    %7469 = vmatpush.bf16.msra.mxu0 %v1638
    %7470 = vmatpush.bf16.msra.mxu0 %v1634
    %7471 = vmatpush.bf16.msra.mxu0 %v1630
    %7472 = vmatpush.bf16.msra.mxu0 %v1626
    %7473 = vmatpush.bf16.msra.mxu0 %v1622
    %7474 = vmatmul.bf16.gmra.mxu0 %v7166
    %v7475 = vpop.f32.mrf.mxu0
    %v7476 = vadd.f32 0.0, %v7475
    %v7477 = vpop.f32.mrf.mxu0
    %7478 = vdwg.mxu0
    %7479 = vmatpush.bf16.msra.mxu0 %v1682
    %7480 = vmatpush.bf16.msra.mxu0 %v1678
    %7481 = vmatpush.bf16.msra.mxu0 %v1674
    %7482 = vmatpush.bf16.msra.mxu0 %v1670
    %7483 = vmatpush.bf16.msra.mxu0 %v1666
    %7484 = vmatpush.bf16.msra.mxu0 %v1662
    %7485 = vmatpush.bf16.msra.mxu0 %v1658
    %7486 = vmatpush.bf16.msra.mxu0 %v1654
    %7487 = vmatmul.bf16.gmra.mxu0 %v7167
    %v7488 = vpop.f32.mrf.mxu0
    %v7489 = vadd.f32 %v7476, %v7488
    %v7490 = vpop.f32.mrf.mxu0
    %7491 = vdwg.mxu0
    %7492 = vmatpush.bf16.msra.mxu0 %v1651
    %7493 = vmatpush.bf16.msra.mxu0 %v1647
    %7494 = vmatpush.bf16.msra.mxu0 %v1643
    %7495 = vmatpush.bf16.msra.mxu0 %v1639
    %7496 = vmatpush.bf16.msra.mxu0 %v1635
    %7497 = vmatpush.bf16.msra.mxu0 %v1631
    %7498 = vmatpush.bf16.msra.mxu0 %v1627
    %7499 = vmatpush.bf16.msra.mxu0 %v1623
    %7500 = vmatmul.bf16.gmra.mxu0 %v7166
    %v7501 = vpop.f32.mrf.mxu0
    %v7502 = vadd.f32 0.0, %v7501
    %v7503 = vpop.f32.mrf.mxu0
    %7504 = vdwg.mxu0
    %7505 = vmatpush.bf16.msra.mxu0 %v1683
    %7506 = vmatpush.bf16.msra.mxu0 %v1679
    %7507 = vmatpush.bf16.msra.mxu0 %v1675
    %7508 = vmatpush.bf16.msra.mxu0 %v1671
    %7509 = vmatpush.bf16.msra.mxu0 %v1667
    %7510 = vmatpush.bf16.msra.mxu0 %v1663
    %7511 = vmatpush.bf16.msra.mxu0 %v1659
    %7512 = vmatpush.bf16.msra.mxu0 %v1655
    %7513 = vmatmul.bf16.gmra.mxu0 %v7167
    %v7514 = vpop.f32.mrf.mxu0
    %v7515 = vadd.f32 %v7502, %v7514
    %v7516 = vpop.f32.mrf.mxu0
    %7517 = vdwg.mxu0
    %7518 = vmatpush.bf16.msra.mxu0 %v1652
    %7519 = vmatpush.bf16.msra.mxu0 %v1648
    %7520 = vmatpush.bf16.msra.mxu0 %v1644
    %7521 = vmatpush.bf16.msra.mxu0 %v1640
    %7522 = vmatpush.bf16.msra.mxu0 %v1636
    %7523 = vmatpush.bf16.msra.mxu0 %v1632
    %7524 = vmatpush.bf16.msra.mxu0 %v1628
    %7525 = vmatpush.bf16.msra.mxu0 %v1624
    %7526 = vmatmul.bf16.gmra.mxu0 %v7166
    %v7527 = vpop.f32.mrf.mxu0
    %v7528 = vadd.f32 0.0, %v7527
    %v7529 = vpop.f32.mrf.mxu0
    %7530 = vdwg.mxu0
    %7531 = vmatpush.bf16.msra.mxu0 %v1684
    %7532 = vmatpush.bf16.msra.mxu0 %v1680
    %7533 = vmatpush.bf16.msra.mxu0 %v1676
    %7534 = vmatpush.bf16.msra.mxu0 %v1672
    %7535 = vmatpush.bf16.msra.mxu0 %v1668
    %7536 = vmatpush.bf16.msra.mxu0 %v1664
    %7537 = vmatpush.bf16.msra.mxu0 %v1660
    %7538 = vmatpush.bf16.msra.mxu0 %v1656
    %7539 = vmatmul.bf16.gmra.mxu0 %v7167
    %v7540 = vpop.f32.mrf.mxu0
    %v7541 = vadd.f32 %v7528, %v7540
    %v7542 = vpop.f32.mrf.mxu0
    %7543 = vdwg.mxu0
    %7544 = vmatpush.bf16.msra.mxu0 %v2016
    %7545 = vmatpush.bf16.msra.mxu0 %v2011
    %7546 = vmatpush.bf16.msra.mxu0 %v2006
    %7547 = vmatpush.bf16.msra.mxu0 %v2001
    %7548 = vmatpush.bf16.msra.mxu0 %v1996
    %7549 = vmatpush.bf16.msra.mxu0 %v1991
    %7550 = vmatpush.bf16.msra.mxu0 %v1986
    %7551 = vmatpush.bf16.msra.mxu0 %v1981
    %7552 = vmatmul.bf16.gmra.mxu0 %v7439
    %v7553 = vpop.f32.mrf.mxu0
    %v7554 = vadd.f32 0.0, %v7553
    %v7555 = vpop.f32.mrf.mxu0
    %7556 = vdwg.mxu0
    %7557 = vmatpush.bf16.msra.mxu0 %v2017
    %7558 = vmatpush.bf16.msra.mxu0 %v2012
    %7559 = vmatpush.bf16.msra.mxu0 %v2007
    %7560 = vmatpush.bf16.msra.mxu0 %v2002
    %7561 = vmatpush.bf16.msra.mxu0 %v1997
    %7562 = vmatpush.bf16.msra.mxu0 %v1992
    %7563 = vmatpush.bf16.msra.mxu0 %v1987
    %7564 = vmatpush.bf16.msra.mxu0 %v1982
    %7565 = vmatmul.bf16.gmra.mxu0 %v7439
    %v7566 = vpop.f32.mrf.mxu0
    %v7567 = vadd.f32 0.0, %v7566
    %v7568 = vpop.f32.mrf.mxu0
    %7569 = vdwg.mxu0
    %7570 = vmatpush.bf16.msra.mxu0 %v2018
    %7571 = vmatpush.bf16.msra.mxu0 %v2013
    %7572 = vmatpush.bf16.msra.mxu0 %v2008
    %7573 = vmatpush.bf16.msra.mxu0 %v2003
    %7574 = vmatpush.bf16.msra.mxu0 %v1998
    %7575 = vmatpush.bf16.msra.mxu0 %v1993
    %7576 = vmatpush.bf16.msra.mxu0 %v1988
    %7577 = vmatpush.bf16.msra.mxu0 %v1983
    %7578 = vmatmul.bf16.gmra.mxu0 %v7439
    %v7579 = vpop.f32.mrf.mxu0
    %v7580 = vadd.f32 0.0, %v7579
    %v7581 = vpop.f32.mrf.mxu0
    %7582 = vdwg.mxu0
    %7583 = vmatpush.bf16.msra.mxu0 %v2019
    %7584 = vmatpush.bf16.msra.mxu0 %v2014
    %7585 = vmatpush.bf16.msra.mxu0 %v2009
    %7586 = vmatpush.bf16.msra.mxu0 %v2004
    %7587 = vmatpush.bf16.msra.mxu0 %v1999
    %7588 = vmatpush.bf16.msra.mxu0 %v1994
    %7589 = vmatpush.bf16.msra.mxu0 %v1989
    %7590 = vmatpush.bf16.msra.mxu0 %v1984
    %7591 = vmatmul.bf16.gmra.mxu0 %v7439
    %v7592 = vpop.f32.mrf.mxu0
    %v7593 = vadd.f32 0.0, %v7592
    %v7594 = vpop.f32.mrf.mxu0
    %7595 = vdwg.mxu0
    %7596 = vmatpush.bf16.msra.mxu0 %v2020
    %7597 = vmatpush.bf16.msra.mxu0 %v2015
    %7598 = vmatpush.bf16.msra.mxu0 %v2010
    %7599 = vmatpush.bf16.msra.mxu0 %v2005
    %7600 = vmatpush.bf16.msra.mxu0 %v2000
    %7601 = vmatpush.bf16.msra.mxu0 %v1995
    %7602 = vmatpush.bf16.msra.mxu0 %v1990
    %7603 = vmatpush.bf16.msra.mxu0 %v1985
    %7604 = vmatmul.bf16.gmra.mxu0 %v7439
    %v7605 = vpop.f32.mrf.mxu0
    %v7606 = vadd.f32 0.0, %v7605
    %v7607 = vpop.f32.mrf.mxu0
    %7608 = vdwg.mxu0
    %v7609 = vadd.f32 %v7554, %v7463
    %v7610 = vadd.f32 %v7567, %v7489
    %v7611 = vadd.f32 %v7580, %v7515
    %v7612 = vadd.f32 %v7593, %v7541
    %v7613 = vrot.slane %v396, 3
    %v7615 = vadd.f32 %v7609, %v3541
    %v7616 = vadd.f32 %v7610, %v3542
    %v7617 = vadd.f32 %v7611, %v3543
    %v7618 = vadd.f32 %v7612, %v7613
    %v7619 = vrot.slane %v416, 3
    %v7621 = vadd.f32 %v7606, %v7619
    %v7622 = vxor.u32 %v7615, 2147483648
    %v7623 = vxor.u32 %v7616, 2147483648
    %v7624 = vmul.f32 %v7622, 1.442695
    %v7625 = vpow.pop %v7624
    %v7626 = vmul.f32 %v7623, 1.442695
    %v7627 = vpow.pop %v7626
    %v7628 = vadd.f32 %v7625, 1.0
    %v7629 = vadd.f32 %v7627, 1.0
    %v7630 = vrcp.pop %v7628
    %v7631 = vmul.f32 %v7628, %v7630
    %v7632 = vsub.f32 1.0, %v7631
    %v7633 = vmul.f32 %v7630, %v7632
    %v7634 = vadd.f32 %v7630, %v7633
    %vm7635 = vweird.f32 %v7628
    %vm7636 = vweird.f32 %v7630
    %vm7637 = vmor %vm7635, %vm7636
    %v7638 = vsel %vm7637, %v7630, %v7634
    %v7639 = vand.u32 2147483647, %v7628
    %vm7640 = vcmp.eq.f32.partialorder %v7639, 8.507059e+37
    %v7641 = vand.u32 %v7628, 2147483648
    %v7642 = vor.u32 1.1754944e-38, %v7641
    %v7643 = vsel %vm7640, %v7642, %v7638
    %v7644 = vmul.f32 1.0, %v7643
    %v7645 = vrcp.pop %v7629
    %v7646 = vmul.f32 %v7629, %v7645
    %v7647 = vsub.f32 1.0, %v7646
    %v7648 = vmul.f32 %v7645, %v7647
    %v7649 = vadd.f32 %v7645, %v7648
    %vm7650 = vweird.f32 %v7629
    %vm7651 = vweird.f32 %v7645
    %vm7652 = vmor %vm7650, %vm7651
    %v7653 = vsel %vm7652, %v7645, %v7649
    %v7654 = vand.u32 2147483647, %v7629
    %vm7655 = vcmp.eq.f32.partialorder %v7654, 8.507059e+37
    %v7656 = vand.u32 %v7629, 2147483648
    %v7657 = vor.u32 1.1754944e-38, %v7656
    %v7658 = vsel %vm7655, %v7657, %v7653
    %v7659 = vmul.f32 1.0, %v7658
    %v7660 = vtanh.pop %v7617
    %v7661 = vxor.u32 %v7618, 2147483648
    %v7662 = vmul.f32 %v7661, 1.442695
    %v7663 = vpow.pop %v7662
    %v7664 = vadd.f32 %v7663, 1.0
    %v7665 = vrcp.pop %v7664
    %v7666 = vmul.f32 %v7664, %v7665
    %v7667 = vsub.f32 1.0, %v7666
    %v7668 = vmul.f32 %v7665, %v7667
    %v7669 = vadd.f32 %v7665, %v7668
    %vm7670 = vweird.f32 %v7664
    %vm7671 = vweird.f32 %v7665
    %vm7672 = vmor %vm7670, %vm7671
    %v7673 = vsel %vm7672, %v7665, %v7669
    %v7674 = vand.u32 2147483647, %v7664
    %vm7675 = vcmp.eq.f32.partialorder %v7674, 8.507059e+37
    %v7676 = vand.u32 %v7664, 2147483648
    %v7677 = vor.u32 1.1754944e-38, %v7676
    %v7678 = vsel %vm7675, %v7677, %v7673
    %v7679 = vmul.f32 1.0, %v7678
    %v7680 = vxor.u32 %v7621, 2147483648
    %v7681 = vmul.f32 %v7680, 1.442695
    %v7682 = vpow.pop %v7681
    %v7683 = vadd.f32 %v7682, 1.0
    %v7684 = vrcp.pop %v7683
    %v7685 = vmul.f32 %v7683, %v7684
    %v7686 = vsub.f32 1.0, %v7685
    %v7687 = vmul.f32 %v7684, %v7686
    %v7688 = vadd.f32 %v7684, %v7687
    %vm7689 = vweird.f32 %v7683
    %vm7690 = vweird.f32 %v7684
    %vm7691 = vmor %vm7689, %vm7690
    %v7692 = vsel %vm7691, %v7684, %v7688
    %v7693 = vand.u32 2147483647, %v7683
    %vm7694 = vcmp.eq.f32.partialorder %v7693, 8.507059e+37
    %v7695 = vand.u32 %v7683, 2147483648
    %v7696 = vor.u32 1.1754944e-38, %v7695
    %v7697 = vsel %vm7694, %v7696, %v7692
    %v7698 = vmul.f32 1.0, %v7697
    %v7699 = vmul.f32 %v7644, %v7698
    %v7700 = vmul.f32 %v7699, %v7660
    %v7701 = vmul.f32 %v7659, %v7163
    %v7702 = vadd.f32 %v7700, %v7701
    %v7703 = vtanh.pop %v7702
    %v7704 = vmul.f32 %v7679, %v7703
    %v7705 = vpack.c.bf16 %v7704, %v7704
    %v7707 = vunpack.c.l.b16 %v6626
    %v7708 = vpack.c.b16 %v7707, %v7707
    %v7710 = vshll.u32 %v7708, 16
    %v7714 = vunpack.c.l.b16 %v7166
    %v7715 = vpack.c.b16 %v7714, %v7714
    %v7716 = vrot.slane %v7715, 7
    %v7718 = vunpack.c.l.b16 %v7705
    %v7719 = vpack.c.b16 %v7718, %v7718
    %v7721 = vshll.u32 %v7719, 16
    %v7723 = vrot.slane %v7721, 7
    %vm7725 = vcmask 1040384
    %vm7726 = vsmask.f32 256
    %vm7727 = vmand %vm7725, %vm7726
    %v7728 = vsel %vm7727, %v6082, %v7710
    %vm7729 = vcmask 1040384
    %v7732 = vsel %vm7729, %v7728, %v7716
    %vm7734 = vcmask 1041408
    %vm7735 = vsmask.f32 1280
    %vm7736 = vmand %vm7734, %vm7735
    %v7737 = vsel %vm7736, %v7732, %v7723
    %v7738 = vld [vmem:[%s11] sm:$0xf]
    %v7739 = vld [vmem:[%s11 + $0x4] sm:$0xf]
    %v7740 = vld [vmem:[%s11 + $0x8] sm:$0xf]
    %v7741 = vld [vmem:[%s11 + $0xc] sm:$0xf]
    %v7742 = vld [vmem:[%s11 + $0x10] sm:$0xf]
    %v7743 = vld [vmem:[%s11 + $0x14] sm:$0xf]
    %v7744 = vld [vmem:[%s11 + $0x18] sm:$0xf]
    %v7745 = vld [vmem:[%s11 + $0x1c] sm:$0xf]
    %v7746 = vld [vmem:[%s11 + $0x20] sm:$0xf]
    %v7747 = vld [vmem:[%s11 + $0x24] sm:$0xf]
    %v7748 = vld [vmem:[%s11 + $0x28] sm:$0xf]
    %v7749 = vld [vmem:[%s11 + $0x2c] sm:$0xf]
    %v7750 = vld [vmem:[%s11 + $0x30] sm:$0xf]
    %v7751 = vld [vmem:[%s11 + $0x34] sm:$0xf]
    %v7752 = vld [vmem:[%s11 + $0x38] sm:$0xf]
    %v7753 = vld [vmem:[%s11 + $0x3c] sm:$0xf]
    %v7754 = vld [vmem:[%s12] sm:$0x1]
    %v7756 = vperm.slane %v7754, 0
    %v7774 = vunpack.c.l.b16 %v7738
    %v7775 = vunpack.c.l.b16 %v7739
    %v7776 = vunpack.c.l.b16 %v7740
    %v7777 = vunpack.c.l.b16 %v7741
    %v7778 = vunpack.c.l.b16 %v7742
    %v7779 = vunpack.c.l.b16 %v7743
    %v7780 = vunpack.c.l.b16 %v7744
    %v7781 = vunpack.c.l.b16 %v7745
    %v7782 = vunpack.c.l.b16 %v7746
    %v7783 = vunpack.c.l.b16 %v7747
    %v7784 = vunpack.c.l.b16 %v7748
    %v7785 = vunpack.c.l.b16 %v7749
    %v7786 = vunpack.c.l.b16 %v7750
    %v7787 = vunpack.c.l.b16 %v7751
    %v7788 = vunpack.c.l.b16 %v7752
    %v7789 = vunpack.c.l.b16 %v7753
    %v7790 = vpack.c.b16 %v7775, %v7774
    %v7791 = vpack.c.b16 %v7777, %v7776
    %v7792 = vpack.c.b16 %v7779, %v7778
    %v7793 = vpack.c.b16 %v7781, %v7780
    %v7794 = vpack.c.b16 %v7783, %v7782
    %v7795 = vpack.c.b16 %v7785, %v7784
    %v7796 = vpack.c.b16 %v7787, %v7786
    %v7797 = vpack.c.b16 %v7789, %v7788
    %7806 = vmatpush.bf16.msra.mxu0 %v7797
    %7807 = vmatpush.bf16.msra.mxu0 %v7796
    %7808 = vmatpush.bf16.msra.mxu0 %v7795
    %7809 = vmatpush.bf16.msra.mxu0 %v7794
    %7810 = vmatpush.bf16.msra.mxu0 %v7793
    %7811 = vmatpush.bf16.msra.mxu0 %v7792
    %7812 = vmatpush.bf16.msra.mxu0 %v7791
    %7813 = vmatpush.bf16.msra.mxu0 %v7790
    %7814 = vmatmul.bf16.gmra.mxu0 %v7737
    %v7815 = vpop.f32.mrf.mxu0
    %v7816 = vadd.f32 %v7756, %v7815
    %v7817 = vpop.f32.mrf.mxu0
    %7818 = vdwg.mxu0
    %7819 = vst [vmem:[#allocation2] sm:$0xf] %v7816
    // Predicated region
    $region54: #{seq_time_lstm.1} parent=1 // pred_check
      _
    $region55: #{seq_time_lstm.1} parent=1 // pred_check_branch
      %7821 = sbr.rel (0) target = $region57
    $region56: #{seq_time_lstm.1} parent=1 // pred_region
      %7823 = vsyncadd [#allocation3], 0
      %s7825 = sshll.u32 [#allocation2], 4
      %s7826 = int_to_ptr.vmem [resolvable:$true] %s7825
      %s7827 = sshll.u32 %s13, 4
      %s7828 = int_to_ptr.hbm [resolvable:$true] %s7827
      %7830 = dma.vmem_to_hbm [thread:$0]  %s7826, 64, %s7828, [#allocation3]
    $region57: #{seq_time_lstm.1} parent=1 // pred_fallthru
      _
    // Predicated region
    $region58: #{seq_time_lstm.1} parent=1 // pred_check
      _
    $region59: #{seq_time_lstm.1} parent=1 // pred_check_branch
      %7832 = sbr.rel (0) target = $region61
    $region60: #{seq_time_lstm.1} parent=1 // pred_region
      %7834 = dma.done [#allocation3], 64
    $region61: #{seq_time_lstm.1} parent=1 // pred_fallthru
      _
    %7835 = vsyncpa [#allocation3], 1

</llo_original>
